<compile_context>
chip_gen: v7x
topology: tpu7x:2x2x1
jax: 0.10.0
libtpu: 0.0.40
codegen_flags: <defaults>
</compile_context>

<pallas_src>
import functools

import numpy as np
import jax
import jax.numpy as jnp
from jax.experimental import pallas as pl
from jax.experimental.pallas import tpu as pltpu

EPS = 1e-5


# ----------------------------- in-kernel helpers ---------------------------- #

def _build_patch(src_ref, patch_ref, ho, wo, hpp, wpp, stride, ch):
    """Write the 9 shifted 3x3 taps into patch_ref as one (Ho*Wo, 9*ch) slab."""
    for ky in range(3):
        r0 = (ky % stride) * hpp + ky // stride
        for kx in range(3):
            c0 = (kx % stride) * wpp + kx // stride
            t = 3 * ky + kx
            tap = src_ref[r0:r0 + ho, c0:c0 + wo, :]
            patch_ref[:, t * ch:(t + 1) * ch] = tap.reshape(ho * wo, ch)


def _accumulate_stats(st_ref, acc):
    """Resident per-channel sum / sum-of-squares accumulator (one store)."""
    @pl.when(pl.program_id(1) == 0)
    def _init():
        st_ref[...] = jnp.zeros(st_ref.shape, st_ref.dtype)

    upd = jnp.concatenate(
        [jnp.sum(acc, axis=0, keepdims=True),
         jnp.sum(acc * acc, axis=0, keepdims=True)], axis=0)
    st_ref[...] += upd


# ------------------------------ Pallas kernels ------------------------------ #

def _conv_stats_kernel(x_ref, w_ref, y_ref, st_ref, patch_ref,
                       *, ho, wo, hpp, wpp, stride, cin):
    """conv1 (3x3, stride) as one deep-K matmul + per-channel BN1 stats."""
    _build_patch(x_ref, patch_ref, ho, wo, hpp, wpp, stride, cin)
    acc = jnp.dot(patch_ref[...], w_ref[...],
                  preferred_element_type=jnp.float32)          # (Ho*Wo, Cout) f32
    y_ref[...] = acc.reshape(ho, wo, acc.shape[-1])
    _accumulate_stats(st_ref, acc)


def _bn_relu_conv_stats_kernel(y1_ref, a_ref, b_ref, w_ref, y2_ref, st_ref,
                               pad_ref, patch_ref, *, ho, wo, cout):
    """BN1(scale/shift) + ReLU + conv2 (deep-K matmul) + BN2 stats."""
    # Zero the pad slab (halo) once; scratch persists across grid steps, and
    # the interior is fully overwritten every step.
    @pl.when(pl.program_id(1) == 0)
    def _zero_halo():
        pad_ref[...] = jnp.zeros(pad_ref.shape, pad_ref.dtype)

    a = a_ref[...].reshape(1, 1, -1)
    b = b_ref[...].reshape(1, 1, -1)
    h = jnp.maximum(y1_ref[...] * a + b, 0.0)                   # f32 BN + ReLU
    pad_ref[1:ho + 1, 1:wo + 1, :] = h.astype(pad_ref.dtype)    # bf16 interior

    _build_patch(pad_ref, patch_ref, ho, wo, ho + 2, wo + 2, 1, cout)
    acc = jnp.dot(patch_ref[...], w_ref[...],
                  preferred_element_type=jnp.float32)
    y2_ref[...] = acc.reshape(ho, wo, cout)
    _accumulate_stats(st_ref, acc)


def _bn_add_relu_kernel(y2_ref, a_ref, b_ref, xs_ref, o_ref, *, cin, cout):
    """BN2(scale/shift) + eye-shortcut add (first min(cin,cout) ch) + ReLU."""
    a = a_ref[...].reshape(1, 1, -1)
    b = b_ref[...].reshape(1, 1, -1)
    r = y2_ref[...] * a + b
    c = min(cin, cout)
    o_ref[...] = jnp.maximum(r, 0.0)
    o_ref[:, :, :c] = jnp.maximum(r[:, :, :c] + xs_ref[:, :, :c], 0.0)


# -------------------------------- JAX glue ---------------------------------- #

def _phase_pad(x_nhwc, stride):
    """Zero-pad by 1 and, for stride>1, permute rows/cols into a phase
    (space-to-depth) layout so every 3x3/stride tap is a contiguous static
    slice inside the kernel.  Same total size as the padded input."""
    n, h, w, c = x_nhwc.shape
    hs, ws = h + 2, w + 2
    hpad = -(-hs // stride) * stride
    wpad = -(-ws // stride) * stride
    xp = jnp.pad(x_nhwc, ((0, 0), (1, hpad - h - 1), (1, wpad - w - 1), (0, 0)))
    hpp, wpp = hpad // stride, wpad // stride
    xr = xp.reshape(n, hpp, stride, wpp, stride, c)
    xr = xr.transpose(0, 2, 1, 4, 3, 5).reshape(n, stride * hpp, stride * wpp, c)
    return xr, hpp, wpp


def _affine_from_stats(stats, gamma, beta, m):
    """Fold batch mean/var (from sum & sumsq) + BN affine into y*scale + shift."""
    mu = stats[0] / m
    var = jnp.maximum(stats[1] / m - mu * mu, 0.0)
    scale = gamma.reshape(-1) * jax.lax.rsqrt(var + EPS)
    shift = beta.reshape(-1) - mu * scale
    return scale.reshape(1, -1), shift.reshape(1, -1)


def resnet_block_forward(x_nchw, params, stride=1):
    x = jnp.transpose(x_nchw, (0, 2, 3, 1)).astype(jnp.float32)      # NHWC f32
    n, h, w, cin = x.shape
    cout = params["w1"].shape[-1]
    ho = (h - 1) // stride + 1
    wo = (w - 1) // stride + 1
    m = n * ho * wo

    xr, hpp, wpp = _phase_pad(x, stride)
    xr = xr.astype(jnp.bfloat16)                  # bf16 conv operands in HBM
    sh, sw = stride * hpp, stride * wpp

    # v7x dual-TC: outer "parallel" axis with per-outer stats partials.
    n_outer = 2 if (n % 2 == 0 and n >= 2) else 1
    n_inner = n // n_outer

    cp_conv = pltpu.CompilerParams(
        dimension_semantics=("parallel", "arbitrary"),
        vmem_limit_bytes=32 * 1024 * 1024)
    cp_elem = pltpu.CompilerParams(
        dimension_semantics=("parallel",),
        vmem_limit_bytes=32 * 1024 * 1024)

    # ---- conv1 (deep-K matmul) + BN1 partial stats ----
    y1, st1 = pl.pallas_call(
        functools.partial(_conv_stats_kernel, ho=ho, wo=wo, hpp=hpp, wpp=wpp,
                          stride=stride, cin=cin),
        out_shape=(jax.ShapeDtypeStruct((n, ho, wo, cout), jnp.float32),
                   jax.ShapeDtypeStruct((n_outer, 2, cout), jnp.float32)),
        grid_spec=pltpu.PrefetchScalarGridSpec(
            num_scalar_prefetch=0, grid=(n_outer, n_inner),
            in_specs=[
                pl.BlockSpec((None, sh, sw, cin),
                             lambda o, i: (o * n_inner + i, 0, 0, 0)),
                pl.BlockSpec((9 * cin, cout), lambda o, i: (0, 0)),
            ],
            out_specs=(
                pl.BlockSpec((None, ho, wo, cout),
                             lambda o, i: (o * n_inner + i, 0, 0, 0)),
                pl.BlockSpec((None, 2, cout), lambda o, i: (o, 0, 0)),
            ),
            scratch_shapes=[pltpu.VMEM((ho * wo, 9 * cin), jnp.bfloat16)]),
        compiler_params=cp_conv,
        cost_estimate=pl.CostEstimate(
            flops=2 * m * 9 * cin * cout, transcendentals=0,
            bytes_accessed=n * sh * sw * cin * 2 + 9 * cin * cout * 2
                           + m * cout * 4),
    )(xr, params["w1"])

    a1, b1 = _affine_from_stats(jnp.sum(st1, axis=0), params["g1"],
                                params["b1"], m)

    # ---- BN1 + ReLU + conv2 (deep-K matmul) + BN2 partial stats ----
    y2, st2 = pl.pallas_call(
        functools.partial(_bn_relu_conv_stats_kernel, ho=ho, wo=wo, cout=cout),
        out_shape=(jax.ShapeDtypeStruct((n, ho, wo, cout), jnp.float32),
                   jax.ShapeDtypeStruct((n_outer, 2, cout), jnp.float32)),
        grid_spec=pltpu.PrefetchScalarGridSpec(
            num_scalar_prefetch=0, grid=(n_outer, n_inner),
            in_specs=[
                pl.BlockSpec((None, ho, wo, cout),
                             lambda o, i: (o * n_inner + i, 0, 0, 0)),
                pl.BlockSpec((1, cout), lambda o, i: (0, 0)),
                pl.BlockSpec((1, cout), lambda o, i: (0, 0)),
                pl.BlockSpec((9 * cout, cout), lambda o, i: (0, 0)),
            ],
            out_specs=(
                pl.BlockSpec((None, ho, wo, cout),
                             lambda o, i: (o * n_inner + i, 0, 0, 0)),
                pl.BlockSpec((None, 2, cout), lambda o, i: (o, 0, 0)),
            ),
            scratch_shapes=[
                pltpu.VMEM((ho + 2, wo + 2, cout), jnp.bfloat16),   # pad slab
                pltpu.VMEM((ho * wo, 9 * cout), jnp.bfloat16),      # im2col patch
            ]),
        compiler_params=cp_conv,
        cost_estimate=pl.CostEstimate(
            flops=2 * m * 9 * cout * cout + 4 * m * cout, transcendentals=0,
            bytes_accessed=2 * m * cout * 4 + 9 * cout * cout * 2),
    )(y1, a1, b1, params["w2"])

    a2, b2 = _affine_from_stats(jnp.sum(st2, axis=0), params["g2"],
                                params["b2"], m)

    # ---- eye-projection shortcut: strided slice only (channel pad in-kernel) ----
    xs = x[:, ::stride, ::stride, :]                 # (n, ho, wo, cin) f32

    # ---- BN2 + shortcut add + ReLU (pure elementwise) ----
    out = pl.pallas_call(
        functools.partial(_bn_add_relu_kernel, cin=cin, cout=cout),
        out_shape=jax.ShapeDtypeStruct((n, ho, wo, cout), jnp.float32),
        grid_spec=pltpu.PrefetchScalarGridSpec(
            num_scalar_prefetch=0, grid=(n,),
            in_specs=[
                pl.BlockSpec((None, ho, wo, cout), lambda i: (i, 0, 0, 0)),
                pl.BlockSpec((1, cout), lambda i: (0, 0)),
                pl.BlockSpec((1, cout), lambda i: (0, 0)),
                pl.BlockSpec((None, ho, wo, cin), lambda i: (i, 0, 0, 0)),
            ],
            out_specs=pl.BlockSpec((None, ho, wo, cout),
                                   lambda i: (i, 0, 0, 0))),
        compiler_params=cp_elem,
        cost_estimate=pl.CostEstimate(
            flops=4 * m * cout, transcendentals=0,
            bytes_accessed=2 * m * cout * 4 + m * cin * 4),
    )(y2, a2, b2, xs)

    return jnp.transpose(out, (0, 3, 1, 2))                          # NCHW


# ------------------------- deterministic parameters ------------------------- #

def init_params(key, cin, cout):
    k1, k2, k3, k4, k5, k6 = jax.random.split(key, 6)
    w1_hwio = 0.1 * jax.random.normal(k1, (3, 3, cin, cout), jnp.float32)
    w2_hwio = 0.1 * jax.random.normal(k2, (3, 3, cout, cout), jnp.float32)
    return {
        # bf16 MXU weights in deep-K layout (9*Cin, Cout), tap-major.
        "w1": w1_hwio.astype(jnp.bfloat16).reshape(9 * cin, cout),
        "w2": w2_hwio.astype(jnp.bfloat16).reshape(9 * cout, cout),
        # f32 HWIO copies for the XLA reference.
        "w1_hwio": w1_hwio,
        "w2_hwio": w2_hwio,
        "g1": 1.0 + 0.1 * jax.random.normal(k3, (1, cout), jnp.float32),
        "b1": 0.1 * jax.random.normal(k4, (1, cout), jnp.float32),
        "g2": 1.0 + 0.1 * jax.random.normal(k5, (1, cout), jnp.float32),
        "b2": 0.1 * jax.random.normal(k6, (1, cout), jnp.float32),
    }


# ------------------------------ pure-JAX ref --------------------------------- #

def ref_forward(x_nchw, params, stride):
    x = jnp.transpose(x_nchw, (0, 2, 3, 1)).astype(jnp.float32)
    cin = x.shape[-1]
    cout = params["w1_hwio"].shape[-1]
    dn = ("NHWC", "HWIO", "NHWC")

    def bn(y, g, b):
        mu = jnp.mean(y, axis=(0, 1, 2), keepdims=True)
        var = jnp.mean(jnp.square(y - mu), axis=(0, 1, 2), keepdims=True)
        return (y - mu) * jax.lax.rsqrt(var + EPS) * g.reshape(1, 1, 1, -1) \
               + b.reshape(1, 1, 1, -1)

    def conv_bf16(inp, w_hwio, s):
        # Same operand precision as the kernels: bf16 inputs, f32 accumulation.
        return jax.lax.conv_general_dilated(
            inp.astype(jnp.bfloat16), w_hwio.astype(jnp.bfloat16),
            (s, s), ((1, 1), (1, 1)), dimension_numbers=dn,
            preferred_element_type=jnp.float32)

    y1 = conv_bf16(x, params["w1_hwio"], stride)
    hmid = jnp.maximum(bn(y1, params["g1"], params["b1"]), 0.0)
    y2 = conv_bf16(hmid, params["w2_hwio"], 1)
    r = bn(y2, params["g2"], params["b2"])
    eye_oi = jnp.eye(cout, cin, dtype=jnp.float32)        # torch.eye(cout, cin)
    s = jax.lax.conv_general_dilated(
        x, eye_oi.T.reshape(1, 1, cin, cout), (stride, stride), "VALID",
        dimension_numbers=dn)
    return jnp.transpose(jnp.maximum(s + r, 0.0), (0, 3, 1, 2))


# ----------------------------------- main ------------------------------------ #

if __name__ == "__main__":
    key = jax.random.PRNGKey(0)
    k_x, k_p = jax.random.split(key)
    cin, cout = 4, 8
    x = jax.random.normal(k_x, (2, cin, 16, 16), jnp.float32)   # NCHW like PyTorch
    params = init_params(k_p, cin, cout)

    fwd = jax.jit(resnet_block_forward, static_argnames=("stride",))
    for stride in (1, 2):
        out = jax.block_until_ready(fwd(x, params, stride=stride))
        ref = jax.block_until_ready(ref_forward(x, params, stride))
        assert out.shape == ref.shape, (out.shape, ref.shape)
        # bf16 MXU operands + BatchNorm amplification -> 1e-2 tolerance.
        if not np.allclose(np.asarray(out), np.asarray(ref), atol=1e-2, rtol=1e-2):
            err = float(np.max(np.abs(np.asarray(out) - np.asarray(ref))))
            raise AssertionError(f"Pallas/JAX mismatch at stride={stride}: {err}")

    print("KERNEL_OK")
</pallas_src>

<mosaic_0001>
module attributes {stable_mosaic.version = 11 : i64} {
  func.func @_conv_stats_kernel(%arg0: i32, %arg1: i32, %arg2: memref<1x18x18x4xbf16, #tpu.memory_space<vmem>>, %arg3: memref<36x8xbf16, #tpu.memory_space<vmem>>, %arg4: memref<1x16x16x8xf32, #tpu.memory_space<vmem>>, %arg5: memref<1x2x8xf32, #tpu.memory_space<vmem>>, %arg6: memref<256x36xbf16, #tpu.memory_space<vmem>>) attributes {dimension_semantics = [#tpu.dimension_semantics<parallel>, #tpu.dimension_semantics<arbitrary>], iteration_bounds = array<i64: 2, 1>, scalar_prefetch = 0 : i64, scratch_operands = 1 : i64, tpu.core_type = #tpu.core_type<tc>, window_params = [{transform_indices = @transform_0, window_bounds = array<i64: 1, 18, 18, 4>}, {pipeline_mode = #tpu.pipeline_mode<synchronous>, transform_indices = @transform_1, window_bounds = array<i64: 36, 8>}, {transform_indices = @transform_2, window_bounds = array<i64: 1, 16, 16, 8>}, {transform_indices = @transform_3, window_bounds = array<i64: 1, 2, 8>}]} {
    %c0 = arith.constant 0 : index
    %c0_0 = arith.constant 0 : index
    %c0_1 = arith.constant 0 : index
    %c0_2 = arith.constant 0 : index
    %0 = vector.load %arg2[%c0, %c0_0, %c0_1, %c0_2] : memref<1x18x18x4xbf16, #tpu.memory_space<vmem>>, vector<1x16x16x4xbf16>
    %1 = vector.shape_cast %0 : vector<1x16x16x4xbf16> to vector<16x16x4xbf16>
    %2 = vector.shape_cast %1 : vector<16x16x4xbf16> to vector<256x4xbf16>
    %c0_3 = arith.constant 0 : index
    %c0_4 = arith.constant 0 : index
    %3 = vector.load %arg6[%c0_3, %c0_4] : memref<256x36xbf16, #tpu.memory_space<vmem>>, vector<256x4xbf16>
    tpu.vector_store %arg6[%c0_3, %c0_4], %2 {strides = array<i32>} : memref<256x36xbf16, #tpu.memory_space<vmem>>, vector<256x4xbf16>,
    %c0_5 = arith.constant 0 : index
    %c0_6 = arith.constant 0 : index
    %c1 = arith.constant 1 : index
    %c0_7 = arith.constant 0 : index
    %4 = vector.load %arg2[%c0_5, %c0_6, %c1, %c0_7] : memref<1x18x18x4xbf16, #tpu.memory_space<vmem>>, vector<1x16x16x4xbf16>
    %5 = vector.shape_cast %4 : vector<1x16x16x4xbf16> to vector<16x16x4xbf16>
    %6 = vector.shape_cast %5 : vector<16x16x4xbf16> to vector<256x4xbf16>
    %c0_8 = arith.constant 0 : index
    %c4 = arith.constant 4 : index
    %7 = vector.load %arg6[%c0_8, %c4] : memref<256x36xbf16, #tpu.memory_space<vmem>>, vector<256x4xbf16>
    tpu.vector_store %arg6[%c0_8, %c4], %6 {strides = array<i32>} : memref<256x36xbf16, #tpu.memory_space<vmem>>, vector<256x4xbf16>,
    %c0_9 = arith.constant 0 : index
    %c0_10 = arith.constant 0 : index
    %c2 = arith.constant 2 : index
    %c0_11 = arith.constant 0 : index
    %8 = vector.load %arg2[%c0_9, %c0_10, %c2, %c0_11] : memref<1x18x18x4xbf16, #tpu.memory_space<vmem>>, vector<1x16x16x4xbf16>
    %9 = vector.shape_cast %8 : vector<1x16x16x4xbf16> to vector<16x16x4xbf16>
    %10 = vector.shape_cast %9 : vector<16x16x4xbf16> to vector<256x4xbf16>
    %c0_12 = arith.constant 0 : index
    %c8 = arith.constant 8 : index
    %11 = vector.load %arg6[%c0_12, %c8] : memref<256x36xbf16, #tpu.memory_space<vmem>>, vector<256x4xbf16>
    tpu.vector_store %arg6[%c0_12, %c8], %10 {strides = array<i32>} : memref<256x36xbf16, #tpu.memory_space<vmem>>, vector<256x4xbf16>,
    %c0_13 = arith.constant 0 : index
    %c1_14 = arith.constant 1 : index
    %c0_15 = arith.constant 0 : index
    %c0_16 = arith.constant 0 : index
    %12 = vector.load %arg2[%c0_13, %c1_14, %c0_15, %c0_16] : memref<1x18x18x4xbf16, #tpu.memory_space<vmem>>, vector<1x16x16x4xbf16>
    %13 = vector.shape_cast %12 : vector<1x16x16x4xbf16> to vector<16x16x4xbf16>
    %14 = vector.shape_cast %13 : vector<16x16x4xbf16> to vector<256x4xbf16>
    %c0_17 = arith.constant 0 : index
    %c12 = arith.constant 12 : index
    %15 = vector.load %arg6[%c0_17, %c12] : memref<256x36xbf16, #tpu.memory_space<vmem>>, vector<256x4xbf16>
    tpu.vector_store %arg6[%c0_17, %c12], %14 {strides = array<i32>} : memref<256x36xbf16, #tpu.memory_space<vmem>>, vector<256x4xbf16>,
    %c0_18 = arith.constant 0 : index
    %c1_19 = arith.constant 1 : index
    %c1_20 = arith.constant 1 : index
    %c0_21 = arith.constant 0 : index
    %16 = vector.load %arg2[%c0_18, %c1_19, %c1_20, %c0_21] : memref<1x18x18x4xbf16, #tpu.memory_space<vmem>>, vector<1x16x16x4xbf16>
    %17 = vector.shape_cast %16 : vector<1x16x16x4xbf16> to vector<16x16x4xbf16>
    %18 = vector.shape_cast %17 : vector<16x16x4xbf16> to vector<256x4xbf16>
    %c0_22 = arith.constant 0 : index
    %c16 = arith.constant 16 : index
    %19 = vector.load %arg6[%c0_22, %c16] : memref<256x36xbf16, #tpu.memory_space<vmem>>, vector<256x4xbf16>
    tpu.vector_store %arg6[%c0_22, %c16], %18 {strides = array<i32>} : memref<256x36xbf16, #tpu.memory_space<vmem>>, vector<256x4xbf16>,
    %c0_23 = arith.constant 0 : index
    %c1_24 = arith.constant 1 : index
    %c2_25 = arith.constant 2 : index
    %c0_26 = arith.constant 0 : index
    %20 = vector.load %arg2[%c0_23, %c1_24, %c2_25, %c0_26] : memref<1x18x18x4xbf16, #tpu.memory_space<vmem>>, vector<1x16x16x4xbf16>
    %21 = vector.shape_cast %20 : vector<1x16x16x4xbf16> to vector<16x16x4xbf16>
    %22 = vector.shape_cast %21 : vector<16x16x4xbf16> to vector<256x4xbf16>
    %c0_27 = arith.constant 0 : index
    %c20 = arith.constant 20 : index
    %23 = vector.load %arg6[%c0_27, %c20] : memref<256x36xbf16, #tpu.memory_space<vmem>>, vector<256x4xbf16>
    tpu.vector_store %arg6[%c0_27, %c20], %22 {strides = array<i32>} : memref<256x36xbf16, #tpu.memory_space<vmem>>, vector<256x4xbf16>,
    %c0_28 = arith.constant 0 : index
    %c2_29 = arith.constant 2 : index
    %c0_30 = arith.constant 0 : index
    %c0_31 = arith.constant 0 : index
    %24 = vector.load %arg2[%c0_28, %c2_29, %c0_30, %c0_31] : memref<1x18x18x4xbf16, #tpu.memory_space<vmem>>, vector<1x16x16x4xbf16>
    %25 = vector.shape_cast %24 : vector<1x16x16x4xbf16> to vector<16x16x4xbf16>
    %26 = vector.shape_cast %25 : vector<16x16x4xbf16> to vector<256x4xbf16>
    %c0_32 = arith.constant 0 : index
    %c24 = arith.constant 24 : index
    %27 = vector.load %arg6[%c0_32, %c24] : memref<256x36xbf16, #tpu.memory_space<vmem>>, vector<256x4xbf16>
    tpu.vector_store %arg6[%c0_32, %c24], %26 {strides = array<i32>} : memref<256x36xbf16, #tpu.memory_space<vmem>>, vector<256x4xbf16>,
    %c0_33 = arith.constant 0 : index
    %c2_34 = arith.constant 2 : index
    %c1_35 = arith.constant 1 : index
    %c0_36 = arith.constant 0 : index
    %28 = vector.load %arg2[%c0_33, %c2_34, %c1_35, %c0_36] : memref<1x18x18x4xbf16, #tpu.memory_space<vmem>>, vector<1x16x16x4xbf16>
    %29 = vector.shape_cast %28 : vector<1x16x16x4xbf16> to vector<16x16x4xbf16>
    %30 = vector.shape_cast %29 : vector<16x16x4xbf16> to vector<256x4xbf16>
    %c0_37 = arith.constant 0 : index
    %c28 = arith.constant 28 : index
    %31 = vector.load %arg6[%c0_37, %c28] : memref<256x36xbf16, #tpu.memory_space<vmem>>, vector<256x4xbf16>
    tpu.vector_store %arg6[%c0_37, %c28], %30 {strides = array<i32>} : memref<256x36xbf16, #tpu.memory_space<vmem>>, vector<256x4xbf16>,
    %c0_38 = arith.constant 0 : index
    %c2_39 = arith.constant 2 : index
    %c2_40 = arith.constant 2 : index
    %c0_41 = arith.constant 0 : index
    %32 = vector.load %arg2[%c0_38, %c2_39, %c2_40, %c0_41] : memref<1x18x18x4xbf16, #tpu.memory_space<vmem>>, vector<1x16x16x4xbf16>
    %33 = vector.shape_cast %32 : vector<1x16x16x4xbf16> to vector<16x16x4xbf16>
    %34 = vector.shape_cast %33 : vector<16x16x4xbf16> to vector<256x4xbf16>
    %c0_42 = arith.constant 0 : index
    %c32 = arith.constant 32 : index
    %35 = vector.load %arg6[%c0_42, %c32] : memref<256x36xbf16, #tpu.memory_space<vmem>>, vector<256x4xbf16>
    tpu.vector_store %arg6[%c0_42, %c32], %34 {strides = array<i32>} : memref<256x36xbf16, #tpu.memory_space<vmem>>, vector<256x4xbf16>,
    %c0_43 = arith.constant 0 : index
    %c0_44 = arith.constant 0 : index
    %36 = vector.load %arg6[%c0_43, %c0_44] : memref<256x36xbf16, #tpu.memory_space<vmem>>, vector<256x36xbf16>
    %c0_45 = arith.constant 0 : index
    %c0_46 = arith.constant 0 : index
    %37 = vector.load %arg3[%c0_45, %c0_46] : memref<36x8xbf16, #tpu.memory_space<vmem>>, vector<36x8xbf16>
    %cst = arith.constant dense<0.000000e+00> : vector<256x8xf32>
    %38 = tpu.matmul %36, %37, %cst {dimension_numbers = #tpu.dot_dimension_numbers<[1], [0], [0], [1], [0, 0, 1, 1], [], []>} : vector<256x36xbf16>, vector<36x8xbf16>, vector<256x8xf32> -> vector<256x8xf32>
    %39 = vector.shape_cast %38 : vector<256x8xf32> to vector<16x16x8xf32>
    %c0_47 = arith.constant 0 : index
    %c0_48 = arith.constant 0 : index
    %c0_49 = arith.constant 0 : index
    %c0_50 = arith.constant 0 : index
    %40 = vector.load %arg4[%c0_47, %c0_48, %c0_49, %c0_50] : memref<1x16x16x8xf32, #tpu.memory_space<vmem>>, vector<1x16x16x8xf32>
    %41 = vector.shape_cast %40 : vector<1x16x16x8xf32> to vector<16x16x8xf32>
    %42 = vector.shape_cast %39 : vector<16x16x8xf32> to vector<1x16x16x8xf32>
    tpu.vector_store %arg4[%c0_47, %c0_48, %c0_49, %c0_50], %42 {strides = array<i32>} : memref<1x16x16x8xf32, #tpu.memory_space<vmem>>, vector<1x16x16x8xf32>,
    %c0_i32 = arith.constant 0 : i32
    %43 = arith.cmpi eq, %arg1, %c0_i32 : i32
    %44 = arith.extui %43 : i1 to i32
    %c0_i32_51 = arith.constant 0 : i32
    %45 = arith.cmpi ne, %44, %c0_i32_51 : i32
    scf.if %45 {
      %cst_60 = arith.constant 0.000000e+00 : f32
      %58 = vector.broadcast %cst_60 : f32 to vector<2x8xf32>
      %c0_61 = arith.constant 0 : index
      %c0_62 = arith.constant 0 : index
      %c0_63 = arith.constant 0 : index
      %59 = vector.load %arg5[%c0_61, %c0_62, %c0_63] : memref<1x2x8xf32, #tpu.memory_space<vmem>>, vector<1x2x8xf32>
      %60 = vector.shape_cast %59 : vector<1x2x8xf32> to vector<2x8xf32>
      %61 = vector.shape_cast %58 : vector<2x8xf32> to vector<1x2x8xf32>
      tpu.vector_store %arg5[%c0_61, %c0_62, %c0_63], %61 {strides = array<i32>} : memref<1x2x8xf32, #tpu.memory_space<vmem>>, vector<1x2x8xf32>,
    } else {
    }
    %cst_52 = arith.constant dense<0.000000e+00> : vector<8xf32>
    %46 = vector.multi_reduction <add>, %38, %cst_52 [0] : vector<256x8xf32> to vector<8xf32>
    %47 = vector.shape_cast %46 : vector<8xf32> to vector<1x8xf32>
    %48 = arith.mulf %38, %38 : vector<256x8xf32>
    %cst_53 = arith.constant dense<0.000000e+00> : vector<8xf32>
    %49 = vector.multi_reduction <add>, %48, %cst_53 [0] : vector<256x8xf32> to vector<8xf32>
    %50 = vector.shape_cast %49 : vector<8xf32> to vector<1x8xf32>
    %51 = tpu.concatenate %47, %50 in 0 : vector<1x8xf32>, vector<1x8xf32> -> vector<2x8xf32>
    %c0_54 = arith.constant 0 : index
    %c0_55 = arith.constant 0 : index
    %c0_56 = arith.constant 0 : index
    %52 = vector.load %arg5[%c0_54, %c0_55, %c0_56] : memref<1x2x8xf32, #tpu.memory_space<vmem>>, vector<1x2x8xf32>
    %53 = vector.shape_cast %52 : vector<1x2x8xf32> to vector<2x8xf32>
    %54 = arith.addf %53, %51 : vector<2x8xf32>
    %c0_57 = arith.constant 0 : index
    %c0_58 = arith.constant 0 : index
    %c0_59 = arith.constant 0 : index
    %55 = vector.load %arg5[%c0_57, %c0_58, %c0_59] : memref<1x2x8xf32, #tpu.memory_space<vmem>>, vector<1x2x8xf32>
    %56 = vector.shape_cast %55 : vector<1x2x8xf32> to vector<2x8xf32>
    %57 = vector.shape_cast %54 : vector<2x8xf32> to vector<1x2x8xf32>
    tpu.vector_store %arg5[%c0_57, %c0_58, %c0_59], %57 {strides = array<i32>} : memref<1x2x8xf32, #tpu.memory_space<vmem>>, vector<1x2x8xf32>,
    return
  }
  func.func @transform_0(%arg0: i32, %arg1: i32) -> (i32, i32, i32, i32) {
    %c1_i32 = arith.constant 1 : i32
    %0 = arith.muli %arg0, %c1_i32 : i32
    %1 = arith.addi %0, %arg1 : i32
    %c0_i32 = arith.constant 0 : i32
    %c0_i32_0 = arith.constant 0 : i32
    %c0_i32_1 = arith.constant 0 : i32
    %c0_i32_2 = arith.constant 0 : i32
    return %1, %c0_i32, %c0_i32_0, %c0_i32_1 : i32, i32, i32, i32
  }
  func.func @transform_1(%arg0: i32, %arg1: i32) -> (i32, i32) {
    %c0_i32 = arith.constant 0 : i32
    %c0_i32_0 = arith.constant 0 : i32
    %c0_i32_1 = arith.constant 0 : i32
    return %c0_i32, %c0_i32_0 : i32, i32
  }
  func.func @transform_2(%arg0: i32, %arg1: i32) -> (i32, i32, i32, i32) {
    %c1_i32 = arith.constant 1 : i32
    %0 = arith.muli %arg0, %c1_i32 : i32
    %1 = arith.addi %0, %arg1 : i32
    %c0_i32 = arith.constant 0 : i32
    %c0_i32_0 = arith.constant 0 : i32
    %c0_i32_1 = arith.constant 0 : i32
    %c0_i32_2 = arith.constant 0 : i32
    return %1, %c0_i32, %c0_i32_0, %c0_i32_1 : i32, i32, i32, i32
  }
  func.func @transform_3(%arg0: i32, %arg1: i32) -> (i32, i32, i32) {
    %c0_i32 = arith.constant 0 : i32
    %c0_i32_0 = arith.constant 0 : i32
    %c0_i32_1 = arith.constant 0 : i32
    return %arg0, %c0_i32, %c0_i32_0 : i32, i32, i32
  }
}

module attributes {stable_mosaic.version = 11 : i64} {
  func.func @_bn_relu_conv_stats_kernel(%arg0: i32, %arg1: i32, %arg2: memref<1x16x16x8xf32, #tpu.memory_space<vmem>>, %arg3: memref<1x8xf32, #tpu.memory_space<vmem>>, %arg4: memref<1x8xf32, #tpu.memory_space<vmem>>, %arg5: memref<72x8xbf16, #tpu.memory_space<vmem>>, %arg6: memref<1x16x16x8xf32, #tpu.memory_space<vmem>>, %arg7: memref<1x2x8xf32, #tpu.memory_space<vmem>>, %arg8: memref<18x18x8xbf16, #tpu.memory_space<vmem>>, %arg9: memref<256x72xbf16, #tpu.memory_space<vmem>>) attributes {dimension_semantics = [#tpu.dimension_semantics<parallel>, #tpu.dimension_semantics<arbitrary>], iteration_bounds = array<i64: 2, 1>, scalar_prefetch = 0 : i64, scratch_operands = 2 : i64, tpu.core_type = #tpu.core_type<tc>, window_params = [{transform_indices = @transform_0, window_bounds = array<i64: 1, 16, 16, 8>}, {pipeline_mode = #tpu.pipeline_mode<synchronous>, transform_indices = @transform_1, window_bounds = array<i64: 1, 8>}, {pipeline_mode = #tpu.pipeline_mode<synchronous>, transform_indices = @transform_2, window_bounds = array<i64: 1, 8>}, {pipeline_mode = #tpu.pipeline_mode<synchronous>, transform_indices = @transform_3, window_bounds = array<i64: 72, 8>}, {transform_indices = @transform_4, window_bounds = array<i64: 1, 16, 16, 8>}, {transform_indices = @transform_5, window_bounds = array<i64: 1, 2, 8>}]} {
    %c0_i32 = arith.constant 0 : i32
    %0 = arith.cmpi eq, %arg1, %c0_i32 : i32
    %1 = arith.extui %0 : i1 to i32
    %c0_i32_0 = arith.constant 0 : i32
    %2 = arith.cmpi ne, %1, %c0_i32_0 : i32
    scf.if %2 {
      %cst_65 = arith.constant 0.000000e+00 : bf16
      %66 = vector.broadcast %cst_65 : bf16 to vector<18x18x8xbf16>
      %c0_66 = arith.constant 0 : index
      %c0_67 = arith.constant 0 : index
      %c0_68 = arith.constant 0 : index
      %67 = vector.load %arg8[%c0_66, %c0_67, %c0_68] : memref<18x18x8xbf16, #tpu.memory_space<vmem>>, vector<18x18x8xbf16>
      tpu.vector_store %arg8[%c0_66, %c0_67, %c0_68], %66 {strides = array<i32>} : memref<18x18x8xbf16, #tpu.memory_space<vmem>>, vector<18x18x8xbf16>,
    } else {
    }
    %c0 = arith.constant 0 : index
    %c0_1 = arith.constant 0 : index
    %3 = vector.load %arg3[%c0, %c0_1] : memref<1x8xf32, #tpu.memory_space<vmem>>, vector<1x8xf32>
    %4 = vector.shape_cast %3 : vector<1x8xf32> to vector<1x1x8xf32>
    %c0_2 = arith.constant 0 : index
    %c0_3 = arith.constant 0 : index
    %5 = vector.load %arg4[%c0_2, %c0_3] : memref<1x8xf32, #tpu.memory_space<vmem>>, vector<1x8xf32>
    %6 = vector.shape_cast %5 : vector<1x8xf32> to vector<1x1x8xf32>
    %c0_4 = arith.constant 0 : index
    %c0_5 = arith.constant 0 : index
    %c0_6 = arith.constant 0 : index
    %c0_7 = arith.constant 0 : index
    %7 = vector.load %arg2[%c0_4, %c0_5, %c0_6, %c0_7] : memref<1x16x16x8xf32, #tpu.memory_space<vmem>>, vector<1x16x16x8xf32>
    %8 = vector.shape_cast %7 : vector<1x16x16x8xf32> to vector<16x16x8xf32>
    %9 = vector.broadcast %4 : vector<1x1x8xf32> to vector<16x16x8xf32>
    %10 = arith.mulf %8, %9 : vector<16x16x8xf32>
    %11 = vector.broadcast %6 : vector<1x1x8xf32> to vector<16x16x8xf32>
    %12 = arith.addf %10, %11 : vector<16x16x8xf32>
    %cst = arith.constant 0.000000e+00 : f32
    %13 = vector.broadcast %cst : f32 to vector<16x16x8xf32>
    %14 = arith.maximumf %12, %13 : vector<16x16x8xf32>
    %15 = arith.truncf %14 : vector<16x16x8xf32> to vector<16x16x8xbf16>
    %c1 = arith.constant 1 : index
    %c1_8 = arith.constant 1 : index
    %c0_9 = arith.constant 0 : index
    %16 = vector.load %arg8[%c1, %c1_8, %c0_9] : memref<18x18x8xbf16, #tpu.memory_space<vmem>>, vector<16x16x8xbf16>
    tpu.vector_store %arg8[%c1, %c1_8, %c0_9], %15 {strides = array<i32>} : memref<18x18x8xbf16, #tpu.memory_space<vmem>>, vector<16x16x8xbf16>,
    %c0_10 = arith.constant 0 : index
    %c0_11 = arith.constant 0 : index
    %c0_12 = arith.constant 0 : index
    %17 = vector.load %arg8[%c0_10, %c0_11, %c0_12] : memref<18x18x8xbf16, #tpu.memory_space<vmem>>, vector<16x16x8xbf16>
    %18 = vector.shape_cast %17 : vector<16x16x8xbf16> to vector<256x8xbf16>
    %c0_13 = arith.constant 0 : index
    %c0_14 = arith.constant 0 : index
    %19 = vector.load %arg9[%c0_13, %c0_14] : memref<256x72xbf16, #tpu.memory_space<vmem>>, vector<256x8xbf16>
    tpu.vector_store %arg9[%c0_13, %c0_14], %18 {strides = array<i32>} : memref<256x72xbf16, #tpu.memory_space<vmem>>, vector<256x8xbf16>,
    %c0_15 = arith.constant 0 : index
    %c1_16 = arith.constant 1 : index
    %c0_17 = arith.constant 0 : index
    %20 = vector.load %arg8[%c0_15, %c1_16, %c0_17] : memref<18x18x8xbf16, #tpu.memory_space<vmem>>, vector<16x16x8xbf16>
    %21 = vector.shape_cast %20 : vector<16x16x8xbf16> to vector<256x8xbf16>
    %c0_18 = arith.constant 0 : index
    %c8 = arith.constant 8 : index
    %22 = vector.load %arg9[%c0_18, %c8] : memref<256x72xbf16, #tpu.memory_space<vmem>>, vector<256x8xbf16>
    tpu.vector_store %arg9[%c0_18, %c8], %21 {strides = array<i32>} : memref<256x72xbf16, #tpu.memory_space<vmem>>, vector<256x8xbf16>,
    %c0_19 = arith.constant 0 : index
    %c2 = arith.constant 2 : index
    %c0_20 = arith.constant 0 : index
    %23 = vector.load %arg8[%c0_19, %c2, %c0_20] : memref<18x18x8xbf16, #tpu.memory_space<vmem>>, vector<16x16x8xbf16>
    %24 = vector.shape_cast %23 : vector<16x16x8xbf16> to vector<256x8xbf16>
    %c0_21 = arith.constant 0 : index
    %c16 = arith.constant 16 : index
    %25 = vector.load %arg9[%c0_21, %c16] : memref<256x72xbf16, #tpu.memory_space<vmem>>, vector<256x8xbf16>
    tpu.vector_store %arg9[%c0_21, %c16], %24 {strides = array<i32>} : memref<256x72xbf16, #tpu.memory_space<vmem>>, vector<256x8xbf16>,
    %c1_22 = arith.constant 1 : index
    %c0_23 = arith.constant 0 : index
    %c0_24 = arith.constant 0 : index
    %26 = vector.load %arg8[%c1_22, %c0_23, %c0_24] : memref<18x18x8xbf16, #tpu.memory_space<vmem>>, vector<16x16x8xbf16>
    %27 = vector.shape_cast %26 : vector<16x16x8xbf16> to vector<256x8xbf16>
    %c0_25 = arith.constant 0 : index
    %c24 = arith.constant 24 : index
    %28 = vector.load %arg9[%c0_25, %c24] : memref<256x72xbf16, #tpu.memory_space<vmem>>, vector<256x8xbf16>
    tpu.vector_store %arg9[%c0_25, %c24], %27 {strides = array<i32>} : memref<256x72xbf16, #tpu.memory_space<vmem>>, vector<256x8xbf16>,
    %c1_26 = arith.constant 1 : index
    %c1_27 = arith.constant 1 : index
    %c0_28 = arith.constant 0 : index
    %29 = vector.load %arg8[%c1_26, %c1_27, %c0_28] : memref<18x18x8xbf16, #tpu.memory_space<vmem>>, vector<16x16x8xbf16>
    %30 = vector.shape_cast %29 : vector<16x16x8xbf16> to vector<256x8xbf16>
    %c0_29 = arith.constant 0 : index
    %c32 = arith.constant 32 : index
    %31 = vector.load %arg9[%c0_29, %c32] : memref<256x72xbf16, #tpu.memory_space<vmem>>, vector<256x8xbf16>
    tpu.vector_store %arg9[%c0_29, %c32], %30 {strides = array<i32>} : memref<256x72xbf16, #tpu.memory_space<vmem>>, vector<256x8xbf16>,
    %c1_30 = arith.constant 1 : index
    %c2_31 = arith.constant 2 : index
    %c0_32 = arith.constant 0 : index
    %32 = vector.load %arg8[%c1_30, %c2_31, %c0_32] : memref<18x18x8xbf16, #tpu.memory_space<vmem>>, vector<16x16x8xbf16>
    %33 = vector.shape_cast %32 : vector<16x16x8xbf16> to vector<256x8xbf16>
    %c0_33 = arith.constant 0 : index
    %c40 = arith.constant 40 : index
    %34 = vector.load %arg9[%c0_33, %c40] : memref<256x72xbf16, #tpu.memory_space<vmem>>, vector<256x8xbf16>
    tpu.vector_store %arg9[%c0_33, %c40], %33 {strides = array<i32>} : memref<256x72xbf16, #tpu.memory_space<vmem>>, vector<256x8xbf16>,
    %c2_34 = arith.constant 2 : index
    %c0_35 = arith.constant 0 : index
    %c0_36 = arith.constant 0 : index
    %35 = vector.load %arg8[%c2_34, %c0_35, %c0_36] : memref<18x18x8xbf16, #tpu.memory_space<vmem>>, vector<16x16x8xbf16>
    %36 = vector.shape_cast %35 : vector<16x16x8xbf16> to vector<256x8xbf16>
    %c0_37 = arith.constant 0 : index
    %c48 = arith.constant 48 : index
    %37 = vector.load %arg9[%c0_37, %c48] : memref<256x72xbf16, #tpu.memory_space<vmem>>, vector<256x8xbf16>
    tpu.vector_store %arg9[%c0_37, %c48], %36 {strides = array<i32>} : memref<256x72xbf16, #tpu.memory_space<vmem>>, vector<256x8xbf16>,
    %c2_38 = arith.constant 2 : index
    %c1_39 = arith.constant 1 : index
    %c0_40 = arith.constant 0 : index
    %38 = vector.load %arg8[%c2_38, %c1_39, %c0_40] : memref<18x18x8xbf16, #tpu.memory_space<vmem>>, vector<16x16x8xbf16>
    %39 = vector.shape_cast %38 : vector<16x16x8xbf16> to vector<256x8xbf16>
    %c0_41 = arith.constant 0 : index
    %c56 = arith.constant 56 : index
    %40 = vector.load %arg9[%c0_41, %c56] : memref<256x72xbf16, #tpu.memory_space<vmem>>, vector<256x8xbf16>
    tpu.vector_store %arg9[%c0_41, %c56], %39 {strides = array<i32>} : memref<256x72xbf16, #tpu.memory_space<vmem>>, vector<256x8xbf16>,
    %c2_42 = arith.constant 2 : index
    %c2_43 = arith.constant 2 : index
    %c0_44 = arith.constant 0 : index
    %41 = vector.load %arg8[%c2_42, %c2_43, %c0_44] : memref<18x18x8xbf16, #tpu.memory_space<vmem>>, vector<16x16x8xbf16>
    %42 = vector.shape_cast %41 : vector<16x16x8xbf16> to vector<256x8xbf16>
    %c0_45 = arith.constant 0 : index
    %c64 = arith.constant 64 : index
    %43 = vector.load %arg9[%c0_45, %c64] : memref<256x72xbf16, #tpu.memory_space<vmem>>, vector<256x8xbf16>
    tpu.vector_store %arg9[%c0_45, %c64], %42 {strides = array<i32>} : memref<256x72xbf16, #tpu.memory_space<vmem>>, vector<256x8xbf16>,
    %c0_46 = arith.constant 0 : index
    %c0_47 = arith.constant 0 : index
    %44 = vector.load %arg9[%c0_46, %c0_47] : memref<256x72xbf16, #tpu.memory_space<vmem>>, vector<256x72xbf16>
    %c0_48 = arith.constant 0 : index
    %c0_49 = arith.constant 0 : index
    %45 = vector.load %arg5[%c0_48, %c0_49] : memref<72x8xbf16, #tpu.memory_space<vmem>>, vector<72x8xbf16>
    %cst_50 = arith.constant dense<0.000000e+00> : vector<256x8xf32>
    %46 = tpu.matmul %44, %45, %cst_50 {dimension_numbers = #tpu.dot_dimension_numbers<[1], [0], [0], [1], [0, 0, 1, 1], [], []>} : vector<256x72xbf16>, vector<72x8xbf16>, vector<256x8xf32> -> vector<256x8xf32>
    %47 = vector.shape_cast %46 : vector<256x8xf32> to vector<16x16x8xf32>
    %c0_51 = arith.constant 0 : index
    %c0_52 = arith.constant 0 : index
    %c0_53 = arith.constant 0 : index
    %c0_54 = arith.constant 0 : index
    %48 = vector.load %arg6[%c0_51, %c0_52, %c0_53, %c0_54] : memref<1x16x16x8xf32, #tpu.memory_space<vmem>>, vector<1x16x16x8xf32>
    %49 = vector.shape_cast %48 : vector<1x16x16x8xf32> to vector<16x16x8xf32>
    %50 = vector.shape_cast %47 : vector<16x16x8xf32> to vector<1x16x16x8xf32>
    tpu.vector_store %arg6[%c0_51, %c0_52, %c0_53, %c0_54], %50 {strides = array<i32>} : memref<1x16x16x8xf32, #tpu.memory_space<vmem>>, vector<1x16x16x8xf32>,
    %c0_i32_55 = arith.constant 0 : i32
    %51 = arith.cmpi eq, %arg1, %c0_i32_55 : i32
    %52 = arith.extui %51 : i1 to i32
    %c0_i32_56 = arith.constant 0 : i32
    %53 = arith.cmpi ne, %52, %c0_i32_56 : i32
    scf.if %53 {
      %cst_65 = arith.constant 0.000000e+00 : f32
      %66 = vector.broadcast %cst_65 : f32 to vector<2x8xf32>
      %c0_66 = arith.constant 0 : index
      %c0_67 = arith.constant 0 : index
      %c0_68 = arith.constant 0 : index
      %67 = vector.load %arg7[%c0_66, %c0_67, %c0_68] : memref<1x2x8xf32, #tpu.memory_space<vmem>>, vector<1x2x8xf32>
      %68 = vector.shape_cast %67 : vector<1x2x8xf32> to vector<2x8xf32>
      %69 = vector.shape_cast %66 : vector<2x8xf32> to vector<1x2x8xf32>
      tpu.vector_store %arg7[%c0_66, %c0_67, %c0_68], %69 {strides = array<i32>} : memref<1x2x8xf32, #tpu.memory_space<vmem>>, vector<1x2x8xf32>,
    } else {
    }
    %cst_57 = arith.constant dense<0.000000e+00> : vector<8xf32>
    %54 = vector.multi_reduction <add>, %46, %cst_57 [0] : vector<256x8xf32> to vector<8xf32>
    %55 = vector.shape_cast %54 : vector<8xf32> to vector<1x8xf32>
    %56 = arith.mulf %46, %46 : vector<256x8xf32>
    %cst_58 = arith.constant dense<0.000000e+00> : vector<8xf32>
    %57 = vector.multi_reduction <add>, %56, %cst_58 [0] : vector<256x8xf32> to vector<8xf32>
    %58 = vector.shape_cast %57 : vector<8xf32> to vector<1x8xf32>
    %59 = tpu.concatenate %55, %58 in 0 : vector<1x8xf32>, vector<1x8xf32> -> vector<2x8xf32>
    %c0_59 = arith.constant 0 : index
    %c0_60 = arith.constant 0 : index
    %c0_61 = arith.constant 0 : index
    %60 = vector.load %arg7[%c0_59, %c0_60, %c0_61] : memref<1x2x8xf32, #tpu.memory_space<vmem>>, vector<1x2x8xf32>
    %61 = vector.shape_cast %60 : vector<1x2x8xf32> to vector<2x8xf32>
    %62 = arith.addf %61, %59 : vector<2x8xf32>
    %c0_62 = arith.constant 0 : index
    %c0_63 = arith.constant 0 : index
    %c0_64 = arith.constant 0 : index
    %63 = vector.load %arg7[%c0_62, %c0_63, %c0_64] : memref<1x2x8xf32, #tpu.memory_space<vmem>>, vector<1x2x8xf32>
    %64 = vector.shape_cast %63 : vector<1x2x8xf32> to vector<2x8xf32>
    %65 = vector.shape_cast %62 : vector<2x8xf32> to vector<1x2x8xf32>
    tpu.vector_store %arg7[%c0_62, %c0_63, %c0_64], %65 {strides = array<i32>} : memref<1x2x8xf32, #tpu.memory_space<vmem>>, vector<1x2x8xf32>,
    return
  }
  func.func @transform_0(%arg0: i32, %arg1: i32) -> (i32, i32, i32, i32) {
    %c1_i32 = arith.constant 1 : i32
    %0 = arith.muli %arg0, %c1_i32 : i32
    %1 = arith.addi %0, %arg1 : i32
    %c0_i32 = arith.constant 0 : i32
    %c0_i32_0 = arith.constant 0 : i32
    %c0_i32_1 = arith.constant 0 : i32
    %c0_i32_2 = arith.constant 0 : i32
    return %1, %c0_i32, %c0_i32_0, %c0_i32_1 : i32, i32, i32, i32
  }
  func.func @transform_1(%arg0: i32, %arg1: i32) -> (i32, i32) {
    %c0_i32 = arith.constant 0 : i32
    %c0_i32_0 = arith.constant 0 : i32
    %c0_i32_1 = arith.constant 0 : i32
    return %c0_i32, %c0_i32_0 : i32, i32
  }
  func.func @transform_2(%arg0: i32, %arg1: i32) -> (i32, i32) {
    %c0_i32 = arith.constant 0 : i32
    %c0_i32_0 = arith.constant 0 : i32
    %c0_i32_1 = arith.constant 0 : i32
    return %c0_i32, %c0_i32_0 : i32, i32
  }
  func.func @transform_3(%arg0: i32, %arg1: i32) -> (i32, i32) {
    %c0_i32 = arith.constant 0 : i32
    %c0_i32_0 = arith.constant 0 : i32
    %c0_i32_1 = arith.constant 0 : i32
    return %c0_i32, %c0_i32_0 : i32, i32
  }
  func.func @transform_4(%arg0: i32, %arg1: i32) -> (i32, i32, i32, i32) {
    %c1_i32 = arith.constant 1 : i32
    %0 = arith.muli %arg0, %c1_i32 : i32
    %1 = arith.addi %0, %arg1 : i32
    %c0_i32 = arith.constant 0 : i32
    %c0_i32_0 = arith.constant 0 : i32
    %c0_i32_1 = arith.constant 0 : i32
    %c0_i32_2 = arith.constant 0 : i32
    return %1, %c0_i32, %c0_i32_0, %c0_i32_1 : i32, i32, i32, i32
  }
  func.func @transform_5(%arg0: i32, %arg1: i32) -> (i32, i32, i32) {
    %c0_i32 = arith.constant 0 : i32
    %c0_i32_0 = arith.constant 0 : i32
    %c0_i32_1 = arith.constant 0 : i32
    return %arg0, %c0_i32, %c0_i32_0 : i32, i32, i32
  }
}

module attributes {stable_mosaic.version = 11 : i64} {
  func.func @_bn_add_relu_kernel(%arg0: i32, %arg1: memref<1x16x16x8xf32, #tpu.memory_space<vmem>>, %arg2: memref<1x8xf32, #tpu.memory_space<vmem>>, %arg3: memref<1x8xf32, #tpu.memory_space<vmem>>, %arg4: memref<1x16x16x4xf32, #tpu.memory_space<vmem>>, %arg5: memref<1x16x16x8xf32, #tpu.memory_space<vmem>>) attributes {dimension_semantics = [#tpu.dimension_semantics<parallel>], iteration_bounds = array<i64: 2>, scalar_prefetch = 0 : i64, scratch_operands = 0 : i64, tpu.core_type = #tpu.core_type<tc>, window_params = [{transform_indices = @transform_0, window_bounds = array<i64: 1, 16, 16, 8>}, {pipeline_mode = #tpu.pipeline_mode<synchronous>, transform_indices = @transform_1, window_bounds = array<i64: 1, 8>}, {pipeline_mode = #tpu.pipeline_mode<synchronous>, transform_indices = @transform_2, window_bounds = array<i64: 1, 8>}, {transform_indices = @transform_3, window_bounds = array<i64: 1, 16, 16, 4>}, {transform_indices = @transform_4, window_bounds = array<i64: 1, 16, 16, 8>}]} {
    %c0 = arith.constant 0 : index
    %c0_0 = arith.constant 0 : index
    %0 = vector.load %arg2[%c0, %c0_0] : memref<1x8xf32, #tpu.memory_space<vmem>>, vector<1x8xf32>
    %1 = vector.shape_cast %0 : vector<1x8xf32> to vector<1x1x8xf32>
    %c0_1 = arith.constant 0 : index
    %c0_2 = arith.constant 0 : index
    %2 = vector.load %arg3[%c0_1, %c0_2] : memref<1x8xf32, #tpu.memory_space<vmem>>, vector<1x8xf32>
    %3 = vector.shape_cast %2 : vector<1x8xf32> to vector<1x1x8xf32>
    %c0_3 = arith.constant 0 : index
    %c0_4 = arith.constant 0 : index
    %c0_5 = arith.constant 0 : index
    %c0_6 = arith.constant 0 : index
    %4 = vector.load %arg1[%c0_3, %c0_4, %c0_5, %c0_6] : memref<1x16x16x8xf32, #tpu.memory_space<vmem>>, vector<1x16x16x8xf32>
    %5 = vector.shape_cast %4 : vector<1x16x16x8xf32> to vector<16x16x8xf32>
    %6 = vector.broadcast %1 : vector<1x1x8xf32> to vector<16x16x8xf32>
    %7 = arith.mulf %5, %6 : vector<16x16x8xf32>
    %8 = vector.broadcast %3 : vector<1x1x8xf32> to vector<16x16x8xf32>
    %9 = arith.addf %7, %8 : vector<16x16x8xf32>
    %cst = arith.constant 0.000000e+00 : f32
    %10 = vector.broadcast %cst : f32 to vector<16x16x8xf32>
    %11 = arith.maximumf %9, %10 : vector<16x16x8xf32>
    %c0_7 = arith.constant 0 : index
    %c0_8 = arith.constant 0 : index
    %c0_9 = arith.constant 0 : index
    %c0_10 = arith.constant 0 : index
    %12 = vector.load %arg5[%c0_7, %c0_8, %c0_9, %c0_10] : memref<1x16x16x8xf32, #tpu.memory_space<vmem>>, vector<1x16x16x8xf32>
    %13 = vector.shape_cast %12 : vector<1x16x16x8xf32> to vector<16x16x8xf32>
    %14 = vector.shape_cast %11 : vector<16x16x8xf32> to vector<1x16x16x8xf32>
    tpu.vector_store %arg5[%c0_7, %c0_8, %c0_9, %c0_10], %14 {strides = array<i32>} : memref<1x16x16x8xf32, #tpu.memory_space<vmem>>, vector<1x16x16x8xf32>,
    %15 = vector.extract_strided_slice %9 {offsets = [0, 0, 0], sizes = [16, 16, 4], strides = [1, 1, 1]} : vector<16x16x8xf32> to vector<16x16x4xf32>
    %c0_11 = arith.constant 0 : index
    %c0_12 = arith.constant 0 : index
    %c0_13 = arith.constant 0 : index
    %c0_14 = arith.constant 0 : index
    %16 = vector.load %arg4[%c0_11, %c0_12, %c0_13, %c0_14] : memref<1x16x16x4xf32, #tpu.memory_space<vmem>>, vector<1x16x16x4xf32>
    %17 = vector.shape_cast %16 : vector<1x16x16x4xf32> to vector<16x16x4xf32>
    %18 = arith.addf %15, %17 : vector<16x16x4xf32>
    %cst_15 = arith.constant 0.000000e+00 : f32
    %19 = vector.broadcast %cst_15 : f32 to vector<16x16x4xf32>
    %20 = arith.maximumf %18, %19 : vector<16x16x4xf32>
    %c0_16 = arith.constant 0 : index
    %c0_17 = arith.constant 0 : index
    %c0_18 = arith.constant 0 : index
    %c0_19 = arith.constant 0 : index
    %21 = vector.load %arg5[%c0_16, %c0_17, %c0_18, %c0_19] : memref<1x16x16x8xf32, #tpu.memory_space<vmem>>, vector<1x16x16x4xf32>
    %22 = vector.shape_cast %21 : vector<1x16x16x4xf32> to vector<16x16x4xf32>
    %23 = vector.shape_cast %20 : vector<16x16x4xf32> to vector<1x16x16x4xf32>
    tpu.vector_store %arg5[%c0_16, %c0_17, %c0_18, %c0_19], %23 {strides = array<i32>} : memref<1x16x16x8xf32, #tpu.memory_space<vmem>>, vector<1x16x16x4xf32>,
    return
  }
  func.func @transform_0(%arg0: i32) -> (i32, i32, i32, i32) {
    %c0_i32 = arith.constant 0 : i32
    %c0_i32_0 = arith.constant 0 : i32
    %c0_i32_1 = arith.constant 0 : i32
    %c0_i32_2 = arith.constant 0 : i32
    return %arg0, %c0_i32, %c0_i32_0, %c0_i32_1 : i32, i32, i32, i32
  }
  func.func @transform_1(%arg0: i32) -> (i32, i32) {
    %c0_i32 = arith.constant 0 : i32
    %c0_i32_0 = arith.constant 0 : i32
    %c0_i32_1 = arith.constant 0 : i32
    return %c0_i32, %c0_i32_0 : i32, i32
  }
  func.func @transform_2(%arg0: i32) -> (i32, i32) {
    %c0_i32 = arith.constant 0 : i32
    %c0_i32_0 = arith.constant 0 : i32
    %c0_i32_1 = arith.constant 0 : i32
    return %c0_i32, %c0_i32_0 : i32, i32
  }
  func.func @transform_3(%arg0: i32) -> (i32, i32, i32, i32) {
    %c0_i32 = arith.constant 0 : i32
    %c0_i32_0 = arith.constant 0 : i32
    %c0_i32_1 = arith.constant 0 : i32
    %c0_i32_2 = arith.constant 0 : i32
    return %arg0, %c0_i32, %c0_i32_0, %c0_i32_1 : i32, i32, i32, i32
  }
  func.func @transform_4(%arg0: i32) -> (i32, i32, i32, i32) {
    %c0_i32 = arith.constant 0 : i32
    %c0_i32_0 = arith.constant 0 : i32
    %c0_i32_1 = arith.constant 0 : i32
    %c0_i32_2 = arith.constant 0 : i32
    return %arg0, %c0_i32, %c0_i32_0, %c0_i32_1 : i32, i32, i32, i32
  }
}

</mosaic_0001>

<llo_original>
// kernel: resnet_block_forward.5
$region0: #{resnet_block_forward.5}
  #allocation0 [shape = 'u32[]', space=smem, size = 0x4, offset = 0x4, fixed_abs, tag = 'smem constant byte address 0x4 - core index']
  #allocation1 [shape = 'u32[144,128]{1,0:T(1,128)}', space=vmem, size = 0x12000, scoped, tag = 'internal scratch']
  %s0 = inlined_call_operand.vmem [shape: f32[2,16,16,8], index: 0, kind: input, shape index: {}]
  %s1 = inlined_call_operand.vmem [shape: f32[1,8], index: 1, kind: input, shape index: {}]
  %s2 = inlined_call_operand.vmem [shape: f32[1,8], index: 2, kind: input, shape index: {}]
  %s3 = inlined_call_operand.vmem [shape: f32[2,16,16,4], index: 3, kind: input, shape index: {}]
  %s4 = inlined_call_operand.vmem [shape: f32[2,16,16,8], index: 4, kind: output, shape index: {}]
  %s5 = sld [smem:[#allocation0]]
  $region49: #{resnet_block_forward.5} parent=0
    _
  %s7 = ssub.s32 1, %s5
  %s8 = scalar_select 0, %s7, %s5
  loop: start=0, step=1, limit=4
  $region2: #{resnet_block_forward.5} parent=0 // loop_pre_header
    _
  $region3: #{resnet_block_forward.5} parent=0 // loop_header
    %s10 = sphi 0, %s14
    %p11 = scmp.ge.s32.totalorder %s10, 4
    %s20 = sphi 0, %s22
    %s23 = sphi 0, %s20
    %s24 = sphi 0, %s23
    %s40 = sphi 0, %s24
    %s44 = sphi 0, %s44
    %s46 = sphi 0, %s44
    %s47 = sphi 0, %s46
    %s61 = sphi 0, %s47
    %s65 = sphi 0, %s65
    %s67 = sphi 0, %s65
    %s68 = sphi 0, %s67
    %s82 = sphi 0, %s68
    %s88 = sphi 0, %s90
    %s91 = sphi 0, %s88
    %s92 = sphi 0, %s91
    %s108 = sphi 0, %s92
    %s114 = sphi 0, %s116
    %s117 = sphi 0, %s114
    %s118 = sphi 0, %s117
    %s134 = sphi 0, %s118
  $region4: #{resnet_block_forward.5} parent=0 // loop_header_branch
    %13 = sbr.rel (%p11) target = $region8
  $region5: #{resnet_block_forward.5} parent=0 // loop_body
    %s15 = ssub.s32 %s10, 1
    %s16 = ssub.s32 %s10, 2
    %s17 = sadd.s32 %s10, 1
    %s18 = ssub.s32 %s10, %s17
    %p19 = scmp.eq.s32.totalorder %s18, 0
    %s21 = sadd.s32 %s20, 1
    %s22 = scalar_select %p19, %s20, %s21
    %p25 = pneg %p19
    %p26 = scmp.eq.s32.totalorder %s10, 1
    %p27 = por %p25, %p26
    %p28 = scmp.ne.s32.totalorder %s20, %s23
    %p29 = scmp.eq.s32.totalorder %s10, 0
    %p30 = por %p28, %p29
    %p31 = scmp.ne.s32.totalorder %s20, %s23
    %p32 = scmp.eq.s32.totalorder %s15, 1
    %p33 = por %p31, %p32
    %p34 = scmp.ne.s32.totalorder %s23, %s24
    %p35 = scmp.eq.s32.totalorder %s15, 0
    %p36 = por %p34, %p35
    %p37 = scmp.ne.s32.totalorder %s23, %s24
    %p38 = scmp.eq.s32.totalorder %s16, 1
    %p39 = por %p37, %p38
    %p41 = scmp.ne.s32.totalorder %s24, %s40
    %p42 = scmp.eq.s32.totalorder %s16, 0
    %p43 = por %p41, %p42
    %s45 = sadd.s32 %s44, 1
    %p48 = scmp.eq.s32.totalorder %s10, 1
    %p49 = scmp.ne.s32.totalorder %s44, %s46
    %p50 = scmp.eq.s32.totalorder %s10, 0
    %p51 = por %p49, %p50
    %p52 = scmp.ne.s32.totalorder %s44, %s46
    %p53 = scmp.eq.s32.totalorder %s15, 1
    %p54 = por %p52, %p53
    %p55 = scmp.ne.s32.totalorder %s46, %s47
    %p56 = scmp.eq.s32.totalorder %s15, 0
    %p57 = por %p55, %p56
    %p58 = scmp.ne.s32.totalorder %s46, %s47
    %p59 = scmp.eq.s32.totalorder %s16, 1
    %p60 = por %p58, %p59
    %p62 = scmp.ne.s32.totalorder %s47, %s61
    %p63 = scmp.eq.s32.totalorder %s16, 0
    %p64 = por %p62, %p63
    %s66 = sadd.s32 %s65, 1
    %p69 = scmp.eq.s32.totalorder %s10, 1
    %p70 = scmp.ne.s32.totalorder %s65, %s67
    %p71 = scmp.eq.s32.totalorder %s10, 0
    %p72 = por %p70, %p71
    %p73 = scmp.ne.s32.totalorder %s65, %s67
    %p74 = scmp.eq.s32.totalorder %s15, 1
    %p75 = por %p73, %p74
    %p76 = scmp.ne.s32.totalorder %s67, %s68
    %p77 = scmp.eq.s32.totalorder %s15, 0
    %p78 = por %p76, %p77
    %p79 = scmp.ne.s32.totalorder %s67, %s68
    %p80 = scmp.eq.s32.totalorder %s16, 1
    %p81 = por %p79, %p80
    %p83 = scmp.ne.s32.totalorder %s68, %s82
    %p84 = scmp.eq.s32.totalorder %s16, 0
    %p85 = por %p83, %p84
    %s86 = ssub.s32 %s10, %s17
    %p87 = scmp.eq.s32.totalorder %s86, 0
    %s89 = sadd.s32 %s88, 1
    %s90 = scalar_select %p87, %s88, %s89
    %p93 = pneg %p87
    %p94 = scmp.eq.s32.totalorder %s10, 1
    %p95 = por %p93, %p94
    %p96 = scmp.ne.s32.totalorder %s88, %s91
    %p97 = scmp.eq.s32.totalorder %s10, 0
    %p98 = por %p96, %p97
    %p99 = scmp.ne.s32.totalorder %s88, %s91
    %p100 = scmp.eq.s32.totalorder %s15, 1
    %p101 = por %p99, %p100
    %p102 = scmp.ne.s32.totalorder %s91, %s92
    %p103 = scmp.eq.s32.totalorder %s15, 0
    %p104 = por %p102, %p103
    %p105 = scmp.ne.s32.totalorder %s91, %s92
    %p106 = scmp.eq.s32.totalorder %s16, 1
    %p107 = por %p105, %p106
    %p109 = scmp.ne.s32.totalorder %s92, %s108
    %p110 = scmp.eq.s32.totalorder %s16, 0
    %p111 = por %p109, %p110
    %s112 = ssub.s32 %s10, %s17
    %p113 = scmp.eq.s32.totalorder %s112, 0
    %s115 = sadd.s32 %s114, 1
    %s116 = scalar_select %p113, %s114, %s115
    %p119 = pneg %p113
    %p120 = scmp.eq.s32.totalorder %s10, 1
    %p121 = por %p119, %p120
    %p122 = scmp.ne.s32.totalorder %s114, %s117
    %p123 = scmp.eq.s32.totalorder %s10, 0
    %p124 = por %p122, %p123
    %p125 = scmp.ne.s32.totalorder %s114, %s117
    %p126 = scmp.eq.s32.totalorder %s15, 1
    %p127 = por %p125, %p126
    %p128 = scmp.ne.s32.totalorder %s117, %s118
    %p129 = scmp.eq.s32.totalorder %s15, 0
    %p130 = por %p128, %p129
    %p131 = scmp.ne.s32.totalorder %s117, %s118
    %p132 = scmp.eq.s32.totalorder %s16, 1
    %p133 = por %p131, %p132
    %p135 = scmp.ne.s32.totalorder %s118, %s134
    %p136 = scmp.eq.s32.totalorder %s16, 0
    %p137 = por %p135, %p136
    %p138 = scmp.le.s32.totalorder 1, %s10
    %p139 = scmp.lt.s32.totalorder %s10, 3
    %p140 = pnand %p138, %p139
    %p141 = pneg %p140
    // Predicated region
    $region9: #{resnet_block_forward.5} parent=5 // pred_check
      _
    $region10: #{resnet_block_forward.5} parent=5 // pred_check_branch
      %143 = sbr.rel (%p140) target = $region12
    $region11: #{resnet_block_forward.5} parent=5 // pred_region
      %s144 = ssub.s32 %s10, 1
      // Predicated region
      $region13: #{resnet_block_forward.5} parent=11 // pred_check
        %p145 = pneg %p57
      $region14: #{resnet_block_forward.5} parent=11 // pred_check_branch
        %147 = sbr.rel (%p145) target = $region16
      $region15: #{resnet_block_forward.5} parent=11 // pred_region
        _
      $region16: #{resnet_block_forward.5} parent=11 // pred_fallthru
        _
      // Predicated region
      $region17: #{resnet_block_forward.5} parent=11 // pred_check
        %p148 = pneg %p78
      $region18: #{resnet_block_forward.5} parent=11 // pred_check_branch
        %150 = sbr.rel (%p148) target = $region20
      $region19: #{resnet_block_forward.5} parent=11 // pred_region
        _
      $region20: #{resnet_block_forward.5} parent=11 // pred_fallthru
        _
    $region12: #{resnet_block_forward.5} parent=5 // pred_fallthru
      _
    %p151 = scmp.lt.s32.totalorder %s10, 2
    // Predicated region
    $region21: #{resnet_block_forward.5} parent=5 // pred_check
      %p152 = pneg %p151
    $region22: #{resnet_block_forward.5} parent=5 // pred_check_branch
      %154 = sbr.rel (%p152) target = $region24
    $region23: #{resnet_block_forward.5} parent=5 // pred_region
      // Predicated region
      $region25: #{resnet_block_forward.5} parent=23 // pred_check
        %p155 = pneg %p30
      $region26: #{resnet_block_forward.5} parent=23 // pred_check_branch
        %157 = sbr.rel (%p155) target = $region28
      $region27: #{resnet_block_forward.5} parent=23 // pred_region
        %p158 = scmp.lt.s32.totalorder %s10, 1
        %s159 = scalar_select %p158, %s10, 1
        %s160 = smul.addr %s159, 32
        %s161 = smul.addr %s160, 8
        %s162 = scalar_lea.vmem %s0, %s161
      $region28: #{resnet_block_forward.5} parent=23 // pred_fallthru
        _
      // Predicated region
      $region29: #{resnet_block_forward.5} parent=23 // pred_check
        %p163 = pneg %p98
      $region30: #{resnet_block_forward.5} parent=23 // pred_check_branch
        %165 = sbr.rel (%p163) target = $region32
      $region31: #{resnet_block_forward.5} parent=23 // pred_region
        %p166 = scmp.lt.s32.totalorder %s10, 1
        %s167 = scalar_select %p166, %s10, 1
        %s168 = smul.addr %s167, 32
        %s169 = smul.addr %s168, 8
        %s170 = scalar_lea.vmem %s3, %s169
      $region32: #{resnet_block_forward.5} parent=23 // pred_fallthru
        _
    $region24: #{resnet_block_forward.5} parent=5 // pred_fallthru
      _
    %p171 = scmp.le.s32.totalorder 1, %s10
    %p172 = scmp.lt.s32.totalorder %s10, 3
    %p173 = pnand %p171, %p172
    %p174 = pneg %p173
    // Predicated region
    $region33: #{resnet_block_forward.5} parent=5 // pred_check
      _
    $region34: #{resnet_block_forward.5} parent=5 // pred_check_branch
      %176 = sbr.rel (%p173) target = $region36
    $region35: #{resnet_block_forward.5} parent=5 // pred_region
      %s177 = ssub.s32 %s10, 1
      %p178 = scmp.lt.s32.totalorder %s15, 1
      %s179 = scalar_select %p178, %s15, 1
      %s180 = smul.addr %s179, 32
      %s181 = smul.addr %s180, 8
      %s182 = scalar_lea.vmem %s0, %s181
      %p183 = pneg %p36
      %p184 = pneg %p33
      %p185 = pneg %p57
      %p186 = pneg %p54
      %p187 = pneg %p78
      %p188 = pneg %p75
      %p189 = scmp.lt.s32.totalorder %s15, 1
      %s190 = scalar_select %p189, %s15, 1
      %s191 = smul.addr %s190, 32
      %s192 = smul.addr %s191, 8
      %s193 = scalar_lea.vmem %s3, %s192
      %p194 = pneg %p104
      %p195 = pneg %p101
      %p196 = pneg %p130
      %p197 = pneg %p127
      %p198 = scmp.lt.s32.totalorder %s15, 1
      %s199 = scalar_select %p198, %s15, 1
      %s200 = smul.addr %s199, 32
      %s201 = smul.addr %s200, 8
      %s202 = scalar_lea.vmem %s4, %s201
      %p203 = scmp.lt.s32.totalorder %s15, 1
      %s204 = scalar_select %p203, %s15, 1
      %s205 = smul.addr %s204, 32
      %s206 = smul.addr %s205, 8
      %s207 = scalar_lea.vmem %s0, %s206
      %p208 = scmp.lt.s32.totalorder %s15, 1
      %s209 = scalar_select %p208, %s15, 1
      %s210 = smul.addr %s209, 32
      %s211 = smul.addr %s210, 8
      %s212 = scalar_lea.vmem %s3, %s211
      %p213 = scmp.lt.s32.totalorder %s15, 1
      %s214 = scalar_select %p213, %s15, 1
      %s215 = smul.addr %s214, 32
      %s216 = smul.addr %s215, 8
      %s217 = scalar_lea.vmem %s4, %s216
      %v218 = vld [vmem:[%s1] sm:$0x1]
      %v219 = vld [vmem:[%s2] sm:$0x1]
      %v220 = vld [vmem:[%s207] sm:$0xff]
      %v221 = vld [vmem:[%s207 + $0x8] sm:$0xff]
      %v222 = vld [vmem:[%s207 + $0x10] sm:$0xff]
      %v223 = vld [vmem:[%s207 + $0x18] sm:$0xff]
      %v224 = vld [vmem:[%s207 + $0x20] sm:$0xff]
      %v225 = vld [vmem:[%s207 + $0x28] sm:$0xff]
      %v226 = vld [vmem:[%s207 + $0x30] sm:$0xff]
      %v227 = vld [vmem:[%s207 + $0x38] sm:$0xff]
      %v228 = vld [vmem:[%s207 + $0x40] sm:$0xff]
      %v229 = vld [vmem:[%s207 + $0x48] sm:$0xff]
      %v230 = vld [vmem:[%s207 + $0x50] sm:$0xff]
      %v231 = vld [vmem:[%s207 + $0x58] sm:$0xff]
      %v232 = vld [vmem:[%s207 + $0x60] sm:$0xff]
      %v233 = vld [vmem:[%s207 + $0x68] sm:$0xff]
      %v234 = vld [vmem:[%s207 + $0x70] sm:$0xff]
      %v235 = vld [vmem:[%s207 + $0x78] sm:$0xff]
      %v236 = vld [vmem:[%s207 + $0x80] sm:$0xff]
      %v237 = vld [vmem:[%s207 + $0x88] sm:$0xff]
      %v238 = vld [vmem:[%s207 + $0x90] sm:$0xff]
      %v239 = vld [vmem:[%s207 + $0x98] sm:$0xff]
      %v240 = vld [vmem:[%s207 + $0xa0] sm:$0xff]
      %v241 = vld [vmem:[%s207 + $0xa8] sm:$0xff]
      %v242 = vld [vmem:[%s207 + $0xb0] sm:$0xff]
      %v243 = vld [vmem:[%s207 + $0xb8] sm:$0xff]
      %v244 = vld [vmem:[%s207 + $0xc0] sm:$0xff]
      %v245 = vld [vmem:[%s207 + $0xc8] sm:$0xff]
      %v246 = vld [vmem:[%s207 + $0xd0] sm:$0xff]
      %v247 = vld [vmem:[%s207 + $0xd8] sm:$0xff]
      %v248 = vld [vmem:[%s207 + $0xe0] sm:$0xff]
      %v249 = vld [vmem:[%s207 + $0xe8] sm:$0xff]
      %v250 = vld [vmem:[%s207 + $0xf0] sm:$0xff]
      %v251 = vld [vmem:[%s207 + $0xf8] sm:$0xff]
      %v253 = vlaneseq
      %v254 = vshrl.u32 %v253, 7
      %v255 = vsub.s32 0, %v254
      %v256 = vrot.slane %v218, %v255
      %v258 = vmul.f32 %v220, %v256
      %v259 = vmul.f32 %v221, %v256
      %v260 = vmul.f32 %v222, %v256
      %v261 = vmul.f32 %v223, %v256
      %v262 = vmul.f32 %v224, %v256
      %v263 = vmul.f32 %v225, %v256
      %v264 = vmul.f32 %v226, %v256
      %v265 = vmul.f32 %v227, %v256
      %v266 = vmul.f32 %v228, %v256
      %v267 = vmul.f32 %v229, %v256
      %v268 = vmul.f32 %v230, %v256
      %v269 = vmul.f32 %v231, %v256
      %v270 = vmul.f32 %v232, %v256
      %v271 = vmul.f32 %v233, %v256
      %v272 = vmul.f32 %v234, %v256
      %v273 = vmul.f32 %v235, %v256
      %v274 = vmul.f32 %v236, %v256
      %v275 = vmul.f32 %v237, %v256
      %v276 = vmul.f32 %v238, %v256
      %v277 = vmul.f32 %v239, %v256
      %v278 = vmul.f32 %v240, %v256
      %v279 = vmul.f32 %v241, %v256
      %v280 = vmul.f32 %v242, %v256
      %v281 = vmul.f32 %v243, %v256
      %v282 = vmul.f32 %v244, %v256
      %v283 = vmul.f32 %v245, %v256
      %v284 = vmul.f32 %v246, %v256
      %v285 = vmul.f32 %v247, %v256
      %v286 = vmul.f32 %v248, %v256
      %v287 = vmul.f32 %v249, %v256
      %v288 = vmul.f32 %v250, %v256
      %v289 = vmul.f32 %v251, %v256
      %v291 = vlaneseq
      %v292 = vshrl.u32 %v291, 7
      %v293 = vsub.s32 0, %v292
      %v294 = vrot.slane %v219, %v293
      %v296 = vadd.f32 %v258, %v294
      %v297 = vadd.f32 %v259, %v294
      %v298 = vadd.f32 %v260, %v294
      %v299 = vadd.f32 %v261, %v294
      %v300 = vadd.f32 %v262, %v294
      %v301 = vadd.f32 %v263, %v294
      %v302 = vadd.f32 %v264, %v294
      %v303 = vadd.f32 %v265, %v294
      %v304 = vadd.f32 %v266, %v294
      %v305 = vadd.f32 %v267, %v294
      %v306 = vadd.f32 %v268, %v294
      %v307 = vadd.f32 %v269, %v294
      %v308 = vadd.f32 %v270, %v294
      %v309 = vadd.f32 %v271, %v294
      %v310 = vadd.f32 %v272, %v294
      %v311 = vadd.f32 %v273, %v294
      %v312 = vadd.f32 %v274, %v294
      %v313 = vadd.f32 %v275, %v294
      %v314 = vadd.f32 %v276, %v294
      %v315 = vadd.f32 %v277, %v294
      %v316 = vadd.f32 %v278, %v294
      %v317 = vadd.f32 %v279, %v294
      %v318 = vadd.f32 %v280, %v294
      %v319 = vadd.f32 %v281, %v294
      %v320 = vadd.f32 %v282, %v294
      %v321 = vadd.f32 %v283, %v294
      %v322 = vadd.f32 %v284, %v294
      %v323 = vadd.f32 %v285, %v294
      %v324 = vadd.f32 %v286, %v294
      %v325 = vadd.f32 %v287, %v294
      %v326 = vadd.f32 %v288, %v294
      %v327 = vadd.f32 %v289, %v294
      %v328 = vmax.f32 %v296, 0.0
      %v329 = vmax.f32 %v297, 0.0
      %v330 = vmax.f32 %v298, 0.0
      %v331 = vmax.f32 %v299, 0.0
      %v332 = vmax.f32 %v300, 0.0
      %v333 = vmax.f32 %v301, 0.0
      %v334 = vmax.f32 %v302, 0.0
      %v335 = vmax.f32 %v303, 0.0
      %v336 = vmax.f32 %v304, 0.0
      %v337 = vmax.f32 %v305, 0.0
      %v338 = vmax.f32 %v306, 0.0
      %v339 = vmax.f32 %v307, 0.0
      %v340 = vmax.f32 %v308, 0.0
      %v341 = vmax.f32 %v309, 0.0
      %v342 = vmax.f32 %v310, 0.0
      %v343 = vmax.f32 %v311, 0.0
      %v344 = vmax.f32 %v312, 0.0
      %v345 = vmax.f32 %v313, 0.0
      %v346 = vmax.f32 %v314, 0.0
      %v347 = vmax.f32 %v315, 0.0
      %v348 = vmax.f32 %v316, 0.0
      %v349 = vmax.f32 %v317, 0.0
      %v350 = vmax.f32 %v318, 0.0
      %v351 = vmax.f32 %v319, 0.0
      %v352 = vmax.f32 %v320, 0.0
      %v353 = vmax.f32 %v321, 0.0
      %v354 = vmax.f32 %v322, 0.0
      %v355 = vmax.f32 %v323, 0.0
      %v356 = vmax.f32 %v324, 0.0
      %v357 = vmax.f32 %v325, 0.0
      %v358 = vmax.f32 %v326, 0.0
      %v359 = vmax.f32 %v327, 0.0
      %vm360 = vcmask 64512
      %361 = vst.msk [vmem:[%s217] sm:$0xff] %vm360, %v328
      %362 = vst.msk [vmem:[%s217 + $0x8] sm:$0xff] %vm360, %v329
      %363 = vst.msk [vmem:[%s217 + $0x10] sm:$0xff] %vm360, %v330
      %364 = vst.msk [vmem:[%s217 + $0x18] sm:$0xff] %vm360, %v331
      %365 = vst.msk [vmem:[%s217 + $0x20] sm:$0xff] %vm360, %v332
      %366 = vst.msk [vmem:[%s217 + $0x28] sm:$0xff] %vm360, %v333
      %367 = vst.msk [vmem:[%s217 + $0x30] sm:$0xff] %vm360, %v334
      %368 = vst.msk [vmem:[%s217 + $0x38] sm:$0xff] %vm360, %v335
      %369 = vst.msk [vmem:[%s217 + $0x40] sm:$0xff] %vm360, %v336
      %370 = vst.msk [vmem:[%s217 + $0x48] sm:$0xff] %vm360, %v337
      %371 = vst.msk [vmem:[%s217 + $0x50] sm:$0xff] %vm360, %v338
      %372 = vst.msk [vmem:[%s217 + $0x58] sm:$0xff] %vm360, %v339
      %373 = vst.msk [vmem:[%s217 + $0x60] sm:$0xff] %vm360, %v340
      %374 = vst.msk [vmem:[%s217 + $0x68] sm:$0xff] %vm360, %v341
      %375 = vst.msk [vmem:[%s217 + $0x70] sm:$0xff] %vm360, %v342
      %376 = vst.msk [vmem:[%s217 + $0x78] sm:$0xff] %vm360, %v343
      %377 = vst.msk [vmem:[%s217 + $0x80] sm:$0xff] %vm360, %v344
      %378 = vst.msk [vmem:[%s217 + $0x88] sm:$0xff] %vm360, %v345
      %379 = vst.msk [vmem:[%s217 + $0x90] sm:$0xff] %vm360, %v346
      %380 = vst.msk [vmem:[%s217 + $0x98] sm:$0xff] %vm360, %v347
      %381 = vst.msk [vmem:[%s217 + $0xa0] sm:$0xff] %vm360, %v348
      %382 = vst.msk [vmem:[%s217 + $0xa8] sm:$0xff] %vm360, %v349
      %383 = vst.msk [vmem:[%s217 + $0xb0] sm:$0xff] %vm360, %v350
      %384 = vst.msk [vmem:[%s217 + $0xb8] sm:$0xff] %vm360, %v351
      %385 = vst.msk [vmem:[%s217 + $0xc0] sm:$0xff] %vm360, %v352
      %386 = vst.msk [vmem:[%s217 + $0xc8] sm:$0xff] %vm360, %v353
      %387 = vst.msk [vmem:[%s217 + $0xd0] sm:$0xff] %vm360, %v354
      %388 = vst.msk [vmem:[%s217 + $0xd8] sm:$0xff] %vm360, %v355
      %389 = vst.msk [vmem:[%s217 + $0xe0] sm:$0xff] %vm360, %v356
      %390 = vst.msk [vmem:[%s217 + $0xe8] sm:$0xff] %vm360, %v357
      %391 = vst.msk [vmem:[%s217 + $0xf0] sm:$0xff] %vm360, %v358
      %392 = vst.msk [vmem:[%s217 + $0xf8] sm:$0xff] %vm360, %v359
      %v393 = vld [vmem:[%s212] sm:$0xff]
      %v394 = vld [vmem:[%s212 + $0x8] sm:$0xff]
      %v395 = vld [vmem:[%s212 + $0x10] sm:$0xff]
      %v396 = vld [vmem:[%s212 + $0x18] sm:$0xff]
      %v397 = vld [vmem:[%s212 + $0x20] sm:$0xff]
      %v398 = vld [vmem:[%s212 + $0x28] sm:$0xff]
      %v399 = vld [vmem:[%s212 + $0x30] sm:$0xff]
      %v400 = vld [vmem:[%s212 + $0x38] sm:$0xff]
      %v401 = vld [vmem:[%s212 + $0x40] sm:$0xff]
      %v402 = vld [vmem:[%s212 + $0x48] sm:$0xff]
      %v403 = vld [vmem:[%s212 + $0x50] sm:$0xff]
      %v404 = vld [vmem:[%s212 + $0x58] sm:$0xff]
      %v405 = vld [vmem:[%s212 + $0x60] sm:$0xff]
      %v406 = vld [vmem:[%s212 + $0x68] sm:$0xff]
      %v407 = vld [vmem:[%s212 + $0x70] sm:$0xff]
      %v408 = vld [vmem:[%s212 + $0x78] sm:$0xff]
      %v409 = vld [vmem:[%s212 + $0x80] sm:$0xff]
      %v410 = vld [vmem:[%s212 + $0x88] sm:$0xff]
      %v411 = vld [vmem:[%s212 + $0x90] sm:$0xff]
      %v412 = vld [vmem:[%s212 + $0x98] sm:$0xff]
      %v413 = vld [vmem:[%s212 + $0xa0] sm:$0xff]
      %v414 = vld [vmem:[%s212 + $0xa8] sm:$0xff]
      %v415 = vld [vmem:[%s212 + $0xb0] sm:$0xff]
      %v416 = vld [vmem:[%s212 + $0xb8] sm:$0xff]
      %v417 = vld [vmem:[%s212 + $0xc0] sm:$0xff]
      %v418 = vld [vmem:[%s212 + $0xc8] sm:$0xff]
      %v419 = vld [vmem:[%s212 + $0xd0] sm:$0xff]
      %v420 = vld [vmem:[%s212 + $0xd8] sm:$0xff]
      %v421 = vld [vmem:[%s212 + $0xe0] sm:$0xff]
      %v422 = vld [vmem:[%s212 + $0xe8] sm:$0xff]
      %v423 = vld [vmem:[%s212 + $0xf0] sm:$0xff]
      %v424 = vld [vmem:[%s212 + $0xf8] sm:$0xff]
      %v425 = vadd.f32 %v296, %v393
      %v426 = vadd.f32 %v297, %v394
      %v427 = vadd.f32 %v298, %v395
      %v428 = vadd.f32 %v299, %v396
      %v429 = vadd.f32 %v300, %v397
      %v430 = vadd.f32 %v301, %v398
      %v431 = vadd.f32 %v302, %v399
      %v432 = vadd.f32 %v303, %v400
      %v433 = vadd.f32 %v304, %v401
      %v434 = vadd.f32 %v305, %v402
      %v435 = vadd.f32 %v306, %v403
      %v436 = vadd.f32 %v307, %v404
      %v437 = vadd.f32 %v308, %v405
      %v438 = vadd.f32 %v309, %v406
      %v439 = vadd.f32 %v310, %v407
      %v440 = vadd.f32 %v311, %v408
      %v441 = vadd.f32 %v312, %v409
      %v442 = vadd.f32 %v313, %v410
      %v443 = vadd.f32 %v314, %v411
      %v444 = vadd.f32 %v315, %v412
      %v445 = vadd.f32 %v316, %v413
      %v446 = vadd.f32 %v317, %v414
      %v447 = vadd.f32 %v318, %v415
      %v448 = vadd.f32 %v319, %v416
      %v449 = vadd.f32 %v320, %v417
      %v450 = vadd.f32 %v321, %v418
      %v451 = vadd.f32 %v322, %v419
      %v452 = vadd.f32 %v323, %v420
      %v453 = vadd.f32 %v324, %v421
      %v454 = vadd.f32 %v325, %v422
      %v455 = vadd.f32 %v326, %v423
      %v456 = vadd.f32 %v327, %v424
      %v457 = vmax.f32 %v425, 0.0
      %v458 = vmax.f32 %v426, 0.0
      %v459 = vmax.f32 %v427, 0.0
      %v460 = vmax.f32 %v428, 0.0
      %v461 = vmax.f32 %v429, 0.0
      %v462 = vmax.f32 %v430, 0.0
      %v463 = vmax.f32 %v431, 0.0
      %v464 = vmax.f32 %v432, 0.0
      %v465 = vmax.f32 %v433, 0.0
      %v466 = vmax.f32 %v434, 0.0
      %v467 = vmax.f32 %v435, 0.0
      %v468 = vmax.f32 %v436, 0.0
      %v469 = vmax.f32 %v437, 0.0
      %v470 = vmax.f32 %v438, 0.0
      %v471 = vmax.f32 %v439, 0.0
      %v472 = vmax.f32 %v440, 0.0
      %v473 = vmax.f32 %v441, 0.0
      %v474 = vmax.f32 %v442, 0.0
      %v475 = vmax.f32 %v443, 0.0
      %v476 = vmax.f32 %v444, 0.0
      %v477 = vmax.f32 %v445, 0.0
      %v478 = vmax.f32 %v446, 0.0
      %v479 = vmax.f32 %v447, 0.0
      %v480 = vmax.f32 %v448, 0.0
      %v481 = vmax.f32 %v449, 0.0
      %v482 = vmax.f32 %v450, 0.0
      %v483 = vmax.f32 %v451, 0.0
      %v484 = vmax.f32 %v452, 0.0
      %v485 = vmax.f32 %v453, 0.0
      %v486 = vmax.f32 %v454, 0.0
      %v487 = vmax.f32 %v455, 0.0
      %v488 = vmax.f32 %v456, 0.0
      %vm489 = vcmask 31744
      %490 = vst.msk [vmem:[%s217] sm:$0xff] %vm489, %v457
      %491 = vst.msk [vmem:[%s217 + $0x8] sm:$0xff] %vm489, %v458
      %492 = vst.msk [vmem:[%s217 + $0x10] sm:$0xff] %vm489, %v459
      %493 = vst.msk [vmem:[%s217 + $0x18] sm:$0xff] %vm489, %v460
      %494 = vst.msk [vmem:[%s217 + $0x20] sm:$0xff] %vm489, %v461
      %495 = vst.msk [vmem:[%s217 + $0x28] sm:$0xff] %vm489, %v462
      %496 = vst.msk [vmem:[%s217 + $0x30] sm:$0xff] %vm489, %v463
      %497 = vst.msk [vmem:[%s217 + $0x38] sm:$0xff] %vm489, %v464
      %498 = vst.msk [vmem:[%s217 + $0x40] sm:$0xff] %vm489, %v465
      %499 = vst.msk [vmem:[%s217 + $0x48] sm:$0xff] %vm489, %v466
      %500 = vst.msk [vmem:[%s217 + $0x50] sm:$0xff] %vm489, %v467
      %501 = vst.msk [vmem:[%s217 + $0x58] sm:$0xff] %vm489, %v468
      %502 = vst.msk [vmem:[%s217 + $0x60] sm:$0xff] %vm489, %v469
      %503 = vst.msk [vmem:[%s217 + $0x68] sm:$0xff] %vm489, %v470
      %504 = vst.msk [vmem:[%s217 + $0x70] sm:$0xff] %vm489, %v471
      %505 = vst.msk [vmem:[%s217 + $0x78] sm:$0xff] %vm489, %v472
      %506 = vst.msk [vmem:[%s217 + $0x80] sm:$0xff] %vm489, %v473
      %507 = vst.msk [vmem:[%s217 + $0x88] sm:$0xff] %vm489, %v474
      %508 = vst.msk [vmem:[%s217 + $0x90] sm:$0xff] %vm489, %v475
      %509 = vst.msk [vmem:[%s217 + $0x98] sm:$0xff] %vm489, %v476
      %510 = vst.msk [vmem:[%s217 + $0xa0] sm:$0xff] %vm489, %v477
      %511 = vst.msk [vmem:[%s217 + $0xa8] sm:$0xff] %vm489, %v478
      %512 = vst.msk [vmem:[%s217 + $0xb0] sm:$0xff] %vm489, %v479
      %513 = vst.msk [vmem:[%s217 + $0xb8] sm:$0xff] %vm489, %v480
      %514 = vst.msk [vmem:[%s217 + $0xc0] sm:$0xff] %vm489, %v481
      %515 = vst.msk [vmem:[%s217 + $0xc8] sm:$0xff] %vm489, %v482
      %516 = vst.msk [vmem:[%s217 + $0xd0] sm:$0xff] %vm489, %v483
      %517 = vst.msk [vmem:[%s217 + $0xd8] sm:$0xff] %vm489, %v484
      %518 = vst.msk [vmem:[%s217 + $0xe0] sm:$0xff] %vm489, %v485
      %519 = vst.msk [vmem:[%s217 + $0xe8] sm:$0xff] %vm489, %v486
      %520 = vst.msk [vmem:[%s217 + $0xf0] sm:$0xff] %vm489, %v487
      %521 = vst.msk [vmem:[%s217 + $0xf8] sm:$0xff] %vm489, %v488
      %p522 = scmp.lt.s32.totalorder %s15, 1
      %s523 = scalar_select %p522, %s15, 1
      %s524 = smul.addr %s523, 32
      %s525 = smul.addr %s524, 8
      %s526 = scalar_lea.vmem %s4, %s525
      // Predicated region
      $region37: #{resnet_block_forward.5} parent=35 // pred_check
        %p527 = pneg %p127
      $region38: #{resnet_block_forward.5} parent=35 // pred_check_branch
        %529 = sbr.rel (%p527) target = $region40
      $region39: #{resnet_block_forward.5} parent=35 // pred_region
        _
      $region40: #{resnet_block_forward.5} parent=35 // pred_fallthru
        _
    $region36: #{resnet_block_forward.5} parent=5 // pred_fallthru
      _
    %p530 = scmp.le.s32.totalorder 2, %s10
    // Predicated region
    $region41: #{resnet_block_forward.5} parent=5 // pred_check
      %p531 = pneg %p530
    $region42: #{resnet_block_forward.5} parent=5 // pred_check_branch
      %533 = sbr.rel (%p531) target = $region44
    $region43: #{resnet_block_forward.5} parent=5 // pred_region
      %s534 = ssub.s32 %s10, 2
      // Predicated region
      $region45: #{resnet_block_forward.5} parent=43 // pred_check
        %p535 = pneg %p133
      $region46: #{resnet_block_forward.5} parent=43 // pred_check_branch
        %537 = sbr.rel (%p535) target = $region48
      $region47: #{resnet_block_forward.5} parent=43 // pred_region
        %p538 = scmp.lt.s32.totalorder %s16, 1
        %s539 = scalar_select %p538, %s16, 1
        %s540 = smul.addr %s539, 32
        %s541 = smul.addr %s540, 8
        %s542 = scalar_lea.vmem %s4, %s541
      $region48: #{resnet_block_forward.5} parent=43 // pred_fallthru
        _
    $region44: #{resnet_block_forward.5} parent=5 // pred_fallthru
      _
  $region6: #{resnet_block_forward.5} parent=0 // loop_footer
    %s14 = sadd.s32 1, %s10
  $region7: #{resnet_block_forward.5} parent=0 // loop_footer_branch
    %9 = sbr.rel target = $region3
  $region8: #{resnet_block_forward.5} parent=0 // loop_exit
    _

// kernel: resnet_block_forward.3
$region0: #{resnet_block_forward.3}
  #allocation0 [shape = 'u32[]', space=smem, size = 0x4, offset = 0x4, fixed_abs, tag = 'smem constant byte address 0x4 - core index']
  #allocation1 [shape = 'u32[144,128]{1,0:T(1,128)}', space=vmem, size = 0x12000, scoped, tag = 'internal scratch']
  #allocation2 [shape = 'bf16[256,36]{1,0:T(16,128)(2,1)}', space=vmem, size = 0x10000, scoped, tag = 'scratch operand']
  %s0 = inlined_call_operand.vmem [shape: bf16[2,18,18,4], index: 0, kind: input, shape index: {}]
  %s1 = inlined_call_operand.vmem [shape: bf16[36,8], index: 1, kind: input, shape index: {}]
  %s2 = inlined_call_operand.vmem [shape: f32[2,16,16,8], index: 2, kind: output, shape index: {0}]
  %s3 = inlined_call_operand.vmem [shape: f32[2,2,8], index: 3, kind: output, shape index: {1}]
  %4 = xla_tuple %s2, %s3
  %s5 = sld [smem:[#allocation0]]
  $region53: #{resnet_block_forward.3} parent=0
    _
  %s7 = ssub.s32 1, %s5
  %s8 = scalar_select 0, %s7, %s5
  loop: start=0, step=1, limit=4
  $region2: #{resnet_block_forward.3} parent=0 // loop_pre_header
    _
  $region3: #{resnet_block_forward.3} parent=0 // loop_header
    %s10 = sphi 0, %s14
    %p11 = scmp.ge.s32.totalorder %s10, 4
    %s17 = sphi 0, %s29
    %s18 = sphi 0, %s25
    %s19 = sphi 0, %s17
    %s20 = sphi 0, %s18
    %s21 = sphi 0, %s19
    %s22 = sphi 0, %s20
    %s34 = sphi 0, %s36
    %s37 = sphi 0, %s34
    %s38 = sphi 0, %s37
    %s54 = sphi 0, %s38
    %s58 = sphi 0, %s58
    %s60 = sphi 0, %s58
    %s61 = sphi 0, %s60
    %s75 = sphi 0, %s61
    %s83 = sphi 0, %s85
    %s86 = sphi 0, %s83
    %s87 = sphi 0, %s86
    %s103 = sphi 0, %s87
    %s109 = sphi 0, %s111
    %s112 = sphi 0, %s109
    %s113 = sphi 0, %s112
    %s129 = sphi 0, %s113
  $region4: #{resnet_block_forward.3} parent=0 // loop_header_branch
    %13 = sbr.rel (%p11) target = $region8
  $region5: #{resnet_block_forward.3} parent=0 // loop_body
    %s15 = ssub.s32 %s10, 1
    %s16 = ssub.s32 %s10, 2
    %s23 = sadd.s32 1, %s18
    %p24 = scmp.ge.s32.totalorder %s23, 1
    %s25 = scalar_select %p24, 0, %s23
    %s26 = sadd.s32 1, %s17
    %s27 = scalar_select %p24, %s26, %s17
    %p28 = scmp.ge.s32.totalorder %s27, 2
    %s29 = scalar_select %p28, 0, %s27
    %s30 = sadd.s32 %s17, %s18
    %s31 = sadd.s32 %s29, %s25
    %s32 = ssub.s32 %s30, %s31
    %p33 = scmp.eq.s32.totalorder %s32, 0
    %s35 = sadd.s32 %s34, 1
    %s36 = scalar_select %p33, %s34, %s35
    %p39 = pneg %p33
    %p40 = scmp.eq.s32.totalorder %s10, 1
    %p41 = por %p39, %p40
    %p42 = scmp.ne.s32.totalorder %s34, %s37
    %p43 = scmp.eq.s32.totalorder %s10, 0
    %p44 = por %p42, %p43
    %p45 = scmp.ne.s32.totalorder %s34, %s37
    %p46 = scmp.eq.s32.totalorder %s15, 1
    %p47 = por %p45, %p46
    %p48 = scmp.ne.s32.totalorder %s37, %s38
    %p49 = scmp.eq.s32.totalorder %s15, 0
    %p50 = por %p48, %p49
    %p51 = scmp.ne.s32.totalorder %s37, %s38
    %p52 = scmp.eq.s32.totalorder %s16, 1
    %p53 = por %p51, %p52
    %p55 = scmp.ne.s32.totalorder %s38, %s54
    %p56 = scmp.eq.s32.totalorder %s16, 0
    %p57 = por %p55, %p56
    %s59 = sadd.s32 %s58, 1
    %p62 = scmp.eq.s32.totalorder %s10, 1
    %p63 = scmp.ne.s32.totalorder %s58, %s60
    %p64 = scmp.eq.s32.totalorder %s10, 0
    %p65 = por %p63, %p64
    %p66 = scmp.ne.s32.totalorder %s58, %s60
    %p67 = scmp.eq.s32.totalorder %s15, 1
    %p68 = por %p66, %p67
    %p69 = scmp.ne.s32.totalorder %s60, %s61
    %p70 = scmp.eq.s32.totalorder %s15, 0
    %p71 = por %p69, %p70
    %p72 = scmp.ne.s32.totalorder %s60, %s61
    %p73 = scmp.eq.s32.totalorder %s16, 1
    %p74 = por %p72, %p73
    %p76 = scmp.ne.s32.totalorder %s61, %s75
    %p77 = scmp.eq.s32.totalorder %s16, 0
    %p78 = por %p76, %p77
    %s79 = sadd.s32 %s17, %s18
    %s80 = sadd.s32 %s29, %s25
    %s81 = ssub.s32 %s79, %s80
    %p82 = scmp.eq.s32.totalorder %s81, 0
    %s84 = sadd.s32 %s83, 1
    %s85 = scalar_select %p82, %s83, %s84
    %p88 = pneg %p82
    %p89 = scmp.eq.s32.totalorder %s10, 1
    %p90 = por %p88, %p89
    %p91 = scmp.ne.s32.totalorder %s83, %s86
    %p92 = scmp.eq.s32.totalorder %s10, 0
    %p93 = por %p91, %p92
    %p94 = scmp.ne.s32.totalorder %s83, %s86
    %p95 = scmp.eq.s32.totalorder %s15, 1
    %p96 = por %p94, %p95
    %p97 = scmp.ne.s32.totalorder %s86, %s87
    %p98 = scmp.eq.s32.totalorder %s15, 0
    %p99 = por %p97, %p98
    %p100 = scmp.ne.s32.totalorder %s86, %s87
    %p101 = scmp.eq.s32.totalorder %s16, 1
    %p102 = por %p100, %p101
    %p104 = scmp.ne.s32.totalorder %s87, %s103
    %p105 = scmp.eq.s32.totalorder %s16, 0
    %p106 = por %p104, %p105
    %s107 = ssub.s32 %s17, %s29
    %p108 = scmp.eq.s32.totalorder %s107, 0
    %s110 = sadd.s32 %s109, 1
    %s111 = scalar_select %p108, %s109, %s110
    %p114 = pneg %p108
    %p115 = scmp.eq.s32.totalorder %s10, 1
    %p116 = por %p114, %p115
    %p117 = scmp.ne.s32.totalorder %s109, %s112
    %p118 = scmp.eq.s32.totalorder %s10, 0
    %p119 = por %p117, %p118
    %p120 = scmp.ne.s32.totalorder %s109, %s112
    %p121 = scmp.eq.s32.totalorder %s15, 1
    %p122 = por %p120, %p121
    %p123 = scmp.ne.s32.totalorder %s112, %s113
    %p124 = scmp.eq.s32.totalorder %s15, 0
    %p125 = por %p123, %p124
    %p126 = scmp.ne.s32.totalorder %s112, %s113
    %p127 = scmp.eq.s32.totalorder %s16, 1
    %p128 = por %p126, %p127
    %p130 = scmp.ne.s32.totalorder %s113, %s129
    %p131 = scmp.eq.s32.totalorder %s16, 0
    %p132 = por %p130, %p131
    %p133 = scmp.le.s32.totalorder 1, %s10
    %p134 = scmp.lt.s32.totalorder %s10, 3
    %p135 = pnand %p133, %p134
    %p136 = pneg %p135
    // Predicated region
    $region9: #{resnet_block_forward.3} parent=5 // pred_check
      _
    $region10: #{resnet_block_forward.3} parent=5 // pred_check_branch
      %138 = sbr.rel (%p135) target = $region12
    $region11: #{resnet_block_forward.3} parent=5 // pred_region
      %s139 = ssub.s32 %s10, 1
      // Predicated region
      $region13: #{resnet_block_forward.3} parent=11 // pred_check
        %p140 = pneg %p71
      $region14: #{resnet_block_forward.3} parent=11 // pred_check_branch
        %142 = sbr.rel (%p140) target = $region16
      $region15: #{resnet_block_forward.3} parent=11 // pred_region
        _
      $region16: #{resnet_block_forward.3} parent=11 // pred_fallthru
        _
    $region12: #{resnet_block_forward.3} parent=5 // pred_fallthru
      _
    %p143 = scmp.lt.s32.totalorder %s10, 2
    // Predicated region
    $region17: #{resnet_block_forward.3} parent=5 // pred_check
      %p144 = pneg %p143
    $region18: #{resnet_block_forward.3} parent=5 // pred_check_branch
      %146 = sbr.rel (%p144) target = $region20
    $region19: #{resnet_block_forward.3} parent=5 // pred_region
      // Predicated region
      $region21: #{resnet_block_forward.3} parent=19 // pred_check
        %p147 = pneg %p44
      $region22: #{resnet_block_forward.3} parent=19 // pred_check_branch
        %149 = sbr.rel (%p147) target = $region24
      $region23: #{resnet_block_forward.3} parent=19 // pred_region
        %s150 = sadd.s32 %s17, %s18
        %p151 = scmp.lt.s32.totalorder %s150, 1
        %s152 = scalar_select %p151, %s150, 1
        %s153 = smul.addr %s152, 54
        %s154 = smul.addr %s153, 4
        %s155 = scalar_lea.vmem %s0, %s154
        %s156 = sadd.s32 %s17, %s18
      $region24: #{resnet_block_forward.3} parent=19 // pred_fallthru
        _
    $region20: #{resnet_block_forward.3} parent=5 // pred_fallthru
      _
    %p157 = scmp.le.s32.totalorder 1, %s10
    %p158 = scmp.lt.s32.totalorder %s10, 3
    %p159 = pnand %p157, %p158
    %p160 = pneg %p159
    // Predicated region
    $region25: #{resnet_block_forward.3} parent=5 // pred_check
      _
    $region26: #{resnet_block_forward.3} parent=5 // pred_check_branch
      %162 = sbr.rel (%p159) target = $region28
    $region27: #{resnet_block_forward.3} parent=5 // pred_region
      %s163 = ssub.s32 %s10, 1
      %s164 = sadd.s32 %s19, %s20
      %p165 = scmp.lt.s32.totalorder %s164, 1
      %s166 = scalar_select %p165, %s164, 1
      %s167 = smul.addr %s166, 54
      %s168 = smul.addr %s167, 4
      %s169 = scalar_lea.vmem %s0, %s168
      %p170 = pneg %p50
      %p171 = pneg %p47
      %p172 = pneg %p71
      %p173 = pneg %p68
      %p174 = pneg %p99
      %p175 = pneg %p96
      %s176 = sadd.s32 %s19, %s20
      %p177 = scmp.lt.s32.totalorder %s176, 1
      %s178 = scalar_select %p177, %s176, 1
      %s179 = smul.addr %s178, 32
      %s180 = smul.addr %s179, 8
      %s181 = scalar_lea.vmem %s2, %s180
      %p182 = pneg %p125
      %p183 = pneg %p122
      %p184 = scmp.lt.s32.totalorder %s19, 1
      %s185 = scalar_select %p184, %s19, 1
      %s186 = smul.addr %s185, 2
      %s187 = scalar_lea.vmem %s3, %s186
      %s188 = sadd.s32 %s19, %s20
      %p189 = scmp.lt.s32.totalorder %s188, 1
      %s190 = scalar_select %p189, %s188, 1
      %s191 = smul.addr %s190, 54
      %s192 = smul.addr %s191, 4
      %s193 = scalar_lea.vmem %s0, %s192
      %s194 = sadd.s32 %s19, %s20
      %s195 = sadd.s32 %s19, %s20
      %p196 = scmp.lt.s32.totalorder %s195, 1
      %s197 = scalar_select %p196, %s195, 1
      %s198 = smul.addr %s197, 32
      %s199 = smul.addr %s198, 8
      %s200 = scalar_lea.vmem %s2, %s199
      %s201 = sadd.s32 %s19, %s20
      %p202 = scmp.lt.s32.totalorder %s19, 1
      %s203 = scalar_select %p202, %s19, 1
      %s204 = smul.addr %s203, 2
      %s205 = scalar_lea.vmem %s3, %s204
      %v207 = vld [vmem:[%s193] sm:$0xf]
      %v208 = vld [vmem:[%s193 + $0x4] sm:$0xf]
      %v209 = vld [vmem:[%s193 + $0xc] sm:$0xf]
      %v210 = vld [vmem:[%s193 + $0x10] sm:$0xf]
      %v211 = vld [vmem:[%s193 + $0x18] sm:$0xf]
      %v212 = vld [vmem:[%s193 + $0x1c] sm:$0xf]
      %v213 = vld [vmem:[%s193 + $0x24] sm:$0xf]
      %v214 = vld [vmem:[%s193 + $0x28] sm:$0xf]
      %v215 = vld [vmem:[%s193 + $0x30] sm:$0xf]
      %v216 = vld [vmem:[%s193 + $0x34] sm:$0xf]
      %v217 = vld [vmem:[%s193 + $0x3c] sm:$0xf]
      %v218 = vld [vmem:[%s193 + $0x40] sm:$0xf]
      %v219 = vld [vmem:[%s193 + $0x48] sm:$0xf]
      %v220 = vld [vmem:[%s193 + $0x4c] sm:$0xf]
      %v221 = vld [vmem:[%s193 + $0x54] sm:$0xf]
      %v222 = vld [vmem:[%s193 + $0x58] sm:$0xf]
      %v223 = vld [vmem:[%s193 + $0x60] sm:$0xf]
      %v224 = vld [vmem:[%s193 + $0x64] sm:$0xf]
      %v225 = vld [vmem:[%s193 + $0x6c] sm:$0xf]
      %v226 = vld [vmem:[%s193 + $0x70] sm:$0xf]
      %v227 = vld [vmem:[%s193 + $0x78] sm:$0xf]
      %v228 = vld [vmem:[%s193 + $0x7c] sm:$0xf]
      %v229 = vld [vmem:[%s193 + $0x84] sm:$0xf]
      %v230 = vld [vmem:[%s193 + $0x88] sm:$0xf]
      %v231 = vld [vmem:[%s193 + $0x90] sm:$0xf]
      %v232 = vld [vmem:[%s193 + $0x94] sm:$0xf]
      %v233 = vld [vmem:[%s193 + $0x9c] sm:$0xf]
      %v234 = vld [vmem:[%s193 + $0xa0] sm:$0xf]
      %v235 = vld [vmem:[%s193 + $0xa8] sm:$0xf]
      %v236 = vld [vmem:[%s193 + $0xac] sm:$0xf]
      %v237 = vld [vmem:[%s193 + $0xb4] sm:$0xf]
      %v238 = vld [vmem:[%s193 + $0xb8] sm:$0xf]
      %v271 = vunpack.c.l.b16 %v207
      %v272 = vunpack.c.l.b16 %v208
      %v273 = vunpack.c.l.b16 %v209
      %v274 = vunpack.c.l.b16 %v210
      %v275 = vunpack.c.l.b16 %v211
      %v276 = vunpack.c.l.b16 %v212
      %v277 = vunpack.c.l.b16 %v213
      %v278 = vunpack.c.l.b16 %v214
      %v279 = vunpack.c.l.b16 %v215
      %v280 = vunpack.c.l.b16 %v216
      %v281 = vunpack.c.l.b16 %v217
      %v282 = vunpack.c.l.b16 %v218
      %v283 = vunpack.c.l.b16 %v219
      %v284 = vunpack.c.l.b16 %v220
      %v285 = vunpack.c.l.b16 %v221
      %v286 = vunpack.c.l.b16 %v222
      %v287 = vunpack.c.l.b16 %v223
      %v288 = vunpack.c.l.b16 %v224
      %v289 = vunpack.c.l.b16 %v225
      %v290 = vunpack.c.l.b16 %v226
      %v291 = vunpack.c.l.b16 %v227
      %v292 = vunpack.c.l.b16 %v228
      %v293 = vunpack.c.l.b16 %v229
      %v294 = vunpack.c.l.b16 %v230
      %v295 = vunpack.c.l.b16 %v231
      %v296 = vunpack.c.l.b16 %v232
      %v297 = vunpack.c.l.b16 %v233
      %v298 = vunpack.c.l.b16 %v234
      %v299 = vunpack.c.l.b16 %v235
      %v300 = vunpack.c.l.b16 %v236
      %v301 = vunpack.c.l.b16 %v237
      %v302 = vunpack.c.l.b16 %v238
      %v303 = vpack.c.b16 %v272, %v271
      %v304 = vpack.c.b16 %v274, %v273
      %v305 = vpack.c.b16 %v276, %v275
      %v306 = vpack.c.b16 %v278, %v277
      %v307 = vpack.c.b16 %v280, %v279
      %v308 = vpack.c.b16 %v282, %v281
      %v309 = vpack.c.b16 %v284, %v283
      %v310 = vpack.c.b16 %v286, %v285
      %v311 = vpack.c.b16 %v288, %v287
      %v312 = vpack.c.b16 %v290, %v289
      %v313 = vpack.c.b16 %v292, %v291
      %v314 = vpack.c.b16 %v294, %v293
      %v315 = vpack.c.b16 %v296, %v295
      %v316 = vpack.c.b16 %v298, %v297
      %v317 = vpack.c.b16 %v300, %v299
      %v318 = vpack.c.b16 %v302, %v301
      %vm335 = vcmask 31744
      %336 = vst.msk [vmem:[#allocation2] sm:$0xff] %vm335, %v303
      %337 = vst.msk [vmem:[#allocation2 + $0x8] sm:$0xff] %vm335, %v304
      %338 = vst.msk [vmem:[#allocation2 + $0x10] sm:$0xff] %vm335, %v305
      %339 = vst.msk [vmem:[#allocation2 + $0x18] sm:$0xff] %vm335, %v306
      %340 = vst.msk [vmem:[#allocation2 + $0x20] sm:$0xff] %vm335, %v307
      %341 = vst.msk [vmem:[#allocation2 + $0x28] sm:$0xff] %vm335, %v308
      %342 = vst.msk [vmem:[#allocation2 + $0x30] sm:$0xff] %vm335, %v309
      %343 = vst.msk [vmem:[#allocation2 + $0x38] sm:$0xff] %vm335, %v310
      %344 = vst.msk [vmem:[#allocation2 + $0x40] sm:$0xff] %vm335, %v311
      %345 = vst.msk [vmem:[#allocation2 + $0x48] sm:$0xff] %vm335, %v312
      %346 = vst.msk [vmem:[#allocation2 + $0x50] sm:$0xff] %vm335, %v313
      %347 = vst.msk [vmem:[#allocation2 + $0x58] sm:$0xff] %vm335, %v314
      %348 = vst.msk [vmem:[#allocation2 + $0x60] sm:$0xff] %vm335, %v315
      %349 = vst.msk [vmem:[#allocation2 + $0x68] sm:$0xff] %vm335, %v316
      %350 = vst.msk [vmem:[#allocation2 + $0x70] sm:$0xff] %vm335, %v317
      %351 = vst.msk [vmem:[#allocation2 + $0x78] sm:$0xff] %vm335, %v318
      %v352 = vld [vmem:[%s193] sm:$0xf]
      %v353 = vld [vmem:[%s193 + $0x4] sm:$0xf]
      %v354 = vld [vmem:[%s193 + $0x8] sm:$0x1]
      %v355 = vld [vmem:[%s193 + $0xc] sm:$0xf]
      %v356 = vld [vmem:[%s193 + $0x10] sm:$0xf]
      %v357 = vld [vmem:[%s193 + $0x14] sm:$0x1]
      %v358 = vld [vmem:[%s193 + $0x18] sm:$0xf]
      %v359 = vld [vmem:[%s193 + $0x1c] sm:$0xf]
      %v360 = vld [vmem:[%s193 + $0x20] sm:$0x1]
      %v361 = vld [vmem:[%s193 + $0x24] sm:$0xf]
      %v362 = vld [vmem:[%s193 + $0x28] sm:$0xf]
      %v363 = vld [vmem:[%s193 + $0x2c] sm:$0x1]
      %v364 = vld [vmem:[%s193 + $0x30] sm:$0xf]
      %v365 = vld [vmem:[%s193 + $0x34] sm:$0xf]
      %v366 = vld [vmem:[%s193 + $0x38] sm:$0x1]
      %v367 = vld [vmem:[%s193 + $0x3c] sm:$0xf]
      %v368 = vld [vmem:[%s193 + $0x40] sm:$0xf]
      %v369 = vld [vmem:[%s193 + $0x44] sm:$0x1]
      %v370 = vld [vmem:[%s193 + $0x48] sm:$0xf]
      %v371 = vld [vmem:[%s193 + $0x4c] sm:$0xf]
      %v372 = vld [vmem:[%s193 + $0x50] sm:$0x1]
      %v373 = vld [vmem:[%s193 + $0x54] sm:$0xf]
      %v374 = vld [vmem:[%s193 + $0x58] sm:$0xf]
      %v375 = vld [vmem:[%s193 + $0x5c] sm:$0x1]
      %v376 = vld [vmem:[%s193 + $0x60] sm:$0xf]
      %v377 = vld [vmem:[%s193 + $0x64] sm:$0xf]
      %v378 = vld [vmem:[%s193 + $0x68] sm:$0x1]
      %v379 = vld [vmem:[%s193 + $0x6c] sm:$0xf]
      %v380 = vld [vmem:[%s193 + $0x70] sm:$0xf]
      %v381 = vld [vmem:[%s193 + $0x74] sm:$0x1]
      %v382 = vld [vmem:[%s193 + $0x78] sm:$0xf]
      %v383 = vld [vmem:[%s193 + $0x7c] sm:$0xf]
      %v384 = vld [vmem:[%s193 + $0x80] sm:$0x1]
      %v385 = vld [vmem:[%s193 + $0x84] sm:$0xf]
      %v386 = vld [vmem:[%s193 + $0x88] sm:$0xf]
      %v387 = vld [vmem:[%s193 + $0x8c] sm:$0x1]
      %v388 = vld [vmem:[%s193 + $0x90] sm:$0xf]
      %v389 = vld [vmem:[%s193 + $0x94] sm:$0xf]
      %v390 = vld [vmem:[%s193 + $0x98] sm:$0x1]
      %v391 = vld [vmem:[%s193 + $0x9c] sm:$0xf]
      %v392 = vld [vmem:[%s193 + $0xa0] sm:$0xf]
      %v393 = vld [vmem:[%s193 + $0xa4] sm:$0x1]
      %v394 = vld [vmem:[%s193 + $0xa8] sm:$0xf]
      %v395 = vld [vmem:[%s193 + $0xac] sm:$0xf]
      %v396 = vld [vmem:[%s193 + $0xb0] sm:$0x1]
      %v397 = vld [vmem:[%s193 + $0xb4] sm:$0xf]
      %v398 = vld [vmem:[%s193 + $0xb8] sm:$0xf]
      %v399 = vld [vmem:[%s193 + $0xbc] sm:$0x1]
      %vm400 = vsmask.f32 3328
      %vm401 = vsmask.f32 7440
      %vm402 = vmor %vm400, %vm401
      %v404 = vshrl.u32 %v352, 16
      %v406 = vrot.slane %v404, 4
      %v407 = vshll.u32 %v352, 16
      %v409 = vrot.slane %v407, 5
      %v410 = vor.u32 %v406, %v409
      %v411 = vrot.slane %v410, 4
      %v413 = vshll.u32 %v353, 16
      %v415 = vrot.slane %v413, 5
      %v416 = vsel %vm402, %v411, %v415
      %v417 = vshrl.u32 %v353, 16
      %v419 = vrot.slane %v417, 4
      %v420 = vor.u32 %v419, %v415
      %v421 = vrot.slane %v420, 4
      %v423 = vshll.u32 %v354, 16
      %v425 = vrot.slane %v423, 5
      %v426 = vsel %vm402, %v421, %v425
      %v428 = vshrl.u32 %v355, 16
      %v430 = vrot.slane %v428, 4
      %v431 = vshll.u32 %v355, 16
      %v433 = vrot.slane %v431, 5
      %v434 = vor.u32 %v430, %v433
      %v435 = vrot.slane %v434, 4
      %v437 = vshll.u32 %v356, 16
      %v439 = vrot.slane %v437, 5
      %v440 = vsel %vm402, %v435, %v439
      %v441 = vshrl.u32 %v356, 16
      %v443 = vrot.slane %v441, 4
      %v444 = vor.u32 %v443, %v439
      %v445 = vrot.slane %v444, 4
      %v447 = vshll.u32 %v357, 16
      %v449 = vrot.slane %v447, 5
      %v450 = vsel %vm402, %v445, %v449
      %v452 = vshrl.u32 %v358, 16
      %v454 = vrot.slane %v452, 4
      %v455 = vshll.u32 %v358, 16
      %v457 = vrot.slane %v455, 5
      %v458 = vor.u32 %v454, %v457
      %v459 = vrot.slane %v458, 4
      %v461 = vshll.u32 %v359, 16
      %v463 = vrot.slane %v461, 5
      %v464 = vsel %vm402, %v459, %v463
      %v465 = vshrl.u32 %v359, 16
      %v467 = vrot.slane %v465, 4
      %v468 = vor.u32 %v467, %v463
      %v469 = vrot.slane %v468, 4
      %v471 = vshll.u32 %v360, 16
      %v473 = vrot.slane %v471, 5
      %v474 = vsel %vm402, %v469, %v473
      %v476 = vshrl.u32 %v361, 16
      %v478 = vrot.slane %v476, 4
      %v479 = vshll.u32 %v361, 16
      %v481 = vrot.slane %v479, 5
      %v482 = vor.u32 %v478, %v481
      %v483 = vrot.slane %v482, 4
      %v485 = vshll.u32 %v362, 16
      %v487 = vrot.slane %v485, 5
      %v488 = vsel %vm402, %v483, %v487
      %v489 = vshrl.u32 %v362, 16
      %v491 = vrot.slane %v489, 4
      %v492 = vor.u32 %v491, %v487
      %v493 = vrot.slane %v492, 4
      %v495 = vshll.u32 %v363, 16
      %v497 = vrot.slane %v495, 5
      %v498 = vsel %vm402, %v493, %v497
      %v500 = vshrl.u32 %v364, 16
      %v502 = vrot.slane %v500, 4
      %v503 = vshll.u32 %v364, 16
      %v505 = vrot.slane %v503, 5
      %v506 = vor.u32 %v502, %v505
      %v507 = vrot.slane %v506, 4
      %v509 = vshll.u32 %v365, 16
      %v511 = vrot.slane %v509, 5
      %v512 = vsel %vm402, %v507, %v511
      %v513 = vshrl.u32 %v365, 16
      %v515 = vrot.slane %v513, 4
      %v516 = vor.u32 %v515, %v511
      %v517 = vrot.slane %v516, 4
      %v519 = vshll.u32 %v366, 16
      %v521 = vrot.slane %v519, 5
      %v522 = vsel %vm402, %v517, %v521
      %v524 = vshrl.u32 %v367, 16
      %v526 = vrot.slane %v524, 4
      %v527 = vshll.u32 %v367, 16
      %v529 = vrot.slane %v527, 5
      %v530 = vor.u32 %v526, %v529
      %v531 = vrot.slane %v530, 4
      %v533 = vshll.u32 %v368, 16
      %v535 = vrot.slane %v533, 5
      %v536 = vsel %vm402, %v531, %v535
      %v537 = vshrl.u32 %v368, 16
      %v539 = vrot.slane %v537, 4
      %v540 = vor.u32 %v539, %v535
      %v541 = vrot.slane %v540, 4
      %v543 = vshll.u32 %v369, 16
      %v545 = vrot.slane %v543, 5
      %v546 = vsel %vm402, %v541, %v545
      %v548 = vshrl.u32 %v370, 16
      %v550 = vrot.slane %v548, 4
      %v551 = vshll.u32 %v370, 16
      %v553 = vrot.slane %v551, 5
      %v554 = vor.u32 %v550, %v553
      %v555 = vrot.slane %v554, 4
      %v557 = vshll.u32 %v371, 16
      %v559 = vrot.slane %v557, 5
      %v560 = vsel %vm402, %v555, %v559
      %v561 = vshrl.u32 %v371, 16
      %v563 = vrot.slane %v561, 4
      %v564 = vor.u32 %v563, %v559
      %v565 = vrot.slane %v564, 4
      %v567 = vshll.u32 %v372, 16
      %v569 = vrot.slane %v567, 5
      %v570 = vsel %vm402, %v565, %v569
      %v572 = vshrl.u32 %v373, 16
      %v574 = vrot.slane %v572, 4
      %v575 = vshll.u32 %v373, 16
      %v577 = vrot.slane %v575, 5
      %v578 = vor.u32 %v574, %v577
      %v579 = vrot.slane %v578, 4
      %v581 = vshll.u32 %v374, 16
      %v583 = vrot.slane %v581, 5
      %v584 = vsel %vm402, %v579, %v583
      %v585 = vshrl.u32 %v374, 16
      %v587 = vrot.slane %v585, 4
      %v588 = vor.u32 %v587, %v583
      %v589 = vrot.slane %v588, 4
      %v591 = vshll.u32 %v375, 16
      %v593 = vrot.slane %v591, 5
      %v594 = vsel %vm402, %v589, %v593
      %v596 = vshrl.u32 %v376, 16
      %v598 = vrot.slane %v596, 4
      %v599 = vshll.u32 %v376, 16
      %v601 = vrot.slane %v599, 5
      %v602 = vor.u32 %v598, %v601
      %v603 = vrot.slane %v602, 4
      %v605 = vshll.u32 %v377, 16
      %v607 = vrot.slane %v605, 5
      %v608 = vsel %vm402, %v603, %v607
      %v609 = vshrl.u32 %v377, 16
      %v611 = vrot.slane %v609, 4
      %v612 = vor.u32 %v611, %v607
      %v613 = vrot.slane %v612, 4
      %v615 = vshll.u32 %v378, 16
      %v617 = vrot.slane %v615, 5
      %v618 = vsel %vm402, %v613, %v617
      %v620 = vshrl.u32 %v379, 16
      %v622 = vrot.slane %v620, 4
      %v623 = vshll.u32 %v379, 16
      %v625 = vrot.slane %v623, 5
      %v626 = vor.u32 %v622, %v625
      %v627 = vrot.slane %v626, 4
      %v629 = vshll.u32 %v380, 16
      %v631 = vrot.slane %v629, 5
      %v632 = vsel %vm402, %v627, %v631
      %v633 = vshrl.u32 %v380, 16
      %v635 = vrot.slane %v633, 4
      %v636 = vor.u32 %v635, %v631
      %v637 = vrot.slane %v636, 4
      %v639 = vshll.u32 %v381, 16
      %v641 = vrot.slane %v639, 5
      %v642 = vsel %vm402, %v637, %v641
      %v644 = vshrl.u32 %v382, 16
      %v646 = vrot.slane %v644, 4
      %v647 = vshll.u32 %v382, 16
      %v649 = vrot.slane %v647, 5
      %v650 = vor.u32 %v646, %v649
      %v651 = vrot.slane %v650, 4
      %v653 = vshll.u32 %v383, 16
      %v655 = vrot.slane %v653, 5
      %v656 = vsel %vm402, %v651, %v655
      %v657 = vshrl.u32 %v383, 16
      %v659 = vrot.slane %v657, 4
      %v660 = vor.u32 %v659, %v655
      %v661 = vrot.slane %v660, 4
      %v663 = vshll.u32 %v384, 16
      %v665 = vrot.slane %v663, 5
      %v666 = vsel %vm402, %v661, %v665
      %v668 = vshrl.u32 %v385, 16
      %v670 = vrot.slane %v668, 4
      %v671 = vshll.u32 %v385, 16
      %v673 = vrot.slane %v671, 5
      %v674 = vor.u32 %v670, %v673
      %v675 = vrot.slane %v674, 4
      %v677 = vshll.u32 %v386, 16
      %v679 = vrot.slane %v677, 5
      %v680 = vsel %vm402, %v675, %v679
      %v681 = vshrl.u32 %v386, 16
      %v683 = vrot.slane %v681, 4
      %v684 = vor.u32 %v683, %v679
      %v685 = vrot.slane %v684, 4
      %v687 = vshll.u32 %v387, 16
      %v689 = vrot.slane %v687, 5
      %v690 = vsel %vm402, %v685, %v689
      %v692 = vshrl.u32 %v388, 16
      %v694 = vrot.slane %v692, 4
      %v695 = vshll.u32 %v388, 16
      %v697 = vrot.slane %v695, 5
      %v698 = vor.u32 %v694, %v697
      %v699 = vrot.slane %v698, 4
      %v701 = vshll.u32 %v389, 16
      %v703 = vrot.slane %v701, 5
      %v704 = vsel %vm402, %v699, %v703
      %v705 = vshrl.u32 %v389, 16
      %v707 = vrot.slane %v705, 4
      %v708 = vor.u32 %v707, %v703
      %v709 = vrot.slane %v708, 4
      %v711 = vshll.u32 %v390, 16
      %v713 = vrot.slane %v711, 5
      %v714 = vsel %vm402, %v709, %v713
      %v716 = vshrl.u32 %v391, 16
      %v718 = vrot.slane %v716, 4
      %v719 = vshll.u32 %v391, 16
      %v721 = vrot.slane %v719, 5
      %v722 = vor.u32 %v718, %v721
      %v723 = vrot.slane %v722, 4
      %v725 = vshll.u32 %v392, 16
      %v727 = vrot.slane %v725, 5
      %v728 = vsel %vm402, %v723, %v727
      %v729 = vshrl.u32 %v392, 16
      %v731 = vrot.slane %v729, 4
      %v732 = vor.u32 %v731, %v727
      %v733 = vrot.slane %v732, 4
      %v735 = vshll.u32 %v393, 16
      %v737 = vrot.slane %v735, 5
      %v738 = vsel %vm402, %v733, %v737
      %v740 = vshrl.u32 %v394, 16
      %v742 = vrot.slane %v740, 4
      %v743 = vshll.u32 %v394, 16
      %v745 = vrot.slane %v743, 5
      %v746 = vor.u32 %v742, %v745
      %v747 = vrot.slane %v746, 4
      %v749 = vshll.u32 %v395, 16
      %v751 = vrot.slane %v749, 5
      %v752 = vsel %vm402, %v747, %v751
      %v753 = vshrl.u32 %v395, 16
      %v755 = vrot.slane %v753, 4
      %v756 = vor.u32 %v755, %v751
      %v757 = vrot.slane %v756, 4
      %v759 = vshll.u32 %v396, 16
      %v761 = vrot.slane %v759, 5
      %v762 = vsel %vm402, %v757, %v761
      %v764 = vshrl.u32 %v397, 16
      %v766 = vrot.slane %v764, 4
      %v767 = vshll.u32 %v397, 16
      %v769 = vrot.slane %v767, 5
      %v770 = vor.u32 %v766, %v769
      %v771 = vrot.slane %v770, 4
      %v773 = vshll.u32 %v398, 16
      %v775 = vrot.slane %v773, 5
      %v776 = vsel %vm402, %v771, %v775
      %v777 = vshrl.u32 %v398, 16
      %v779 = vrot.slane %v777, 4
      %v780 = vor.u32 %v779, %v775
      %v781 = vrot.slane %v780, 4
      %v783 = vshll.u32 %v399, 16
      %v785 = vrot.slane %v783, 5
      %v786 = vsel %vm402, %v781, %v785
      %v787 = vunpack.c.l.b16 %v416
      %v788 = vunpack.c.l.b16 %v426
      %v789 = vunpack.c.l.b16 %v440
      %v790 = vunpack.c.l.b16 %v450
      %v791 = vunpack.c.l.b16 %v464
      %v792 = vunpack.c.l.b16 %v474
      %v793 = vunpack.c.l.b16 %v488
      %v794 = vunpack.c.l.b16 %v498
      %v795 = vunpack.c.l.b16 %v512
      %v796 = vunpack.c.l.b16 %v522
      %v797 = vunpack.c.l.b16 %v536
      %v798 = vunpack.c.l.b16 %v546
      %v799 = vunpack.c.l.b16 %v560
      %v800 = vunpack.c.l.b16 %v570
      %v801 = vunpack.c.l.b16 %v584
      %v802 = vunpack.c.l.b16 %v594
      %v803 = vunpack.c.l.b16 %v608
      %v804 = vunpack.c.l.b16 %v618
      %v805 = vunpack.c.l.b16 %v632
      %v806 = vunpack.c.l.b16 %v642
      %v807 = vunpack.c.l.b16 %v656
      %v808 = vunpack.c.l.b16 %v666
      %v809 = vunpack.c.l.b16 %v680
      %v810 = vunpack.c.l.b16 %v690
      %v811 = vunpack.c.l.b16 %v704
      %v812 = vunpack.c.l.b16 %v714
      %v813 = vunpack.c.l.b16 %v728
      %v814 = vunpack.c.l.b16 %v738
      %v815 = vunpack.c.l.b16 %v752
      %v816 = vunpack.c.l.b16 %v762
      %v817 = vunpack.c.l.b16 %v776
      %v818 = vunpack.c.l.b16 %v786
      %v819 = vpack.c.b16 %v788, %v787
      %v820 = vpack.c.b16 %v790, %v789
      %v821 = vpack.c.b16 %v792, %v791
      %v822 = vpack.c.b16 %v794, %v793
      %v823 = vpack.c.b16 %v796, %v795
      %v824 = vpack.c.b16 %v798, %v797
      %v825 = vpack.c.b16 %v800, %v799
      %v826 = vpack.c.b16 %v802, %v801
      %v827 = vpack.c.b16 %v804, %v803
      %v828 = vpack.c.b16 %v806, %v805
      %v829 = vpack.c.b16 %v808, %v807
      %v830 = vpack.c.b16 %v810, %v809
      %v831 = vpack.c.b16 %v812, %v811
      %v832 = vpack.c.b16 %v814, %v813
      %v833 = vpack.c.b16 %v816, %v815
      %v834 = vpack.c.b16 %v818, %v817
      %835 = vrot.lane.b32.xlu0 %v819, 4
      %v836 = vpop.permute.xlu0 %835
      %837 = vrot.lane.b32.xlu0 %v820, 4
      %v838 = vpop.permute.xlu0 %837
      %839 = vrot.lane.b32.xlu0 %v821, 4
      %v840 = vpop.permute.xlu0 %839
      %841 = vrot.lane.b32.xlu0 %v822, 4
      %v842 = vpop.permute.xlu0 %841
      %843 = vrot.lane.b32.xlu0 %v823, 4
      %v844 = vpop.permute.xlu0 %843
      %845 = vrot.lane.b32.xlu0 %v824, 4
      %v846 = vpop.permute.xlu0 %845
      %847 = vrot.lane.b32.xlu0 %v825, 4
      %v848 = vpop.permute.xlu0 %847
      %849 = vrot.lane.b32.xlu0 %v826, 4
      %v850 = vpop.permute.xlu0 %849
      %851 = vrot.lane.b32.xlu0 %v827, 4
      %v852 = vpop.permute.xlu0 %851
      %853 = vrot.lane.b32.xlu0 %v828, 4
      %v854 = vpop.permute.xlu0 %853
      %855 = vrot.lane.b32.xlu0 %v829, 4
      %v856 = vpop.permute.xlu0 %855
      %857 = vrot.lane.b32.xlu0 %v830, 4
      %v858 = vpop.permute.xlu0 %857
      %859 = vrot.lane.b32.xlu0 %v831, 4
      %v860 = vpop.permute.xlu0 %859
      %861 = vrot.lane.b32.xlu0 %v832, 4
      %v862 = vpop.permute.xlu0 %861
      %863 = vrot.lane.b32.xlu0 %v833, 4
      %v864 = vpop.permute.xlu0 %863
      %865 = vrot.lane.b32.xlu0 %v834, 4
      %v866 = vpop.permute.xlu0 %865
      %vm883 = vcmask 64544
      %884 = vst.msk [vmem:[#allocation2] sm:$0xff] %vm883, %v836
      %885 = vst.msk [vmem:[#allocation2 + $0x8] sm:$0xff] %vm883, %v838
      %886 = vst.msk [vmem:[#allocation2 + $0x10] sm:$0xff] %vm883, %v840
      %887 = vst.msk [vmem:[#allocation2 + $0x18] sm:$0xff] %vm883, %v842
      %888 = vst.msk [vmem:[#allocation2 + $0x20] sm:$0xff] %vm883, %v844
      %889 = vst.msk [vmem:[#allocation2 + $0x28] sm:$0xff] %vm883, %v846
      %890 = vst.msk [vmem:[#allocation2 + $0x30] sm:$0xff] %vm883, %v848
      %891 = vst.msk [vmem:[#allocation2 + $0x38] sm:$0xff] %vm883, %v850
      %892 = vst.msk [vmem:[#allocation2 + $0x40] sm:$0xff] %vm883, %v852
      %893 = vst.msk [vmem:[#allocation2 + $0x48] sm:$0xff] %vm883, %v854
      %894 = vst.msk [vmem:[#allocation2 + $0x50] sm:$0xff] %vm883, %v856
      %895 = vst.msk [vmem:[#allocation2 + $0x58] sm:$0xff] %vm883, %v858
      %896 = vst.msk [vmem:[#allocation2 + $0x60] sm:$0xff] %vm883, %v860
      %897 = vst.msk [vmem:[#allocation2 + $0x68] sm:$0xff] %vm883, %v862
      %898 = vst.msk [vmem:[#allocation2 + $0x70] sm:$0xff] %vm883, %v864
      %899 = vst.msk [vmem:[#allocation2 + $0x78] sm:$0xff] %vm883, %v866
      %v900 = vld [vmem:[%s193] sm:$0xe]
      %v901 = vld [vmem:[%s193 + $0x4] sm:$0xf]
      %v902 = vld [vmem:[%s193 + $0x8] sm:$0x1]
      %v903 = vld [vmem:[%s193 + $0xc] sm:$0xe]
      %v904 = vld [vmem:[%s193 + $0x10] sm:$0xf]
      %v905 = vld [vmem:[%s193 + $0x14] sm:$0x1]
      %v906 = vld [vmem:[%s193 + $0x18] sm:$0xe]
      %v907 = vld [vmem:[%s193 + $0x1c] sm:$0xf]
      %v908 = vld [vmem:[%s193 + $0x20] sm:$0x1]
      %v909 = vld [vmem:[%s193 + $0x24] sm:$0xe]
      %v910 = vld [vmem:[%s193 + $0x28] sm:$0xf]
      %v911 = vld [vmem:[%s193 + $0x2c] sm:$0x1]
      %v912 = vld [vmem:[%s193 + $0x30] sm:$0xe]
      %v913 = vld [vmem:[%s193 + $0x34] sm:$0xf]
      %v914 = vld [vmem:[%s193 + $0x38] sm:$0x1]
      %v915 = vld [vmem:[%s193 + $0x3c] sm:$0xe]
      %v916 = vld [vmem:[%s193 + $0x40] sm:$0xf]
      %v917 = vld [vmem:[%s193 + $0x44] sm:$0x1]
      %v918 = vld [vmem:[%s193 + $0x48] sm:$0xe]
      %v919 = vld [vmem:[%s193 + $0x4c] sm:$0xf]
      %v920 = vld [vmem:[%s193 + $0x50] sm:$0x1]
      %v921 = vld [vmem:[%s193 + $0x54] sm:$0xe]
      %v922 = vld [vmem:[%s193 + $0x58] sm:$0xf]
      %v923 = vld [vmem:[%s193 + $0x5c] sm:$0x1]
      %v924 = vld [vmem:[%s193 + $0x60] sm:$0xe]
      %v925 = vld [vmem:[%s193 + $0x64] sm:$0xf]
      %v926 = vld [vmem:[%s193 + $0x68] sm:$0x1]
      %v927 = vld [vmem:[%s193 + $0x6c] sm:$0xe]
      %v928 = vld [vmem:[%s193 + $0x70] sm:$0xf]
      %v929 = vld [vmem:[%s193 + $0x74] sm:$0x1]
      %v930 = vld [vmem:[%s193 + $0x78] sm:$0xe]
      %v931 = vld [vmem:[%s193 + $0x7c] sm:$0xf]
      %v932 = vld [vmem:[%s193 + $0x80] sm:$0x1]
      %v933 = vld [vmem:[%s193 + $0x84] sm:$0xe]
      %v934 = vld [vmem:[%s193 + $0x88] sm:$0xf]
      %v935 = vld [vmem:[%s193 + $0x8c] sm:$0x1]
      %v936 = vld [vmem:[%s193 + $0x90] sm:$0xe]
      %v937 = vld [vmem:[%s193 + $0x94] sm:$0xf]
      %v938 = vld [vmem:[%s193 + $0x98] sm:$0x1]
      %v939 = vld [vmem:[%s193 + $0x9c] sm:$0xe]
      %v940 = vld [vmem:[%s193 + $0xa0] sm:$0xf]
      %v941 = vld [vmem:[%s193 + $0xa4] sm:$0x1]
      %v942 = vld [vmem:[%s193 + $0xa8] sm:$0xe]
      %v943 = vld [vmem:[%s193 + $0xac] sm:$0xf]
      %v944 = vld [vmem:[%s193 + $0xb0] sm:$0x1]
      %v945 = vld [vmem:[%s193 + $0xb4] sm:$0xe]
      %v946 = vld [vmem:[%s193 + $0xb8] sm:$0xf]
      %v947 = vld [vmem:[%s193 + $0xbc] sm:$0x1]
      %vm996 = vcmask 1042432
      %vm997 = vcmask 1046532
      %vm998 = vmor %vm996, %vm997
      %v999 = vrot.slane %v900, 5
      %v1000 = vrot.slane %v999, 4
      %v1001 = vrot.slane %v901, 5
      %v1002 = vsel %vm998, %v1000, %v1001
      %v1003 = vrot.slane %v1001, 4
      %v1004 = vrot.slane %v902, 5
      %v1005 = vsel %vm998, %v1003, %v1004
      %v1006 = vrot.slane %v903, 5
      %v1007 = vrot.slane %v1006, 4
      %v1008 = vrot.slane %v904, 5
      %v1009 = vsel %vm998, %v1007, %v1008
      %v1010 = vrot.slane %v1008, 4
      %v1011 = vrot.slane %v905, 5
      %v1012 = vsel %vm998, %v1010, %v1011
      %v1013 = vrot.slane %v906, 5
      %v1014 = vrot.slane %v1013, 4
      %v1015 = vrot.slane %v907, 5
      %v1016 = vsel %vm998, %v1014, %v1015
      %v1017 = vrot.slane %v1015, 4
      %v1018 = vrot.slane %v908, 5
      %v1019 = vsel %vm998, %v1017, %v1018
      %v1020 = vrot.slane %v909, 5
      %v1021 = vrot.slane %v1020, 4
      %v1022 = vrot.slane %v910, 5
      %v1023 = vsel %vm998, %v1021, %v1022
      %v1024 = vrot.slane %v1022, 4
      %v1025 = vrot.slane %v911, 5
      %v1026 = vsel %vm998, %v1024, %v1025
      %v1027 = vrot.slane %v912, 5
      %v1028 = vrot.slane %v1027, 4
      %v1029 = vrot.slane %v913, 5
      %v1030 = vsel %vm998, %v1028, %v1029
      %v1031 = vrot.slane %v1029, 4
      %v1032 = vrot.slane %v914, 5
      %v1033 = vsel %vm998, %v1031, %v1032
      %v1034 = vrot.slane %v915, 5
      %v1035 = vrot.slane %v1034, 4
      %v1036 = vrot.slane %v916, 5
      %v1037 = vsel %vm998, %v1035, %v1036
      %v1038 = vrot.slane %v1036, 4
      %v1039 = vrot.slane %v917, 5
      %v1040 = vsel %vm998, %v1038, %v1039
      %v1041 = vrot.slane %v918, 5
      %v1042 = vrot.slane %v1041, 4
      %v1043 = vrot.slane %v919, 5
      %v1044 = vsel %vm998, %v1042, %v1043
      %v1045 = vrot.slane %v1043, 4
      %v1046 = vrot.slane %v920, 5
      %v1047 = vsel %vm998, %v1045, %v1046
      %v1048 = vrot.slane %v921, 5
      %v1049 = vrot.slane %v1048, 4
      %v1050 = vrot.slane %v922, 5
      %v1051 = vsel %vm998, %v1049, %v1050
      %v1052 = vrot.slane %v1050, 4
      %v1053 = vrot.slane %v923, 5
      %v1054 = vsel %vm998, %v1052, %v1053
      %v1055 = vrot.slane %v924, 5
      %v1056 = vrot.slane %v1055, 4
      %v1057 = vrot.slane %v925, 5
      %v1058 = vsel %vm998, %v1056, %v1057
      %v1059 = vrot.slane %v1057, 4
      %v1060 = vrot.slane %v926, 5
      %v1061 = vsel %vm998, %v1059, %v1060
      %v1062 = vrot.slane %v927, 5
      %v1063 = vrot.slane %v1062, 4
      %v1064 = vrot.slane %v928, 5
      %v1065 = vsel %vm998, %v1063, %v1064
      %v1066 = vrot.slane %v1064, 4
      %v1067 = vrot.slane %v929, 5
      %v1068 = vsel %vm998, %v1066, %v1067
      %v1069 = vrot.slane %v930, 5
      %v1070 = vrot.slane %v1069, 4
      %v1071 = vrot.slane %v931, 5
      %v1072 = vsel %vm998, %v1070, %v1071
      %v1073 = vrot.slane %v1071, 4
      %v1074 = vrot.slane %v932, 5
      %v1075 = vsel %vm998, %v1073, %v1074
      %v1076 = vrot.slane %v933, 5
      %v1077 = vrot.slane %v1076, 4
      %v1078 = vrot.slane %v934, 5
      %v1079 = vsel %vm998, %v1077, %v1078
      %v1080 = vrot.slane %v1078, 4
      %v1081 = vrot.slane %v935, 5
      %v1082 = vsel %vm998, %v1080, %v1081
      %v1083 = vrot.slane %v936, 5
      %v1084 = vrot.slane %v1083, 4
      %v1085 = vrot.slane %v937, 5
      %v1086 = vsel %vm998, %v1084, %v1085
      %v1087 = vrot.slane %v1085, 4
      %v1088 = vrot.slane %v938, 5
      %v1089 = vsel %vm998, %v1087, %v1088
      %v1090 = vrot.slane %v939, 5
      %v1091 = vrot.slane %v1090, 4
      %v1092 = vrot.slane %v940, 5
      %v1093 = vsel %vm998, %v1091, %v1092
      %v1094 = vrot.slane %v1092, 4
      %v1095 = vrot.slane %v941, 5
      %v1096 = vsel %vm998, %v1094, %v1095
      %v1097 = vrot.slane %v942, 5
      %v1098 = vrot.slane %v1097, 4
      %v1099 = vrot.slane %v943, 5
      %v1100 = vsel %vm998, %v1098, %v1099
      %v1101 = vrot.slane %v1099, 4
      %v1102 = vrot.slane %v944, 5
      %v1103 = vsel %vm998, %v1101, %v1102
      %v1104 = vrot.slane %v945, 5
      %v1105 = vrot.slane %v1104, 4
      %v1106 = vrot.slane %v946, 5
      %v1107 = vsel %vm998, %v1105, %v1106
      %v1108 = vrot.slane %v1106, 4
      %v1109 = vrot.slane %v947, 5
      %v1110 = vsel %vm998, %v1108, %v1109
      %v1111 = vunpack.c.l.b16 %v1002
      %v1112 = vunpack.c.l.b16 %v1005
      %v1113 = vunpack.c.l.b16 %v1009
      %v1114 = vunpack.c.l.b16 %v1012
      %v1115 = vunpack.c.l.b16 %v1016
      %v1116 = vunpack.c.l.b16 %v1019
      %v1117 = vunpack.c.l.b16 %v1023
      %v1118 = vunpack.c.l.b16 %v1026
      %v1119 = vunpack.c.l.b16 %v1030
      %v1120 = vunpack.c.l.b16 %v1033
      %v1121 = vunpack.c.l.b16 %v1037
      %v1122 = vunpack.c.l.b16 %v1040
      %v1123 = vunpack.c.l.b16 %v1044
      %v1124 = vunpack.c.l.b16 %v1047
      %v1125 = vunpack.c.l.b16 %v1051
      %v1126 = vunpack.c.l.b16 %v1054
      %v1127 = vunpack.c.l.b16 %v1058
      %v1128 = vunpack.c.l.b16 %v1061
      %v1129 = vunpack.c.l.b16 %v1065
      %v1130 = vunpack.c.l.b16 %v1068
      %v1131 = vunpack.c.l.b16 %v1072
      %v1132 = vunpack.c.l.b16 %v1075
      %v1133 = vunpack.c.l.b16 %v1079
      %v1134 = vunpack.c.l.b16 %v1082
      %v1135 = vunpack.c.l.b16 %v1086
      %v1136 = vunpack.c.l.b16 %v1089
      %v1137 = vunpack.c.l.b16 %v1093
      %v1138 = vunpack.c.l.b16 %v1096
      %v1139 = vunpack.c.l.b16 %v1100
      %v1140 = vunpack.c.l.b16 %v1103
      %v1141 = vunpack.c.l.b16 %v1107
      %v1142 = vunpack.c.l.b16 %v1110
      %v1143 = vpack.c.b16 %v1112, %v1111
      %v1144 = vpack.c.b16 %v1114, %v1113
      %v1145 = vpack.c.b16 %v1116, %v1115
      %v1146 = vpack.c.b16 %v1118, %v1117
      %v1147 = vpack.c.b16 %v1120, %v1119
      %v1148 = vpack.c.b16 %v1122, %v1121
      %v1149 = vpack.c.b16 %v1124, %v1123
      %v1150 = vpack.c.b16 %v1126, %v1125
      %v1151 = vpack.c.b16 %v1128, %v1127
      %v1152 = vpack.c.b16 %v1130, %v1129
      %v1153 = vpack.c.b16 %v1132, %v1131
      %v1154 = vpack.c.b16 %v1134, %v1133
      %v1155 = vpack.c.b16 %v1136, %v1135
      %v1156 = vpack.c.b16 %v1138, %v1137
      %v1157 = vpack.c.b16 %v1140, %v1139
      %v1158 = vpack.c.b16 %v1142, %v1141
      %1159 = vrot.lane.b32.xlu0 %v1143, 8
      %v1160 = vpop.permute.xlu0 %1159
      %1161 = vrot.lane.b32.xlu0 %v1144, 8
      %v1162 = vpop.permute.xlu0 %1161
      %1163 = vrot.lane.b32.xlu0 %v1145, 8
      %v1164 = vpop.permute.xlu0 %1163
      %1165 = vrot.lane.b32.xlu0 %v1146, 8
      %v1166 = vpop.permute.xlu0 %1165
      %1167 = vrot.lane.b32.xlu0 %v1147, 8
      %v1168 = vpop.permute.xlu0 %1167
      %1169 = vrot.lane.b32.xlu0 %v1148, 8
      %v1170 = vpop.permute.xlu0 %1169
      %1171 = vrot.lane.b32.xlu0 %v1149, 8
      %v1172 = vpop.permute.xlu0 %1171
      %1173 = vrot.lane.b32.xlu0 %v1150, 8
      %v1174 = vpop.permute.xlu0 %1173
      %1175 = vrot.lane.b32.xlu0 %v1151, 8
      %v1176 = vpop.permute.xlu0 %1175
      %1177 = vrot.lane.b32.xlu0 %v1152, 8
      %v1178 = vpop.permute.xlu0 %1177
      %1179 = vrot.lane.b32.xlu0 %v1153, 8
      %v1180 = vpop.permute.xlu0 %1179
      %1181 = vrot.lane.b32.xlu0 %v1154, 8
      %v1182 = vpop.permute.xlu0 %1181
      %1183 = vrot.lane.b32.xlu0 %v1155, 8
      %v1184 = vpop.permute.xlu0 %1183
      %1185 = vrot.lane.b32.xlu0 %v1156, 8
      %v1186 = vpop.permute.xlu0 %1185
      %1187 = vrot.lane.b32.xlu0 %v1157, 8
      %v1188 = vpop.permute.xlu0 %1187
      %1189 = vrot.lane.b32.xlu0 %v1158, 8
      %v1190 = vpop.permute.xlu0 %1189
      %vm1207 = vcmask 97344
      %1208 = vst.msk [vmem:[#allocation2] sm:$0xff] %vm1207, %v1160
      %1209 = vst.msk [vmem:[#allocation2 + $0x8] sm:$0xff] %vm1207, %v1162
      %1210 = vst.msk [vmem:[#allocation2 + $0x10] sm:$0xff] %vm1207, %v1164
      %1211 = vst.msk [vmem:[#allocation2 + $0x18] sm:$0xff] %vm1207, %v1166
      %1212 = vst.msk [vmem:[#allocation2 + $0x20] sm:$0xff] %vm1207, %v1168
      %1213 = vst.msk [vmem:[#allocation2 + $0x28] sm:$0xff] %vm1207, %v1170
      %1214 = vst.msk [vmem:[#allocation2 + $0x30] sm:$0xff] %vm1207, %v1172
      %1215 = vst.msk [vmem:[#allocation2 + $0x38] sm:$0xff] %vm1207, %v1174
      %1216 = vst.msk [vmem:[#allocation2 + $0x40] sm:$0xff] %vm1207, %v1176
      %1217 = vst.msk [vmem:[#allocation2 + $0x48] sm:$0xff] %vm1207, %v1178
      %1218 = vst.msk [vmem:[#allocation2 + $0x50] sm:$0xff] %vm1207, %v1180
      %1219 = vst.msk [vmem:[#allocation2 + $0x58] sm:$0xff] %vm1207, %v1182
      %1220 = vst.msk [vmem:[#allocation2 + $0x60] sm:$0xff] %vm1207, %v1184
      %1221 = vst.msk [vmem:[#allocation2 + $0x68] sm:$0xff] %vm1207, %v1186
      %1222 = vst.msk [vmem:[#allocation2 + $0x70] sm:$0xff] %vm1207, %v1188
      %1223 = vst.msk [vmem:[#allocation2 + $0x78] sm:$0xff] %vm1207, %v1190
      %s1224 = scalar_lea.vmem %s193, 12
      %v1225 = vld [vmem:[%s1224] sm:$0xf]
      %v1226 = vld [vmem:[%s1224 + $0x4] sm:$0xf]
      %v1227 = vld [vmem:[%s1224 + $0xc] sm:$0xf]
      %v1228 = vld [vmem:[%s1224 + $0x10] sm:$0xf]
      %v1229 = vld [vmem:[%s1224 + $0x18] sm:$0xf]
      %v1230 = vld [vmem:[%s1224 + $0x1c] sm:$0xf]
      %v1231 = vld [vmem:[%s1224 + $0x24] sm:$0xf]
      %v1232 = vld [vmem:[%s1224 + $0x28] sm:$0xf]
      %v1233 = vld [vmem:[%s1224 + $0x30] sm:$0xf]
      %v1234 = vld [vmem:[%s1224 + $0x34] sm:$0xf]
      %v1235 = vld [vmem:[%s1224 + $0x3c] sm:$0xf]
      %v1236 = vld [vmem:[%s1224 + $0x40] sm:$0xf]
      %v1237 = vld [vmem:[%s1224 + $0x48] sm:$0xf]
      %v1238 = vld [vmem:[%s1224 + $0x4c] sm:$0xf]
      %v1239 = vld [vmem:[%s1224 + $0x54] sm:$0xf]
      %v1240 = vld [vmem:[%s1224 + $0x58] sm:$0xf]
      %v1241 = vld [vmem:[%s1224 + $0x60] sm:$0xf]
      %v1242 = vld [vmem:[%s1224 + $0x64] sm:$0xf]
      %v1243 = vld [vmem:[%s1224 + $0x6c] sm:$0xf]
      %v1244 = vld [vmem:[%s1224 + $0x70] sm:$0xf]
      %v1245 = vld [vmem:[%s1224 + $0x78] sm:$0xf]
      %v1246 = vld [vmem:[%s1224 + $0x7c] sm:$0xf]
      %v1247 = vld [vmem:[%s1224 + $0x84] sm:$0xf]
      %v1248 = vld [vmem:[%s1224 + $0x88] sm:$0xf]
      %v1249 = vld [vmem:[%s1224 + $0x90] sm:$0xf]
      %v1250 = vld [vmem:[%s1224 + $0x94] sm:$0xf]
      %v1251 = vld [vmem:[%s1224 + $0x9c] sm:$0xf]
      %v1252 = vld [vmem:[%s1224 + $0xa0] sm:$0xf]
      %v1253 = vld [vmem:[%s1224 + $0xa8] sm:$0xf]
      %v1254 = vld [vmem:[%s1224 + $0xac] sm:$0xf]
      %v1255 = vld [vmem:[%s1224 + $0xb4] sm:$0xf]
      %v1256 = vld [vmem:[%s1224 + $0xb8] sm:$0xf]
      %v1289 = vunpack.c.l.b16 %v1225
      %v1290 = vunpack.c.l.b16 %v1226
      %v1291 = vunpack.c.l.b16 %v1227
      %v1292 = vunpack.c.l.b16 %v1228
      %v1293 = vunpack.c.l.b16 %v1229
      %v1294 = vunpack.c.l.b16 %v1230
      %v1295 = vunpack.c.l.b16 %v1231
      %v1296 = vunpack.c.l.b16 %v1232
      %v1297 = vunpack.c.l.b16 %v1233
      %v1298 = vunpack.c.l.b16 %v1234
      %v1299 = vunpack.c.l.b16 %v1235
      %v1300 = vunpack.c.l.b16 %v1236
      %v1301 = vunpack.c.l.b16 %v1237
      %v1302 = vunpack.c.l.b16 %v1238
      %v1303 = vunpack.c.l.b16 %v1239
      %v1304 = vunpack.c.l.b16 %v1240
      %v1305 = vunpack.c.l.b16 %v1241
      %v1306 = vunpack.c.l.b16 %v1242
      %v1307 = vunpack.c.l.b16 %v1243
      %v1308 = vunpack.c.l.b16 %v1244
      %v1309 = vunpack.c.l.b16 %v1245
      %v1310 = vunpack.c.l.b16 %v1246
      %v1311 = vunpack.c.l.b16 %v1247
      %v1312 = vunpack.c.l.b16 %v1248
      %v1313 = vunpack.c.l.b16 %v1249
      %v1314 = vunpack.c.l.b16 %v1250
      %v1315 = vunpack.c.l.b16 %v1251
      %v1316 = vunpack.c.l.b16 %v1252
      %v1317 = vunpack.c.l.b16 %v1253
      %v1318 = vunpack.c.l.b16 %v1254
      %v1319 = vunpack.c.l.b16 %v1255
      %v1320 = vunpack.c.l.b16 %v1256
      %v1321 = vpack.c.b16 %v1290, %v1289
      %v1322 = vpack.c.b16 %v1292, %v1291
      %v1323 = vpack.c.b16 %v1294, %v1293
      %v1324 = vpack.c.b16 %v1296, %v1295
      %v1325 = vpack.c.b16 %v1298, %v1297
      %v1326 = vpack.c.b16 %v1300, %v1299
      %v1327 = vpack.c.b16 %v1302, %v1301
      %v1328 = vpack.c.b16 %v1304, %v1303
      %v1329 = vpack.c.b16 %v1306, %v1305
      %v1330 = vpack.c.b16 %v1308, %v1307
      %v1331 = vpack.c.b16 %v1310, %v1309
      %v1332 = vpack.c.b16 %v1312, %v1311
      %v1333 = vpack.c.b16 %v1314, %v1313
      %v1334 = vpack.c.b16 %v1316, %v1315
      %v1335 = vpack.c.b16 %v1318, %v1317
      %v1336 = vpack.c.b16 %v1320, %v1319
      %1337 = vrot.lane.b32.xlu0 %v1321, 12
      %v1338 = vpop.permute.xlu0 %1337
      %1339 = vrot.lane.b32.xlu0 %v1322, 12
      %v1340 = vpop.permute.xlu0 %1339
      %1341 = vrot.lane.b32.xlu0 %v1323, 12
      %v1342 = vpop.permute.xlu0 %1341
      %1343 = vrot.lane.b32.xlu0 %v1324, 12
      %v1344 = vpop.permute.xlu0 %1343
      %1345 = vrot.lane.b32.xlu0 %v1325, 12
      %v1346 = vpop.permute.xlu0 %1345
      %1347 = vrot.lane.b32.xlu0 %v1326, 12
      %v1348 = vpop.permute.xlu0 %1347
      %1349 = vrot.lane.b32.xlu0 %v1327, 12
      %v1350 = vpop.permute.xlu0 %1349
      %1351 = vrot.lane.b32.xlu0 %v1328, 12
      %v1352 = vpop.permute.xlu0 %1351
      %1353 = vrot.lane.b32.xlu0 %v1329, 12
      %v1354 = vpop.permute.xlu0 %1353
      %1355 = vrot.lane.b32.xlu0 %v1330, 12
      %v1356 = vpop.permute.xlu0 %1355
      %1357 = vrot.lane.b32.xlu0 %v1331, 12
      %v1358 = vpop.permute.xlu0 %1357
      %1359 = vrot.lane.b32.xlu0 %v1332, 12
      %v1360 = vpop.permute.xlu0 %1359
      %1361 = vrot.lane.b32.xlu0 %v1333, 12
      %v1362 = vpop.permute.xlu0 %1361
      %1363 = vrot.lane.b32.xlu0 %v1334, 12
      %v1364 = vpop.permute.xlu0 %1363
      %1365 = vrot.lane.b32.xlu0 %v1335, 12
      %v1366 = vpop.permute.xlu0 %1365
      %1367 = vrot.lane.b32.xlu0 %v1336, 12
      %v1368 = vpop.permute.xlu0 %1367
      %vm1385 = vcmask 130144
      %1386 = vst.msk [vmem:[#allocation2] sm:$0xff] %vm1385, %v1338
      %1387 = vst.msk [vmem:[#allocation2 + $0x8] sm:$0xff] %vm1385, %v1340
      %1388 = vst.msk [vmem:[#allocation2 + $0x10] sm:$0xff] %vm1385, %v1342
      %1389 = vst.msk [vmem:[#allocation2 + $0x18] sm:$0xff] %vm1385, %v1344
      %1390 = vst.msk [vmem:[#allocation2 + $0x20] sm:$0xff] %vm1385, %v1346
      %1391 = vst.msk [vmem:[#allocation2 + $0x28] sm:$0xff] %vm1385, %v1348
      %1392 = vst.msk [vmem:[#allocation2 + $0x30] sm:$0xff] %vm1385, %v1350
      %1393 = vst.msk [vmem:[#allocation2 + $0x38] sm:$0xff] %vm1385, %v1352
      %1394 = vst.msk [vmem:[#allocation2 + $0x40] sm:$0xff] %vm1385, %v1354
      %1395 = vst.msk [vmem:[#allocation2 + $0x48] sm:$0xff] %vm1385, %v1356
      %1396 = vst.msk [vmem:[#allocation2 + $0x50] sm:$0xff] %vm1385, %v1358
      %1397 = vst.msk [vmem:[#allocation2 + $0x58] sm:$0xff] %vm1385, %v1360
      %1398 = vst.msk [vmem:[#allocation2 + $0x60] sm:$0xff] %vm1385, %v1362
      %1399 = vst.msk [vmem:[#allocation2 + $0x68] sm:$0xff] %vm1385, %v1364
      %1400 = vst.msk [vmem:[#allocation2 + $0x70] sm:$0xff] %vm1385, %v1366
      %1401 = vst.msk [vmem:[#allocation2 + $0x78] sm:$0xff] %vm1385, %v1368
      %v1402 = vld [vmem:[%s1224] sm:$0xf]
      %v1403 = vld [vmem:[%s1224 + $0x4] sm:$0xf]
      %v1404 = vld [vmem:[%s1224 + $0x8] sm:$0x1]
      %v1405 = vld [vmem:[%s1224 + $0xc] sm:$0xf]
      %v1406 = vld [vmem:[%s1224 + $0x10] sm:$0xf]
      %v1407 = vld [vmem:[%s1224 + $0x14] sm:$0x1]
      %v1408 = vld [vmem:[%s1224 + $0x18] sm:$0xf]
      %v1409 = vld [vmem:[%s1224 + $0x1c] sm:$0xf]
      %v1410 = vld [vmem:[%s1224 + $0x20] sm:$0x1]
      %v1411 = vld [vmem:[%s1224 + $0x24] sm:$0xf]
      %v1412 = vld [vmem:[%s1224 + $0x28] sm:$0xf]
      %v1413 = vld [vmem:[%s1224 + $0x2c] sm:$0x1]
      %v1414 = vld [vmem:[%s1224 + $0x30] sm:$0xf]
      %v1415 = vld [vmem:[%s1224 + $0x34] sm:$0xf]
      %v1416 = vld [vmem:[%s1224 + $0x38] sm:$0x1]
      %v1417 = vld [vmem:[%s1224 + $0x3c] sm:$0xf]
      %v1418 = vld [vmem:[%s1224 + $0x40] sm:$0xf]
      %v1419 = vld [vmem:[%s1224 + $0x44] sm:$0x1]
      %v1420 = vld [vmem:[%s1224 + $0x48] sm:$0xf]
      %v1421 = vld [vmem:[%s1224 + $0x4c] sm:$0xf]
      %v1422 = vld [vmem:[%s1224 + $0x50] sm:$0x1]
      %v1423 = vld [vmem:[%s1224 + $0x54] sm:$0xf]
      %v1424 = vld [vmem:[%s1224 + $0x58] sm:$0xf]
      %v1425 = vld [vmem:[%s1224 + $0x5c] sm:$0x1]
      %v1426 = vld [vmem:[%s1224 + $0x60] sm:$0xf]
      %v1427 = vld [vmem:[%s1224 + $0x64] sm:$0xf]
      %v1428 = vld [vmem:[%s1224 + $0x68] sm:$0x1]
      %v1429 = vld [vmem:[%s1224 + $0x6c] sm:$0xf]
      %v1430 = vld [vmem:[%s1224 + $0x70] sm:$0xf]
      %v1431 = vld [vmem:[%s1224 + $0x74] sm:$0x1]
      %v1432 = vld [vmem:[%s1224 + $0x78] sm:$0xf]
      %v1433 = vld [vmem:[%s1224 + $0x7c] sm:$0xf]
      %v1434 = vld [vmem:[%s1224 + $0x80] sm:$0x1]
      %v1435 = vld [vmem:[%s1224 + $0x84] sm:$0xf]
      %v1436 = vld [vmem:[%s1224 + $0x88] sm:$0xf]
      %v1437 = vld [vmem:[%s1224 + $0x8c] sm:$0x1]
      %v1438 = vld [vmem:[%s1224 + $0x90] sm:$0xf]
      %v1439 = vld [vmem:[%s1224 + $0x94] sm:$0xf]
      %v1440 = vld [vmem:[%s1224 + $0x98] sm:$0x1]
      %v1441 = vld [vmem:[%s1224 + $0x9c] sm:$0xf]
      %v1442 = vld [vmem:[%s1224 + $0xa0] sm:$0xf]
      %v1443 = vld [vmem:[%s1224 + $0xa4] sm:$0x1]
      %v1444 = vld [vmem:[%s1224 + $0xa8] sm:$0xf]
      %v1445 = vld [vmem:[%s1224 + $0xac] sm:$0xf]
      %v1446 = vld [vmem:[%s1224 + $0xb0] sm:$0x1]
      %v1447 = vld [vmem:[%s1224 + $0xb4] sm:$0xf]
      %v1448 = vld [vmem:[%s1224 + $0xb8] sm:$0xf]
      %v1449 = vld [vmem:[%s1224 + $0xbc] sm:$0x1]
      %v1451 = vshrl.u32 %v1402, 16
      %v1453 = vrot.slane %v1451, 4
      %v1454 = vshll.u32 %v1402, 16
      %v1456 = vrot.slane %v1454, 5
      %v1457 = vor.u32 %v1453, %v1456
      %v1458 = vrot.slane %v1457, 4
      %v1460 = vshll.u32 %v1403, 16
      %v1462 = vrot.slane %v1460, 5
      %v1463 = vsel %vm402, %v1458, %v1462
      %v1464 = vshrl.u32 %v1403, 16
      %v1466 = vrot.slane %v1464, 4
      %v1467 = vor.u32 %v1466, %v1462
      %v1468 = vrot.slane %v1467, 4
      %v1470 = vshll.u32 %v1404, 16
      %v1472 = vrot.slane %v1470, 5
      %v1473 = vsel %vm402, %v1468, %v1472
      %v1475 = vshrl.u32 %v1405, 16
      %v1477 = vrot.slane %v1475, 4
      %v1478 = vshll.u32 %v1405, 16
      %v1480 = vrot.slane %v1478, 5
      %v1481 = vor.u32 %v1477, %v1480
      %v1482 = vrot.slane %v1481, 4
      %v1484 = vshll.u32 %v1406, 16
      %v1486 = vrot.slane %v1484, 5
      %v1487 = vsel %vm402, %v1482, %v1486
      %v1488 = vshrl.u32 %v1406, 16
      %v1490 = vrot.slane %v1488, 4
      %v1491 = vor.u32 %v1490, %v1486
      %v1492 = vrot.slane %v1491, 4
      %v1494 = vshll.u32 %v1407, 16
      %v1496 = vrot.slane %v1494, 5
      %v1497 = vsel %vm402, %v1492, %v1496
      %v1499 = vshrl.u32 %v1408, 16
      %v1501 = vrot.slane %v1499, 4
      %v1502 = vshll.u32 %v1408, 16
      %v1504 = vrot.slane %v1502, 5
      %v1505 = vor.u32 %v1501, %v1504
      %v1506 = vrot.slane %v1505, 4
      %v1508 = vshll.u32 %v1409, 16
      %v1510 = vrot.slane %v1508, 5
      %v1511 = vsel %vm402, %v1506, %v1510
      %v1512 = vshrl.u32 %v1409, 16
      %v1514 = vrot.slane %v1512, 4
      %v1515 = vor.u32 %v1514, %v1510
      %v1516 = vrot.slane %v1515, 4
      %v1518 = vshll.u32 %v1410, 16
      %v1520 = vrot.slane %v1518, 5
      %v1521 = vsel %vm402, %v1516, %v1520
      %v1523 = vshrl.u32 %v1411, 16
      %v1525 = vrot.slane %v1523, 4
      %v1526 = vshll.u32 %v1411, 16
      %v1528 = vrot.slane %v1526, 5
      %v1529 = vor.u32 %v1525, %v1528
      %v1530 = vrot.slane %v1529, 4
      %v1532 = vshll.u32 %v1412, 16
      %v1534 = vrot.slane %v1532, 5
      %v1535 = vsel %vm402, %v1530, %v1534
      %v1536 = vshrl.u32 %v1412, 16
      %v1538 = vrot.slane %v1536, 4
      %v1539 = vor.u32 %v1538, %v1534
      %v1540 = vrot.slane %v1539, 4
      %v1542 = vshll.u32 %v1413, 16
      %v1544 = vrot.slane %v1542, 5
      %v1545 = vsel %vm402, %v1540, %v1544
      %v1547 = vshrl.u32 %v1414, 16
      %v1549 = vrot.slane %v1547, 4
      %v1550 = vshll.u32 %v1414, 16
      %v1552 = vrot.slane %v1550, 5
      %v1553 = vor.u32 %v1549, %v1552
      %v1554 = vrot.slane %v1553, 4
      %v1556 = vshll.u32 %v1415, 16
      %v1558 = vrot.slane %v1556, 5
      %v1559 = vsel %vm402, %v1554, %v1558
      %v1560 = vshrl.u32 %v1415, 16
      %v1562 = vrot.slane %v1560, 4
      %v1563 = vor.u32 %v1562, %v1558
      %v1564 = vrot.slane %v1563, 4
      %v1566 = vshll.u32 %v1416, 16
      %v1568 = vrot.slane %v1566, 5
      %v1569 = vsel %vm402, %v1564, %v1568
      %v1571 = vshrl.u32 %v1417, 16
      %v1573 = vrot.slane %v1571, 4
      %v1574 = vshll.u32 %v1417, 16
      %v1576 = vrot.slane %v1574, 5
      %v1577 = vor.u32 %v1573, %v1576
      %v1578 = vrot.slane %v1577, 4
      %v1580 = vshll.u32 %v1418, 16
      %v1582 = vrot.slane %v1580, 5
      %v1583 = vsel %vm402, %v1578, %v1582
      %v1584 = vshrl.u32 %v1418, 16
      %v1586 = vrot.slane %v1584, 4
      %v1587 = vor.u32 %v1586, %v1582
      %v1588 = vrot.slane %v1587, 4
      %v1590 = vshll.u32 %v1419, 16
      %v1592 = vrot.slane %v1590, 5
      %v1593 = vsel %vm402, %v1588, %v1592
      %v1595 = vshrl.u32 %v1420, 16
      %v1597 = vrot.slane %v1595, 4
      %v1598 = vshll.u32 %v1420, 16
      %v1600 = vrot.slane %v1598, 5
      %v1601 = vor.u32 %v1597, %v1600
      %v1602 = vrot.slane %v1601, 4
      %v1604 = vshll.u32 %v1421, 16
      %v1606 = vrot.slane %v1604, 5
      %v1607 = vsel %vm402, %v1602, %v1606
      %v1608 = vshrl.u32 %v1421, 16
      %v1610 = vrot.slane %v1608, 4
      %v1611 = vor.u32 %v1610, %v1606
      %v1612 = vrot.slane %v1611, 4
      %v1614 = vshll.u32 %v1422, 16
      %v1616 = vrot.slane %v1614, 5
      %v1617 = vsel %vm402, %v1612, %v1616
      %v1619 = vshrl.u32 %v1423, 16
      %v1621 = vrot.slane %v1619, 4
      %v1622 = vshll.u32 %v1423, 16
      %v1624 = vrot.slane %v1622, 5
      %v1625 = vor.u32 %v1621, %v1624
      %v1626 = vrot.slane %v1625, 4
      %v1628 = vshll.u32 %v1424, 16
      %v1630 = vrot.slane %v1628, 5
      %v1631 = vsel %vm402, %v1626, %v1630
      %v1632 = vshrl.u32 %v1424, 16
      %v1634 = vrot.slane %v1632, 4
      %v1635 = vor.u32 %v1634, %v1630
      %v1636 = vrot.slane %v1635, 4
      %v1638 = vshll.u32 %v1425, 16
      %v1640 = vrot.slane %v1638, 5
      %v1641 = vsel %vm402, %v1636, %v1640
      %v1643 = vshrl.u32 %v1426, 16
      %v1645 = vrot.slane %v1643, 4
      %v1646 = vshll.u32 %v1426, 16
      %v1648 = vrot.slane %v1646, 5
      %v1649 = vor.u32 %v1645, %v1648
      %v1650 = vrot.slane %v1649, 4
      %v1652 = vshll.u32 %v1427, 16
      %v1654 = vrot.slane %v1652, 5
      %v1655 = vsel %vm402, %v1650, %v1654
      %v1656 = vshrl.u32 %v1427, 16
      %v1658 = vrot.slane %v1656, 4
      %v1659 = vor.u32 %v1658, %v1654
      %v1660 = vrot.slane %v1659, 4
      %v1662 = vshll.u32 %v1428, 16
      %v1664 = vrot.slane %v1662, 5
      %v1665 = vsel %vm402, %v1660, %v1664
      %v1667 = vshrl.u32 %v1429, 16
      %v1669 = vrot.slane %v1667, 4
      %v1670 = vshll.u32 %v1429, 16
      %v1672 = vrot.slane %v1670, 5
      %v1673 = vor.u32 %v1669, %v1672
      %v1674 = vrot.slane %v1673, 4
      %v1676 = vshll.u32 %v1430, 16
      %v1678 = vrot.slane %v1676, 5
      %v1679 = vsel %vm402, %v1674, %v1678
      %v1680 = vshrl.u32 %v1430, 16
      %v1682 = vrot.slane %v1680, 4
      %v1683 = vor.u32 %v1682, %v1678
      %v1684 = vrot.slane %v1683, 4
      %v1686 = vshll.u32 %v1431, 16
      %v1688 = vrot.slane %v1686, 5
      %v1689 = vsel %vm402, %v1684, %v1688
      %v1691 = vshrl.u32 %v1432, 16
      %v1693 = vrot.slane %v1691, 4
      %v1694 = vshll.u32 %v1432, 16
      %v1696 = vrot.slane %v1694, 5
      %v1697 = vor.u32 %v1693, %v1696
      %v1698 = vrot.slane %v1697, 4
      %v1700 = vshll.u32 %v1433, 16
      %v1702 = vrot.slane %v1700, 5
      %v1703 = vsel %vm402, %v1698, %v1702
      %v1704 = vshrl.u32 %v1433, 16
      %v1706 = vrot.slane %v1704, 4
      %v1707 = vor.u32 %v1706, %v1702
      %v1708 = vrot.slane %v1707, 4
      %v1710 = vshll.u32 %v1434, 16
      %v1712 = vrot.slane %v1710, 5
      %v1713 = vsel %vm402, %v1708, %v1712
      %v1715 = vshrl.u32 %v1435, 16
      %v1717 = vrot.slane %v1715, 4
      %v1718 = vshll.u32 %v1435, 16
      %v1720 = vrot.slane %v1718, 5
      %v1721 = vor.u32 %v1717, %v1720
      %v1722 = vrot.slane %v1721, 4
      %v1724 = vshll.u32 %v1436, 16
      %v1726 = vrot.slane %v1724, 5
      %v1727 = vsel %vm402, %v1722, %v1726
      %v1728 = vshrl.u32 %v1436, 16
      %v1730 = vrot.slane %v1728, 4
      %v1731 = vor.u32 %v1730, %v1726
      %v1732 = vrot.slane %v1731, 4
      %v1734 = vshll.u32 %v1437, 16
      %v1736 = vrot.slane %v1734, 5
      %v1737 = vsel %vm402, %v1732, %v1736
      %v1739 = vshrl.u32 %v1438, 16
      %v1741 = vrot.slane %v1739, 4
      %v1742 = vshll.u32 %v1438, 16
      %v1744 = vrot.slane %v1742, 5
      %v1745 = vor.u32 %v1741, %v1744
      %v1746 = vrot.slane %v1745, 4
      %v1748 = vshll.u32 %v1439, 16
      %v1750 = vrot.slane %v1748, 5
      %v1751 = vsel %vm402, %v1746, %v1750
      %v1752 = vshrl.u32 %v1439, 16
      %v1754 = vrot.slane %v1752, 4
      %v1755 = vor.u32 %v1754, %v1750
      %v1756 = vrot.slane %v1755, 4
      %v1758 = vshll.u32 %v1440, 16
      %v1760 = vrot.slane %v1758, 5
      %v1761 = vsel %vm402, %v1756, %v1760
      %v1763 = vshrl.u32 %v1441, 16
      %v1765 = vrot.slane %v1763, 4
      %v1766 = vshll.u32 %v1441, 16
      %v1768 = vrot.slane %v1766, 5
      %v1769 = vor.u32 %v1765, %v1768
      %v1770 = vrot.slane %v1769, 4
      %v1772 = vshll.u32 %v1442, 16
      %v1774 = vrot.slane %v1772, 5
      %v1775 = vsel %vm402, %v1770, %v1774
      %v1776 = vshrl.u32 %v1442, 16
      %v1778 = vrot.slane %v1776, 4
      %v1779 = vor.u32 %v1778, %v1774
      %v1780 = vrot.slane %v1779, 4
      %v1782 = vshll.u32 %v1443, 16
      %v1784 = vrot.slane %v1782, 5
      %v1785 = vsel %vm402, %v1780, %v1784
      %v1787 = vshrl.u32 %v1444, 16
      %v1789 = vrot.slane %v1787, 4
      %v1790 = vshll.u32 %v1444, 16
      %v1792 = vrot.slane %v1790, 5
      %v1793 = vor.u32 %v1789, %v1792
      %v1794 = vrot.slane %v1793, 4
      %v1796 = vshll.u32 %v1445, 16
      %v1798 = vrot.slane %v1796, 5
      %v1799 = vsel %vm402, %v1794, %v1798
      %v1800 = vshrl.u32 %v1445, 16
      %v1802 = vrot.slane %v1800, 4
      %v1803 = vor.u32 %v1802, %v1798
      %v1804 = vrot.slane %v1803, 4
      %v1806 = vshll.u32 %v1446, 16
      %v1808 = vrot.slane %v1806, 5
      %v1809 = vsel %vm402, %v1804, %v1808
      %v1811 = vshrl.u32 %v1447, 16
      %v1813 = vrot.slane %v1811, 4
      %v1814 = vshll.u32 %v1447, 16
      %v1816 = vrot.slane %v1814, 5
      %v1817 = vor.u32 %v1813, %v1816
      %v1818 = vrot.slane %v1817, 4
      %v1820 = vshll.u32 %v1448, 16
      %v1822 = vrot.slane %v1820, 5
      %v1823 = vsel %vm402, %v1818, %v1822
      %v1824 = vshrl.u32 %v1448, 16
      %v1826 = vrot.slane %v1824, 4
      %v1827 = vor.u32 %v1826, %v1822
      %v1828 = vrot.slane %v1827, 4
      %v1830 = vshll.u32 %v1449, 16
      %v1832 = vrot.slane %v1830, 5
      %v1833 = vsel %vm402, %v1828, %v1832
      %v1834 = vunpack.c.l.b16 %v1463
      %v1835 = vunpack.c.l.b16 %v1473
      %v1836 = vunpack.c.l.b16 %v1487
      %v1837 = vunpack.c.l.b16 %v1497
      %v1838 = vunpack.c.l.b16 %v1511
      %v1839 = vunpack.c.l.b16 %v1521
      %v1840 = vunpack.c.l.b16 %v1535
      %v1841 = vunpack.c.l.b16 %v1545
      %v1842 = vunpack.c.l.b16 %v1559
      %v1843 = vunpack.c.l.b16 %v1569
      %v1844 = vunpack.c.l.b16 %v1583
      %v1845 = vunpack.c.l.b16 %v1593
      %v1846 = vunpack.c.l.b16 %v1607
      %v1847 = vunpack.c.l.b16 %v1617
      %v1848 = vunpack.c.l.b16 %v1631
      %v1849 = vunpack.c.l.b16 %v1641
      %v1850 = vunpack.c.l.b16 %v1655
      %v1851 = vunpack.c.l.b16 %v1665
      %v1852 = vunpack.c.l.b16 %v1679
      %v1853 = vunpack.c.l.b16 %v1689
      %v1854 = vunpack.c.l.b16 %v1703
      %v1855 = vunpack.c.l.b16 %v1713
      %v1856 = vunpack.c.l.b16 %v1727
      %v1857 = vunpack.c.l.b16 %v1737
      %v1858 = vunpack.c.l.b16 %v1751
      %v1859 = vunpack.c.l.b16 %v1761
      %v1860 = vunpack.c.l.b16 %v1775
      %v1861 = vunpack.c.l.b16 %v1785
      %v1862 = vunpack.c.l.b16 %v1799
      %v1863 = vunpack.c.l.b16 %v1809
      %v1864 = vunpack.c.l.b16 %v1823
      %v1865 = vunpack.c.l.b16 %v1833
      %v1866 = vpack.c.b16 %v1835, %v1834
      %v1867 = vpack.c.b16 %v1837, %v1836
      %v1868 = vpack.c.b16 %v1839, %v1838
      %v1869 = vpack.c.b16 %v1841, %v1840
      %v1870 = vpack.c.b16 %v1843, %v1842
      %v1871 = vpack.c.b16 %v1845, %v1844
      %v1872 = vpack.c.b16 %v1847, %v1846
      %v1873 = vpack.c.b16 %v1849, %v1848
      %v1874 = vpack.c.b16 %v1851, %v1850
      %v1875 = vpack.c.b16 %v1853, %v1852
      %v1876 = vpack.c.b16 %v1855, %v1854
      %v1877 = vpack.c.b16 %v1857, %v1856
      %v1878 = vpack.c.b16 %v1859, %v1858
      %v1879 = vpack.c.b16 %v1861, %v1860
      %v1880 = vpack.c.b16 %v1863, %v1862
      %v1881 = vpack.c.b16 %v1865, %v1864
      %1882 = vrot.lane.b32.xlu0 %v1866, 16
      %v1883 = vpop.permute.xlu0 %1882
      %1884 = vrot.lane.b32.xlu0 %v1867, 16
      %v1885 = vpop.permute.xlu0 %1884
      %1886 = vrot.lane.b32.xlu0 %v1868, 16
      %v1887 = vpop.permute.xlu0 %1886
      %1888 = vrot.lane.b32.xlu0 %v1869, 16
      %v1889 = vpop.permute.xlu0 %1888
      %1890 = vrot.lane.b32.xlu0 %v1870, 16
      %v1891 = vpop.permute.xlu0 %1890
      %1892 = vrot.lane.b32.xlu0 %v1871, 16
      %v1893 = vpop.permute.xlu0 %1892
      %1894 = vrot.lane.b32.xlu0 %v1872, 16
      %v1895 = vpop.permute.xlu0 %1894
      %1896 = vrot.lane.b32.xlu0 %v1873, 16
      %v1897 = vpop.permute.xlu0 %1896
      %1898 = vrot.lane.b32.xlu0 %v1874, 16
      %v1899 = vpop.permute.xlu0 %1898
      %1900 = vrot.lane.b32.xlu0 %v1875, 16
      %v1901 = vpop.permute.xlu0 %1900
      %1902 = vrot.lane.b32.xlu0 %v1876, 16
      %v1903 = vpop.permute.xlu0 %1902
      %1904 = vrot.lane.b32.xlu0 %v1877, 16
      %v1905 = vpop.permute.xlu0 %1904
      %1906 = vrot.lane.b32.xlu0 %v1878, 16
      %v1907 = vpop.permute.xlu0 %1906
      %1908 = vrot.lane.b32.xlu0 %v1879, 16
      %v1909 = vpop.permute.xlu0 %1908
      %1910 = vrot.lane.b32.xlu0 %v1880, 16
      %v1911 = vpop.permute.xlu0 %1910
      %1912 = vrot.lane.b32.xlu0 %v1881, 16
      %v1913 = vpop.permute.xlu0 %1912
      %vm1930 = vcmask 162944
      %1931 = vst.msk [vmem:[#allocation2] sm:$0xff] %vm1930, %v1883
      %1932 = vst.msk [vmem:[#allocation2 + $0x8] sm:$0xff] %vm1930, %v1885
      %1933 = vst.msk [vmem:[#allocation2 + $0x10] sm:$0xff] %vm1930, %v1887
      %1934 = vst.msk [vmem:[#allocation2 + $0x18] sm:$0xff] %vm1930, %v1889
      %1935 = vst.msk [vmem:[#allocation2 + $0x20] sm:$0xff] %vm1930, %v1891
      %1936 = vst.msk [vmem:[#allocation2 + $0x28] sm:$0xff] %vm1930, %v1893
      %1937 = vst.msk [vmem:[#allocation2 + $0x30] sm:$0xff] %vm1930, %v1895
      %1938 = vst.msk [vmem:[#allocation2 + $0x38] sm:$0xff] %vm1930, %v1897
      %1939 = vst.msk [vmem:[#allocation2 + $0x40] sm:$0xff] %vm1930, %v1899
      %1940 = vst.msk [vmem:[#allocation2 + $0x48] sm:$0xff] %vm1930, %v1901
      %1941 = vst.msk [vmem:[#allocation2 + $0x50] sm:$0xff] %vm1930, %v1903
      %1942 = vst.msk [vmem:[#allocation2 + $0x58] sm:$0xff] %vm1930, %v1905
      %1943 = vst.msk [vmem:[#allocation2 + $0x60] sm:$0xff] %vm1930, %v1907
      %1944 = vst.msk [vmem:[#allocation2 + $0x68] sm:$0xff] %vm1930, %v1909
      %1945 = vst.msk [vmem:[#allocation2 + $0x70] sm:$0xff] %vm1930, %v1911
      %1946 = vst.msk [vmem:[#allocation2 + $0x78] sm:$0xff] %vm1930, %v1913
      %v1947 = vld [vmem:[%s1224] sm:$0xe]
      %v1948 = vld [vmem:[%s1224 + $0x4] sm:$0xf]
      %v1949 = vld [vmem:[%s1224 + $0x8] sm:$0x1]
      %v1950 = vld [vmem:[%s1224 + $0xc] sm:$0xe]
      %v1951 = vld [vmem:[%s1224 + $0x10] sm:$0xf]
      %v1952 = vld [vmem:[%s1224 + $0x14] sm:$0x1]
      %v1953 = vld [vmem:[%s1224 + $0x18] sm:$0xe]
      %v1954 = vld [vmem:[%s1224 + $0x1c] sm:$0xf]
      %v1955 = vld [vmem:[%s1224 + $0x20] sm:$0x1]
      %v1956 = vld [vmem:[%s1224 + $0x24] sm:$0xe]
      %v1957 = vld [vmem:[%s1224 + $0x28] sm:$0xf]
      %v1958 = vld [vmem:[%s1224 + $0x2c] sm:$0x1]
      %v1959 = vld [vmem:[%s1224 + $0x30] sm:$0xe]
      %v1960 = vld [vmem:[%s1224 + $0x34] sm:$0xf]
      %v1961 = vld [vmem:[%s1224 + $0x38] sm:$0x1]
      %v1962 = vld [vmem:[%s1224 + $0x3c] sm:$0xe]
      %v1963 = vld [vmem:[%s1224 + $0x40] sm:$0xf]
      %v1964 = vld [vmem:[%s1224 + $0x44] sm:$0x1]
      %v1965 = vld [vmem:[%s1224 + $0x48] sm:$0xe]
      %v1966 = vld [vmem:[%s1224 + $0x4c] sm:$0xf]
      %v1967 = vld [vmem:[%s1224 + $0x50] sm:$0x1]
      %v1968 = vld [vmem:[%s1224 + $0x54] sm:$0xe]
      %v1969 = vld [vmem:[%s1224 + $0x58] sm:$0xf]
      %v1970 = vld [vmem:[%s1224 + $0x5c] sm:$0x1]
      %v1971 = vld [vmem:[%s1224 + $0x60] sm:$0xe]
      %v1972 = vld [vmem:[%s1224 + $0x64] sm:$0xf]
      %v1973 = vld [vmem:[%s1224 + $0x68] sm:$0x1]
      %v1974 = vld [vmem:[%s1224 + $0x6c] sm:$0xe]
      %v1975 = vld [vmem:[%s1224 + $0x70] sm:$0xf]
      %v1976 = vld [vmem:[%s1224 + $0x74] sm:$0x1]
      %v1977 = vld [vmem:[%s1224 + $0x78] sm:$0xe]
      %v1978 = vld [vmem:[%s1224 + $0x7c] sm:$0xf]
      %v1979 = vld [vmem:[%s1224 + $0x80] sm:$0x1]
      %v1980 = vld [vmem:[%s1224 + $0x84] sm:$0xe]
      %v1981 = vld [vmem:[%s1224 + $0x88] sm:$0xf]
      %v1982 = vld [vmem:[%s1224 + $0x8c] sm:$0x1]
      %v1983 = vld [vmem:[%s1224 + $0x90] sm:$0xe]
      %v1984 = vld [vmem:[%s1224 + $0x94] sm:$0xf]
      %v1985 = vld [vmem:[%s1224 + $0x98] sm:$0x1]
      %v1986 = vld [vmem:[%s1224 + $0x9c] sm:$0xe]
      %v1987 = vld [vmem:[%s1224 + $0xa0] sm:$0xf]
      %v1988 = vld [vmem:[%s1224 + $0xa4] sm:$0x1]
      %v1989 = vld [vmem:[%s1224 + $0xa8] sm:$0xe]
      %v1990 = vld [vmem:[%s1224 + $0xac] sm:$0xf]
      %v1991 = vld [vmem:[%s1224 + $0xb0] sm:$0x1]
      %v1992 = vld [vmem:[%s1224 + $0xb4] sm:$0xe]
      %v1993 = vld [vmem:[%s1224 + $0xb8] sm:$0xf]
      %v1994 = vld [vmem:[%s1224 + $0xbc] sm:$0x1]
      %v2043 = vrot.slane %v1947, 5
      %v2044 = vrot.slane %v2043, 4
      %v2045 = vrot.slane %v1948, 5
      %v2046 = vsel %vm998, %v2044, %v2045
      %v2047 = vrot.slane %v2045, 4
      %v2048 = vrot.slane %v1949, 5
      %v2049 = vsel %vm998, %v2047, %v2048
      %v2050 = vrot.slane %v1950, 5
      %v2051 = vrot.slane %v2050, 4
      %v2052 = vrot.slane %v1951, 5
      %v2053 = vsel %vm998, %v2051, %v2052
      %v2054 = vrot.slane %v2052, 4
      %v2055 = vrot.slane %v1952, 5
      %v2056 = vsel %vm998, %v2054, %v2055
      %v2057 = vrot.slane %v1953, 5
      %v2058 = vrot.slane %v2057, 4
      %v2059 = vrot.slane %v1954, 5
      %v2060 = vsel %vm998, %v2058, %v2059
      %v2061 = vrot.slane %v2059, 4
      %v2062 = vrot.slane %v1955, 5
      %v2063 = vsel %vm998, %v2061, %v2062
      %v2064 = vrot.slane %v1956, 5
      %v2065 = vrot.slane %v2064, 4
      %v2066 = vrot.slane %v1957, 5
      %v2067 = vsel %vm998, %v2065, %v2066
      %v2068 = vrot.slane %v2066, 4
      %v2069 = vrot.slane %v1958, 5
      %v2070 = vsel %vm998, %v2068, %v2069
      %v2071 = vrot.slane %v1959, 5
      %v2072 = vrot.slane %v2071, 4
      %v2073 = vrot.slane %v1960, 5
      %v2074 = vsel %vm998, %v2072, %v2073
      %v2075 = vrot.slane %v2073, 4
      %v2076 = vrot.slane %v1961, 5
      %v2077 = vsel %vm998, %v2075, %v2076
      %v2078 = vrot.slane %v1962, 5
      %v2079 = vrot.slane %v2078, 4
      %v2080 = vrot.slane %v1963, 5
      %v2081 = vsel %vm998, %v2079, %v2080
      %v2082 = vrot.slane %v2080, 4
      %v2083 = vrot.slane %v1964, 5
      %v2084 = vsel %vm998, %v2082, %v2083
      %v2085 = vrot.slane %v1965, 5
      %v2086 = vrot.slane %v2085, 4
      %v2087 = vrot.slane %v1966, 5
      %v2088 = vsel %vm998, %v2086, %v2087
      %v2089 = vrot.slane %v2087, 4
      %v2090 = vrot.slane %v1967, 5
      %v2091 = vsel %vm998, %v2089, %v2090
      %v2092 = vrot.slane %v1968, 5
      %v2093 = vrot.slane %v2092, 4
      %v2094 = vrot.slane %v1969, 5
      %v2095 = vsel %vm998, %v2093, %v2094
      %v2096 = vrot.slane %v2094, 4
      %v2097 = vrot.slane %v1970, 5
      %v2098 = vsel %vm998, %v2096, %v2097
      %v2099 = vrot.slane %v1971, 5
      %v2100 = vrot.slane %v2099, 4
      %v2101 = vrot.slane %v1972, 5
      %v2102 = vsel %vm998, %v2100, %v2101
      %v2103 = vrot.slane %v2101, 4
      %v2104 = vrot.slane %v1973, 5
      %v2105 = vsel %vm998, %v2103, %v2104
      %v2106 = vrot.slane %v1974, 5
      %v2107 = vrot.slane %v2106, 4
      %v2108 = vrot.slane %v1975, 5
      %v2109 = vsel %vm998, %v2107, %v2108
      %v2110 = vrot.slane %v2108, 4
      %v2111 = vrot.slane %v1976, 5
      %v2112 = vsel %vm998, %v2110, %v2111
      %v2113 = vrot.slane %v1977, 5
      %v2114 = vrot.slane %v2113, 4
      %v2115 = vrot.slane %v1978, 5
      %v2116 = vsel %vm998, %v2114, %v2115
      %v2117 = vrot.slane %v2115, 4
      %v2118 = vrot.slane %v1979, 5
      %v2119 = vsel %vm998, %v2117, %v2118
      %v2120 = vrot.slane %v1980, 5
      %v2121 = vrot.slane %v2120, 4
      %v2122 = vrot.slane %v1981, 5
      %v2123 = vsel %vm998, %v2121, %v2122
      %v2124 = vrot.slane %v2122, 4
      %v2125 = vrot.slane %v1982, 5
      %v2126 = vsel %vm998, %v2124, %v2125
      %v2127 = vrot.slane %v1983, 5
      %v2128 = vrot.slane %v2127, 4
      %v2129 = vrot.slane %v1984, 5
      %v2130 = vsel %vm998, %v2128, %v2129
      %v2131 = vrot.slane %v2129, 4
      %v2132 = vrot.slane %v1985, 5
      %v2133 = vsel %vm998, %v2131, %v2132
      %v2134 = vrot.slane %v1986, 5
      %v2135 = vrot.slane %v2134, 4
      %v2136 = vrot.slane %v1987, 5
      %v2137 = vsel %vm998, %v2135, %v2136
      %v2138 = vrot.slane %v2136, 4
      %v2139 = vrot.slane %v1988, 5
      %v2140 = vsel %vm998, %v2138, %v2139
      %v2141 = vrot.slane %v1989, 5
      %v2142 = vrot.slane %v2141, 4
      %v2143 = vrot.slane %v1990, 5
      %v2144 = vsel %vm998, %v2142, %v2143
      %v2145 = vrot.slane %v2143, 4
      %v2146 = vrot.slane %v1991, 5
      %v2147 = vsel %vm998, %v2145, %v2146
      %v2148 = vrot.slane %v1992, 5
      %v2149 = vrot.slane %v2148, 4
      %v2150 = vrot.slane %v1993, 5
      %v2151 = vsel %vm998, %v2149, %v2150
      %v2152 = vrot.slane %v2150, 4
      %v2153 = vrot.slane %v1994, 5
      %v2154 = vsel %vm998, %v2152, %v2153
      %v2155 = vunpack.c.l.b16 %v2046
      %v2156 = vunpack.c.l.b16 %v2049
      %v2157 = vunpack.c.l.b16 %v2053
      %v2158 = vunpack.c.l.b16 %v2056
      %v2159 = vunpack.c.l.b16 %v2060
      %v2160 = vunpack.c.l.b16 %v2063
      %v2161 = vunpack.c.l.b16 %v2067
      %v2162 = vunpack.c.l.b16 %v2070
      %v2163 = vunpack.c.l.b16 %v2074
      %v2164 = vunpack.c.l.b16 %v2077
      %v2165 = vunpack.c.l.b16 %v2081
      %v2166 = vunpack.c.l.b16 %v2084
      %v2167 = vunpack.c.l.b16 %v2088
      %v2168 = vunpack.c.l.b16 %v2091
      %v2169 = vunpack.c.l.b16 %v2095
      %v2170 = vunpack.c.l.b16 %v2098
      %v2171 = vunpack.c.l.b16 %v2102
      %v2172 = vunpack.c.l.b16 %v2105
      %v2173 = vunpack.c.l.b16 %v2109
      %v2174 = vunpack.c.l.b16 %v2112
      %v2175 = vunpack.c.l.b16 %v2116
      %v2176 = vunpack.c.l.b16 %v2119
      %v2177 = vunpack.c.l.b16 %v2123
      %v2178 = vunpack.c.l.b16 %v2126
      %v2179 = vunpack.c.l.b16 %v2130
      %v2180 = vunpack.c.l.b16 %v2133
      %v2181 = vunpack.c.l.b16 %v2137
      %v2182 = vunpack.c.l.b16 %v2140
      %v2183 = vunpack.c.l.b16 %v2144
      %v2184 = vunpack.c.l.b16 %v2147
      %v2185 = vunpack.c.l.b16 %v2151
      %v2186 = vunpack.c.l.b16 %v2154
      %v2187 = vpack.c.b16 %v2156, %v2155
      %v2188 = vpack.c.b16 %v2158, %v2157
      %v2189 = vpack.c.b16 %v2160, %v2159
      %v2190 = vpack.c.b16 %v2162, %v2161
      %v2191 = vpack.c.b16 %v2164, %v2163
      %v2192 = vpack.c.b16 %v2166, %v2165
      %v2193 = vpack.c.b16 %v2168, %v2167
      %v2194 = vpack.c.b16 %v2170, %v2169
      %v2195 = vpack.c.b16 %v2172, %v2171
      %v2196 = vpack.c.b16 %v2174, %v2173
      %v2197 = vpack.c.b16 %v2176, %v2175
      %v2198 = vpack.c.b16 %v2178, %v2177
      %v2199 = vpack.c.b16 %v2180, %v2179
      %v2200 = vpack.c.b16 %v2182, %v2181
      %v2201 = vpack.c.b16 %v2184, %v2183
      %v2202 = vpack.c.b16 %v2186, %v2185
      %2203 = vrot.lane.b32.xlu0 %v2187, 20
      %v2204 = vpop.permute.xlu0 %2203
      %2205 = vrot.lane.b32.xlu0 %v2188, 20
      %v2206 = vpop.permute.xlu0 %2205
      %2207 = vrot.lane.b32.xlu0 %v2189, 20
      %v2208 = vpop.permute.xlu0 %2207
      %2209 = vrot.lane.b32.xlu0 %v2190, 20
      %v2210 = vpop.permute.xlu0 %2209
      %2211 = vrot.lane.b32.xlu0 %v2191, 20
      %v2212 = vpop.permute.xlu0 %2211
      %2213 = vrot.lane.b32.xlu0 %v2192, 20
      %v2214 = vpop.permute.xlu0 %2213
      %2215 = vrot.lane.b32.xlu0 %v2193, 20
      %v2216 = vpop.permute.xlu0 %2215
      %2217 = vrot.lane.b32.xlu0 %v2194, 20
      %v2218 = vpop.permute.xlu0 %2217
      %2219 = vrot.lane.b32.xlu0 %v2195, 20
      %v2220 = vpop.permute.xlu0 %2219
      %2221 = vrot.lane.b32.xlu0 %v2196, 20
      %v2222 = vpop.permute.xlu0 %2221
      %2223 = vrot.lane.b32.xlu0 %v2197, 20
      %v2224 = vpop.permute.xlu0 %2223
      %2225 = vrot.lane.b32.xlu0 %v2198, 20
      %v2226 = vpop.permute.xlu0 %2225
      %2227 = vrot.lane.b32.xlu0 %v2199, 20
      %v2228 = vpop.permute.xlu0 %2227
      %2229 = vrot.lane.b32.xlu0 %v2200, 20
      %v2230 = vpop.permute.xlu0 %2229
      %2231 = vrot.lane.b32.xlu0 %v2201, 20
      %v2232 = vpop.permute.xlu0 %2231
      %2233 = vrot.lane.b32.xlu0 %v2202, 20
      %v2234 = vpop.permute.xlu0 %2233
      %vm2251 = vcmask 195744
      %2252 = vst.msk [vmem:[#allocation2] sm:$0xff] %vm2251, %v2204
      %2253 = vst.msk [vmem:[#allocation2 + $0x8] sm:$0xff] %vm2251, %v2206
      %2254 = vst.msk [vmem:[#allocation2 + $0x10] sm:$0xff] %vm2251, %v2208
      %2255 = vst.msk [vmem:[#allocation2 + $0x18] sm:$0xff] %vm2251, %v2210
      %2256 = vst.msk [vmem:[#allocation2 + $0x20] sm:$0xff] %vm2251, %v2212
      %2257 = vst.msk [vmem:[#allocation2 + $0x28] sm:$0xff] %vm2251, %v2214
      %2258 = vst.msk [vmem:[#allocation2 + $0x30] sm:$0xff] %vm2251, %v2216
      %2259 = vst.msk [vmem:[#allocation2 + $0x38] sm:$0xff] %vm2251, %v2218
      %2260 = vst.msk [vmem:[#allocation2 + $0x40] sm:$0xff] %vm2251, %v2220
      %2261 = vst.msk [vmem:[#allocation2 + $0x48] sm:$0xff] %vm2251, %v2222
      %2262 = vst.msk [vmem:[#allocation2 + $0x50] sm:$0xff] %vm2251, %v2224
      %2263 = vst.msk [vmem:[#allocation2 + $0x58] sm:$0xff] %vm2251, %v2226
      %2264 = vst.msk [vmem:[#allocation2 + $0x60] sm:$0xff] %vm2251, %v2228
      %2265 = vst.msk [vmem:[#allocation2 + $0x68] sm:$0xff] %vm2251, %v2230
      %2266 = vst.msk [vmem:[#allocation2 + $0x70] sm:$0xff] %vm2251, %v2232
      %2267 = vst.msk [vmem:[#allocation2 + $0x78] sm:$0xff] %vm2251, %v2234
      %s2268 = scalar_lea.vmem %s193, 24
      %v2269 = vld [vmem:[%s2268] sm:$0xf]
      %v2270 = vld [vmem:[%s2268 + $0x4] sm:$0xf]
      %v2271 = vld [vmem:[%s2268 + $0xc] sm:$0xf]
      %v2272 = vld [vmem:[%s2268 + $0x10] sm:$0xf]
      %v2273 = vld [vmem:[%s2268 + $0x18] sm:$0xf]
      %v2274 = vld [vmem:[%s2268 + $0x1c] sm:$0xf]
      %v2275 = vld [vmem:[%s2268 + $0x24] sm:$0xf]
      %v2276 = vld [vmem:[%s2268 + $0x28] sm:$0xf]
      %v2277 = vld [vmem:[%s2268 + $0x30] sm:$0xf]
      %v2278 = vld [vmem:[%s2268 + $0x34] sm:$0xf]
      %v2279 = vld [vmem:[%s2268 + $0x3c] sm:$0xf]
      %v2280 = vld [vmem:[%s2268 + $0x40] sm:$0xf]
      %v2281 = vld [vmem:[%s2268 + $0x48] sm:$0xf]
      %v2282 = vld [vmem:[%s2268 + $0x4c] sm:$0xf]
      %v2283 = vld [vmem:[%s2268 + $0x54] sm:$0xf]
      %v2284 = vld [vmem:[%s2268 + $0x58] sm:$0xf]
      %v2285 = vld [vmem:[%s2268 + $0x60] sm:$0xf]
      %v2286 = vld [vmem:[%s2268 + $0x64] sm:$0xf]
      %v2287 = vld [vmem:[%s2268 + $0x6c] sm:$0xf]
      %v2288 = vld [vmem:[%s2268 + $0x70] sm:$0xf]
      %v2289 = vld [vmem:[%s2268 + $0x78] sm:$0xf]
      %v2290 = vld [vmem:[%s2268 + $0x7c] sm:$0xf]
      %v2291 = vld [vmem:[%s2268 + $0x84] sm:$0xf]
      %v2292 = vld [vmem:[%s2268 + $0x88] sm:$0xf]
      %v2293 = vld [vmem:[%s2268 + $0x90] sm:$0xf]
      %v2294 = vld [vmem:[%s2268 + $0x94] sm:$0xf]
      %v2295 = vld [vmem:[%s2268 + $0x9c] sm:$0xf]
      %v2296 = vld [vmem:[%s2268 + $0xa0] sm:$0xf]
      %v2297 = vld [vmem:[%s2268 + $0xa8] sm:$0xf]
      %v2298 = vld [vmem:[%s2268 + $0xac] sm:$0xf]
      %v2299 = vld [vmem:[%s2268 + $0xb4] sm:$0xf]
      %v2300 = vld [vmem:[%s2268 + $0xb8] sm:$0xf]
      %v2333 = vunpack.c.l.b16 %v2269
      %v2334 = vunpack.c.l.b16 %v2270
      %v2335 = vunpack.c.l.b16 %v2271
      %v2336 = vunpack.c.l.b16 %v2272
      %v2337 = vunpack.c.l.b16 %v2273
      %v2338 = vunpack.c.l.b16 %v2274
      %v2339 = vunpack.c.l.b16 %v2275
      %v2340 = vunpack.c.l.b16 %v2276
      %v2341 = vunpack.c.l.b16 %v2277
      %v2342 = vunpack.c.l.b16 %v2278
      %v2343 = vunpack.c.l.b16 %v2279
      %v2344 = vunpack.c.l.b16 %v2280
      %v2345 = vunpack.c.l.b16 %v2281
      %v2346 = vunpack.c.l.b16 %v2282
      %v2347 = vunpack.c.l.b16 %v2283
      %v2348 = vunpack.c.l.b16 %v2284
      %v2349 = vunpack.c.l.b16 %v2285
      %v2350 = vunpack.c.l.b16 %v2286
      %v2351 = vunpack.c.l.b16 %v2287
      %v2352 = vunpack.c.l.b16 %v2288
      %v2353 = vunpack.c.l.b16 %v2289
      %v2354 = vunpack.c.l.b16 %v2290
      %v2355 = vunpack.c.l.b16 %v2291
      %v2356 = vunpack.c.l.b16 %v2292
      %v2357 = vunpack.c.l.b16 %v2293
      %v2358 = vunpack.c.l.b16 %v2294
      %v2359 = vunpack.c.l.b16 %v2295
      %v2360 = vunpack.c.l.b16 %v2296
      %v2361 = vunpack.c.l.b16 %v2297
      %v2362 = vunpack.c.l.b16 %v2298
      %v2363 = vunpack.c.l.b16 %v2299
      %v2364 = vunpack.c.l.b16 %v2300
      %v2365 = vpack.c.b16 %v2334, %v2333
      %v2366 = vpack.c.b16 %v2336, %v2335
      %v2367 = vpack.c.b16 %v2338, %v2337
      %v2368 = vpack.c.b16 %v2340, %v2339
      %v2369 = vpack.c.b16 %v2342, %v2341
      %v2370 = vpack.c.b16 %v2344, %v2343
      %v2371 = vpack.c.b16 %v2346, %v2345
      %v2372 = vpack.c.b16 %v2348, %v2347
      %v2373 = vpack.c.b16 %v2350, %v2349
      %v2374 = vpack.c.b16 %v2352, %v2351
      %v2375 = vpack.c.b16 %v2354, %v2353
      %v2376 = vpack.c.b16 %v2356, %v2355
      %v2377 = vpack.c.b16 %v2358, %v2357
      %v2378 = vpack.c.b16 %v2360, %v2359
      %v2379 = vpack.c.b16 %v2362, %v2361
      %v2380 = vpack.c.b16 %v2364, %v2363
      %2381 = vrot.lane.b32.xlu0 %v2365, 24
      %v2382 = vpop.permute.xlu0 %2381
      %2383 = vrot.lane.b32.xlu0 %v2366, 24
      %v2384 = vpop.permute.xlu0 %2383
      %2385 = vrot.lane.b32.xlu0 %v2367, 24
      %v2386 = vpop.permute.xlu0 %2385
      %2387 = vrot.lane.b32.xlu0 %v2368, 24
      %v2388 = vpop.permute.xlu0 %2387
      %2389 = vrot.lane.b32.xlu0 %v2369, 24
      %v2390 = vpop.permute.xlu0 %2389
      %2391 = vrot.lane.b32.xlu0 %v2370, 24
      %v2392 = vpop.permute.xlu0 %2391
      %2393 = vrot.lane.b32.xlu0 %v2371, 24
      %v2394 = vpop.permute.xlu0 %2393
      %2395 = vrot.lane.b32.xlu0 %v2372, 24
      %v2396 = vpop.permute.xlu0 %2395
      %2397 = vrot.lane.b32.xlu0 %v2373, 24
      %v2398 = vpop.permute.xlu0 %2397
      %2399 = vrot.lane.b32.xlu0 %v2374, 24
      %v2400 = vpop.permute.xlu0 %2399
      %2401 = vrot.lane.b32.xlu0 %v2375, 24
      %v2402 = vpop.permute.xlu0 %2401
      %2403 = vrot.lane.b32.xlu0 %v2376, 24
      %v2404 = vpop.permute.xlu0 %2403
      %2405 = vrot.lane.b32.xlu0 %v2377, 24
      %v2406 = vpop.permute.xlu0 %2405
      %2407 = vrot.lane.b32.xlu0 %v2378, 24
      %v2408 = vpop.permute.xlu0 %2407
      %2409 = vrot.lane.b32.xlu0 %v2379, 24
      %v2410 = vpop.permute.xlu0 %2409
      %2411 = vrot.lane.b32.xlu0 %v2380, 24
      %v2412 = vpop.permute.xlu0 %2411
      %vm2429 = vcmask 228544
      %2430 = vst.msk [vmem:[#allocation2] sm:$0xff] %vm2429, %v2382
      %2431 = vst.msk [vmem:[#allocation2 + $0x8] sm:$0xff] %vm2429, %v2384
      %2432 = vst.msk [vmem:[#allocation2 + $0x10] sm:$0xff] %vm2429, %v2386
      %2433 = vst.msk [vmem:[#allocation2 + $0x18] sm:$0xff] %vm2429, %v2388
      %2434 = vst.msk [vmem:[#allocation2 + $0x20] sm:$0xff] %vm2429, %v2390
      %2435 = vst.msk [vmem:[#allocation2 + $0x28] sm:$0xff] %vm2429, %v2392
      %2436 = vst.msk [vmem:[#allocation2 + $0x30] sm:$0xff] %vm2429, %v2394
      %2437 = vst.msk [vmem:[#allocation2 + $0x38] sm:$0xff] %vm2429, %v2396
      %2438 = vst.msk [vmem:[#allocation2 + $0x40] sm:$0xff] %vm2429, %v2398
      %2439 = vst.msk [vmem:[#allocation2 + $0x48] sm:$0xff] %vm2429, %v2400
      %2440 = vst.msk [vmem:[#allocation2 + $0x50] sm:$0xff] %vm2429, %v2402
      %2441 = vst.msk [vmem:[#allocation2 + $0x58] sm:$0xff] %vm2429, %v2404
      %2442 = vst.msk [vmem:[#allocation2 + $0x60] sm:$0xff] %vm2429, %v2406
      %2443 = vst.msk [vmem:[#allocation2 + $0x68] sm:$0xff] %vm2429, %v2408
      %2444 = vst.msk [vmem:[#allocation2 + $0x70] sm:$0xff] %vm2429, %v2410
      %2445 = vst.msk [vmem:[#allocation2 + $0x78] sm:$0xff] %vm2429, %v2412
      %v2446 = vld [vmem:[%s2268] sm:$0xf]
      %v2447 = vld [vmem:[%s2268 + $0x4] sm:$0xf]
      %v2448 = vld [vmem:[%s2268 + $0x8] sm:$0x1]
      %v2449 = vld [vmem:[%s2268 + $0xc] sm:$0xf]
      %v2450 = vld [vmem:[%s2268 + $0x10] sm:$0xf]
      %v2451 = vld [vmem:[%s2268 + $0x14] sm:$0x1]
      %v2452 = vld [vmem:[%s2268 + $0x18] sm:$0xf]
      %v2453 = vld [vmem:[%s2268 + $0x1c] sm:$0xf]
      %v2454 = vld [vmem:[%s2268 + $0x20] sm:$0x1]
      %v2455 = vld [vmem:[%s2268 + $0x24] sm:$0xf]
      %v2456 = vld [vmem:[%s2268 + $0x28] sm:$0xf]
      %v2457 = vld [vmem:[%s2268 + $0x2c] sm:$0x1]
      %v2458 = vld [vmem:[%s2268 + $0x30] sm:$0xf]
      %v2459 = vld [vmem:[%s2268 + $0x34] sm:$0xf]
      %v2460 = vld [vmem:[%s2268 + $0x38] sm:$0x1]
      %v2461 = vld [vmem:[%s2268 + $0x3c] sm:$0xf]
      %v2462 = vld [vmem:[%s2268 + $0x40] sm:$0xf]
      %v2463 = vld [vmem:[%s2268 + $0x44] sm:$0x1]
      %v2464 = vld [vmem:[%s2268 + $0x48] sm:$0xf]
      %v2465 = vld [vmem:[%s2268 + $0x4c] sm:$0xf]
      %v2466 = vld [vmem:[%s2268 + $0x50] sm:$0x1]
      %v2467 = vld [vmem:[%s2268 + $0x54] sm:$0xf]
      %v2468 = vld [vmem:[%s2268 + $0x58] sm:$0xf]
      %v2469 = vld [vmem:[%s2268 + $0x5c] sm:$0x1]
      %v2470 = vld [vmem:[%s2268 + $0x60] sm:$0xf]
      %v2471 = vld [vmem:[%s2268 + $0x64] sm:$0xf]
      %v2472 = vld [vmem:[%s2268 + $0x68] sm:$0x1]
      %v2473 = vld [vmem:[%s2268 + $0x6c] sm:$0xf]
      %v2474 = vld [vmem:[%s2268 + $0x70] sm:$0xf]
      %v2475 = vld [vmem:[%s2268 + $0x74] sm:$0x1]
      %v2476 = vld [vmem:[%s2268 + $0x78] sm:$0xf]
      %v2477 = vld [vmem:[%s2268 + $0x7c] sm:$0xf]
      %v2478 = vld [vmem:[%s2268 + $0x80] sm:$0x1]
      %v2479 = vld [vmem:[%s2268 + $0x84] sm:$0xf]
      %v2480 = vld [vmem:[%s2268 + $0x88] sm:$0xf]
      %v2481 = vld [vmem:[%s2268 + $0x8c] sm:$0x1]
      %v2482 = vld [vmem:[%s2268 + $0x90] sm:$0xf]
      %v2483 = vld [vmem:[%s2268 + $0x94] sm:$0xf]
      %v2484 = vld [vmem:[%s2268 + $0x98] sm:$0x1]
      %v2485 = vld [vmem:[%s2268 + $0x9c] sm:$0xf]
      %v2486 = vld [vmem:[%s2268 + $0xa0] sm:$0xf]
      %v2487 = vld [vmem:[%s2268 + $0xa4] sm:$0x1]
      %v2488 = vld [vmem:[%s2268 + $0xa8] sm:$0xf]
      %v2489 = vld [vmem:[%s2268 + $0xac] sm:$0xf]
      %v2490 = vld [vmem:[%s2268 + $0xb0] sm:$0x1]
      %v2491 = vld [vmem:[%s2268 + $0xb4] sm:$0xf]
      %v2492 = vld [vmem:[%s2268 + $0xb8] sm:$0xf]
      %v2493 = vld [vmem:[%s2268 + $0xbc] sm:$0x1]
      %v2495 = vshrl.u32 %v2446, 16
      %v2497 = vrot.slane %v2495, 4
      %v2498 = vshll.u32 %v2446, 16
      %v2500 = vrot.slane %v2498, 5
      %v2501 = vor.u32 %v2497, %v2500
      %v2502 = vrot.slane %v2501, 4
      %v2504 = vshll.u32 %v2447, 16
      %v2506 = vrot.slane %v2504, 5
      %v2507 = vsel %vm402, %v2502, %v2506
      %v2508 = vshrl.u32 %v2447, 16
      %v2510 = vrot.slane %v2508, 4
      %v2511 = vor.u32 %v2510, %v2506
      %v2512 = vrot.slane %v2511, 4
      %v2514 = vshll.u32 %v2448, 16
      %v2516 = vrot.slane %v2514, 5
      %v2517 = vsel %vm402, %v2512, %v2516
      %v2519 = vshrl.u32 %v2449, 16
      %v2521 = vrot.slane %v2519, 4
      %v2522 = vshll.u32 %v2449, 16
      %v2524 = vrot.slane %v2522, 5
      %v2525 = vor.u32 %v2521, %v2524
      %v2526 = vrot.slane %v2525, 4
      %v2528 = vshll.u32 %v2450, 16
      %v2530 = vrot.slane %v2528, 5
      %v2531 = vsel %vm402, %v2526, %v2530
      %v2532 = vshrl.u32 %v2450, 16
      %v2534 = vrot.slane %v2532, 4
      %v2535 = vor.u32 %v2534, %v2530
      %v2536 = vrot.slane %v2535, 4
      %v2538 = vshll.u32 %v2451, 16
      %v2540 = vrot.slane %v2538, 5
      %v2541 = vsel %vm402, %v2536, %v2540
      %v2543 = vshrl.u32 %v2452, 16
      %v2545 = vrot.slane %v2543, 4
      %v2546 = vshll.u32 %v2452, 16
      %v2548 = vrot.slane %v2546, 5
      %v2549 = vor.u32 %v2545, %v2548
      %v2550 = vrot.slane %v2549, 4
      %v2552 = vshll.u32 %v2453, 16
      %v2554 = vrot.slane %v2552, 5
      %v2555 = vsel %vm402, %v2550, %v2554
      %v2556 = vshrl.u32 %v2453, 16
      %v2558 = vrot.slane %v2556, 4
      %v2559 = vor.u32 %v2558, %v2554
      %v2560 = vrot.slane %v2559, 4
      %v2562 = vshll.u32 %v2454, 16
      %v2564 = vrot.slane %v2562, 5
      %v2565 = vsel %vm402, %v2560, %v2564
      %v2567 = vshrl.u32 %v2455, 16
      %v2569 = vrot.slane %v2567, 4
      %v2570 = vshll.u32 %v2455, 16
      %v2572 = vrot.slane %v2570, 5
      %v2573 = vor.u32 %v2569, %v2572
      %v2574 = vrot.slane %v2573, 4
      %v2576 = vshll.u32 %v2456, 16
      %v2578 = vrot.slane %v2576, 5
      %v2579 = vsel %vm402, %v2574, %v2578
      %v2580 = vshrl.u32 %v2456, 16
      %v2582 = vrot.slane %v2580, 4
      %v2583 = vor.u32 %v2582, %v2578
      %v2584 = vrot.slane %v2583, 4
      %v2586 = vshll.u32 %v2457, 16
      %v2588 = vrot.slane %v2586, 5
      %v2589 = vsel %vm402, %v2584, %v2588
      %v2591 = vshrl.u32 %v2458, 16
      %v2593 = vrot.slane %v2591, 4
      %v2594 = vshll.u32 %v2458, 16
      %v2596 = vrot.slane %v2594, 5
      %v2597 = vor.u32 %v2593, %v2596
      %v2598 = vrot.slane %v2597, 4
      %v2600 = vshll.u32 %v2459, 16
      %v2602 = vrot.slane %v2600, 5
      %v2603 = vsel %vm402, %v2598, %v2602
      %v2604 = vshrl.u32 %v2459, 16
      %v2606 = vrot.slane %v2604, 4
      %v2607 = vor.u32 %v2606, %v2602
      %v2608 = vrot.slane %v2607, 4
      %v2610 = vshll.u32 %v2460, 16
      %v2612 = vrot.slane %v2610, 5
      %v2613 = vsel %vm402, %v2608, %v2612
      %v2615 = vshrl.u32 %v2461, 16
      %v2617 = vrot.slane %v2615, 4
      %v2618 = vshll.u32 %v2461, 16
      %v2620 = vrot.slane %v2618, 5
      %v2621 = vor.u32 %v2617, %v2620
      %v2622 = vrot.slane %v2621, 4
      %v2624 = vshll.u32 %v2462, 16
      %v2626 = vrot.slane %v2624, 5
      %v2627 = vsel %vm402, %v2622, %v2626
      %v2628 = vshrl.u32 %v2462, 16
      %v2630 = vrot.slane %v2628, 4
      %v2631 = vor.u32 %v2630, %v2626
      %v2632 = vrot.slane %v2631, 4
      %v2634 = vshll.u32 %v2463, 16
      %v2636 = vrot.slane %v2634, 5
      %v2637 = vsel %vm402, %v2632, %v2636
      %v2639 = vshrl.u32 %v2464, 16
      %v2641 = vrot.slane %v2639, 4
      %v2642 = vshll.u32 %v2464, 16
      %v2644 = vrot.slane %v2642, 5
      %v2645 = vor.u32 %v2641, %v2644
      %v2646 = vrot.slane %v2645, 4
      %v2648 = vshll.u32 %v2465, 16
      %v2650 = vrot.slane %v2648, 5
      %v2651 = vsel %vm402, %v2646, %v2650
      %v2652 = vshrl.u32 %v2465, 16
      %v2654 = vrot.slane %v2652, 4
      %v2655 = vor.u32 %v2654, %v2650
      %v2656 = vrot.slane %v2655, 4
      %v2658 = vshll.u32 %v2466, 16
      %v2660 = vrot.slane %v2658, 5
      %v2661 = vsel %vm402, %v2656, %v2660
      %v2663 = vshrl.u32 %v2467, 16
      %v2665 = vrot.slane %v2663, 4
      %v2666 = vshll.u32 %v2467, 16
      %v2668 = vrot.slane %v2666, 5
      %v2669 = vor.u32 %v2665, %v2668
      %v2670 = vrot.slane %v2669, 4
      %v2672 = vshll.u32 %v2468, 16
      %v2674 = vrot.slane %v2672, 5
      %v2675 = vsel %vm402, %v2670, %v2674
      %v2676 = vshrl.u32 %v2468, 16
      %v2678 = vrot.slane %v2676, 4
      %v2679 = vor.u32 %v2678, %v2674
      %v2680 = vrot.slane %v2679, 4
      %v2682 = vshll.u32 %v2469, 16
      %v2684 = vrot.slane %v2682, 5
      %v2685 = vsel %vm402, %v2680, %v2684
      %v2687 = vshrl.u32 %v2470, 16
      %v2689 = vrot.slane %v2687, 4
      %v2690 = vshll.u32 %v2470, 16
      %v2692 = vrot.slane %v2690, 5
      %v2693 = vor.u32 %v2689, %v2692
      %v2694 = vrot.slane %v2693, 4
      %v2696 = vshll.u32 %v2471, 16
      %v2698 = vrot.slane %v2696, 5
      %v2699 = vsel %vm402, %v2694, %v2698
      %v2700 = vshrl.u32 %v2471, 16
      %v2702 = vrot.slane %v2700, 4
      %v2703 = vor.u32 %v2702, %v2698
      %v2704 = vrot.slane %v2703, 4
      %v2706 = vshll.u32 %v2472, 16
      %v2708 = vrot.slane %v2706, 5
      %v2709 = vsel %vm402, %v2704, %v2708
      %v2711 = vshrl.u32 %v2473, 16
      %v2713 = vrot.slane %v2711, 4
      %v2714 = vshll.u32 %v2473, 16
      %v2716 = vrot.slane %v2714, 5
      %v2717 = vor.u32 %v2713, %v2716
      %v2718 = vrot.slane %v2717, 4
      %v2720 = vshll.u32 %v2474, 16
      %v2722 = vrot.slane %v2720, 5
      %v2723 = vsel %vm402, %v2718, %v2722
      %v2724 = vshrl.u32 %v2474, 16
      %v2726 = vrot.slane %v2724, 4
      %v2727 = vor.u32 %v2726, %v2722
      %v2728 = vrot.slane %v2727, 4
      %v2730 = vshll.u32 %v2475, 16
      %v2732 = vrot.slane %v2730, 5
      %v2733 = vsel %vm402, %v2728, %v2732
      %v2735 = vshrl.u32 %v2476, 16
      %v2737 = vrot.slane %v2735, 4
      %v2738 = vshll.u32 %v2476, 16
      %v2740 = vrot.slane %v2738, 5
      %v2741 = vor.u32 %v2737, %v2740
      %v2742 = vrot.slane %v2741, 4
      %v2744 = vshll.u32 %v2477, 16
      %v2746 = vrot.slane %v2744, 5
      %v2747 = vsel %vm402, %v2742, %v2746
      %v2748 = vshrl.u32 %v2477, 16
      %v2750 = vrot.slane %v2748, 4
      %v2751 = vor.u32 %v2750, %v2746
      %v2752 = vrot.slane %v2751, 4
      %v2754 = vshll.u32 %v2478, 16
      %v2756 = vrot.slane %v2754, 5
      %v2757 = vsel %vm402, %v2752, %v2756
      %v2759 = vshrl.u32 %v2479, 16
      %v2761 = vrot.slane %v2759, 4
      %v2762 = vshll.u32 %v2479, 16
      %v2764 = vrot.slane %v2762, 5
      %v2765 = vor.u32 %v2761, %v2764
      %v2766 = vrot.slane %v2765, 4
      %v2768 = vshll.u32 %v2480, 16
      %v2770 = vrot.slane %v2768, 5
      %v2771 = vsel %vm402, %v2766, %v2770
      %v2772 = vshrl.u32 %v2480, 16
      %v2774 = vrot.slane %v2772, 4
      %v2775 = vor.u32 %v2774, %v2770
      %v2776 = vrot.slane %v2775, 4
      %v2778 = vshll.u32 %v2481, 16
      %v2780 = vrot.slane %v2778, 5
      %v2781 = vsel %vm402, %v2776, %v2780
      %v2783 = vshrl.u32 %v2482, 16
      %v2785 = vrot.slane %v2783, 4
      %v2786 = vshll.u32 %v2482, 16
      %v2788 = vrot.slane %v2786, 5
      %v2789 = vor.u32 %v2785, %v2788
      %v2790 = vrot.slane %v2789, 4
      %v2792 = vshll.u32 %v2483, 16
      %v2794 = vrot.slane %v2792, 5
      %v2795 = vsel %vm402, %v2790, %v2794
      %v2796 = vshrl.u32 %v2483, 16
      %v2798 = vrot.slane %v2796, 4
      %v2799 = vor.u32 %v2798, %v2794
      %v2800 = vrot.slane %v2799, 4
      %v2802 = vshll.u32 %v2484, 16
      %v2804 = vrot.slane %v2802, 5
      %v2805 = vsel %vm402, %v2800, %v2804
      %v2807 = vshrl.u32 %v2485, 16
      %v2809 = vrot.slane %v2807, 4
      %v2810 = vshll.u32 %v2485, 16
      %v2812 = vrot.slane %v2810, 5
      %v2813 = vor.u32 %v2809, %v2812
      %v2814 = vrot.slane %v2813, 4
      %v2816 = vshll.u32 %v2486, 16
      %v2818 = vrot.slane %v2816, 5
      %v2819 = vsel %vm402, %v2814, %v2818
      %v2820 = vshrl.u32 %v2486, 16
      %v2822 = vrot.slane %v2820, 4
      %v2823 = vor.u32 %v2822, %v2818
      %v2824 = vrot.slane %v2823, 4
      %v2826 = vshll.u32 %v2487, 16
      %v2828 = vrot.slane %v2826, 5
      %v2829 = vsel %vm402, %v2824, %v2828
      %v2831 = vshrl.u32 %v2488, 16
      %v2833 = vrot.slane %v2831, 4
      %v2834 = vshll.u32 %v2488, 16
      %v2836 = vrot.slane %v2834, 5
      %v2837 = vor.u32 %v2833, %v2836
      %v2838 = vrot.slane %v2837, 4
      %v2840 = vshll.u32 %v2489, 16
      %v2842 = vrot.slane %v2840, 5
      %v2843 = vsel %vm402, %v2838, %v2842
      %v2844 = vshrl.u32 %v2489, 16
      %v2846 = vrot.slane %v2844, 4
      %v2847 = vor.u32 %v2846, %v2842
      %v2848 = vrot.slane %v2847, 4
      %v2850 = vshll.u32 %v2490, 16
      %v2852 = vrot.slane %v2850, 5
      %v2853 = vsel %vm402, %v2848, %v2852
      %v2855 = vshrl.u32 %v2491, 16
      %v2857 = vrot.slane %v2855, 4
      %v2858 = vshll.u32 %v2491, 16
      %v2860 = vrot.slane %v2858, 5
      %v2861 = vor.u32 %v2857, %v2860
      %v2862 = vrot.slane %v2861, 4
      %v2864 = vshll.u32 %v2492, 16
      %v2866 = vrot.slane %v2864, 5
      %v2867 = vsel %vm402, %v2862, %v2866
      %v2868 = vshrl.u32 %v2492, 16
      %v2870 = vrot.slane %v2868, 4
      %v2871 = vor.u32 %v2870, %v2866
      %v2872 = vrot.slane %v2871, 4
      %v2874 = vshll.u32 %v2493, 16
      %v2876 = vrot.slane %v2874, 5
      %v2877 = vsel %vm402, %v2872, %v2876
      %v2878 = vunpack.c.l.b16 %v2507
      %v2879 = vunpack.c.l.b16 %v2517
      %v2880 = vunpack.c.l.b16 %v2531
      %v2881 = vunpack.c.l.b16 %v2541
      %v2882 = vunpack.c.l.b16 %v2555
      %v2883 = vunpack.c.l.b16 %v2565
      %v2884 = vunpack.c.l.b16 %v2579
      %v2885 = vunpack.c.l.b16 %v2589
      %v2886 = vunpack.c.l.b16 %v2603
      %v2887 = vunpack.c.l.b16 %v2613
      %v2888 = vunpack.c.l.b16 %v2627
      %v2889 = vunpack.c.l.b16 %v2637
      %v2890 = vunpack.c.l.b16 %v2651
      %v2891 = vunpack.c.l.b16 %v2661
      %v2892 = vunpack.c.l.b16 %v2675
      %v2893 = vunpack.c.l.b16 %v2685
      %v2894 = vunpack.c.l.b16 %v2699
      %v2895 = vunpack.c.l.b16 %v2709
      %v2896 = vunpack.c.l.b16 %v2723
      %v2897 = vunpack.c.l.b16 %v2733
      %v2898 = vunpack.c.l.b16 %v2747
      %v2899 = vunpack.c.l.b16 %v2757
      %v2900 = vunpack.c.l.b16 %v2771
      %v2901 = vunpack.c.l.b16 %v2781
      %v2902 = vunpack.c.l.b16 %v2795
      %v2903 = vunpack.c.l.b16 %v2805
      %v2904 = vunpack.c.l.b16 %v2819
      %v2905 = vunpack.c.l.b16 %v2829
      %v2906 = vunpack.c.l.b16 %v2843
      %v2907 = vunpack.c.l.b16 %v2853
      %v2908 = vunpack.c.l.b16 %v2867
      %v2909 = vunpack.c.l.b16 %v2877
      %v2910 = vpack.c.b16 %v2879, %v2878
      %v2911 = vpack.c.b16 %v2881, %v2880
      %v2912 = vpack.c.b16 %v2883, %v2882
      %v2913 = vpack.c.b16 %v2885, %v2884
      %v2914 = vpack.c.b16 %v2887, %v2886
      %v2915 = vpack.c.b16 %v2889, %v2888
      %v2916 = vpack.c.b16 %v2891, %v2890
      %v2917 = vpack.c.b16 %v2893, %v2892
      %v2918 = vpack.c.b16 %v2895, %v2894
      %v2919 = vpack.c.b16 %v2897, %v2896
      %v2920 = vpack.c.b16 %v2899, %v2898
      %v2921 = vpack.c.b16 %v2901, %v2900
      %v2922 = vpack.c.b16 %v2903, %v2902
      %v2923 = vpack.c.b16 %v2905, %v2904
      %v2924 = vpack.c.b16 %v2907, %v2906
      %v2925 = vpack.c.b16 %v2909, %v2908
      %2926 = vrot.lane.b32.xlu0 %v2910, 28
      %v2927 = vpop.permute.xlu0 %2926
      %2928 = vrot.lane.b32.xlu0 %v2911, 28
      %v2929 = vpop.permute.xlu0 %2928
      %2930 = vrot.lane.b32.xlu0 %v2912, 28
      %v2931 = vpop.permute.xlu0 %2930
      %2932 = vrot.lane.b32.xlu0 %v2913, 28
      %v2933 = vpop.permute.xlu0 %2932
      %2934 = vrot.lane.b32.xlu0 %v2914, 28
      %v2935 = vpop.permute.xlu0 %2934
      %2936 = vrot.lane.b32.xlu0 %v2915, 28
      %v2937 = vpop.permute.xlu0 %2936
      %2938 = vrot.lane.b32.xlu0 %v2916, 28
      %v2939 = vpop.permute.xlu0 %2938
      %2940 = vrot.lane.b32.xlu0 %v2917, 28
      %v2941 = vpop.permute.xlu0 %2940
      %2942 = vrot.lane.b32.xlu0 %v2918, 28
      %v2943 = vpop.permute.xlu0 %2942
      %2944 = vrot.lane.b32.xlu0 %v2919, 28
      %v2945 = vpop.permute.xlu0 %2944
      %2946 = vrot.lane.b32.xlu0 %v2920, 28
      %v2947 = vpop.permute.xlu0 %2946
      %2948 = vrot.lane.b32.xlu0 %v2921, 28
      %v2949 = vpop.permute.xlu0 %2948
      %2950 = vrot.lane.b32.xlu0 %v2922, 28
      %v2951 = vpop.permute.xlu0 %2950
      %2952 = vrot.lane.b32.xlu0 %v2923, 28
      %v2953 = vpop.permute.xlu0 %2952
      %2954 = vrot.lane.b32.xlu0 %v2924, 28
      %v2955 = vpop.permute.xlu0 %2954
      %2956 = vrot.lane.b32.xlu0 %v2925, 28
      %v2957 = vpop.permute.xlu0 %2956
      %vm2974 = vcmask 261344
      %2975 = vst.msk [vmem:[#allocation2] sm:$0xff] %vm2974, %v2927
      %2976 = vst.msk [vmem:[#allocation2 + $0x8] sm:$0xff] %vm2974, %v2929
      %2977 = vst.msk [vmem:[#allocation2 + $0x10] sm:$0xff] %vm2974, %v2931
      %2978 = vst.msk [vmem:[#allocation2 + $0x18] sm:$0xff] %vm2974, %v2933
      %2979 = vst.msk [vmem:[#allocation2 + $0x20] sm:$0xff] %vm2974, %v2935
      %2980 = vst.msk [vmem:[#allocation2 + $0x28] sm:$0xff] %vm2974, %v2937
      %2981 = vst.msk [vmem:[#allocation2 + $0x30] sm:$0xff] %vm2974, %v2939
      %2982 = vst.msk [vmem:[#allocation2 + $0x38] sm:$0xff] %vm2974, %v2941
      %2983 = vst.msk [vmem:[#allocation2 + $0x40] sm:$0xff] %vm2974, %v2943
      %2984 = vst.msk [vmem:[#allocation2 + $0x48] sm:$0xff] %vm2974, %v2945
      %2985 = vst.msk [vmem:[#allocation2 + $0x50] sm:$0xff] %vm2974, %v2947
      %2986 = vst.msk [vmem:[#allocation2 + $0x58] sm:$0xff] %vm2974, %v2949
      %2987 = vst.msk [vmem:[#allocation2 + $0x60] sm:$0xff] %vm2974, %v2951
      %2988 = vst.msk [vmem:[#allocation2 + $0x68] sm:$0xff] %vm2974, %v2953
      %2989 = vst.msk [vmem:[#allocation2 + $0x70] sm:$0xff] %vm2974, %v2955
      %2990 = vst.msk [vmem:[#allocation2 + $0x78] sm:$0xff] %vm2974, %v2957
      %v2991 = vld [vmem:[%s2268] sm:$0xe]
      %v2992 = vld [vmem:[%s2268 + $0x4] sm:$0xf]
      %v2993 = vld [vmem:[%s2268 + $0x8] sm:$0x1]
      %v2994 = vld [vmem:[%s2268 + $0xc] sm:$0xe]
      %v2995 = vld [vmem:[%s2268 + $0x10] sm:$0xf]
      %v2996 = vld [vmem:[%s2268 + $0x14] sm:$0x1]
      %v2997 = vld [vmem:[%s2268 + $0x18] sm:$0xe]
      %v2998 = vld [vmem:[%s2268 + $0x1c] sm:$0xf]
      %v2999 = vld [vmem:[%s2268 + $0x20] sm:$0x1]
      %v3000 = vld [vmem:[%s2268 + $0x24] sm:$0xe]
      %v3001 = vld [vmem:[%s2268 + $0x28] sm:$0xf]
      %v3002 = vld [vmem:[%s2268 + $0x2c] sm:$0x1]
      %v3003 = vld [vmem:[%s2268 + $0x30] sm:$0xe]
      %v3004 = vld [vmem:[%s2268 + $0x34] sm:$0xf]
      %v3005 = vld [vmem:[%s2268 + $0x38] sm:$0x1]
      %v3006 = vld [vmem:[%s2268 + $0x3c] sm:$0xe]
      %v3007 = vld [vmem:[%s2268 + $0x40] sm:$0xf]
      %v3008 = vld [vmem:[%s2268 + $0x44] sm:$0x1]
      %v3009 = vld [vmem:[%s2268 + $0x48] sm:$0xe]
      %v3010 = vld [vmem:[%s2268 + $0x4c] sm:$0xf]
      %v3011 = vld [vmem:[%s2268 + $0x50] sm:$0x1]
      %v3012 = vld [vmem:[%s2268 + $0x54] sm:$0xe]
      %v3013 = vld [vmem:[%s2268 + $0x58] sm:$0xf]
      %v3014 = vld [vmem:[%s2268 + $0x5c] sm:$0x1]
      %v3015 = vld [vmem:[%s2268 + $0x60] sm:$0xe]
      %v3016 = vld [vmem:[%s2268 + $0x64] sm:$0xf]
      %v3017 = vld [vmem:[%s2268 + $0x68] sm:$0x1]
      %v3018 = vld [vmem:[%s2268 + $0x6c] sm:$0xe]
      %v3019 = vld [vmem:[%s2268 + $0x70] sm:$0xf]
      %v3020 = vld [vmem:[%s2268 + $0x74] sm:$0x1]
      %v3021 = vld [vmem:[%s2268 + $0x78] sm:$0xe]
      %v3022 = vld [vmem:[%s2268 + $0x7c] sm:$0xf]
      %v3023 = vld [vmem:[%s2268 + $0x80] sm:$0x1]
      %v3024 = vld [vmem:[%s2268 + $0x84] sm:$0xe]
      %v3025 = vld [vmem:[%s2268 + $0x88] sm:$0xf]
      %v3026 = vld [vmem:[%s2268 + $0x8c] sm:$0x1]
      %v3027 = vld [vmem:[%s2268 + $0x90] sm:$0xe]
      %v3028 = vld [vmem:[%s2268 + $0x94] sm:$0xf]
      %v3029 = vld [vmem:[%s2268 + $0x98] sm:$0x1]
      %v3030 = vld [vmem:[%s2268 + $0x9c] sm:$0xe]
      %v3031 = vld [vmem:[%s2268 + $0xa0] sm:$0xf]
      %v3032 = vld [vmem:[%s2268 + $0xa4] sm:$0x1]
      %v3033 = vld [vmem:[%s2268 + $0xa8] sm:$0xe]
      %v3034 = vld [vmem:[%s2268 + $0xac] sm:$0xf]
      %v3035 = vld [vmem:[%s2268 + $0xb0] sm:$0x1]
      %v3036 = vld [vmem:[%s2268 + $0xb4] sm:$0xe]
      %v3037 = vld [vmem:[%s2268 + $0xb8] sm:$0xf]
      %v3038 = vld [vmem:[%s2268 + $0xbc] sm:$0x1]
      %v3087 = vrot.slane %v2991, 5
      %v3088 = vrot.slane %v3087, 4
      %v3089 = vrot.slane %v2992, 5
      %v3090 = vsel %vm998, %v3088, %v3089
      %v3091 = vrot.slane %v3089, 4
      %v3092 = vrot.slane %v2993, 5
      %v3093 = vsel %vm998, %v3091, %v3092
      %v3094 = vrot.slane %v2994, 5
      %v3095 = vrot.slane %v3094, 4
      %v3096 = vrot.slane %v2995, 5
      %v3097 = vsel %vm998, %v3095, %v3096
      %v3098 = vrot.slane %v3096, 4
      %v3099 = vrot.slane %v2996, 5
      %v3100 = vsel %vm998, %v3098, %v3099
      %v3101 = vrot.slane %v2997, 5
      %v3102 = vrot.slane %v3101, 4
      %v3103 = vrot.slane %v2998, 5
      %v3104 = vsel %vm998, %v3102, %v3103
      %v3105 = vrot.slane %v3103, 4
      %v3106 = vrot.slane %v2999, 5
      %v3107 = vsel %vm998, %v3105, %v3106
      %v3108 = vrot.slane %v3000, 5
      %v3109 = vrot.slane %v3108, 4
      %v3110 = vrot.slane %v3001, 5
      %v3111 = vsel %vm998, %v3109, %v3110
      %v3112 = vrot.slane %v3110, 4
      %v3113 = vrot.slane %v3002, 5
      %v3114 = vsel %vm998, %v3112, %v3113
      %v3115 = vrot.slane %v3003, 5
      %v3116 = vrot.slane %v3115, 4
      %v3117 = vrot.slane %v3004, 5
      %v3118 = vsel %vm998, %v3116, %v3117
      %v3119 = vrot.slane %v3117, 4
      %v3120 = vrot.slane %v3005, 5
      %v3121 = vsel %vm998, %v3119, %v3120
      %v3122 = vrot.slane %v3006, 5
      %v3123 = vrot.slane %v3122, 4
      %v3124 = vrot.slane %v3007, 5
      %v3125 = vsel %vm998, %v3123, %v3124
      %v3126 = vrot.slane %v3124, 4
      %v3127 = vrot.slane %v3008, 5
      %v3128 = vsel %vm998, %v3126, %v3127
      %v3129 = vrot.slane %v3009, 5
      %v3130 = vrot.slane %v3129, 4
      %v3131 = vrot.slane %v3010, 5
      %v3132 = vsel %vm998, %v3130, %v3131
      %v3133 = vrot.slane %v3131, 4
      %v3134 = vrot.slane %v3011, 5
      %v3135 = vsel %vm998, %v3133, %v3134
      %v3136 = vrot.slane %v3012, 5
      %v3137 = vrot.slane %v3136, 4
      %v3138 = vrot.slane %v3013, 5
      %v3139 = vsel %vm998, %v3137, %v3138
      %v3140 = vrot.slane %v3138, 4
      %v3141 = vrot.slane %v3014, 5
      %v3142 = vsel %vm998, %v3140, %v3141
      %v3143 = vrot.slane %v3015, 5
      %v3144 = vrot.slane %v3143, 4
      %v3145 = vrot.slane %v3016, 5
      %v3146 = vsel %vm998, %v3144, %v3145
      %v3147 = vrot.slane %v3145, 4
      %v3148 = vrot.slane %v3017, 5
      %v3149 = vsel %vm998, %v3147, %v3148
      %v3150 = vrot.slane %v3018, 5
      %v3151 = vrot.slane %v3150, 4
      %v3152 = vrot.slane %v3019, 5
      %v3153 = vsel %vm998, %v3151, %v3152
      %v3154 = vrot.slane %v3152, 4
      %v3155 = vrot.slane %v3020, 5
      %v3156 = vsel %vm998, %v3154, %v3155
      %v3157 = vrot.slane %v3021, 5
      %v3158 = vrot.slane %v3157, 4
      %v3159 = vrot.slane %v3022, 5
      %v3160 = vsel %vm998, %v3158, %v3159
      %v3161 = vrot.slane %v3159, 4
      %v3162 = vrot.slane %v3023, 5
      %v3163 = vsel %vm998, %v3161, %v3162
      %v3164 = vrot.slane %v3024, 5
      %v3165 = vrot.slane %v3164, 4
      %v3166 = vrot.slane %v3025, 5
      %v3167 = vsel %vm998, %v3165, %v3166
      %v3168 = vrot.slane %v3166, 4
      %v3169 = vrot.slane %v3026, 5
      %v3170 = vsel %vm998, %v3168, %v3169
      %v3171 = vrot.slane %v3027, 5
      %v3172 = vrot.slane %v3171, 4
      %v3173 = vrot.slane %v3028, 5
      %v3174 = vsel %vm998, %v3172, %v3173
      %v3175 = vrot.slane %v3173, 4
      %v3176 = vrot.slane %v3029, 5
      %v3177 = vsel %vm998, %v3175, %v3176
      %v3178 = vrot.slane %v3030, 5
      %v3179 = vrot.slane %v3178, 4
      %v3180 = vrot.slane %v3031, 5
      %v3181 = vsel %vm998, %v3179, %v3180
      %v3182 = vrot.slane %v3180, 4
      %v3183 = vrot.slane %v3032, 5
      %v3184 = vsel %vm998, %v3182, %v3183
      %v3185 = vrot.slane %v3033, 5
      %v3186 = vrot.slane %v3185, 4
      %v3187 = vrot.slane %v3034, 5
      %v3188 = vsel %vm998, %v3186, %v3187
      %v3189 = vrot.slane %v3187, 4
      %v3190 = vrot.slane %v3035, 5
      %v3191 = vsel %vm998, %v3189, %v3190
      %v3192 = vrot.slane %v3036, 5
      %v3193 = vrot.slane %v3192, 4
      %v3194 = vrot.slane %v3037, 5
      %v3195 = vsel %vm998, %v3193, %v3194
      %v3196 = vrot.slane %v3194, 4
      %v3197 = vrot.slane %v3038, 5
      %v3198 = vsel %vm998, %v3196, %v3197
      %v3199 = vunpack.c.l.b16 %v3090
      %v3200 = vunpack.c.l.b16 %v3093
      %v3201 = vunpack.c.l.b16 %v3097
      %v3202 = vunpack.c.l.b16 %v3100
      %v3203 = vunpack.c.l.b16 %v3104
      %v3204 = vunpack.c.l.b16 %v3107
      %v3205 = vunpack.c.l.b16 %v3111
      %v3206 = vunpack.c.l.b16 %v3114
      %v3207 = vunpack.c.l.b16 %v3118
      %v3208 = vunpack.c.l.b16 %v3121
      %v3209 = vunpack.c.l.b16 %v3125
      %v3210 = vunpack.c.l.b16 %v3128
      %v3211 = vunpack.c.l.b16 %v3132
      %v3212 = vunpack.c.l.b16 %v3135
      %v3213 = vunpack.c.l.b16 %v3139
      %v3214 = vunpack.c.l.b16 %v3142
      %v3215 = vunpack.c.l.b16 %v3146
      %v3216 = vunpack.c.l.b16 %v3149
      %v3217 = vunpack.c.l.b16 %v3153
      %v3218 = vunpack.c.l.b16 %v3156
      %v3219 = vunpack.c.l.b16 %v3160
      %v3220 = vunpack.c.l.b16 %v3163
      %v3221 = vunpack.c.l.b16 %v3167
      %v3222 = vunpack.c.l.b16 %v3170
      %v3223 = vunpack.c.l.b16 %v3174
      %v3224 = vunpack.c.l.b16 %v3177
      %v3225 = vunpack.c.l.b16 %v3181
      %v3226 = vunpack.c.l.b16 %v3184
      %v3227 = vunpack.c.l.b16 %v3188
      %v3228 = vunpack.c.l.b16 %v3191
      %v3229 = vunpack.c.l.b16 %v3195
      %v3230 = vunpack.c.l.b16 %v3198
      %v3231 = vpack.c.b16 %v3200, %v3199
      %v3232 = vpack.c.b16 %v3202, %v3201
      %v3233 = vpack.c.b16 %v3204, %v3203
      %v3234 = vpack.c.b16 %v3206, %v3205
      %v3235 = vpack.c.b16 %v3208, %v3207
      %v3236 = vpack.c.b16 %v3210, %v3209
      %v3237 = vpack.c.b16 %v3212, %v3211
      %v3238 = vpack.c.b16 %v3214, %v3213
      %v3239 = vpack.c.b16 %v3216, %v3215
      %v3240 = vpack.c.b16 %v3218, %v3217
      %v3241 = vpack.c.b16 %v3220, %v3219
      %v3242 = vpack.c.b16 %v3222, %v3221
      %v3243 = vpack.c.b16 %v3224, %v3223
      %v3244 = vpack.c.b16 %v3226, %v3225
      %v3245 = vpack.c.b16 %v3228, %v3227
      %v3246 = vpack.c.b16 %v3230, %v3229
      %3247 = vrot.lane.b32.xlu0 %v3231, 32
      %v3248 = vpop.permute.xlu0 %3247
      %3249 = vrot.lane.b32.xlu0 %v3232, 32
      %v3250 = vpop.permute.xlu0 %3249
      %3251 = vrot.lane.b32.xlu0 %v3233, 32
      %v3252 = vpop.permute.xlu0 %3251
      %3253 = vrot.lane.b32.xlu0 %v3234, 32
      %v3254 = vpop.permute.xlu0 %3253
      %3255 = vrot.lane.b32.xlu0 %v3235, 32
      %v3256 = vpop.permute.xlu0 %3255
      %3257 = vrot.lane.b32.xlu0 %v3236, 32
      %v3258 = vpop.permute.xlu0 %3257
      %3259 = vrot.lane.b32.xlu0 %v3237, 32
      %v3260 = vpop.permute.xlu0 %3259
      %3261 = vrot.lane.b32.xlu0 %v3238, 32
      %v3262 = vpop.permute.xlu0 %3261
      %3263 = vrot.lane.b32.xlu0 %v3239, 32
      %v3264 = vpop.permute.xlu0 %3263
      %3265 = vrot.lane.b32.xlu0 %v3240, 32
      %v3266 = vpop.permute.xlu0 %3265
      %3267 = vrot.lane.b32.xlu0 %v3241, 32
      %v3268 = vpop.permute.xlu0 %3267
      %3269 = vrot.lane.b32.xlu0 %v3242, 32
      %v3270 = vpop.permute.xlu0 %3269
      %3271 = vrot.lane.b32.xlu0 %v3243, 32
      %v3272 = vpop.permute.xlu0 %3271
      %3273 = vrot.lane.b32.xlu0 %v3244, 32
      %v3274 = vpop.permute.xlu0 %3273
      %3275 = vrot.lane.b32.xlu0 %v3245, 32
      %v3276 = vpop.permute.xlu0 %3275
      %3277 = vrot.lane.b32.xlu0 %v3246, 32
      %v3278 = vpop.permute.xlu0 %3277
      %vm3295 = vcmask 294144
      %3296 = vst.msk [vmem:[#allocation2] sm:$0xff] %vm3295, %v3248
      %3297 = vst.msk [vmem:[#allocation2 + $0x8] sm:$0xff] %vm3295, %v3250
      %3298 = vst.msk [vmem:[#allocation2 + $0x10] sm:$0xff] %vm3295, %v3252
      %3299 = vst.msk [vmem:[#allocation2 + $0x18] sm:$0xff] %vm3295, %v3254
      %3300 = vst.msk [vmem:[#allocation2 + $0x20] sm:$0xff] %vm3295, %v3256
      %3301 = vst.msk [vmem:[#allocation2 + $0x28] sm:$0xff] %vm3295, %v3258
      %3302 = vst.msk [vmem:[#allocation2 + $0x30] sm:$0xff] %vm3295, %v3260
      %3303 = vst.msk [vmem:[#allocation2 + $0x38] sm:$0xff] %vm3295, %v3262
      %3304 = vst.msk [vmem:[#allocation2 + $0x40] sm:$0xff] %vm3295, %v3264
      %3305 = vst.msk [vmem:[#allocation2 + $0x48] sm:$0xff] %vm3295, %v3266
      %3306 = vst.msk [vmem:[#allocation2 + $0x50] sm:$0xff] %vm3295, %v3268
      %3307 = vst.msk [vmem:[#allocation2 + $0x58] sm:$0xff] %vm3295, %v3270
      %3308 = vst.msk [vmem:[#allocation2 + $0x60] sm:$0xff] %vm3295, %v3272
      %3309 = vst.msk [vmem:[#allocation2 + $0x68] sm:$0xff] %vm3295, %v3274
      %3310 = vst.msk [vmem:[#allocation2 + $0x70] sm:$0xff] %vm3295, %v3276
      %3311 = vst.msk [vmem:[#allocation2 + $0x78] sm:$0xff] %vm3295, %v3278
      %v3312 = vld [vmem:[#allocation2] sm:$0xff]
      %v3313 = vld [vmem:[#allocation2 + $0x8] sm:$0xff]
      %v3314 = vld [vmem:[#allocation2 + $0x10] sm:$0xff]
      %v3315 = vld [vmem:[#allocation2 + $0x18] sm:$0xff]
      %v3316 = vld [vmem:[#allocation2 + $0x20] sm:$0xff]
      %v3317 = vld [vmem:[#allocation2 + $0x28] sm:$0xff]
      %v3318 = vld [vmem:[#allocation2 + $0x30] sm:$0xff]
      %v3319 = vld [vmem:[#allocation2 + $0x38] sm:$0xff]
      %v3320 = vld [vmem:[#allocation2 + $0x40] sm:$0xff]
      %v3321 = vld [vmem:[#allocation2 + $0x48] sm:$0xff]
      %v3322 = vld [vmem:[#allocation2 + $0x50] sm:$0xff]
      %v3323 = vld [vmem:[#allocation2 + $0x58] sm:$0xff]
      %v3324 = vld [vmem:[#allocation2 + $0x60] sm:$0xff]
      %v3325 = vld [vmem:[#allocation2 + $0x68] sm:$0xff]
      %v3326 = vld [vmem:[#allocation2 + $0x70] sm:$0xff]
      %v3327 = vld [vmem:[#allocation2 + $0x78] sm:$0xff]
      %v3328 = vld [vmem:[%s1] sm:$0xf]
      %v3329 = vld [vmem:[%s1 + $0x4] sm:$0xf]
      %v3330 = vld [vmem:[%s1 + $0x8] sm:$0xf]
      %v3331 = vld [vmem:[%s1 + $0xc] sm:$0xf]
      %v3332 = vld [vmem:[%s1 + $0x10] sm:$0x3]
      %v3338 = vunpack.c.l.b16 %v3328
      %v3339 = vunpack.c.l.b16 %v3329
      %v3340 = vunpack.c.l.b16 %v3330
      %v3341 = vunpack.c.l.b16 %v3331
      %v3342 = vunpack.c.l.b16 %v3332
      %v3343 = vpack.c.b16 %v3339, %v3338
      %v3344 = vpack.c.b16 %v3341, %v3340
      %v3345 = vpack.c.b16 %v3342, %v3342
      %vm3348 = vcmask 293888
      %v3350 = vsel %vm3348, %v3312, 0
      %v3353 = vsel %vm3348, %v3313, 0
      %v3356 = vsel %vm3348, %v3314, 0
      %v3359 = vsel %vm3348, %v3315, 0
      %v3362 = vsel %vm3348, %v3316, 0
      %v3365 = vsel %vm3348, %v3317, 0
      %v3368 = vsel %vm3348, %v3318, 0
      %v3371 = vsel %vm3348, %v3319, 0
      %v3374 = vsel %vm3348, %v3320, 0
      %v3377 = vsel %vm3348, %v3321, 0
      %v3380 = vsel %vm3348, %v3322, 0
      %v3383 = vsel %vm3348, %v3323, 0
      %v3386 = vsel %vm3348, %v3324, 0
      %v3389 = vsel %vm3348, %v3325, 0
      %v3392 = vsel %vm3348, %v3326, 0
      %v3395 = vsel %vm3348, %v3327, 0
      %vm3397 = vcmask 1041408
      %v3399 = vsel %vm3397, %v3345, 0
      %3401 = vmatprep.subr.bf16.mxu0 0
      %3402 = vmatpush1.bf16.msra.mxu0 %v3343
      %3403 = vmatprep.subr.bf16.mxu0 0
      %3404 = vmatpush1.bf16.msra.mxu0 %v3344
      %3405 = vmatprep.subr.bf16.mxu0 0
      %3406 = vmatpush1.bf16.msra.mxu0 %v3399
      %3407 = vmatprep.subr.bf16.mxu0 0
      %3408 = vmatpush1.bf16.msra.mxu0 0
      %3409 = vmatprep.subr.bf16.mxu0 0
      %3410 = vmatpush1.bf16.msra.mxu0 0
      %3411 = vmatprep.subr.bf16.mxu0 0
      %3412 = vmatpush1.bf16.msra.mxu0 0
      %3413 = vmatprep.subr.bf16.mxu0 0
      %3414 = vmatpush1.bf16.msra.mxu0 0
      %3415 = vmatprep.subr.bf16.mxu0 0
      %3416 = vmatpush1.bf16.msra.mxu0 0
      %3417 = vmatprep.subr.bf16.mxu0 0
      %3418 = vmatpush1.bf16.msra.mxu0 0
      %3419 = vmatprep.subr.bf16.mxu0 0
      %3420 = vmatpush1.bf16.msra.mxu0 0
      %3421 = vmatprep.subr.bf16.mxu0 0
      %3422 = vmatpush1.bf16.msra.mxu0 0
      %3423 = vmatprep.subr.bf16.mxu0 0
      %3424 = vmatpush1.bf16.msra.mxu0 0
      %3425 = vmatprep.subr.bf16.mxu0 0
      %3426 = vmatpush1.bf16.msra.mxu0 0
      %3427 = vmatprep.subr.bf16.mxu0 0
      %3428 = vmatpush1.bf16.msra.mxu0 0
      %3429 = vmatprep.subr.bf16.mxu0 0
      %3430 = vmatpush1.bf16.msra.mxu0 0
      %3431 = vmatprep.subr.bf16.mxu0 0
      %3432 = vmatpush1.bf16.msra.mxu0 0
      %3433 = vmatprep.mubr.bf16.mxu0 0
      %3434 = vmatmul.mubr.bf16.gmra.mrb[0].mxu0 %v3350
      %v3435 = vpop.f32.mrb[0].mxu0
      %v3436 = vadd.f32 0.0, %v3435
      %v3437 = vpop.f32.mrb[0].mxu0
      %v3438 = vpop.f32.mrb[0].mxu0
      %v3439 = vadd.f32 0.0, %v3438
      %v3440 = vpop.f32.mrb[0].mxu0
      %3441 = vmatprep.mubr.bf16.mxu0 0
      %3442 = vmatmul.mubr.bf16.gmra.mrb[0].mxu0 %v3353
      %v3443 = vpop.f32.mrb[0].mxu0
      %v3444 = vadd.f32 0.0, %v3443
      %v3445 = vpop.f32.mrb[0].mxu0
      %v3446 = vpop.f32.mrb[0].mxu0
      %v3447 = vadd.f32 0.0, %v3446
      %v3448 = vpop.f32.mrb[0].mxu0
      %3449 = vmatprep.mubr.bf16.mxu0 0
      %3450 = vmatmul.mubr.bf16.gmra.mrb[0].mxu0 %v3356
      %v3451 = vpop.f32.mrb[0].mxu0
      %v3452 = vadd.f32 0.0, %v3451
      %v3453 = vpop.f32.mrb[0].mxu0
      %v3454 = vpop.f32.mrb[0].mxu0
      %v3455 = vadd.f32 0.0, %v3454
      %v3456 = vpop.f32.mrb[0].mxu0
      %3457 = vmatprep.mubr.bf16.mxu0 0
      %3458 = vmatmul.mubr.bf16.gmra.mrb[0].mxu0 %v3359
      %v3459 = vpop.f32.mrb[0].mxu0
      %v3460 = vadd.f32 0.0, %v3459
      %v3461 = vpop.f32.mrb[0].mxu0
      %v3462 = vpop.f32.mrb[0].mxu0
      %v3463 = vadd.f32 0.0, %v3462
      %v3464 = vpop.f32.mrb[0].mxu0
      %3465 = vmatprep.mubr.bf16.mxu0 0
      %3466 = vmatmul.mubr.bf16.gmra.mrb[0].mxu0 %v3362
      %v3467 = vpop.f32.mrb[0].mxu0
      %v3468 = vadd.f32 0.0, %v3467
      %v3469 = vpop.f32.mrb[0].mxu0
      %v3470 = vpop.f32.mrb[0].mxu0
      %v3471 = vadd.f32 0.0, %v3470
      %v3472 = vpop.f32.mrb[0].mxu0
      %3473 = vmatprep.mubr.bf16.mxu0 0
      %3474 = vmatmul.mubr.bf16.gmra.mrb[0].mxu0 %v3365
      %v3475 = vpop.f32.mrb[0].mxu0
      %v3476 = vadd.f32 0.0, %v3475
      %v3477 = vpop.f32.mrb[0].mxu0
      %v3478 = vpop.f32.mrb[0].mxu0
      %v3479 = vadd.f32 0.0, %v3478
      %v3480 = vpop.f32.mrb[0].mxu0
      %3481 = vmatprep.mubr.bf16.mxu0 0
      %3482 = vmatmul.mubr.bf16.gmra.mrb[0].mxu0 %v3368
      %v3483 = vpop.f32.mrb[0].mxu0
      %v3484 = vadd.f32 0.0, %v3483
      %v3485 = vpop.f32.mrb[0].mxu0
      %v3486 = vpop.f32.mrb[0].mxu0
      %v3487 = vadd.f32 0.0, %v3486
      %v3488 = vpop.f32.mrb[0].mxu0
      %3489 = vmatprep.mubr.bf16.mxu0 0
      %3490 = vmatmul.mubr.bf16.gmra.mrb[0].mxu0 %v3371
      %v3491 = vpop.f32.mrb[0].mxu0
      %v3492 = vadd.f32 0.0, %v3491
      %v3493 = vpop.f32.mrb[0].mxu0
      %v3494 = vpop.f32.mrb[0].mxu0
      %v3495 = vadd.f32 0.0, %v3494
      %v3496 = vpop.f32.mrb[0].mxu0
      %3497 = vmatprep.mubr.bf16.mxu0 0
      %3498 = vmatmul.mubr.bf16.gmra.mrb[0].mxu0 %v3374
      %v3499 = vpop.f32.mrb[0].mxu0
      %v3500 = vadd.f32 0.0, %v3499
      %v3501 = vpop.f32.mrb[0].mxu0
      %v3502 = vpop.f32.mrb[0].mxu0
      %v3503 = vadd.f32 0.0, %v3502
      %v3504 = vpop.f32.mrb[0].mxu0
      %3505 = vmatprep.mubr.bf16.mxu0 0
      %3506 = vmatmul.mubr.bf16.gmra.mrb[0].mxu0 %v3377
      %v3507 = vpop.f32.mrb[0].mxu0
      %v3508 = vadd.f32 0.0, %v3507
      %v3509 = vpop.f32.mrb[0].mxu0
      %v3510 = vpop.f32.mrb[0].mxu0
      %v3511 = vadd.f32 0.0, %v3510
      %v3512 = vpop.f32.mrb[0].mxu0
      %3513 = vmatprep.mubr.bf16.mxu0 0
      %3514 = vmatmul.mubr.bf16.gmra.mrb[0].mxu0 %v3380
      %v3515 = vpop.f32.mrb[0].mxu0
      %v3516 = vadd.f32 0.0, %v3515
      %v3517 = vpop.f32.mrb[0].mxu0
      %v3518 = vpop.f32.mrb[0].mxu0
      %v3519 = vadd.f32 0.0, %v3518
      %v3520 = vpop.f32.mrb[0].mxu0
      %3521 = vmatprep.mubr.bf16.mxu0 0
      %3522 = vmatmul.mubr.bf16.gmra.mrb[0].mxu0 %v3383
      %v3523 = vpop.f32.mrb[0].mxu0
      %v3524 = vadd.f32 0.0, %v3523
      %v3525 = vpop.f32.mrb[0].mxu0
      %v3526 = vpop.f32.mrb[0].mxu0
      %v3527 = vadd.f32 0.0, %v3526
      %v3528 = vpop.f32.mrb[0].mxu0
      %3529 = vmatprep.mubr.bf16.mxu0 0
      %3530 = vmatmul.mubr.bf16.gmra.mrb[0].mxu0 %v3386
      %v3531 = vpop.f32.mrb[0].mxu0
      %v3532 = vadd.f32 0.0, %v3531
      %v3533 = vpop.f32.mrb[0].mxu0
      %v3534 = vpop.f32.mrb[0].mxu0
      %v3535 = vadd.f32 0.0, %v3534
      %v3536 = vpop.f32.mrb[0].mxu0
      %3537 = vmatprep.mubr.bf16.mxu0 0
      %3538 = vmatmul.mubr.bf16.gmra.mrb[0].mxu0 %v3389
      %v3539 = vpop.f32.mrb[0].mxu0
      %v3540 = vadd.f32 0.0, %v3539
      %v3541 = vpop.f32.mrb[0].mxu0
      %v3542 = vpop.f32.mrb[0].mxu0
      %v3543 = vadd.f32 0.0, %v3542
      %v3544 = vpop.f32.mrb[0].mxu0
      %3545 = vmatprep.mubr.bf16.mxu0 0
      %3546 = vmatmul.mubr.bf16.gmra.mrb[0].mxu0 %v3392
      %v3547 = vpop.f32.mrb[0].mxu0
      %v3548 = vadd.f32 0.0, %v3547
      %v3549 = vpop.f32.mrb[0].mxu0
      %v3550 = vpop.f32.mrb[0].mxu0
      %v3551 = vadd.f32 0.0, %v3550
      %v3552 = vpop.f32.mrb[0].mxu0
      %3553 = vmatprep.mubr.bf16.mxu0 0
      %3554 = vmatmul.mubr.bf16.gmra.mrb[0].mxu0 %v3395
      %v3555 = vpop.f32.mrb[0].mxu0
      %v3556 = vadd.f32 0.0, %v3555
      %v3557 = vpop.f32.mrb[0].mxu0
      %v3558 = vpop.f32.mrb[0].mxu0
      %v3559 = vadd.f32 0.0, %v3558
      %v3560 = vpop.f32.mrb[0].mxu0
      %3561 = vdwg.mxu0
      %vm3562 = vcmask 64512
      %3563 = vst.msk [vmem:[%s200] sm:$0xff] %vm3562, %v3436
      %3564 = vst.msk [vmem:[%s200 + $0x8] sm:$0xff] %vm3562, %v3439
      %3565 = vst.msk [vmem:[%s200 + $0x10] sm:$0xff] %vm3562, %v3444
      %3566 = vst.msk [vmem:[%s200 + $0x18] sm:$0xff] %vm3562, %v3447
      %3567 = vst.msk [vmem:[%s200 + $0x20] sm:$0xff] %vm3562, %v3452
      %3568 = vst.msk [vmem:[%s200 + $0x28] sm:$0xff] %vm3562, %v3455
      %3569 = vst.msk [vmem:[%s200 + $0x30] sm:$0xff] %vm3562, %v3460
      %3570 = vst.msk [vmem:[%s200 + $0x38] sm:$0xff] %vm3562, %v3463
      %3571 = vst.msk [vmem:[%s200 + $0x40] sm:$0xff] %vm3562, %v3468
      %3572 = vst.msk [vmem:[%s200 + $0x48] sm:$0xff] %vm3562, %v3471
      %3573 = vst.msk [vmem:[%s200 + $0x50] sm:$0xff] %vm3562, %v3476
      %3574 = vst.msk [vmem:[%s200 + $0x58] sm:$0xff] %vm3562, %v3479
      %3575 = vst.msk [vmem:[%s200 + $0x60] sm:$0xff] %vm3562, %v3484
      %3576 = vst.msk [vmem:[%s200 + $0x68] sm:$0xff] %vm3562, %v3487
      %3577 = vst.msk [vmem:[%s200 + $0x70] sm:$0xff] %vm3562, %v3492
      %3578 = vst.msk [vmem:[%s200 + $0x78] sm:$0xff] %vm3562, %v3495
      %3579 = vst.msk [vmem:[%s200 + $0x80] sm:$0xff] %vm3562, %v3500
      %3580 = vst.msk [vmem:[%s200 + $0x88] sm:$0xff] %vm3562, %v3503
      %3581 = vst.msk [vmem:[%s200 + $0x90] sm:$0xff] %vm3562, %v3508
      %3582 = vst.msk [vmem:[%s200 + $0x98] sm:$0xff] %vm3562, %v3511
      %3583 = vst.msk [vmem:[%s200 + $0xa0] sm:$0xff] %vm3562, %v3516
      %3584 = vst.msk [vmem:[%s200 + $0xa8] sm:$0xff] %vm3562, %v3519
      %3585 = vst.msk [vmem:[%s200 + $0xb0] sm:$0xff] %vm3562, %v3524
      %3586 = vst.msk [vmem:[%s200 + $0xb8] sm:$0xff] %vm3562, %v3527
      %3587 = vst.msk [vmem:[%s200 + $0xc0] sm:$0xff] %vm3562, %v3532
      %3588 = vst.msk [vmem:[%s200 + $0xc8] sm:$0xff] %vm3562, %v3535
      %3589 = vst.msk [vmem:[%s200 + $0xd0] sm:$0xff] %vm3562, %v3540
      %3590 = vst.msk [vmem:[%s200 + $0xd8] sm:$0xff] %vm3562, %v3543
      %3591 = vst.msk [vmem:[%s200 + $0xe0] sm:$0xff] %vm3562, %v3548
      %3592 = vst.msk [vmem:[%s200 + $0xe8] sm:$0xff] %vm3562, %v3551
      %3593 = vst.msk [vmem:[%s200 + $0xf0] sm:$0xff] %vm3562, %v3556
      %3594 = vst.msk [vmem:[%s200 + $0xf8] sm:$0xff] %vm3562, %v3559
      %p3595 = scmp.eq.s32.totalorder %s20, 0
      // Predicated region
      $region29: #{resnet_block_forward.3} parent=27 // pred_check
        %p3596 = pneg %p3595
      $region30: #{resnet_block_forward.3} parent=27 // pred_check_branch
        %3598 = sbr.rel (%p3596) target = $region32
      $region31: #{resnet_block_forward.3} parent=27 // pred_region
        %vm3599 = vcmask 58368
        %3600 = vst.msk [vmem:[%s205] sm:$0x3] %vm3599, 0.0
      $region32: #{resnet_block_forward.3} parent=27 // pred_fallthru
        _
      %v3601 = vsel %vm3562, %v3436, 0.0
      %v3602 = vsel %vm3562, %v3439, 0.0
      %v3603 = vadd.f32 %v3601, %v3602
      %v3604 = vsel %vm3562, %v3444, 0.0
      %v3605 = vadd.f32 %v3603, %v3604
      %v3606 = vsel %vm3562, %v3447, 0.0
      %v3607 = vadd.f32 %v3605, %v3606
      %v3608 = vsel %vm3562, %v3452, 0.0
      %v3609 = vadd.f32 %v3607, %v3608
      %v3610 = vsel %vm3562, %v3455, 0.0
      %v3611 = vadd.f32 %v3609, %v3610
      %v3612 = vsel %vm3562, %v3460, 0.0
      %v3613 = vadd.f32 %v3611, %v3612
      %v3614 = vsel %vm3562, %v3463, 0.0
      %v3615 = vadd.f32 %v3613, %v3614
      %v3616 = vsel %vm3562, %v3468, 0.0
      %v3617 = vadd.f32 %v3615, %v3616
      %v3618 = vsel %vm3562, %v3471, 0.0
      %v3619 = vadd.f32 %v3617, %v3618
      %v3620 = vsel %vm3562, %v3476, 0.0
      %v3621 = vadd.f32 %v3619, %v3620
      %v3622 = vsel %vm3562, %v3479, 0.0
      %v3623 = vadd.f32 %v3621, %v3622
      %v3624 = vsel %vm3562, %v3484, 0.0
      %v3625 = vadd.f32 %v3623, %v3624
      %v3626 = vsel %vm3562, %v3487, 0.0
      %v3627 = vadd.f32 %v3625, %v3626
      %v3628 = vsel %vm3562, %v3492, 0.0
      %v3629 = vadd.f32 %v3627, %v3628
      %v3630 = vsel %vm3562, %v3495, 0.0
      %v3631 = vadd.f32 %v3629, %v3630
      %v3632 = vsel %vm3562, %v3500, 0.0
      %v3633 = vadd.f32 %v3631, %v3632
      %v3634 = vsel %vm3562, %v3503, 0.0
      %v3635 = vadd.f32 %v3633, %v3634
      %v3636 = vsel %vm3562, %v3508, 0.0
      %v3637 = vadd.f32 %v3635, %v3636
      %v3638 = vsel %vm3562, %v3511, 0.0
      %v3639 = vadd.f32 %v3637, %v3638
      %v3640 = vsel %vm3562, %v3516, 0.0
      %v3641 = vadd.f32 %v3639, %v3640
      %v3642 = vsel %vm3562, %v3519, 0.0
      %v3643 = vadd.f32 %v3641, %v3642
      %v3644 = vsel %vm3562, %v3524, 0.0
      %v3645 = vadd.f32 %v3643, %v3644
      %v3646 = vsel %vm3562, %v3527, 0.0
      %v3647 = vadd.f32 %v3645, %v3646
      %v3648 = vsel %vm3562, %v3532, 0.0
      %v3649 = vadd.f32 %v3647, %v3648
      %v3650 = vsel %vm3562, %v3535, 0.0
      %v3651 = vadd.f32 %v3649, %v3650
      %v3652 = vsel %vm3562, %v3540, 0.0
      %v3653 = vadd.f32 %v3651, %v3652
      %v3654 = vsel %vm3562, %v3543, 0.0
      %v3655 = vadd.f32 %v3653, %v3654
      %v3656 = vsel %vm3562, %v3548, 0.0
      %v3657 = vadd.f32 %v3655, %v3656
      %v3658 = vsel %vm3562, %v3551, 0.0
      %v3659 = vadd.f32 %v3657, %v3658
      %v3660 = vsel %vm3562, %v3556, 0.0
      %v3661 = vadd.f32 %v3659, %v3660
      %v3662 = vsel %vm3562, %v3559, 0.0
      %v3663 = vadd.f32 %v3661, %v3662
      %v3664 = vrot.slane %v3663, 4
      %v3665 = vadd.f32 %v3663, %v3664
      %v3666 = vrot.slane %v3665, 2
      %v3667 = vadd.f32 %v3665, %v3666
      %v3668 = vrot.slane %v3667, 1
      %v3669 = vadd.f32 %v3667, %v3668
      %v3670 = vmul.f32 %v3436, %v3436
      %v3671 = vmul.f32 %v3439, %v3439
      %v3672 = vmul.f32 %v3444, %v3444
      %v3673 = vmul.f32 %v3447, %v3447
      %v3674 = vmul.f32 %v3452, %v3452
      %v3675 = vmul.f32 %v3455, %v3455
      %v3676 = vmul.f32 %v3460, %v3460
      %v3677 = vmul.f32 %v3463, %v3463
      %v3678 = vmul.f32 %v3468, %v3468
      %v3679 = vmul.f32 %v3471, %v3471
      %v3680 = vmul.f32 %v3476, %v3476
      %v3681 = vmul.f32 %v3479, %v3479
      %v3682 = vmul.f32 %v3484, %v3484
      %v3683 = vmul.f32 %v3487, %v3487
      %v3684 = vmul.f32 %v3492, %v3492
      %v3685 = vmul.f32 %v3495, %v3495
      %v3686 = vmul.f32 %v3500, %v3500
      %v3687 = vmul.f32 %v3503, %v3503
      %v3688 = vmul.f32 %v3508, %v3508
      %v3689 = vmul.f32 %v3511, %v3511
      %v3690 = vmul.f32 %v3516, %v3516
      %v3691 = vmul.f32 %v3519, %v3519
      %v3692 = vmul.f32 %v3524, %v3524
      %v3693 = vmul.f32 %v3527, %v3527
      %v3694 = vmul.f32 %v3532, %v3532
      %v3695 = vmul.f32 %v3535, %v3535
      %v3696 = vmul.f32 %v3540, %v3540
      %v3697 = vmul.f32 %v3543, %v3543
      %v3698 = vmul.f32 %v3548, %v3548
      %v3699 = vmul.f32 %v3551, %v3551
      %v3700 = vmul.f32 %v3556, %v3556
      %v3701 = vmul.f32 %v3559, %v3559
      %v3702 = vsel %vm3562, %v3670, 0.0
      %v3703 = vsel %vm3562, %v3671, 0.0
      %v3704 = vadd.f32 %v3702, %v3703
      %v3705 = vsel %vm3562, %v3672, 0.0
      %v3706 = vadd.f32 %v3704, %v3705
      %v3707 = vsel %vm3562, %v3673, 0.0
      %v3708 = vadd.f32 %v3706, %v3707
      %v3709 = vsel %vm3562, %v3674, 0.0
      %v3710 = vadd.f32 %v3708, %v3709
      %v3711 = vsel %vm3562, %v3675, 0.0
      %v3712 = vadd.f32 %v3710, %v3711
      %v3713 = vsel %vm3562, %v3676, 0.0
      %v3714 = vadd.f32 %v3712, %v3713
      %v3715 = vsel %vm3562, %v3677, 0.0
      %v3716 = vadd.f32 %v3714, %v3715
      %v3717 = vsel %vm3562, %v3678, 0.0
      %v3718 = vadd.f32 %v3716, %v3717
      %v3719 = vsel %vm3562, %v3679, 0.0
      %v3720 = vadd.f32 %v3718, %v3719
      %v3721 = vsel %vm3562, %v3680, 0.0
      %v3722 = vadd.f32 %v3720, %v3721
      %v3723 = vsel %vm3562, %v3681, 0.0
      %v3724 = vadd.f32 %v3722, %v3723
      %v3725 = vsel %vm3562, %v3682, 0.0
      %v3726 = vadd.f32 %v3724, %v3725
      %v3727 = vsel %vm3562, %v3683, 0.0
      %v3728 = vadd.f32 %v3726, %v3727
      %v3729 = vsel %vm3562, %v3684, 0.0
      %v3730 = vadd.f32 %v3728, %v3729
      %v3731 = vsel %vm3562, %v3685, 0.0
      %v3732 = vadd.f32 %v3730, %v3731
      %v3733 = vsel %vm3562, %v3686, 0.0
      %v3734 = vadd.f32 %v3732, %v3733
      %v3735 = vsel %vm3562, %v3687, 0.0
      %v3736 = vadd.f32 %v3734, %v3735
      %v3737 = vsel %vm3562, %v3688, 0.0
      %v3738 = vadd.f32 %v3736, %v3737
      %v3739 = vsel %vm3562, %v3689, 0.0
      %v3740 = vadd.f32 %v3738, %v3739
      %v3741 = vsel %vm3562, %v3690, 0.0
      %v3742 = vadd.f32 %v3740, %v3741
      %v3743 = vsel %vm3562, %v3691, 0.0
      %v3744 = vadd.f32 %v3742, %v3743
      %v3745 = vsel %vm3562, %v3692, 0.0
      %v3746 = vadd.f32 %v3744, %v3745
      %v3747 = vsel %vm3562, %v3693, 0.0
      %v3748 = vadd.f32 %v3746, %v3747
      %v3749 = vsel %vm3562, %v3694, 0.0
      %v3750 = vadd.f32 %v3748, %v3749
      %v3751 = vsel %vm3562, %v3695, 0.0
      %v3752 = vadd.f32 %v3750, %v3751
      %v3753 = vsel %vm3562, %v3696, 0.0
      %v3754 = vadd.f32 %v3752, %v3753
      %v3755 = vsel %vm3562, %v3697, 0.0
      %v3756 = vadd.f32 %v3754, %v3755
      %v3757 = vsel %vm3562, %v3698, 0.0
      %v3758 = vadd.f32 %v3756, %v3757
      %v3759 = vsel %vm3562, %v3699, 0.0
      %v3760 = vadd.f32 %v3758, %v3759
      %v3761 = vsel %vm3562, %v3700, 0.0
      %v3762 = vadd.f32 %v3760, %v3761
      %v3763 = vsel %vm3562, %v3701, 0.0
      %v3764 = vadd.f32 %v3762, %v3763
      %v3765 = vrot.slane %v3764, 4
      %v3766 = vadd.f32 %v3764, %v3765
      %v3767 = vrot.slane %v3766, 2
      %v3768 = vadd.f32 %v3766, %v3767
      %v3769 = vrot.slane %v3768, 1
      %v3770 = vadd.f32 %v3768, %v3769
      %vm3771 = vcmask 1040384
      %v3772 = vsel %vm3771, %v3669, %v3770
      %v3773 = vld [vmem:[%s205] sm:$0x3]
      %v3774 = vadd.f32 %v3773, %v3772
      %vm3775 = vcmask 58368
      %3776 = vst.msk [vmem:[%s205] sm:$0x3] %vm3775, %v3774
      %s3777 = sadd.s32 %s19, %s20
      %p3778 = scmp.lt.s32.totalorder %s3777, 1
      %s3779 = scalar_select %p3778, %s3777, 1
      %s3780 = smul.addr %s3779, 32
      %s3781 = smul.addr %s3780, 8
      %s3782 = scalar_lea.vmem %s2, %s3781
      %p3783 = scmp.lt.s32.totalorder %s19, 1
      %s3784 = scalar_select %p3783, %s19, 1
      %s3785 = smul.addr %s3784, 2
      %s3786 = scalar_lea.vmem %s3, %s3785
      // Predicated region
      $region33: #{resnet_block_forward.3} parent=27 // pred_check
        %p3787 = pneg %p96
      $region34: #{resnet_block_forward.3} parent=27 // pred_check_branch
        %3789 = sbr.rel (%p3787) target = $region36
      $region35: #{resnet_block_forward.3} parent=27 // pred_region
        %s3790 = sadd.s32 %s19, %s20
      $region36: #{resnet_block_forward.3} parent=27 // pred_fallthru
        _
      // Predicated region
      $region37: #{resnet_block_forward.3} parent=27 // pred_check
        %p3791 = pneg %p122
      $region38: #{resnet_block_forward.3} parent=27 // pred_check_branch
        %3793 = sbr.rel (%p3791) target = $region40
      $region39: #{resnet_block_forward.3} parent=27 // pred_region
        _
      $region40: #{resnet_block_forward.3} parent=27 // pred_fallthru
        _
    $region28: #{resnet_block_forward.3} parent=5 // pred_fallthru
      _
    %p3794 = scmp.le.s32.totalorder 2, %s10
    // Predicated region
    $region41: #{resnet_block_forward.3} parent=5 // pred_check
      %p3795 = pneg %p3794
    $region42: #{resnet_block_forward.3} parent=5 // pred_check_branch
      %3797 = sbr.rel (%p3795) target = $region44
    $region43: #{resnet_block_forward.3} parent=5 // pred_region
      %s3798 = ssub.s32 %s10, 2
      // Predicated region
      $region45: #{resnet_block_forward.3} parent=43 // pred_check
        %p3799 = pneg %p102
      $region46: #{resnet_block_forward.3} parent=43 // pred_check_branch
        %3801 = sbr.rel (%p3799) target = $region48
      $region47: #{resnet_block_forward.3} parent=43 // pred_region
        %s3802 = sadd.s32 %s21, %s22
        %p3803 = scmp.lt.s32.totalorder %s3802, 1
        %s3804 = scalar_select %p3803, %s3802, 1
        %s3805 = smul.addr %s3804, 32
        %s3806 = smul.addr %s3805, 8
        %s3807 = scalar_lea.vmem %s2, %s3806
      $region48: #{resnet_block_forward.3} parent=43 // pred_fallthru
        _
      // Predicated region
      $region49: #{resnet_block_forward.3} parent=43 // pred_check
        %p3808 = pneg %p128
      $region50: #{resnet_block_forward.3} parent=43 // pred_check_branch
        %3810 = sbr.rel (%p3808) target = $region52
      $region51: #{resnet_block_forward.3} parent=43 // pred_region
        %p3811 = scmp.lt.s32.totalorder %s21, 1
        %s3812 = scalar_select %p3811, %s21, 1
        %s3813 = smul.addr %s3812, 2
        %s3814 = scalar_lea.vmem %s3, %s3813
      $region52: #{resnet_block_forward.3} parent=43 // pred_fallthru
        _
    $region44: #{resnet_block_forward.3} parent=5 // pred_fallthru
      _
  $region6: #{resnet_block_forward.3} parent=0 // loop_footer
    %s14 = sadd.s32 1, %s10
  $region7: #{resnet_block_forward.3} parent=0 // loop_footer_branch
    %9 = sbr.rel target = $region3
  $region8: #{resnet_block_forward.3} parent=0 // loop_exit
    _

// kernel: resnet_block_forward.4
$region0: #{resnet_block_forward.4}
  #allocation0 [shape = 'u32[]', space=smem, size = 0x4, offset = 0x4, fixed_abs, tag = 'smem constant byte address 0x4 - core index']
  #allocation1 [shape = 'u32[144,128]{1,0:T(1,128)}', space=vmem, size = 0x12000, scoped, tag = 'internal scratch']
  #allocation2 [shape = 'bf16[18,18,8]{2,1,0:T(8,128)(2,1)}', space=vmem, size = 0x1b000, scoped, tag = 'scratch operand']
  #allocation3 [shape = 'bf16[256,72]{1,0:T(16,128)(2,1)}', space=vmem, size = 0x10000, scoped, tag = 'scratch operand']
  %s0 = inlined_call_operand.vmem [shape: f32[2,16,16,8], index: 0, kind: input, shape index: {}]
  %s1 = inlined_call_operand.vmem [shape: f32[1,8], index: 1, kind: input, shape index: {}]
  %s2 = inlined_call_operand.vmem [shape: f32[1,8], index: 2, kind: input, shape index: {}]
  %s3 = inlined_call_operand.vmem [shape: bf16[72,8], index: 3, kind: input, shape index: {}]
  %s4 = inlined_call_operand.vmem [shape: f32[2,16,16,8], index: 4, kind: output, shape index: {0}]
  %s5 = inlined_call_operand.vmem [shape: f32[2,2,8], index: 5, kind: output, shape index: {1}]
  %6 = xla_tuple %s4, %s5
  %s7 = sld [smem:[#allocation0]]
  $region65: #{resnet_block_forward.4} parent=0
    _
  %s9 = ssub.s32 1, %s7
  %s10 = scalar_select 0, %s9, %s7
  loop: start=0, step=1, limit=4
  $region2: #{resnet_block_forward.4} parent=0 // loop_pre_header
    _
  $region3: #{resnet_block_forward.4} parent=0 // loop_header
    %s12 = sphi 0, %s16
    %p13 = scmp.ge.s32.totalorder %s12, 4
    %s19 = sphi 0, %s31
    %s20 = sphi 0, %s27
    %s21 = sphi 0, %s19
    %s22 = sphi 0, %s20
    %s23 = sphi 0, %s21
    %s24 = sphi 0, %s22
    %s36 = sphi 0, %s38
    %s39 = sphi 0, %s36
    %s40 = sphi 0, %s39
    %s56 = sphi 0, %s40
    %s60 = sphi 0, %s60
    %s62 = sphi 0, %s60
    %s63 = sphi 0, %s62
    %s77 = sphi 0, %s63
    %s81 = sphi 0, %s81
    %s83 = sphi 0, %s81
    %s84 = sphi 0, %s83
    %s98 = sphi 0, %s84
    %s102 = sphi 0, %s102
    %s104 = sphi 0, %s102
    %s105 = sphi 0, %s104
    %s119 = sphi 0, %s105
    %s127 = sphi 0, %s129
    %s130 = sphi 0, %s127
    %s131 = sphi 0, %s130
    %s147 = sphi 0, %s131
    %s153 = sphi 0, %s155
    %s156 = sphi 0, %s153
    %s157 = sphi 0, %s156
    %s173 = sphi 0, %s157
  $region4: #{resnet_block_forward.4} parent=0 // loop_header_branch
    %15 = sbr.rel (%p13) target = $region8
  $region5: #{resnet_block_forward.4} parent=0 // loop_body
    %s17 = ssub.s32 %s12, 1
    %s18 = ssub.s32 %s12, 2
    %s25 = sadd.s32 1, %s20
    %p26 = scmp.ge.s32.totalorder %s25, 1
    %s27 = scalar_select %p26, 0, %s25
    %s28 = sadd.s32 1, %s19
    %s29 = scalar_select %p26, %s28, %s19
    %p30 = scmp.ge.s32.totalorder %s29, 2
    %s31 = scalar_select %p30, 0, %s29
    %s32 = sadd.s32 %s19, %s20
    %s33 = sadd.s32 %s31, %s27
    %s34 = ssub.s32 %s32, %s33
    %p35 = scmp.eq.s32.totalorder %s34, 0
    %s37 = sadd.s32 %s36, 1
    %s38 = scalar_select %p35, %s36, %s37
    %p41 = pneg %p35
    %p42 = scmp.eq.s32.totalorder %s12, 1
    %p43 = por %p41, %p42
    %p44 = scmp.ne.s32.totalorder %s36, %s39
    %p45 = scmp.eq.s32.totalorder %s12, 0
    %p46 = por %p44, %p45
    %p47 = scmp.ne.s32.totalorder %s36, %s39
    %p48 = scmp.eq.s32.totalorder %s17, 1
    %p49 = por %p47, %p48
    %p50 = scmp.ne.s32.totalorder %s39, %s40
    %p51 = scmp.eq.s32.totalorder %s17, 0
    %p52 = por %p50, %p51
    %p53 = scmp.ne.s32.totalorder %s39, %s40
    %p54 = scmp.eq.s32.totalorder %s18, 1
    %p55 = por %p53, %p54
    %p57 = scmp.ne.s32.totalorder %s40, %s56
    %p58 = scmp.eq.s32.totalorder %s18, 0
    %p59 = por %p57, %p58
    %s61 = sadd.s32 %s60, 1
    %p64 = scmp.eq.s32.totalorder %s12, 1
    %p65 = scmp.ne.s32.totalorder %s60, %s62
    %p66 = scmp.eq.s32.totalorder %s12, 0
    %p67 = por %p65, %p66
    %p68 = scmp.ne.s32.totalorder %s60, %s62
    %p69 = scmp.eq.s32.totalorder %s17, 1
    %p70 = por %p68, %p69
    %p71 = scmp.ne.s32.totalorder %s62, %s63
    %p72 = scmp.eq.s32.totalorder %s17, 0
    %p73 = por %p71, %p72
    %p74 = scmp.ne.s32.totalorder %s62, %s63
    %p75 = scmp.eq.s32.totalorder %s18, 1
    %p76 = por %p74, %p75
    %p78 = scmp.ne.s32.totalorder %s63, %s77
    %p79 = scmp.eq.s32.totalorder %s18, 0
    %p80 = por %p78, %p79
    %s82 = sadd.s32 %s81, 1
    %p85 = scmp.eq.s32.totalorder %s12, 1
    %p86 = scmp.ne.s32.totalorder %s81, %s83
    %p87 = scmp.eq.s32.totalorder %s12, 0
    %p88 = por %p86, %p87
    %p89 = scmp.ne.s32.totalorder %s81, %s83
    %p90 = scmp.eq.s32.totalorder %s17, 1
    %p91 = por %p89, %p90
    %p92 = scmp.ne.s32.totalorder %s83, %s84
    %p93 = scmp.eq.s32.totalorder %s17, 0
    %p94 = por %p92, %p93
    %p95 = scmp.ne.s32.totalorder %s83, %s84
    %p96 = scmp.eq.s32.totalorder %s18, 1
    %p97 = por %p95, %p96
    %p99 = scmp.ne.s32.totalorder %s84, %s98
    %p100 = scmp.eq.s32.totalorder %s18, 0
    %p101 = por %p99, %p100
    %s103 = sadd.s32 %s102, 1
    %p106 = scmp.eq.s32.totalorder %s12, 1
    %p107 = scmp.ne.s32.totalorder %s102, %s104
    %p108 = scmp.eq.s32.totalorder %s12, 0
    %p109 = por %p107, %p108
    %p110 = scmp.ne.s32.totalorder %s102, %s104
    %p111 = scmp.eq.s32.totalorder %s17, 1
    %p112 = por %p110, %p111
    %p113 = scmp.ne.s32.totalorder %s104, %s105
    %p114 = scmp.eq.s32.totalorder %s17, 0
    %p115 = por %p113, %p114
    %p116 = scmp.ne.s32.totalorder %s104, %s105
    %p117 = scmp.eq.s32.totalorder %s18, 1
    %p118 = por %p116, %p117
    %p120 = scmp.ne.s32.totalorder %s105, %s119
    %p121 = scmp.eq.s32.totalorder %s18, 0
    %p122 = por %p120, %p121
    %s123 = sadd.s32 %s19, %s20
    %s124 = sadd.s32 %s31, %s27
    %s125 = ssub.s32 %s123, %s124
    %p126 = scmp.eq.s32.totalorder %s125, 0
    %s128 = sadd.s32 %s127, 1
    %s129 = scalar_select %p126, %s127, %s128
    %p132 = pneg %p126
    %p133 = scmp.eq.s32.totalorder %s12, 1
    %p134 = por %p132, %p133
    %p135 = scmp.ne.s32.totalorder %s127, %s130
    %p136 = scmp.eq.s32.totalorder %s12, 0
    %p137 = por %p135, %p136
    %p138 = scmp.ne.s32.totalorder %s127, %s130
    %p139 = scmp.eq.s32.totalorder %s17, 1
    %p140 = por %p138, %p139
    %p141 = scmp.ne.s32.totalorder %s130, %s131
    %p142 = scmp.eq.s32.totalorder %s17, 0
    %p143 = por %p141, %p142
    %p144 = scmp.ne.s32.totalorder %s130, %s131
    %p145 = scmp.eq.s32.totalorder %s18, 1
    %p146 = por %p144, %p145
    %p148 = scmp.ne.s32.totalorder %s131, %s147
    %p149 = scmp.eq.s32.totalorder %s18, 0
    %p150 = por %p148, %p149
    %s151 = ssub.s32 %s19, %s31
    %p152 = scmp.eq.s32.totalorder %s151, 0
    %s154 = sadd.s32 %s153, 1
    %s155 = scalar_select %p152, %s153, %s154
    %p158 = pneg %p152
    %p159 = scmp.eq.s32.totalorder %s12, 1
    %p160 = por %p158, %p159
    %p161 = scmp.ne.s32.totalorder %s153, %s156
    %p162 = scmp.eq.s32.totalorder %s12, 0
    %p163 = por %p161, %p162
    %p164 = scmp.ne.s32.totalorder %s153, %s156
    %p165 = scmp.eq.s32.totalorder %s17, 1
    %p166 = por %p164, %p165
    %p167 = scmp.ne.s32.totalorder %s156, %s157
    %p168 = scmp.eq.s32.totalorder %s17, 0
    %p169 = por %p167, %p168
    %p170 = scmp.ne.s32.totalorder %s156, %s157
    %p171 = scmp.eq.s32.totalorder %s18, 1
    %p172 = por %p170, %p171
    %p174 = scmp.ne.s32.totalorder %s157, %s173
    %p175 = scmp.eq.s32.totalorder %s18, 0
    %p176 = por %p174, %p175
    %p177 = scmp.le.s32.totalorder 1, %s12
    %p178 = scmp.lt.s32.totalorder %s12, 3
    %p179 = pnand %p177, %p178
    %p180 = pneg %p179
    // Predicated region
    $region9: #{resnet_block_forward.4} parent=5 // pred_check
      _
    $region10: #{resnet_block_forward.4} parent=5 // pred_check_branch
      %182 = sbr.rel (%p179) target = $region12
    $region11: #{resnet_block_forward.4} parent=5 // pred_region
      %s183 = ssub.s32 %s12, 1
      // Predicated region
      $region13: #{resnet_block_forward.4} parent=11 // pred_check
        %p184 = pneg %p73
      $region14: #{resnet_block_forward.4} parent=11 // pred_check_branch
        %186 = sbr.rel (%p184) target = $region16
      $region15: #{resnet_block_forward.4} parent=11 // pred_region
        _
      $region16: #{resnet_block_forward.4} parent=11 // pred_fallthru
        _
      // Predicated region
      $region17: #{resnet_block_forward.4} parent=11 // pred_check
        %p187 = pneg %p94
      $region18: #{resnet_block_forward.4} parent=11 // pred_check_branch
        %189 = sbr.rel (%p187) target = $region20
      $region19: #{resnet_block_forward.4} parent=11 // pred_region
        _
      $region20: #{resnet_block_forward.4} parent=11 // pred_fallthru
        _
      // Predicated region
      $region21: #{resnet_block_forward.4} parent=11 // pred_check
        %p190 = pneg %p115
      $region22: #{resnet_block_forward.4} parent=11 // pred_check_branch
        %192 = sbr.rel (%p190) target = $region24
      $region23: #{resnet_block_forward.4} parent=11 // pred_region
        _
      $region24: #{resnet_block_forward.4} parent=11 // pred_fallthru
        _
    $region12: #{resnet_block_forward.4} parent=5 // pred_fallthru
      _
    %p193 = scmp.lt.s32.totalorder %s12, 2
    // Predicated region
    $region25: #{resnet_block_forward.4} parent=5 // pred_check
      %p194 = pneg %p193
    $region26: #{resnet_block_forward.4} parent=5 // pred_check_branch
      %196 = sbr.rel (%p194) target = $region28
    $region27: #{resnet_block_forward.4} parent=5 // pred_region
      // Predicated region
      $region29: #{resnet_block_forward.4} parent=27 // pred_check
        %p197 = pneg %p46
      $region30: #{resnet_block_forward.4} parent=27 // pred_check_branch
        %199 = sbr.rel (%p197) target = $region32
      $region31: #{resnet_block_forward.4} parent=27 // pred_region
        %s200 = sadd.s32 %s19, %s20
        %p201 = scmp.lt.s32.totalorder %s200, 1
        %s202 = scalar_select %p201, %s200, 1
        %s203 = smul.addr %s202, 32
        %s204 = smul.addr %s203, 8
        %s205 = scalar_lea.vmem %s0, %s204
        %s206 = sadd.s32 %s19, %s20
      $region32: #{resnet_block_forward.4} parent=27 // pred_fallthru
        _
    $region28: #{resnet_block_forward.4} parent=5 // pred_fallthru
      _
    %p207 = scmp.le.s32.totalorder 1, %s12
    %p208 = scmp.lt.s32.totalorder %s12, 3
    %p209 = pnand %p207, %p208
    %p210 = pneg %p209
    // Predicated region
    $region33: #{resnet_block_forward.4} parent=5 // pred_check
      _
    $region34: #{resnet_block_forward.4} parent=5 // pred_check_branch
      %212 = sbr.rel (%p209) target = $region36
    $region35: #{resnet_block_forward.4} parent=5 // pred_region
      %s213 = ssub.s32 %s12, 1
      %s214 = sadd.s32 %s21, %s22
      %p215 = scmp.lt.s32.totalorder %s214, 1
      %s216 = scalar_select %p215, %s214, 1
      %s217 = smul.addr %s216, 32
      %s218 = smul.addr %s217, 8
      %s219 = scalar_lea.vmem %s0, %s218
      %p220 = pneg %p52
      %p221 = pneg %p49
      %p222 = pneg %p73
      %p223 = pneg %p70
      %p224 = pneg %p94
      %p225 = pneg %p91
      %p226 = pneg %p115
      %p227 = pneg %p112
      %p228 = pneg %p143
      %p229 = pneg %p140
      %s230 = sadd.s32 %s21, %s22
      %p231 = scmp.lt.s32.totalorder %s230, 1
      %s232 = scalar_select %p231, %s230, 1
      %s233 = smul.addr %s232, 32
      %s234 = smul.addr %s233, 8
      %s235 = scalar_lea.vmem %s4, %s234
      %p236 = pneg %p169
      %p237 = pneg %p166
      %p238 = scmp.lt.s32.totalorder %s21, 1
      %s239 = scalar_select %p238, %s21, 1
      %s240 = smul.addr %s239, 2
      %s241 = scalar_lea.vmem %s5, %s240
      %s242 = sadd.s32 %s21, %s22
      %p243 = scmp.lt.s32.totalorder %s242, 1
      %s244 = scalar_select %p243, %s242, 1
      %s245 = smul.addr %s244, 32
      %s246 = smul.addr %s245, 8
      %s247 = scalar_lea.vmem %s0, %s246
      %s248 = sadd.s32 %s21, %s22
      %s249 = sadd.s32 %s21, %s22
      %p250 = scmp.lt.s32.totalorder %s249, 1
      %s251 = scalar_select %p250, %s249, 1
      %s252 = smul.addr %s251, 32
      %s253 = smul.addr %s252, 8
      %s254 = scalar_lea.vmem %s4, %s253
      %s255 = sadd.s32 %s21, %s22
      %p256 = scmp.lt.s32.totalorder %s21, 1
      %s257 = scalar_select %p256, %s21, 1
      %s258 = smul.addr %s257, 2
      %s259 = scalar_lea.vmem %s5, %s258
      %p261 = scmp.eq.s32.totalorder %s22, 0
      // Predicated region
      $region37: #{resnet_block_forward.4} parent=35 // pred_check
        %p262 = pneg %p261
      $region38: #{resnet_block_forward.4} parent=35 // pred_check_branch
        %264 = sbr.rel (%p262) target = $region40
      $region39: #{resnet_block_forward.4} parent=35 // pred_region
        %vm265 = vcmask 60416
        %266 = vst.msk [vmem:[#allocation2] sm:$0xf] %vm265, 0
        %267 = vst.msk [vmem:[#allocation2 + $0x4] sm:$0xf] %vm265, 0
        %vm268 = vcmask 57344
        %269 = vst.msk [vmem:[#allocation2 + $0x8] sm:$0x1] %vm268, 0
        %270 = vst.msk [vmem:[#allocation2 + $0xc] sm:$0xf] %vm265, 0
        %271 = vst.msk [vmem:[#allocation2 + $0x10] sm:$0xf] %vm265, 0
        %272 = vst.msk [vmem:[#allocation2 + $0x14] sm:$0x1] %vm268, 0
        %273 = vst.msk [vmem:[#allocation2 + $0x18] sm:$0xf] %vm265, 0
        %274 = vst.msk [vmem:[#allocation2 + $0x1c] sm:$0xf] %vm265, 0
        %275 = vst.msk [vmem:[#allocation2 + $0x20] sm:$0x1] %vm268, 0
        %276 = vst.msk [vmem:[#allocation2 + $0x24] sm:$0xf] %vm265, 0
        %277 = vst.msk [vmem:[#allocation2 + $0x28] sm:$0xf] %vm265, 0
        %278 = vst.msk [vmem:[#allocation2 + $0x2c] sm:$0x1] %vm268, 0
        %279 = vst.msk [vmem:[#allocation2 + $0x30] sm:$0xf] %vm265, 0
        %280 = vst.msk [vmem:[#allocation2 + $0x34] sm:$0xf] %vm265, 0
        %281 = vst.msk [vmem:[#allocation2 + $0x38] sm:$0x1] %vm268, 0
        %282 = vst.msk [vmem:[#allocation2 + $0x3c] sm:$0xf] %vm265, 0
        %283 = vst.msk [vmem:[#allocation2 + $0x40] sm:$0xf] %vm265, 0
        %284 = vst.msk [vmem:[#allocation2 + $0x44] sm:$0x1] %vm268, 0
        %285 = vst.msk [vmem:[#allocation2 + $0x48] sm:$0xf] %vm265, 0
        %286 = vst.msk [vmem:[#allocation2 + $0x4c] sm:$0xf] %vm265, 0
        %287 = vst.msk [vmem:[#allocation2 + $0x50] sm:$0x1] %vm268, 0
        %288 = vst.msk [vmem:[#allocation2 + $0x54] sm:$0xf] %vm265, 0
        %289 = vst.msk [vmem:[#allocation2 + $0x58] sm:$0xf] %vm265, 0
        %290 = vst.msk [vmem:[#allocation2 + $0x5c] sm:$0x1] %vm268, 0
        %291 = vst.msk [vmem:[#allocation2 + $0x60] sm:$0xf] %vm265, 0
        %292 = vst.msk [vmem:[#allocation2 + $0x64] sm:$0xf] %vm265, 0
        %293 = vst.msk [vmem:[#allocation2 + $0x68] sm:$0x1] %vm268, 0
        %294 = vst.msk [vmem:[#allocation2 + $0x6c] sm:$0xf] %vm265, 0
        %295 = vst.msk [vmem:[#allocation2 + $0x70] sm:$0xf] %vm265, 0
        %296 = vst.msk [vmem:[#allocation2 + $0x74] sm:$0x1] %vm268, 0
        %297 = vst.msk [vmem:[#allocation2 + $0x78] sm:$0xf] %vm265, 0
        %298 = vst.msk [vmem:[#allocation2 + $0x7c] sm:$0xf] %vm265, 0
        %299 = vst.msk [vmem:[#allocation2 + $0x80] sm:$0x1] %vm268, 0
        %300 = vst.msk [vmem:[#allocation2 + $0x84] sm:$0xf] %vm265, 0
        %301 = vst.msk [vmem:[#allocation2 + $0x88] sm:$0xf] %vm265, 0
        %302 = vst.msk [vmem:[#allocation2 + $0x8c] sm:$0x1] %vm268, 0
        %303 = vst.msk [vmem:[#allocation2 + $0x90] sm:$0xf] %vm265, 0
        %304 = vst.msk [vmem:[#allocation2 + $0x94] sm:$0xf] %vm265, 0
        %305 = vst.msk [vmem:[#allocation2 + $0x98] sm:$0x1] %vm268, 0
        %306 = vst.msk [vmem:[#allocation2 + $0x9c] sm:$0xf] %vm265, 0
        %307 = vst.msk [vmem:[#allocation2 + $0xa0] sm:$0xf] %vm265, 0
        %308 = vst.msk [vmem:[#allocation2 + $0xa4] sm:$0x1] %vm268, 0
        %309 = vst.msk [vmem:[#allocation2 + $0xa8] sm:$0xf] %vm265, 0
        %310 = vst.msk [vmem:[#allocation2 + $0xac] sm:$0xf] %vm265, 0
        %311 = vst.msk [vmem:[#allocation2 + $0xb0] sm:$0x1] %vm268, 0
        %312 = vst.msk [vmem:[#allocation2 + $0xb4] sm:$0xf] %vm265, 0
        %313 = vst.msk [vmem:[#allocation2 + $0xb8] sm:$0xf] %vm265, 0
        %314 = vst.msk [vmem:[#allocation2 + $0xbc] sm:$0x1] %vm268, 0
        %315 = vst.msk [vmem:[#allocation2 + $0xc0] sm:$0xf] %vm265, 0
        %316 = vst.msk [vmem:[#allocation2 + $0xc4] sm:$0xf] %vm265, 0
        %317 = vst.msk [vmem:[#allocation2 + $0xc8] sm:$0x1] %vm268, 0
        %318 = vst.msk [vmem:[#allocation2 + $0xcc] sm:$0xf] %vm265, 0
        %319 = vst.msk [vmem:[#allocation2 + $0xd0] sm:$0xf] %vm265, 0
        %320 = vst.msk [vmem:[#allocation2 + $0xd4] sm:$0x1] %vm268, 0
      $region40: #{resnet_block_forward.4} parent=35 // pred_fallthru
        _
      %v321 = vld [vmem:[%s1] sm:$0x1]
      %v322 = vld [vmem:[%s2] sm:$0x1]
      %v323 = vld [vmem:[%s247] sm:$0xff]
      %v324 = vld [vmem:[%s247 + $0x8] sm:$0xff]
      %v325 = vld [vmem:[%s247 + $0x10] sm:$0xff]
      %v326 = vld [vmem:[%s247 + $0x18] sm:$0xff]
      %v327 = vld [vmem:[%s247 + $0x20] sm:$0xff]
      %v328 = vld [vmem:[%s247 + $0x28] sm:$0xff]
      %v329 = vld [vmem:[%s247 + $0x30] sm:$0xff]
      %v330 = vld [vmem:[%s247 + $0x38] sm:$0xff]
      %v331 = vld [vmem:[%s247 + $0x40] sm:$0xff]
      %v332 = vld [vmem:[%s247 + $0x48] sm:$0xff]
      %v333 = vld [vmem:[%s247 + $0x50] sm:$0xff]
      %v334 = vld [vmem:[%s247 + $0x58] sm:$0xff]
      %v335 = vld [vmem:[%s247 + $0x60] sm:$0xff]
      %v336 = vld [vmem:[%s247 + $0x68] sm:$0xff]
      %v337 = vld [vmem:[%s247 + $0x70] sm:$0xff]
      %v338 = vld [vmem:[%s247 + $0x78] sm:$0xff]
      %v339 = vld [vmem:[%s247 + $0x80] sm:$0xff]
      %v340 = vld [vmem:[%s247 + $0x88] sm:$0xff]
      %v341 = vld [vmem:[%s247 + $0x90] sm:$0xff]
      %v342 = vld [vmem:[%s247 + $0x98] sm:$0xff]
      %v343 = vld [vmem:[%s247 + $0xa0] sm:$0xff]
      %v344 = vld [vmem:[%s247 + $0xa8] sm:$0xff]
      %v345 = vld [vmem:[%s247 + $0xb0] sm:$0xff]
      %v346 = vld [vmem:[%s247 + $0xb8] sm:$0xff]
      %v347 = vld [vmem:[%s247 + $0xc0] sm:$0xff]
      %v348 = vld [vmem:[%s247 + $0xc8] sm:$0xff]
      %v349 = vld [vmem:[%s247 + $0xd0] sm:$0xff]
      %v350 = vld [vmem:[%s247 + $0xd8] sm:$0xff]
      %v351 = vld [vmem:[%s247 + $0xe0] sm:$0xff]
      %v352 = vld [vmem:[%s247 + $0xe8] sm:$0xff]
      %v353 = vld [vmem:[%s247 + $0xf0] sm:$0xff]
      %v354 = vld [vmem:[%s247 + $0xf8] sm:$0xff]
      %v356 = vlaneseq
      %v357 = vshrl.u32 %v356, 7
      %v358 = vsub.s32 0, %v357
      %v359 = vrot.slane %v321, %v358
      %v361 = vmul.f32 %v323, %v359
      %v362 = vmul.f32 %v324, %v359
      %v363 = vmul.f32 %v325, %v359
      %v364 = vmul.f32 %v326, %v359
      %v365 = vmul.f32 %v327, %v359
      %v366 = vmul.f32 %v328, %v359
      %v367 = vmul.f32 %v329, %v359
      %v368 = vmul.f32 %v330, %v359
      %v369 = vmul.f32 %v331, %v359
      %v370 = vmul.f32 %v332, %v359
      %v371 = vmul.f32 %v333, %v359
      %v372 = vmul.f32 %v334, %v359
      %v373 = vmul.f32 %v335, %v359
      %v374 = vmul.f32 %v336, %v359
      %v375 = vmul.f32 %v337, %v359
      %v376 = vmul.f32 %v338, %v359
      %v377 = vmul.f32 %v339, %v359
      %v378 = vmul.f32 %v340, %v359
      %v379 = vmul.f32 %v341, %v359
      %v380 = vmul.f32 %v342, %v359
      %v381 = vmul.f32 %v343, %v359
      %v382 = vmul.f32 %v344, %v359
      %v383 = vmul.f32 %v345, %v359
      %v384 = vmul.f32 %v346, %v359
      %v385 = vmul.f32 %v347, %v359
      %v386 = vmul.f32 %v348, %v359
      %v387 = vmul.f32 %v349, %v359
      %v388 = vmul.f32 %v350, %v359
      %v389 = vmul.f32 %v351, %v359
      %v390 = vmul.f32 %v352, %v359
      %v391 = vmul.f32 %v353, %v359
      %v392 = vmul.f32 %v354, %v359
      %v394 = vlaneseq
      %v395 = vshrl.u32 %v394, 7
      %v396 = vsub.s32 0, %v395
      %v397 = vrot.slane %v322, %v396
      %v399 = vadd.f32 %v361, %v397
      %v400 = vadd.f32 %v362, %v397
      %v401 = vadd.f32 %v363, %v397
      %v402 = vadd.f32 %v364, %v397
      %v403 = vadd.f32 %v365, %v397
      %v404 = vadd.f32 %v366, %v397
      %v405 = vadd.f32 %v367, %v397
      %v406 = vadd.f32 %v368, %v397
      %v407 = vadd.f32 %v369, %v397
      %v408 = vadd.f32 %v370, %v397
      %v409 = vadd.f32 %v371, %v397
      %v410 = vadd.f32 %v372, %v397
      %v411 = vadd.f32 %v373, %v397
      %v412 = vadd.f32 %v374, %v397
      %v413 = vadd.f32 %v375, %v397
      %v414 = vadd.f32 %v376, %v397
      %v415 = vadd.f32 %v377, %v397
      %v416 = vadd.f32 %v378, %v397
      %v417 = vadd.f32 %v379, %v397
      %v418 = vadd.f32 %v380, %v397
      %v419 = vadd.f32 %v381, %v397
      %v420 = vadd.f32 %v382, %v397
      %v421 = vadd.f32 %v383, %v397
      %v422 = vadd.f32 %v384, %v397
      %v423 = vadd.f32 %v385, %v397
      %v424 = vadd.f32 %v386, %v397
      %v425 = vadd.f32 %v387, %v397
      %v426 = vadd.f32 %v388, %v397
      %v427 = vadd.f32 %v389, %v397
      %v428 = vadd.f32 %v390, %v397
      %v429 = vadd.f32 %v391, %v397
      %v430 = vadd.f32 %v392, %v397
      %v431 = vmax.f32 %v399, 0.0
      %v432 = vmax.f32 %v400, 0.0
      %v433 = vmax.f32 %v401, 0.0
      %v434 = vmax.f32 %v402, 0.0
      %v435 = vmax.f32 %v403, 0.0
      %v436 = vmax.f32 %v404, 0.0
      %v437 = vmax.f32 %v405, 0.0
      %v438 = vmax.f32 %v406, 0.0
      %v439 = vmax.f32 %v407, 0.0
      %v440 = vmax.f32 %v408, 0.0
      %v441 = vmax.f32 %v409, 0.0
      %v442 = vmax.f32 %v410, 0.0
      %v443 = vmax.f32 %v411, 0.0
      %v444 = vmax.f32 %v412, 0.0
      %v445 = vmax.f32 %v413, 0.0
      %v446 = vmax.f32 %v414, 0.0
      %v447 = vmax.f32 %v415, 0.0
      %v448 = vmax.f32 %v416, 0.0
      %v449 = vmax.f32 %v417, 0.0
      %v450 = vmax.f32 %v418, 0.0
      %v451 = vmax.f32 %v419, 0.0
      %v452 = vmax.f32 %v420, 0.0
      %v453 = vmax.f32 %v421, 0.0
      %v454 = vmax.f32 %v422, 0.0
      %v455 = vmax.f32 %v423, 0.0
      %v456 = vmax.f32 %v424, 0.0
      %v457 = vmax.f32 %v425, 0.0
      %v458 = vmax.f32 %v426, 0.0
      %v459 = vmax.f32 %v427, 0.0
      %v460 = vmax.f32 %v428, 0.0
      %v461 = vmax.f32 %v429, 0.0
      %v462 = vmax.f32 %v430, 0.0
      %v463 = vpack.c.bf16 %v432, %v431
      %v464 = vpack.c.bf16 %v434, %v433
      %v465 = vpack.c.bf16 %v436, %v435
      %v466 = vpack.c.bf16 %v438, %v437
      %v467 = vpack.c.bf16 %v440, %v439
      %v468 = vpack.c.bf16 %v442, %v441
      %v469 = vpack.c.bf16 %v444, %v443
      %v470 = vpack.c.bf16 %v446, %v445
      %v471 = vpack.c.bf16 %v448, %v447
      %v472 = vpack.c.bf16 %v450, %v449
      %v473 = vpack.c.bf16 %v452, %v451
      %v474 = vpack.c.bf16 %v454, %v453
      %v475 = vpack.c.bf16 %v456, %v455
      %v476 = vpack.c.bf16 %v458, %v457
      %v477 = vpack.c.bf16 %v460, %v459
      %v478 = vpack.c.bf16 %v462, %v461
      %v495 = vunpack.c.l.b16 %v463
      %v496 = vunpack.c.h.b16 %v463
      %v497 = vunpack.c.l.b16 %v464
      %v498 = vunpack.c.h.b16 %v464
      %v499 = vunpack.c.l.b16 %v465
      %v500 = vunpack.c.h.b16 %v465
      %v501 = vunpack.c.l.b16 %v466
      %v502 = vunpack.c.h.b16 %v466
      %v503 = vunpack.c.l.b16 %v467
      %v504 = vunpack.c.h.b16 %v467
      %v505 = vunpack.c.l.b16 %v468
      %v506 = vunpack.c.h.b16 %v468
      %v507 = vunpack.c.l.b16 %v469
      %v508 = vunpack.c.h.b16 %v469
      %v509 = vunpack.c.l.b16 %v470
      %v510 = vunpack.c.h.b16 %v470
      %v511 = vunpack.c.l.b16 %v471
      %v512 = vunpack.c.h.b16 %v471
      %v513 = vunpack.c.l.b16 %v472
      %v514 = vunpack.c.h.b16 %v472
      %v515 = vunpack.c.l.b16 %v473
      %v516 = vunpack.c.h.b16 %v473
      %v517 = vunpack.c.l.b16 %v474
      %v518 = vunpack.c.h.b16 %v474
      %v519 = vunpack.c.l.b16 %v475
      %v520 = vunpack.c.h.b16 %v475
      %v521 = vunpack.c.l.b16 %v476
      %v522 = vunpack.c.h.b16 %v476
      %v523 = vunpack.c.l.b16 %v477
      %v524 = vunpack.c.h.b16 %v477
      %v525 = vunpack.c.l.b16 %v478
      %v526 = vunpack.c.h.b16 %v478
      %v527 = vpack.c.b16 %v495, %v495
      %v528 = vpack.c.b16 %v496, %v496
      %v529 = vpack.c.b16 %v497, %v497
      %v530 = vpack.c.b16 %v498, %v498
      %v531 = vpack.c.b16 %v499, %v499
      %v532 = vpack.c.b16 %v500, %v500
      %v533 = vpack.c.b16 %v501, %v501
      %v534 = vpack.c.b16 %v502, %v502
      %v535 = vpack.c.b16 %v503, %v503
      %v536 = vpack.c.b16 %v504, %v504
      %v537 = vpack.c.b16 %v505, %v505
      %v538 = vpack.c.b16 %v506, %v506
      %v539 = vpack.c.b16 %v507, %v507
      %v540 = vpack.c.b16 %v508, %v508
      %v541 = vpack.c.b16 %v509, %v509
      %v542 = vpack.c.b16 %v510, %v510
      %v543 = vpack.c.b16 %v511, %v511
      %v544 = vpack.c.b16 %v512, %v512
      %v545 = vpack.c.b16 %v513, %v513
      %v546 = vpack.c.b16 %v514, %v514
      %v547 = vpack.c.b16 %v515, %v515
      %v548 = vpack.c.b16 %v516, %v516
      %v549 = vpack.c.b16 %v517, %v517
      %v550 = vpack.c.b16 %v518, %v518
      %v551 = vpack.c.b16 %v519, %v519
      %v552 = vpack.c.b16 %v520, %v520
      %v553 = vpack.c.b16 %v521, %v521
      %v554 = vpack.c.b16 %v522, %v522
      %v555 = vpack.c.b16 %v523, %v523
      %v556 = vpack.c.b16 %v524, %v524
      %v557 = vpack.c.b16 %v525, %v525
      %v558 = vpack.c.b16 %v526, %v526
      %vm559 = vsmask.f32 256
      %vm560 = vsmask.f32 4368
      %vm561 = vmor %vm559, %vm560
      %v563 = vshrl.u32 %v527, 16
      %v565 = vrot.slane %v563, 7
      %v566 = vshll.u32 %v527, 16
      %v568 = vor.u32 %v565, %v566
      %v569 = vrot.slane %v565, 4
      %v571 = vshrl.u32 %v528, 16
      %v573 = vrot.slane %v571, 7
      %v574 = vshll.u32 %v528, 16
      %v576 = vor.u32 %v573, %v574
      %v577 = vsel %vm561, %v569, %v576
      %v578 = vrot.slane %v573, 4
      %v580 = vshrl.u32 %v529, 16
      %v582 = vrot.slane %v580, 7
      %v583 = vshll.u32 %v529, 16
      %v585 = vor.u32 %v582, %v583
      %v586 = vrot.slane %v582, 4
      %v588 = vshrl.u32 %v530, 16
      %v590 = vrot.slane %v588, 7
      %v591 = vshll.u32 %v530, 16
      %v593 = vor.u32 %v590, %v591
      %v594 = vsel %vm561, %v586, %v593
      %v595 = vrot.slane %v590, 4
      %v597 = vshrl.u32 %v531, 16
      %v599 = vrot.slane %v597, 7
      %v600 = vshll.u32 %v531, 16
      %v602 = vor.u32 %v599, %v600
      %v603 = vrot.slane %v599, 4
      %v605 = vshrl.u32 %v532, 16
      %v607 = vrot.slane %v605, 7
      %v608 = vshll.u32 %v532, 16
      %v610 = vor.u32 %v607, %v608
      %v611 = vsel %vm561, %v603, %v610
      %v612 = vrot.slane %v607, 4
      %v614 = vshrl.u32 %v533, 16
      %v616 = vrot.slane %v614, 7
      %v617 = vshll.u32 %v533, 16
      %v619 = vor.u32 %v616, %v617
      %v620 = vrot.slane %v616, 4
      %v622 = vshrl.u32 %v534, 16
      %v624 = vrot.slane %v622, 7
      %v625 = vshll.u32 %v534, 16
      %v627 = vor.u32 %v624, %v625
      %v628 = vsel %vm561, %v620, %v627
      %v629 = vrot.slane %v624, 4
      %v631 = vshrl.u32 %v535, 16
      %v633 = vrot.slane %v631, 7
      %v634 = vshll.u32 %v535, 16
      %v636 = vor.u32 %v633, %v634
      %v637 = vrot.slane %v633, 4
      %v639 = vshrl.u32 %v536, 16
      %v641 = vrot.slane %v639, 7
      %v642 = vshll.u32 %v536, 16
      %v644 = vor.u32 %v641, %v642
      %v645 = vsel %vm561, %v637, %v644
      %v646 = vrot.slane %v641, 4
      %v648 = vshrl.u32 %v537, 16
      %v650 = vrot.slane %v648, 7
      %v651 = vshll.u32 %v537, 16
      %v653 = vor.u32 %v650, %v651
      %v654 = vrot.slane %v650, 4
      %v656 = vshrl.u32 %v538, 16
      %v658 = vrot.slane %v656, 7
      %v659 = vshll.u32 %v538, 16
      %v661 = vor.u32 %v658, %v659
      %v662 = vsel %vm561, %v654, %v661
      %v663 = vrot.slane %v658, 4
      %v665 = vshrl.u32 %v539, 16
      %v667 = vrot.slane %v665, 7
      %v668 = vshll.u32 %v539, 16
      %v670 = vor.u32 %v667, %v668
      %v671 = vrot.slane %v667, 4
      %v673 = vshrl.u32 %v540, 16
      %v675 = vrot.slane %v673, 7
      %v676 = vshll.u32 %v540, 16
      %v678 = vor.u32 %v675, %v676
      %v679 = vsel %vm561, %v671, %v678
      %v680 = vrot.slane %v675, 4
      %v682 = vshrl.u32 %v541, 16
      %v684 = vrot.slane %v682, 7
      %v685 = vshll.u32 %v541, 16
      %v687 = vor.u32 %v684, %v685
      %v688 = vrot.slane %v684, 4
      %v690 = vshrl.u32 %v542, 16
      %v692 = vrot.slane %v690, 7
      %v693 = vshll.u32 %v542, 16
      %v695 = vor.u32 %v692, %v693
      %v696 = vsel %vm561, %v688, %v695
      %v697 = vrot.slane %v692, 4
      %v699 = vshrl.u32 %v543, 16
      %v701 = vrot.slane %v699, 7
      %v702 = vshll.u32 %v543, 16
      %v704 = vor.u32 %v701, %v702
      %v705 = vrot.slane %v701, 4
      %v707 = vshrl.u32 %v544, 16
      %v709 = vrot.slane %v707, 7
      %v710 = vshll.u32 %v544, 16
      %v712 = vor.u32 %v709, %v710
      %v713 = vsel %vm561, %v705, %v712
      %v714 = vrot.slane %v709, 4
      %v716 = vshrl.u32 %v545, 16
      %v718 = vrot.slane %v716, 7
      %v719 = vshll.u32 %v545, 16
      %v721 = vor.u32 %v718, %v719
      %v722 = vrot.slane %v718, 4
      %v724 = vshrl.u32 %v546, 16
      %v726 = vrot.slane %v724, 7
      %v727 = vshll.u32 %v546, 16
      %v729 = vor.u32 %v726, %v727
      %v730 = vsel %vm561, %v722, %v729
      %v731 = vrot.slane %v726, 4
      %v733 = vshrl.u32 %v547, 16
      %v735 = vrot.slane %v733, 7
      %v736 = vshll.u32 %v547, 16
      %v738 = vor.u32 %v735, %v736
      %v739 = vrot.slane %v735, 4
      %v741 = vshrl.u32 %v548, 16
      %v743 = vrot.slane %v741, 7
      %v744 = vshll.u32 %v548, 16
      %v746 = vor.u32 %v743, %v744
      %v747 = vsel %vm561, %v739, %v746
      %v748 = vrot.slane %v743, 4
      %v750 = vshrl.u32 %v549, 16
      %v752 = vrot.slane %v750, 7
      %v753 = vshll.u32 %v549, 16
      %v755 = vor.u32 %v752, %v753
      %v756 = vrot.slane %v752, 4
      %v758 = vshrl.u32 %v550, 16
      %v760 = vrot.slane %v758, 7
      %v761 = vshll.u32 %v550, 16
      %v763 = vor.u32 %v760, %v761
      %v764 = vsel %vm561, %v756, %v763
      %v765 = vrot.slane %v760, 4
      %v767 = vshrl.u32 %v551, 16
      %v769 = vrot.slane %v767, 7
      %v770 = vshll.u32 %v551, 16
      %v772 = vor.u32 %v769, %v770
      %v773 = vrot.slane %v769, 4
      %v775 = vshrl.u32 %v552, 16
      %v777 = vrot.slane %v775, 7
      %v778 = vshll.u32 %v552, 16
      %v780 = vor.u32 %v777, %v778
      %v781 = vsel %vm561, %v773, %v780
      %v782 = vrot.slane %v777, 4
      %v784 = vshrl.u32 %v553, 16
      %v786 = vrot.slane %v784, 7
      %v787 = vshll.u32 %v553, 16
      %v789 = vor.u32 %v786, %v787
      %v790 = vrot.slane %v786, 4
      %v792 = vshrl.u32 %v554, 16
      %v794 = vrot.slane %v792, 7
      %v795 = vshll.u32 %v554, 16
      %v797 = vor.u32 %v794, %v795
      %v798 = vsel %vm561, %v790, %v797
      %v799 = vrot.slane %v794, 4
      %v801 = vshrl.u32 %v555, 16
      %v803 = vrot.slane %v801, 7
      %v804 = vshll.u32 %v555, 16
      %v806 = vor.u32 %v803, %v804
      %v807 = vrot.slane %v803, 4
      %v809 = vshrl.u32 %v556, 16
      %v811 = vrot.slane %v809, 7
      %v812 = vshll.u32 %v556, 16
      %v814 = vor.u32 %v811, %v812
      %v815 = vsel %vm561, %v807, %v814
      %v816 = vrot.slane %v811, 4
      %v818 = vshrl.u32 %v557, 16
      %v820 = vrot.slane %v818, 7
      %v821 = vshll.u32 %v557, 16
      %v823 = vor.u32 %v820, %v821
      %v824 = vrot.slane %v820, 4
      %v826 = vshrl.u32 %v558, 16
      %v828 = vrot.slane %v826, 7
      %v829 = vshll.u32 %v558, 16
      %v831 = vor.u32 %v828, %v829
      %v832 = vsel %vm561, %v824, %v831
      %v833 = vrot.slane %v828, 4
      %s882 = scalar_lea.vmem [#allocation2], 12
      %vm883 = vcmask 60416
      %vm884 = vsmask.f32 7938
      %vm885 = vmand %vm883, %vm884
      %v886 = vld [vmem:[%s882] sm:$0xf]
      %v887 = vsel %vm885, %v568, %v886
      %888 = vst [vmem:[%s882] sm:$0xf] %v887
      %vm889 = vcmask 60416
      %890 = vst.msk [vmem:[%s882 + $0x4] sm:$0xf] %vm889, %v577
      %vm891 = vcmask 57344
      %vm892 = vmand %vm891, %vm559
      %v893 = vld [vmem:[%s882 + $0x8] sm:$0x1]
      %v894 = vsel %vm892, %v578, %v893
      %895 = vst [vmem:[%s882 + $0x8] sm:$0x1] %v894
      %v896 = vld [vmem:[%s882 + $0xc] sm:$0xf]
      %v897 = vsel %vm885, %v585, %v896
      %898 = vst [vmem:[%s882 + $0xc] sm:$0xf] %v897
      %899 = vst.msk [vmem:[%s882 + $0x10] sm:$0xf] %vm889, %v594
      %v900 = vld [vmem:[%s882 + $0x14] sm:$0x1]
      %v901 = vsel %vm892, %v595, %v900
      %902 = vst [vmem:[%s882 + $0x14] sm:$0x1] %v901
      %v903 = vld [vmem:[%s882 + $0x18] sm:$0xf]
      %v904 = vsel %vm885, %v602, %v903
      %905 = vst [vmem:[%s882 + $0x18] sm:$0xf] %v904
      %906 = vst.msk [vmem:[%s882 + $0x1c] sm:$0xf] %vm889, %v611
      %v907 = vld [vmem:[%s882 + $0x20] sm:$0x1]
      %v908 = vsel %vm892, %v612, %v907
      %909 = vst [vmem:[%s882 + $0x20] sm:$0x1] %v908
      %v910 = vld [vmem:[%s882 + $0x24] sm:$0xf]
      %v911 = vsel %vm885, %v619, %v910
      %912 = vst [vmem:[%s882 + $0x24] sm:$0xf] %v911
      %913 = vst.msk [vmem:[%s882 + $0x28] sm:$0xf] %vm889, %v628
      %v914 = vld [vmem:[%s882 + $0x2c] sm:$0x1]
      %v915 = vsel %vm892, %v629, %v914
      %916 = vst [vmem:[%s882 + $0x2c] sm:$0x1] %v915
      %v917 = vld [vmem:[%s882 + $0x30] sm:$0xf]
      %v918 = vsel %vm885, %v636, %v917
      %919 = vst [vmem:[%s882 + $0x30] sm:$0xf] %v918
      %920 = vst.msk [vmem:[%s882 + $0x34] sm:$0xf] %vm889, %v645
      %v921 = vld [vmem:[%s882 + $0x38] sm:$0x1]
      %v922 = vsel %vm892, %v646, %v921
      %923 = vst [vmem:[%s882 + $0x38] sm:$0x1] %v922
      %v924 = vld [vmem:[%s882 + $0x3c] sm:$0xf]
      %v925 = vsel %vm885, %v653, %v924
      %926 = vst [vmem:[%s882 + $0x3c] sm:$0xf] %v925
      %927 = vst.msk [vmem:[%s882 + $0x40] sm:$0xf] %vm889, %v662
      %v928 = vld [vmem:[%s882 + $0x44] sm:$0x1]
      %v929 = vsel %vm892, %v663, %v928
      %930 = vst [vmem:[%s882 + $0x44] sm:$0x1] %v929
      %v931 = vld [vmem:[%s882 + $0x48] sm:$0xf]
      %v932 = vsel %vm885, %v670, %v931
      %933 = vst [vmem:[%s882 + $0x48] sm:$0xf] %v932
      %934 = vst.msk [vmem:[%s882 + $0x4c] sm:$0xf] %vm889, %v679
      %v935 = vld [vmem:[%s882 + $0x50] sm:$0x1]
      %v936 = vsel %vm892, %v680, %v935
      %937 = vst [vmem:[%s882 + $0x50] sm:$0x1] %v936
      %v938 = vld [vmem:[%s882 + $0x54] sm:$0xf]
      %v939 = vsel %vm885, %v687, %v938
      %940 = vst [vmem:[%s882 + $0x54] sm:$0xf] %v939
      %941 = vst.msk [vmem:[%s882 + $0x58] sm:$0xf] %vm889, %v696
      %v942 = vld [vmem:[%s882 + $0x5c] sm:$0x1]
      %v943 = vsel %vm892, %v697, %v942
      %944 = vst [vmem:[%s882 + $0x5c] sm:$0x1] %v943
      %v945 = vld [vmem:[%s882 + $0x60] sm:$0xf]
      %v946 = vsel %vm885, %v704, %v945
      %947 = vst [vmem:[%s882 + $0x60] sm:$0xf] %v946
      %948 = vst.msk [vmem:[%s882 + $0x64] sm:$0xf] %vm889, %v713
      %v949 = vld [vmem:[%s882 + $0x68] sm:$0x1]
      %v950 = vsel %vm892, %v714, %v949
      %951 = vst [vmem:[%s882 + $0x68] sm:$0x1] %v950
      %v952 = vld [vmem:[%s882 + $0x6c] sm:$0xf]
      %v953 = vsel %vm885, %v721, %v952
      %954 = vst [vmem:[%s882 + $0x6c] sm:$0xf] %v953
      %955 = vst.msk [vmem:[%s882 + $0x70] sm:$0xf] %vm889, %v730
      %v956 = vld [vmem:[%s882 + $0x74] sm:$0x1]
      %v957 = vsel %vm892, %v731, %v956
      %958 = vst [vmem:[%s882 + $0x74] sm:$0x1] %v957
      %v959 = vld [vmem:[%s882 + $0x78] sm:$0xf]
      %v960 = vsel %vm885, %v738, %v959
      %961 = vst [vmem:[%s882 + $0x78] sm:$0xf] %v960
      %962 = vst.msk [vmem:[%s882 + $0x7c] sm:$0xf] %vm889, %v747
      %v963 = vld [vmem:[%s882 + $0x80] sm:$0x1]
      %v964 = vsel %vm892, %v748, %v963
      %965 = vst [vmem:[%s882 + $0x80] sm:$0x1] %v964
      %v966 = vld [vmem:[%s882 + $0x84] sm:$0xf]
      %v967 = vsel %vm885, %v755, %v966
      %968 = vst [vmem:[%s882 + $0x84] sm:$0xf] %v967
      %969 = vst.msk [vmem:[%s882 + $0x88] sm:$0xf] %vm889, %v764
      %v970 = vld [vmem:[%s882 + $0x8c] sm:$0x1]
      %v971 = vsel %vm892, %v765, %v970
      %972 = vst [vmem:[%s882 + $0x8c] sm:$0x1] %v971
      %v973 = vld [vmem:[%s882 + $0x90] sm:$0xf]
      %v974 = vsel %vm885, %v772, %v973
      %975 = vst [vmem:[%s882 + $0x90] sm:$0xf] %v974
      %976 = vst.msk [vmem:[%s882 + $0x94] sm:$0xf] %vm889, %v781
      %v977 = vld [vmem:[%s882 + $0x98] sm:$0x1]
      %v978 = vsel %vm892, %v782, %v977
      %979 = vst [vmem:[%s882 + $0x98] sm:$0x1] %v978
      %v980 = vld [vmem:[%s882 + $0x9c] sm:$0xf]
      %v981 = vsel %vm885, %v789, %v980
      %982 = vst [vmem:[%s882 + $0x9c] sm:$0xf] %v981
      %983 = vst.msk [vmem:[%s882 + $0xa0] sm:$0xf] %vm889, %v798
      %v984 = vld [vmem:[%s882 + $0xa4] sm:$0x1]
      %v985 = vsel %vm892, %v799, %v984
      %986 = vst [vmem:[%s882 + $0xa4] sm:$0x1] %v985
      %v987 = vld [vmem:[%s882 + $0xa8] sm:$0xf]
      %v988 = vsel %vm885, %v806, %v987
      %989 = vst [vmem:[%s882 + $0xa8] sm:$0xf] %v988
      %990 = vst.msk [vmem:[%s882 + $0xac] sm:$0xf] %vm889, %v815
      %v991 = vld [vmem:[%s882 + $0xb0] sm:$0x1]
      %v992 = vsel %vm892, %v816, %v991
      %993 = vst [vmem:[%s882 + $0xb0] sm:$0x1] %v992
      %v994 = vld [vmem:[%s882 + $0xb4] sm:$0xf]
      %v995 = vsel %vm885, %v823, %v994
      %996 = vst [vmem:[%s882 + $0xb4] sm:$0xf] %v995
      %997 = vst.msk [vmem:[%s882 + $0xb8] sm:$0xf] %vm889, %v832
      %v998 = vld [vmem:[%s882 + $0xbc] sm:$0x1]
      %v999 = vsel %vm892, %v833, %v998
      %1000 = vst [vmem:[%s882 + $0xbc] sm:$0x1] %v999
      %v1001 = vld [vmem:[#allocation2] sm:$0xf]
      %v1002 = vld [vmem:[#allocation2 + $0x4] sm:$0xf]
      %v1003 = vld [vmem:[#allocation2 + $0xc] sm:$0xf]
      %v1004 = vld [vmem:[#allocation2 + $0x10] sm:$0xf]
      %v1005 = vld [vmem:[#allocation2 + $0x18] sm:$0xf]
      %v1006 = vld [vmem:[#allocation2 + $0x1c] sm:$0xf]
      %v1007 = vld [vmem:[#allocation2 + $0x24] sm:$0xf]
      %v1008 = vld [vmem:[#allocation2 + $0x28] sm:$0xf]
      %v1009 = vld [vmem:[#allocation2 + $0x30] sm:$0xf]
      %v1010 = vld [vmem:[#allocation2 + $0x34] sm:$0xf]
      %v1011 = vld [vmem:[#allocation2 + $0x3c] sm:$0xf]
      %v1012 = vld [vmem:[#allocation2 + $0x40] sm:$0xf]
      %v1013 = vld [vmem:[#allocation2 + $0x48] sm:$0xf]
      %v1014 = vld [vmem:[#allocation2 + $0x4c] sm:$0xf]
      %v1015 = vld [vmem:[#allocation2 + $0x54] sm:$0xf]
      %v1016 = vld [vmem:[#allocation2 + $0x58] sm:$0xf]
      %v1017 = vld [vmem:[#allocation2 + $0x60] sm:$0xf]
      %v1018 = vld [vmem:[#allocation2 + $0x64] sm:$0xf]
      %v1019 = vld [vmem:[#allocation2 + $0x6c] sm:$0xf]
      %v1020 = vld [vmem:[#allocation2 + $0x70] sm:$0xf]
      %v1021 = vld [vmem:[#allocation2 + $0x78] sm:$0xf]
      %v1022 = vld [vmem:[#allocation2 + $0x7c] sm:$0xf]
      %v1023 = vld [vmem:[#allocation2 + $0x84] sm:$0xf]
      %v1024 = vld [vmem:[#allocation2 + $0x88] sm:$0xf]
      %v1025 = vld [vmem:[#allocation2 + $0x90] sm:$0xf]
      %v1026 = vld [vmem:[#allocation2 + $0x94] sm:$0xf]
      %v1027 = vld [vmem:[#allocation2 + $0x9c] sm:$0xf]
      %v1028 = vld [vmem:[#allocation2 + $0xa0] sm:$0xf]
      %v1029 = vld [vmem:[#allocation2 + $0xa8] sm:$0xf]
      %v1030 = vld [vmem:[#allocation2 + $0xac] sm:$0xf]
      %v1031 = vld [vmem:[#allocation2 + $0xb4] sm:$0xf]
      %v1032 = vld [vmem:[#allocation2 + $0xb8] sm:$0xf]
      %v1065 = vunpack.c.l.b16 %v1001
      %v1066 = vunpack.c.l.b16 %v1002
      %v1067 = vunpack.c.l.b16 %v1003
      %v1068 = vunpack.c.l.b16 %v1004
      %v1069 = vunpack.c.l.b16 %v1005
      %v1070 = vunpack.c.l.b16 %v1006
      %v1071 = vunpack.c.l.b16 %v1007
      %v1072 = vunpack.c.l.b16 %v1008
      %v1073 = vunpack.c.l.b16 %v1009
      %v1074 = vunpack.c.l.b16 %v1010
      %v1075 = vunpack.c.l.b16 %v1011
      %v1076 = vunpack.c.l.b16 %v1012
      %v1077 = vunpack.c.l.b16 %v1013
      %v1078 = vunpack.c.l.b16 %v1014
      %v1079 = vunpack.c.l.b16 %v1015
      %v1080 = vunpack.c.l.b16 %v1016
      %v1081 = vunpack.c.l.b16 %v1017
      %v1082 = vunpack.c.l.b16 %v1018
      %v1083 = vunpack.c.l.b16 %v1019
      %v1084 = vunpack.c.l.b16 %v1020
      %v1085 = vunpack.c.l.b16 %v1021
      %v1086 = vunpack.c.l.b16 %v1022
      %v1087 = vunpack.c.l.b16 %v1023
      %v1088 = vunpack.c.l.b16 %v1024
      %v1089 = vunpack.c.l.b16 %v1025
      %v1090 = vunpack.c.l.b16 %v1026
      %v1091 = vunpack.c.l.b16 %v1027
      %v1092 = vunpack.c.l.b16 %v1028
      %v1093 = vunpack.c.l.b16 %v1029
      %v1094 = vunpack.c.l.b16 %v1030
      %v1095 = vunpack.c.l.b16 %v1031
      %v1096 = vunpack.c.l.b16 %v1032
      %v1097 = vpack.c.b16 %v1066, %v1065
      %v1098 = vpack.c.b16 %v1068, %v1067
      %v1099 = vpack.c.b16 %v1070, %v1069
      %v1100 = vpack.c.b16 %v1072, %v1071
      %v1101 = vpack.c.b16 %v1074, %v1073
      %v1102 = vpack.c.b16 %v1076, %v1075
      %v1103 = vpack.c.b16 %v1078, %v1077
      %v1104 = vpack.c.b16 %v1080, %v1079
      %v1105 = vpack.c.b16 %v1082, %v1081
      %v1106 = vpack.c.b16 %v1084, %v1083
      %v1107 = vpack.c.b16 %v1086, %v1085
      %v1108 = vpack.c.b16 %v1088, %v1087
      %v1109 = vpack.c.b16 %v1090, %v1089
      %v1110 = vpack.c.b16 %v1092, %v1091
      %v1111 = vpack.c.b16 %v1094, %v1093
      %v1112 = vpack.c.b16 %v1096, %v1095
      %vm1129 = vcmask 64512
      %1130 = vst.msk [vmem:[#allocation3] sm:$0xff] %vm1129, %v1097
      %1131 = vst.msk [vmem:[#allocation3 + $0x8] sm:$0xff] %vm1129, %v1098
      %1132 = vst.msk [vmem:[#allocation3 + $0x10] sm:$0xff] %vm1129, %v1099
      %1133 = vst.msk [vmem:[#allocation3 + $0x18] sm:$0xff] %vm1129, %v1100
      %1134 = vst.msk [vmem:[#allocation3 + $0x20] sm:$0xff] %vm1129, %v1101
      %1135 = vst.msk [vmem:[#allocation3 + $0x28] sm:$0xff] %vm1129, %v1102
      %1136 = vst.msk [vmem:[#allocation3 + $0x30] sm:$0xff] %vm1129, %v1103
      %1137 = vst.msk [vmem:[#allocation3 + $0x38] sm:$0xff] %vm1129, %v1104
      %1138 = vst.msk [vmem:[#allocation3 + $0x40] sm:$0xff] %vm1129, %v1105
      %1139 = vst.msk [vmem:[#allocation3 + $0x48] sm:$0xff] %vm1129, %v1106
      %1140 = vst.msk [vmem:[#allocation3 + $0x50] sm:$0xff] %vm1129, %v1107
      %1141 = vst.msk [vmem:[#allocation3 + $0x58] sm:$0xff] %vm1129, %v1108
      %1142 = vst.msk [vmem:[#allocation3 + $0x60] sm:$0xff] %vm1129, %v1109
      %1143 = vst.msk [vmem:[#allocation3 + $0x68] sm:$0xff] %vm1129, %v1110
      %1144 = vst.msk [vmem:[#allocation3 + $0x70] sm:$0xff] %vm1129, %v1111
      %1145 = vst.msk [vmem:[#allocation3 + $0x78] sm:$0xff] %vm1129, %v1112
      %v1146 = vld [vmem:[#allocation2] sm:$0xf]
      %v1147 = vld [vmem:[#allocation2 + $0x4] sm:$0xf]
      %v1148 = vld [vmem:[#allocation2 + $0x8] sm:$0x1]
      %v1149 = vld [vmem:[#allocation2 + $0xc] sm:$0xf]
      %v1150 = vld [vmem:[#allocation2 + $0x10] sm:$0xf]
      %v1151 = vld [vmem:[#allocation2 + $0x14] sm:$0x1]
      %v1152 = vld [vmem:[#allocation2 + $0x18] sm:$0xf]
      %v1153 = vld [vmem:[#allocation2 + $0x1c] sm:$0xf]
      %v1154 = vld [vmem:[#allocation2 + $0x20] sm:$0x1]
      %v1155 = vld [vmem:[#allocation2 + $0x24] sm:$0xf]
      %v1156 = vld [vmem:[#allocation2 + $0x28] sm:$0xf]
      %v1157 = vld [vmem:[#allocation2 + $0x2c] sm:$0x1]
      %v1158 = vld [vmem:[#allocation2 + $0x30] sm:$0xf]
      %v1159 = vld [vmem:[#allocation2 + $0x34] sm:$0xf]
      %v1160 = vld [vmem:[#allocation2 + $0x38] sm:$0x1]
      %v1161 = vld [vmem:[#allocation2 + $0x3c] sm:$0xf]
      %v1162 = vld [vmem:[#allocation2 + $0x40] sm:$0xf]
      %v1163 = vld [vmem:[#allocation2 + $0x44] sm:$0x1]
      %v1164 = vld [vmem:[#allocation2 + $0x48] sm:$0xf]
      %v1165 = vld [vmem:[#allocation2 + $0x4c] sm:$0xf]
      %v1166 = vld [vmem:[#allocation2 + $0x50] sm:$0x1]
      %v1167 = vld [vmem:[#allocation2 + $0x54] sm:$0xf]
      %v1168 = vld [vmem:[#allocation2 + $0x58] sm:$0xf]
      %v1169 = vld [vmem:[#allocation2 + $0x5c] sm:$0x1]
      %v1170 = vld [vmem:[#allocation2 + $0x60] sm:$0xf]
      %v1171 = vld [vmem:[#allocation2 + $0x64] sm:$0xf]
      %v1172 = vld [vmem:[#allocation2 + $0x68] sm:$0x1]
      %v1173 = vld [vmem:[#allocation2 + $0x6c] sm:$0xf]
      %v1174 = vld [vmem:[#allocation2 + $0x70] sm:$0xf]
      %v1175 = vld [vmem:[#allocation2 + $0x74] sm:$0x1]
      %v1176 = vld [vmem:[#allocation2 + $0x78] sm:$0xf]
      %v1177 = vld [vmem:[#allocation2 + $0x7c] sm:$0xf]
      %v1178 = vld [vmem:[#allocation2 + $0x80] sm:$0x1]
      %v1179 = vld [vmem:[#allocation2 + $0x84] sm:$0xf]
      %v1180 = vld [vmem:[#allocation2 + $0x88] sm:$0xf]
      %v1181 = vld [vmem:[#allocation2 + $0x8c] sm:$0x1]
      %v1182 = vld [vmem:[#allocation2 + $0x90] sm:$0xf]
      %v1183 = vld [vmem:[#allocation2 + $0x94] sm:$0xf]
      %v1184 = vld [vmem:[#allocation2 + $0x98] sm:$0x1]
      %v1185 = vld [vmem:[#allocation2 + $0x9c] sm:$0xf]
      %v1186 = vld [vmem:[#allocation2 + $0xa0] sm:$0xf]
      %v1187 = vld [vmem:[#allocation2 + $0xa4] sm:$0x1]
      %v1188 = vld [vmem:[#allocation2 + $0xa8] sm:$0xf]
      %v1189 = vld [vmem:[#allocation2 + $0xac] sm:$0xf]
      %v1190 = vld [vmem:[#allocation2 + $0xb0] sm:$0x1]
      %v1191 = vld [vmem:[#allocation2 + $0xb4] sm:$0xf]
      %v1192 = vld [vmem:[#allocation2 + $0xb8] sm:$0xf]
      %v1193 = vld [vmem:[#allocation2 + $0xbc] sm:$0x1]
      %vm1194 = vsmask.f32 3328
      %vm1195 = vsmask.f32 7440
      %vm1196 = vmor %vm1194, %vm1195
      %v1198 = vshrl.u32 %v1146, 16
      %v1200 = vrot.slane %v1198, 4
      %v1201 = vshll.u32 %v1146, 16
      %v1203 = vrot.slane %v1201, 5
      %v1204 = vor.u32 %v1200, %v1203
      %v1205 = vrot.slane %v1204, 4
      %v1207 = vshll.u32 %v1147, 16
      %v1209 = vrot.slane %v1207, 5
      %v1210 = vsel %vm1196, %v1205, %v1209
      %v1211 = vshrl.u32 %v1147, 16
      %v1213 = vrot.slane %v1211, 4
      %v1214 = vor.u32 %v1213, %v1209
      %v1215 = vrot.slane %v1214, 4
      %v1217 = vshll.u32 %v1148, 16
      %v1219 = vrot.slane %v1217, 5
      %v1220 = vsel %vm1196, %v1215, %v1219
      %v1222 = vshrl.u32 %v1149, 16
      %v1224 = vrot.slane %v1222, 4
      %v1225 = vshll.u32 %v1149, 16
      %v1227 = vrot.slane %v1225, 5
      %v1228 = vor.u32 %v1224, %v1227
      %v1229 = vrot.slane %v1228, 4
      %v1231 = vshll.u32 %v1150, 16
      %v1233 = vrot.slane %v1231, 5
      %v1234 = vsel %vm1196, %v1229, %v1233
      %v1235 = vshrl.u32 %v1150, 16
      %v1237 = vrot.slane %v1235, 4
      %v1238 = vor.u32 %v1237, %v1233
      %v1239 = vrot.slane %v1238, 4
      %v1241 = vshll.u32 %v1151, 16
      %v1243 = vrot.slane %v1241, 5
      %v1244 = vsel %vm1196, %v1239, %v1243
      %v1246 = vshrl.u32 %v1152, 16
      %v1248 = vrot.slane %v1246, 4
      %v1249 = vshll.u32 %v1152, 16
      %v1251 = vrot.slane %v1249, 5
      %v1252 = vor.u32 %v1248, %v1251
      %v1253 = vrot.slane %v1252, 4
      %v1255 = vshll.u32 %v1153, 16
      %v1257 = vrot.slane %v1255, 5
      %v1258 = vsel %vm1196, %v1253, %v1257
      %v1259 = vshrl.u32 %v1153, 16
      %v1261 = vrot.slane %v1259, 4
      %v1262 = vor.u32 %v1261, %v1257
      %v1263 = vrot.slane %v1262, 4
      %v1265 = vshll.u32 %v1154, 16
      %v1267 = vrot.slane %v1265, 5
      %v1268 = vsel %vm1196, %v1263, %v1267
      %v1270 = vshrl.u32 %v1155, 16
      %v1272 = vrot.slane %v1270, 4
      %v1273 = vshll.u32 %v1155, 16
      %v1275 = vrot.slane %v1273, 5
      %v1276 = vor.u32 %v1272, %v1275
      %v1277 = vrot.slane %v1276, 4
      %v1279 = vshll.u32 %v1156, 16
      %v1281 = vrot.slane %v1279, 5
      %v1282 = vsel %vm1196, %v1277, %v1281
      %v1283 = vshrl.u32 %v1156, 16
      %v1285 = vrot.slane %v1283, 4
      %v1286 = vor.u32 %v1285, %v1281
      %v1287 = vrot.slane %v1286, 4
      %v1289 = vshll.u32 %v1157, 16
      %v1291 = vrot.slane %v1289, 5
      %v1292 = vsel %vm1196, %v1287, %v1291
      %v1294 = vshrl.u32 %v1158, 16
      %v1296 = vrot.slane %v1294, 4
      %v1297 = vshll.u32 %v1158, 16
      %v1299 = vrot.slane %v1297, 5
      %v1300 = vor.u32 %v1296, %v1299
      %v1301 = vrot.slane %v1300, 4
      %v1303 = vshll.u32 %v1159, 16
      %v1305 = vrot.slane %v1303, 5
      %v1306 = vsel %vm1196, %v1301, %v1305
      %v1307 = vshrl.u32 %v1159, 16
      %v1309 = vrot.slane %v1307, 4
      %v1310 = vor.u32 %v1309, %v1305
      %v1311 = vrot.slane %v1310, 4
      %v1313 = vshll.u32 %v1160, 16
      %v1315 = vrot.slane %v1313, 5
      %v1316 = vsel %vm1196, %v1311, %v1315
      %v1318 = vshrl.u32 %v1161, 16
      %v1320 = vrot.slane %v1318, 4
      %v1321 = vshll.u32 %v1161, 16
      %v1323 = vrot.slane %v1321, 5
      %v1324 = vor.u32 %v1320, %v1323
      %v1325 = vrot.slane %v1324, 4
      %v1327 = vshll.u32 %v1162, 16
      %v1329 = vrot.slane %v1327, 5
      %v1330 = vsel %vm1196, %v1325, %v1329
      %v1331 = vshrl.u32 %v1162, 16
      %v1333 = vrot.slane %v1331, 4
      %v1334 = vor.u32 %v1333, %v1329
      %v1335 = vrot.slane %v1334, 4
      %v1337 = vshll.u32 %v1163, 16
      %v1339 = vrot.slane %v1337, 5
      %v1340 = vsel %vm1196, %v1335, %v1339
      %v1342 = vshrl.u32 %v1164, 16
      %v1344 = vrot.slane %v1342, 4
      %v1345 = vshll.u32 %v1164, 16
      %v1347 = vrot.slane %v1345, 5
      %v1348 = vor.u32 %v1344, %v1347
      %v1349 = vrot.slane %v1348, 4
      %v1351 = vshll.u32 %v1165, 16
      %v1353 = vrot.slane %v1351, 5
      %v1354 = vsel %vm1196, %v1349, %v1353
      %v1355 = vshrl.u32 %v1165, 16
      %v1357 = vrot.slane %v1355, 4
      %v1358 = vor.u32 %v1357, %v1353
      %v1359 = vrot.slane %v1358, 4
      %v1361 = vshll.u32 %v1166, 16
      %v1363 = vrot.slane %v1361, 5
      %v1364 = vsel %vm1196, %v1359, %v1363
      %v1366 = vshrl.u32 %v1167, 16
      %v1368 = vrot.slane %v1366, 4
      %v1369 = vshll.u32 %v1167, 16
      %v1371 = vrot.slane %v1369, 5
      %v1372 = vor.u32 %v1368, %v1371
      %v1373 = vrot.slane %v1372, 4
      %v1375 = vshll.u32 %v1168, 16
      %v1377 = vrot.slane %v1375, 5
      %v1378 = vsel %vm1196, %v1373, %v1377
      %v1379 = vshrl.u32 %v1168, 16
      %v1381 = vrot.slane %v1379, 4
      %v1382 = vor.u32 %v1381, %v1377
      %v1383 = vrot.slane %v1382, 4
      %v1385 = vshll.u32 %v1169, 16
      %v1387 = vrot.slane %v1385, 5
      %v1388 = vsel %vm1196, %v1383, %v1387
      %v1390 = vshrl.u32 %v1170, 16
      %v1392 = vrot.slane %v1390, 4
      %v1393 = vshll.u32 %v1170, 16
      %v1395 = vrot.slane %v1393, 5
      %v1396 = vor.u32 %v1392, %v1395
      %v1397 = vrot.slane %v1396, 4
      %v1399 = vshll.u32 %v1171, 16
      %v1401 = vrot.slane %v1399, 5
      %v1402 = vsel %vm1196, %v1397, %v1401
      %v1403 = vshrl.u32 %v1171, 16
      %v1405 = vrot.slane %v1403, 4
      %v1406 = vor.u32 %v1405, %v1401
      %v1407 = vrot.slane %v1406, 4
      %v1409 = vshll.u32 %v1172, 16
      %v1411 = vrot.slane %v1409, 5
      %v1412 = vsel %vm1196, %v1407, %v1411
      %v1414 = vshrl.u32 %v1173, 16
      %v1416 = vrot.slane %v1414, 4
      %v1417 = vshll.u32 %v1173, 16
      %v1419 = vrot.slane %v1417, 5
      %v1420 = vor.u32 %v1416, %v1419
      %v1421 = vrot.slane %v1420, 4
      %v1423 = vshll.u32 %v1174, 16
      %v1425 = vrot.slane %v1423, 5
      %v1426 = vsel %vm1196, %v1421, %v1425
      %v1427 = vshrl.u32 %v1174, 16
      %v1429 = vrot.slane %v1427, 4
      %v1430 = vor.u32 %v1429, %v1425
      %v1431 = vrot.slane %v1430, 4
      %v1433 = vshll.u32 %v1175, 16
      %v1435 = vrot.slane %v1433, 5
      %v1436 = vsel %vm1196, %v1431, %v1435
      %v1438 = vshrl.u32 %v1176, 16
      %v1440 = vrot.slane %v1438, 4
      %v1441 = vshll.u32 %v1176, 16
      %v1443 = vrot.slane %v1441, 5
      %v1444 = vor.u32 %v1440, %v1443
      %v1445 = vrot.slane %v1444, 4
      %v1447 = vshll.u32 %v1177, 16
      %v1449 = vrot.slane %v1447, 5
      %v1450 = vsel %vm1196, %v1445, %v1449
      %v1451 = vshrl.u32 %v1177, 16
      %v1453 = vrot.slane %v1451, 4
      %v1454 = vor.u32 %v1453, %v1449
      %v1455 = vrot.slane %v1454, 4
      %v1457 = vshll.u32 %v1178, 16
      %v1459 = vrot.slane %v1457, 5
      %v1460 = vsel %vm1196, %v1455, %v1459
      %v1462 = vshrl.u32 %v1179, 16
      %v1464 = vrot.slane %v1462, 4
      %v1465 = vshll.u32 %v1179, 16
      %v1467 = vrot.slane %v1465, 5
      %v1468 = vor.u32 %v1464, %v1467
      %v1469 = vrot.slane %v1468, 4
      %v1471 = vshll.u32 %v1180, 16
      %v1473 = vrot.slane %v1471, 5
      %v1474 = vsel %vm1196, %v1469, %v1473
      %v1475 = vshrl.u32 %v1180, 16
      %v1477 = vrot.slane %v1475, 4
      %v1478 = vor.u32 %v1477, %v1473
      %v1479 = vrot.slane %v1478, 4
      %v1481 = vshll.u32 %v1181, 16
      %v1483 = vrot.slane %v1481, 5
      %v1484 = vsel %vm1196, %v1479, %v1483
      %v1486 = vshrl.u32 %v1182, 16
      %v1488 = vrot.slane %v1486, 4
      %v1489 = vshll.u32 %v1182, 16
      %v1491 = vrot.slane %v1489, 5
      %v1492 = vor.u32 %v1488, %v1491
      %v1493 = vrot.slane %v1492, 4
      %v1495 = vshll.u32 %v1183, 16
      %v1497 = vrot.slane %v1495, 5
      %v1498 = vsel %vm1196, %v1493, %v1497
      %v1499 = vshrl.u32 %v1183, 16
      %v1501 = vrot.slane %v1499, 4
      %v1502 = vor.u32 %v1501, %v1497
      %v1503 = vrot.slane %v1502, 4
      %v1505 = vshll.u32 %v1184, 16
      %v1507 = vrot.slane %v1505, 5
      %v1508 = vsel %vm1196, %v1503, %v1507
      %v1510 = vshrl.u32 %v1185, 16
      %v1512 = vrot.slane %v1510, 4
      %v1513 = vshll.u32 %v1185, 16
      %v1515 = vrot.slane %v1513, 5
      %v1516 = vor.u32 %v1512, %v1515
      %v1517 = vrot.slane %v1516, 4
      %v1519 = vshll.u32 %v1186, 16
      %v1521 = vrot.slane %v1519, 5
      %v1522 = vsel %vm1196, %v1517, %v1521
      %v1523 = vshrl.u32 %v1186, 16
      %v1525 = vrot.slane %v1523, 4
      %v1526 = vor.u32 %v1525, %v1521
      %v1527 = vrot.slane %v1526, 4
      %v1529 = vshll.u32 %v1187, 16
      %v1531 = vrot.slane %v1529, 5
      %v1532 = vsel %vm1196, %v1527, %v1531
      %v1534 = vshrl.u32 %v1188, 16
      %v1536 = vrot.slane %v1534, 4
      %v1537 = vshll.u32 %v1188, 16
      %v1539 = vrot.slane %v1537, 5
      %v1540 = vor.u32 %v1536, %v1539
      %v1541 = vrot.slane %v1540, 4
      %v1543 = vshll.u32 %v1189, 16
      %v1545 = vrot.slane %v1543, 5
      %v1546 = vsel %vm1196, %v1541, %v1545
      %v1547 = vshrl.u32 %v1189, 16
      %v1549 = vrot.slane %v1547, 4
      %v1550 = vor.u32 %v1549, %v1545
      %v1551 = vrot.slane %v1550, 4
      %v1553 = vshll.u32 %v1190, 16
      %v1555 = vrot.slane %v1553, 5
      %v1556 = vsel %vm1196, %v1551, %v1555
      %v1558 = vshrl.u32 %v1191, 16
      %v1560 = vrot.slane %v1558, 4
      %v1561 = vshll.u32 %v1191, 16
      %v1563 = vrot.slane %v1561, 5
      %v1564 = vor.u32 %v1560, %v1563
      %v1565 = vrot.slane %v1564, 4
      %v1567 = vshll.u32 %v1192, 16
      %v1569 = vrot.slane %v1567, 5
      %v1570 = vsel %vm1196, %v1565, %v1569
      %v1571 = vshrl.u32 %v1192, 16
      %v1573 = vrot.slane %v1571, 4
      %v1574 = vor.u32 %v1573, %v1569
      %v1575 = vrot.slane %v1574, 4
      %v1577 = vshll.u32 %v1193, 16
      %v1579 = vrot.slane %v1577, 5
      %v1580 = vsel %vm1196, %v1575, %v1579
      %v1581 = vunpack.c.l.b16 %v1210
      %v1582 = vunpack.c.l.b16 %v1220
      %v1583 = vunpack.c.l.b16 %v1234
      %v1584 = vunpack.c.l.b16 %v1244
      %v1585 = vunpack.c.l.b16 %v1258
      %v1586 = vunpack.c.l.b16 %v1268
      %v1587 = vunpack.c.l.b16 %v1282
      %v1588 = vunpack.c.l.b16 %v1292
      %v1589 = vunpack.c.l.b16 %v1306
      %v1590 = vunpack.c.l.b16 %v1316
      %v1591 = vunpack.c.l.b16 %v1330
      %v1592 = vunpack.c.l.b16 %v1340
      %v1593 = vunpack.c.l.b16 %v1354
      %v1594 = vunpack.c.l.b16 %v1364
      %v1595 = vunpack.c.l.b16 %v1378
      %v1596 = vunpack.c.l.b16 %v1388
      %v1597 = vunpack.c.l.b16 %v1402
      %v1598 = vunpack.c.l.b16 %v1412
      %v1599 = vunpack.c.l.b16 %v1426
      %v1600 = vunpack.c.l.b16 %v1436
      %v1601 = vunpack.c.l.b16 %v1450
      %v1602 = vunpack.c.l.b16 %v1460
      %v1603 = vunpack.c.l.b16 %v1474
      %v1604 = vunpack.c.l.b16 %v1484
      %v1605 = vunpack.c.l.b16 %v1498
      %v1606 = vunpack.c.l.b16 %v1508
      %v1607 = vunpack.c.l.b16 %v1522
      %v1608 = vunpack.c.l.b16 %v1532
      %v1609 = vunpack.c.l.b16 %v1546
      %v1610 = vunpack.c.l.b16 %v1556
      %v1611 = vunpack.c.l.b16 %v1570
      %v1612 = vunpack.c.l.b16 %v1580
      %v1613 = vpack.c.b16 %v1582, %v1581
      %v1614 = vpack.c.b16 %v1584, %v1583
      %v1615 = vpack.c.b16 %v1586, %v1585
      %v1616 = vpack.c.b16 %v1588, %v1587
      %v1617 = vpack.c.b16 %v1590, %v1589
      %v1618 = vpack.c.b16 %v1592, %v1591
      %v1619 = vpack.c.b16 %v1594, %v1593
      %v1620 = vpack.c.b16 %v1596, %v1595
      %v1621 = vpack.c.b16 %v1598, %v1597
      %v1622 = vpack.c.b16 %v1600, %v1599
      %v1623 = vpack.c.b16 %v1602, %v1601
      %v1624 = vpack.c.b16 %v1604, %v1603
      %v1625 = vpack.c.b16 %v1606, %v1605
      %v1626 = vpack.c.b16 %v1608, %v1607
      %v1627 = vpack.c.b16 %v1610, %v1609
      %v1628 = vpack.c.b16 %v1612, %v1611
      %1629 = vrot.lane.b32.xlu0 %v1613, 8
      %v1630 = vpop.permute.xlu0 %1629
      %1631 = vrot.lane.b32.xlu0 %v1614, 8
      %v1632 = vpop.permute.xlu0 %1631
      %1633 = vrot.lane.b32.xlu0 %v1615, 8
      %v1634 = vpop.permute.xlu0 %1633
      %1635 = vrot.lane.b32.xlu0 %v1616, 8
      %v1636 = vpop.permute.xlu0 %1635
      %1637 = vrot.lane.b32.xlu0 %v1617, 8
      %v1638 = vpop.permute.xlu0 %1637
      %1639 = vrot.lane.b32.xlu0 %v1618, 8
      %v1640 = vpop.permute.xlu0 %1639
      %1641 = vrot.lane.b32.xlu0 %v1619, 8
      %v1642 = vpop.permute.xlu0 %1641
      %1643 = vrot.lane.b32.xlu0 %v1620, 8
      %v1644 = vpop.permute.xlu0 %1643
      %1645 = vrot.lane.b32.xlu0 %v1621, 8
      %v1646 = vpop.permute.xlu0 %1645
      %1647 = vrot.lane.b32.xlu0 %v1622, 8
      %v1648 = vpop.permute.xlu0 %1647
      %1649 = vrot.lane.b32.xlu0 %v1623, 8
      %v1650 = vpop.permute.xlu0 %1649
      %1651 = vrot.lane.b32.xlu0 %v1624, 8
      %v1652 = vpop.permute.xlu0 %1651
      %1653 = vrot.lane.b32.xlu0 %v1625, 8
      %v1654 = vpop.permute.xlu0 %1653
      %1655 = vrot.lane.b32.xlu0 %v1626, 8
      %v1656 = vpop.permute.xlu0 %1655
      %1657 = vrot.lane.b32.xlu0 %v1627, 8
      %v1658 = vpop.permute.xlu0 %1657
      %1659 = vrot.lane.b32.xlu0 %v1628, 8
      %v1660 = vpop.permute.xlu0 %1659
      %vm1677 = vcmask 130112
      %1678 = vst.msk [vmem:[#allocation3] sm:$0xff] %vm1677, %v1630
      %1679 = vst.msk [vmem:[#allocation3 + $0x8] sm:$0xff] %vm1677, %v1632
      %1680 = vst.msk [vmem:[#allocation3 + $0x10] sm:$0xff] %vm1677, %v1634
      %1681 = vst.msk [vmem:[#allocation3 + $0x18] sm:$0xff] %vm1677, %v1636
      %1682 = vst.msk [vmem:[#allocation3 + $0x20] sm:$0xff] %vm1677, %v1638
      %1683 = vst.msk [vmem:[#allocation3 + $0x28] sm:$0xff] %vm1677, %v1640
      %1684 = vst.msk [vmem:[#allocation3 + $0x30] sm:$0xff] %vm1677, %v1642
      %1685 = vst.msk [vmem:[#allocation3 + $0x38] sm:$0xff] %vm1677, %v1644
      %1686 = vst.msk [vmem:[#allocation3 + $0x40] sm:$0xff] %vm1677, %v1646
      %1687 = vst.msk [vmem:[#allocation3 + $0x48] sm:$0xff] %vm1677, %v1648
      %1688 = vst.msk [vmem:[#allocation3 + $0x50] sm:$0xff] %vm1677, %v1650
      %1689 = vst.msk [vmem:[#allocation3 + $0x58] sm:$0xff] %vm1677, %v1652
      %1690 = vst.msk [vmem:[#allocation3 + $0x60] sm:$0xff] %vm1677, %v1654
      %1691 = vst.msk [vmem:[#allocation3 + $0x68] sm:$0xff] %vm1677, %v1656
      %1692 = vst.msk [vmem:[#allocation3 + $0x70] sm:$0xff] %vm1677, %v1658
      %1693 = vst.msk [vmem:[#allocation3 + $0x78] sm:$0xff] %vm1677, %v1660
      %v1694 = vld [vmem:[#allocation2] sm:$0xe]
      %v1695 = vld [vmem:[#allocation2 + $0x4] sm:$0xf]
      %v1696 = vld [vmem:[#allocation2 + $0x8] sm:$0x1]
      %v1697 = vld [vmem:[#allocation2 + $0xc] sm:$0xe]
      %v1698 = vld [vmem:[#allocation2 + $0x10] sm:$0xf]
      %v1699 = vld [vmem:[#allocation2 + $0x14] sm:$0x1]
      %v1700 = vld [vmem:[#allocation2 + $0x18] sm:$0xe]
      %v1701 = vld [vmem:[#allocation2 + $0x1c] sm:$0xf]
      %v1702 = vld [vmem:[#allocation2 + $0x20] sm:$0x1]
      %v1703 = vld [vmem:[#allocation2 + $0x24] sm:$0xe]
      %v1704 = vld [vmem:[#allocation2 + $0x28] sm:$0xf]
      %v1705 = vld [vmem:[#allocation2 + $0x2c] sm:$0x1]
      %v1706 = vld [vmem:[#allocation2 + $0x30] sm:$0xe]
      %v1707 = vld [vmem:[#allocation2 + $0x34] sm:$0xf]
      %v1708 = vld [vmem:[#allocation2 + $0x38] sm:$0x1]
      %v1709 = vld [vmem:[#allocation2 + $0x3c] sm:$0xe]
      %v1710 = vld [vmem:[#allocation2 + $0x40] sm:$0xf]
      %v1711 = vld [vmem:[#allocation2 + $0x44] sm:$0x1]
      %v1712 = vld [vmem:[#allocation2 + $0x48] sm:$0xe]
      %v1713 = vld [vmem:[#allocation2 + $0x4c] sm:$0xf]
      %v1714 = vld [vmem:[#allocation2 + $0x50] sm:$0x1]
      %v1715 = vld [vmem:[#allocation2 + $0x54] sm:$0xe]
      %v1716 = vld [vmem:[#allocation2 + $0x58] sm:$0xf]
      %v1717 = vld [vmem:[#allocation2 + $0x5c] sm:$0x1]
      %v1718 = vld [vmem:[#allocation2 + $0x60] sm:$0xe]
      %v1719 = vld [vmem:[#allocation2 + $0x64] sm:$0xf]
      %v1720 = vld [vmem:[#allocation2 + $0x68] sm:$0x1]
      %v1721 = vld [vmem:[#allocation2 + $0x6c] sm:$0xe]
      %v1722 = vld [vmem:[#allocation2 + $0x70] sm:$0xf]
      %v1723 = vld [vmem:[#allocation2 + $0x74] sm:$0x1]
      %v1724 = vld [vmem:[#allocation2 + $0x78] sm:$0xe]
      %v1725 = vld [vmem:[#allocation2 + $0x7c] sm:$0xf]
      %v1726 = vld [vmem:[#allocation2 + $0x80] sm:$0x1]
      %v1727 = vld [vmem:[#allocation2 + $0x84] sm:$0xe]
      %v1728 = vld [vmem:[#allocation2 + $0x88] sm:$0xf]
      %v1729 = vld [vmem:[#allocation2 + $0x8c] sm:$0x1]
      %v1730 = vld [vmem:[#allocation2 + $0x90] sm:$0xe]
      %v1731 = vld [vmem:[#allocation2 + $0x94] sm:$0xf]
      %v1732 = vld [vmem:[#allocation2 + $0x98] sm:$0x1]
      %v1733 = vld [vmem:[#allocation2 + $0x9c] sm:$0xe]
      %v1734 = vld [vmem:[#allocation2 + $0xa0] sm:$0xf]
      %v1735 = vld [vmem:[#allocation2 + $0xa4] sm:$0x1]
      %v1736 = vld [vmem:[#allocation2 + $0xa8] sm:$0xe]
      %v1737 = vld [vmem:[#allocation2 + $0xac] sm:$0xf]
      %v1738 = vld [vmem:[#allocation2 + $0xb0] sm:$0x1]
      %v1739 = vld [vmem:[#allocation2 + $0xb4] sm:$0xe]
      %v1740 = vld [vmem:[#allocation2 + $0xb8] sm:$0xf]
      %v1741 = vld [vmem:[#allocation2 + $0xbc] sm:$0x1]
      %vm1790 = vcmask 1042432
      %vm1791 = vcmask 1046532
      %vm1792 = vmor %vm1790, %vm1791
      %v1793 = vrot.slane %v1694, 5
      %v1794 = vrot.slane %v1793, 4
      %v1795 = vrot.slane %v1695, 5
      %v1796 = vsel %vm1792, %v1794, %v1795
      %v1797 = vrot.slane %v1795, 4
      %v1798 = vrot.slane %v1696, 5
      %v1799 = vsel %vm1792, %v1797, %v1798
      %v1800 = vrot.slane %v1697, 5
      %v1801 = vrot.slane %v1800, 4
      %v1802 = vrot.slane %v1698, 5
      %v1803 = vsel %vm1792, %v1801, %v1802
      %v1804 = vrot.slane %v1802, 4
      %v1805 = vrot.slane %v1699, 5
      %v1806 = vsel %vm1792, %v1804, %v1805
      %v1807 = vrot.slane %v1700, 5
      %v1808 = vrot.slane %v1807, 4
      %v1809 = vrot.slane %v1701, 5
      %v1810 = vsel %vm1792, %v1808, %v1809
      %v1811 = vrot.slane %v1809, 4
      %v1812 = vrot.slane %v1702, 5
      %v1813 = vsel %vm1792, %v1811, %v1812
      %v1814 = vrot.slane %v1703, 5
      %v1815 = vrot.slane %v1814, 4
      %v1816 = vrot.slane %v1704, 5
      %v1817 = vsel %vm1792, %v1815, %v1816
      %v1818 = vrot.slane %v1816, 4
      %v1819 = vrot.slane %v1705, 5
      %v1820 = vsel %vm1792, %v1818, %v1819
      %v1821 = vrot.slane %v1706, 5
      %v1822 = vrot.slane %v1821, 4
      %v1823 = vrot.slane %v1707, 5
      %v1824 = vsel %vm1792, %v1822, %v1823
      %v1825 = vrot.slane %v1823, 4
      %v1826 = vrot.slane %v1708, 5
      %v1827 = vsel %vm1792, %v1825, %v1826
      %v1828 = vrot.slane %v1709, 5
      %v1829 = vrot.slane %v1828, 4
      %v1830 = vrot.slane %v1710, 5
      %v1831 = vsel %vm1792, %v1829, %v1830
      %v1832 = vrot.slane %v1830, 4
      %v1833 = vrot.slane %v1711, 5
      %v1834 = vsel %vm1792, %v1832, %v1833
      %v1835 = vrot.slane %v1712, 5
      %v1836 = vrot.slane %v1835, 4
      %v1837 = vrot.slane %v1713, 5
      %v1838 = vsel %vm1792, %v1836, %v1837
      %v1839 = vrot.slane %v1837, 4
      %v1840 = vrot.slane %v1714, 5
      %v1841 = vsel %vm1792, %v1839, %v1840
      %v1842 = vrot.slane %v1715, 5
      %v1843 = vrot.slane %v1842, 4
      %v1844 = vrot.slane %v1716, 5
      %v1845 = vsel %vm1792, %v1843, %v1844
      %v1846 = vrot.slane %v1844, 4
      %v1847 = vrot.slane %v1717, 5
      %v1848 = vsel %vm1792, %v1846, %v1847
      %v1849 = vrot.slane %v1718, 5
      %v1850 = vrot.slane %v1849, 4
      %v1851 = vrot.slane %v1719, 5
      %v1852 = vsel %vm1792, %v1850, %v1851
      %v1853 = vrot.slane %v1851, 4
      %v1854 = vrot.slane %v1720, 5
      %v1855 = vsel %vm1792, %v1853, %v1854
      %v1856 = vrot.slane %v1721, 5
      %v1857 = vrot.slane %v1856, 4
      %v1858 = vrot.slane %v1722, 5
      %v1859 = vsel %vm1792, %v1857, %v1858
      %v1860 = vrot.slane %v1858, 4
      %v1861 = vrot.slane %v1723, 5
      %v1862 = vsel %vm1792, %v1860, %v1861
      %v1863 = vrot.slane %v1724, 5
      %v1864 = vrot.slane %v1863, 4
      %v1865 = vrot.slane %v1725, 5
      %v1866 = vsel %vm1792, %v1864, %v1865
      %v1867 = vrot.slane %v1865, 4
      %v1868 = vrot.slane %v1726, 5
      %v1869 = vsel %vm1792, %v1867, %v1868
      %v1870 = vrot.slane %v1727, 5
      %v1871 = vrot.slane %v1870, 4
      %v1872 = vrot.slane %v1728, 5
      %v1873 = vsel %vm1792, %v1871, %v1872
      %v1874 = vrot.slane %v1872, 4
      %v1875 = vrot.slane %v1729, 5
      %v1876 = vsel %vm1792, %v1874, %v1875
      %v1877 = vrot.slane %v1730, 5
      %v1878 = vrot.slane %v1877, 4
      %v1879 = vrot.slane %v1731, 5
      %v1880 = vsel %vm1792, %v1878, %v1879
      %v1881 = vrot.slane %v1879, 4
      %v1882 = vrot.slane %v1732, 5
      %v1883 = vsel %vm1792, %v1881, %v1882
      %v1884 = vrot.slane %v1733, 5
      %v1885 = vrot.slane %v1884, 4
      %v1886 = vrot.slane %v1734, 5
      %v1887 = vsel %vm1792, %v1885, %v1886
      %v1888 = vrot.slane %v1886, 4
      %v1889 = vrot.slane %v1735, 5
      %v1890 = vsel %vm1792, %v1888, %v1889
      %v1891 = vrot.slane %v1736, 5
      %v1892 = vrot.slane %v1891, 4
      %v1893 = vrot.slane %v1737, 5
      %v1894 = vsel %vm1792, %v1892, %v1893
      %v1895 = vrot.slane %v1893, 4
      %v1896 = vrot.slane %v1738, 5
      %v1897 = vsel %vm1792, %v1895, %v1896
      %v1898 = vrot.slane %v1739, 5
      %v1899 = vrot.slane %v1898, 4
      %v1900 = vrot.slane %v1740, 5
      %v1901 = vsel %vm1792, %v1899, %v1900
      %v1902 = vrot.slane %v1900, 4
      %v1903 = vrot.slane %v1741, 5
      %v1904 = vsel %vm1792, %v1902, %v1903
      %v1905 = vunpack.c.l.b16 %v1796
      %v1906 = vunpack.c.l.b16 %v1799
      %v1907 = vunpack.c.l.b16 %v1803
      %v1908 = vunpack.c.l.b16 %v1806
      %v1909 = vunpack.c.l.b16 %v1810
      %v1910 = vunpack.c.l.b16 %v1813
      %v1911 = vunpack.c.l.b16 %v1817
      %v1912 = vunpack.c.l.b16 %v1820
      %v1913 = vunpack.c.l.b16 %v1824
      %v1914 = vunpack.c.l.b16 %v1827
      %v1915 = vunpack.c.l.b16 %v1831
      %v1916 = vunpack.c.l.b16 %v1834
      %v1917 = vunpack.c.l.b16 %v1838
      %v1918 = vunpack.c.l.b16 %v1841
      %v1919 = vunpack.c.l.b16 %v1845
      %v1920 = vunpack.c.l.b16 %v1848
      %v1921 = vunpack.c.l.b16 %v1852
      %v1922 = vunpack.c.l.b16 %v1855
      %v1923 = vunpack.c.l.b16 %v1859
      %v1924 = vunpack.c.l.b16 %v1862
      %v1925 = vunpack.c.l.b16 %v1866
      %v1926 = vunpack.c.l.b16 %v1869
      %v1927 = vunpack.c.l.b16 %v1873
      %v1928 = vunpack.c.l.b16 %v1876
      %v1929 = vunpack.c.l.b16 %v1880
      %v1930 = vunpack.c.l.b16 %v1883
      %v1931 = vunpack.c.l.b16 %v1887
      %v1932 = vunpack.c.l.b16 %v1890
      %v1933 = vunpack.c.l.b16 %v1894
      %v1934 = vunpack.c.l.b16 %v1897
      %v1935 = vunpack.c.l.b16 %v1901
      %v1936 = vunpack.c.l.b16 %v1904
      %v1937 = vpack.c.b16 %v1906, %v1905
      %v1938 = vpack.c.b16 %v1908, %v1907
      %v1939 = vpack.c.b16 %v1910, %v1909
      %v1940 = vpack.c.b16 %v1912, %v1911
      %v1941 = vpack.c.b16 %v1914, %v1913
      %v1942 = vpack.c.b16 %v1916, %v1915
      %v1943 = vpack.c.b16 %v1918, %v1917
      %v1944 = vpack.c.b16 %v1920, %v1919
      %v1945 = vpack.c.b16 %v1922, %v1921
      %v1946 = vpack.c.b16 %v1924, %v1923
      %v1947 = vpack.c.b16 %v1926, %v1925
      %v1948 = vpack.c.b16 %v1928, %v1927
      %v1949 = vpack.c.b16 %v1930, %v1929
      %v1950 = vpack.c.b16 %v1932, %v1931
      %v1951 = vpack.c.b16 %v1934, %v1933
      %v1952 = vpack.c.b16 %v1936, %v1935
      %1953 = vrot.lane.b32.xlu0 %v1937, 16
      %v1954 = vpop.permute.xlu0 %1953
      %1955 = vrot.lane.b32.xlu0 %v1938, 16
      %v1956 = vpop.permute.xlu0 %1955
      %1957 = vrot.lane.b32.xlu0 %v1939, 16
      %v1958 = vpop.permute.xlu0 %1957
      %1959 = vrot.lane.b32.xlu0 %v1940, 16
      %v1960 = vpop.permute.xlu0 %1959
      %1961 = vrot.lane.b32.xlu0 %v1941, 16
      %v1962 = vpop.permute.xlu0 %1961
      %1963 = vrot.lane.b32.xlu0 %v1942, 16
      %v1964 = vpop.permute.xlu0 %1963
      %1965 = vrot.lane.b32.xlu0 %v1943, 16
      %v1966 = vpop.permute.xlu0 %1965
      %1967 = vrot.lane.b32.xlu0 %v1944, 16
      %v1968 = vpop.permute.xlu0 %1967
      %1969 = vrot.lane.b32.xlu0 %v1945, 16
      %v1970 = vpop.permute.xlu0 %1969
      %1971 = vrot.lane.b32.xlu0 %v1946, 16
      %v1972 = vpop.permute.xlu0 %1971
      %1973 = vrot.lane.b32.xlu0 %v1947, 16
      %v1974 = vpop.permute.xlu0 %1973
      %1975 = vrot.lane.b32.xlu0 %v1948, 16
      %v1976 = vpop.permute.xlu0 %1975
      %1977 = vrot.lane.b32.xlu0 %v1949, 16
      %v1978 = vpop.permute.xlu0 %1977
      %1979 = vrot.lane.b32.xlu0 %v1950, 16
      %v1980 = vpop.permute.xlu0 %1979
      %1981 = vrot.lane.b32.xlu0 %v1951, 16
      %v1982 = vpop.permute.xlu0 %1981
      %1983 = vrot.lane.b32.xlu0 %v1952, 16
      %v1984 = vpop.permute.xlu0 %1983
      %vm2001 = vcmask 195712
      %2002 = vst.msk [vmem:[#allocation3] sm:$0xff] %vm2001, %v1954
      %2003 = vst.msk [vmem:[#allocation3 + $0x8] sm:$0xff] %vm2001, %v1956
      %2004 = vst.msk [vmem:[#allocation3 + $0x10] sm:$0xff] %vm2001, %v1958
      %2005 = vst.msk [vmem:[#allocation3 + $0x18] sm:$0xff] %vm2001, %v1960
      %2006 = vst.msk [vmem:[#allocation3 + $0x20] sm:$0xff] %vm2001, %v1962
      %2007 = vst.msk [vmem:[#allocation3 + $0x28] sm:$0xff] %vm2001, %v1964
      %2008 = vst.msk [vmem:[#allocation3 + $0x30] sm:$0xff] %vm2001, %v1966
      %2009 = vst.msk [vmem:[#allocation3 + $0x38] sm:$0xff] %vm2001, %v1968
      %2010 = vst.msk [vmem:[#allocation3 + $0x40] sm:$0xff] %vm2001, %v1970
      %2011 = vst.msk [vmem:[#allocation3 + $0x48] sm:$0xff] %vm2001, %v1972
      %2012 = vst.msk [vmem:[#allocation3 + $0x50] sm:$0xff] %vm2001, %v1974
      %2013 = vst.msk [vmem:[#allocation3 + $0x58] sm:$0xff] %vm2001, %v1976
      %2014 = vst.msk [vmem:[#allocation3 + $0x60] sm:$0xff] %vm2001, %v1978
      %2015 = vst.msk [vmem:[#allocation3 + $0x68] sm:$0xff] %vm2001, %v1980
      %2016 = vst.msk [vmem:[#allocation3 + $0x70] sm:$0xff] %vm2001, %v1982
      %2017 = vst.msk [vmem:[#allocation3 + $0x78] sm:$0xff] %vm2001, %v1984
      %v2018 = vld [vmem:[%s882] sm:$0xf]
      %v2019 = vld [vmem:[%s882 + $0x4] sm:$0xf]
      %v2020 = vld [vmem:[%s882 + $0xc] sm:$0xf]
      %v2021 = vld [vmem:[%s882 + $0x10] sm:$0xf]
      %v2022 = vld [vmem:[%s882 + $0x18] sm:$0xf]
      %v2023 = vld [vmem:[%s882 + $0x1c] sm:$0xf]
      %v2024 = vld [vmem:[%s882 + $0x24] sm:$0xf]
      %v2025 = vld [vmem:[%s882 + $0x28] sm:$0xf]
      %v2026 = vld [vmem:[%s882 + $0x30] sm:$0xf]
      %v2027 = vld [vmem:[%s882 + $0x34] sm:$0xf]
      %v2028 = vld [vmem:[%s882 + $0x3c] sm:$0xf]
      %v2029 = vld [vmem:[%s882 + $0x40] sm:$0xf]
      %v2030 = vld [vmem:[%s882 + $0x48] sm:$0xf]
      %v2031 = vld [vmem:[%s882 + $0x4c] sm:$0xf]
      %v2032 = vld [vmem:[%s882 + $0x54] sm:$0xf]
      %v2033 = vld [vmem:[%s882 + $0x58] sm:$0xf]
      %v2034 = vld [vmem:[%s882 + $0x60] sm:$0xf]
      %v2035 = vld [vmem:[%s882 + $0x64] sm:$0xf]
      %v2036 = vld [vmem:[%s882 + $0x6c] sm:$0xf]
      %v2037 = vld [vmem:[%s882 + $0x70] sm:$0xf]
      %v2038 = vld [vmem:[%s882 + $0x78] sm:$0xf]
      %v2039 = vld [vmem:[%s882 + $0x7c] sm:$0xf]
      %v2040 = vld [vmem:[%s882 + $0x84] sm:$0xf]
      %v2041 = vld [vmem:[%s882 + $0x88] sm:$0xf]
      %v2042 = vld [vmem:[%s882 + $0x90] sm:$0xf]
      %v2043 = vld [vmem:[%s882 + $0x94] sm:$0xf]
      %v2044 = vld [vmem:[%s882 + $0x9c] sm:$0xf]
      %v2045 = vld [vmem:[%s882 + $0xa0] sm:$0xf]
      %v2046 = vld [vmem:[%s882 + $0xa8] sm:$0xf]
      %v2047 = vld [vmem:[%s882 + $0xac] sm:$0xf]
      %v2048 = vld [vmem:[%s882 + $0xb4] sm:$0xf]
      %v2049 = vld [vmem:[%s882 + $0xb8] sm:$0xf]
      %v2082 = vunpack.c.l.b16 %v2018
      %v2083 = vunpack.c.l.b16 %v2019
      %v2084 = vunpack.c.l.b16 %v2020
      %v2085 = vunpack.c.l.b16 %v2021
      %v2086 = vunpack.c.l.b16 %v2022
      %v2087 = vunpack.c.l.b16 %v2023
      %v2088 = vunpack.c.l.b16 %v2024
      %v2089 = vunpack.c.l.b16 %v2025
      %v2090 = vunpack.c.l.b16 %v2026
      %v2091 = vunpack.c.l.b16 %v2027
      %v2092 = vunpack.c.l.b16 %v2028
      %v2093 = vunpack.c.l.b16 %v2029
      %v2094 = vunpack.c.l.b16 %v2030
      %v2095 = vunpack.c.l.b16 %v2031
      %v2096 = vunpack.c.l.b16 %v2032
      %v2097 = vunpack.c.l.b16 %v2033
      %v2098 = vunpack.c.l.b16 %v2034
      %v2099 = vunpack.c.l.b16 %v2035
      %v2100 = vunpack.c.l.b16 %v2036
      %v2101 = vunpack.c.l.b16 %v2037
      %v2102 = vunpack.c.l.b16 %v2038
      %v2103 = vunpack.c.l.b16 %v2039
      %v2104 = vunpack.c.l.b16 %v2040
      %v2105 = vunpack.c.l.b16 %v2041
      %v2106 = vunpack.c.l.b16 %v2042
      %v2107 = vunpack.c.l.b16 %v2043
      %v2108 = vunpack.c.l.b16 %v2044
      %v2109 = vunpack.c.l.b16 %v2045
      %v2110 = vunpack.c.l.b16 %v2046
      %v2111 = vunpack.c.l.b16 %v2047
      %v2112 = vunpack.c.l.b16 %v2048
      %v2113 = vunpack.c.l.b16 %v2049
      %v2114 = vpack.c.b16 %v2083, %v2082
      %v2115 = vpack.c.b16 %v2085, %v2084
      %v2116 = vpack.c.b16 %v2087, %v2086
      %v2117 = vpack.c.b16 %v2089, %v2088
      %v2118 = vpack.c.b16 %v2091, %v2090
      %v2119 = vpack.c.b16 %v2093, %v2092
      %v2120 = vpack.c.b16 %v2095, %v2094
      %v2121 = vpack.c.b16 %v2097, %v2096
      %v2122 = vpack.c.b16 %v2099, %v2098
      %v2123 = vpack.c.b16 %v2101, %v2100
      %v2124 = vpack.c.b16 %v2103, %v2102
      %v2125 = vpack.c.b16 %v2105, %v2104
      %v2126 = vpack.c.b16 %v2107, %v2106
      %v2127 = vpack.c.b16 %v2109, %v2108
      %v2128 = vpack.c.b16 %v2111, %v2110
      %v2129 = vpack.c.b16 %v2113, %v2112
      %2130 = vrot.lane.b32.xlu0 %v2114, 24
      %v2131 = vpop.permute.xlu0 %2130
      %2132 = vrot.lane.b32.xlu0 %v2115, 24
      %v2133 = vpop.permute.xlu0 %2132
      %2134 = vrot.lane.b32.xlu0 %v2116, 24
      %v2135 = vpop.permute.xlu0 %2134
      %2136 = vrot.lane.b32.xlu0 %v2117, 24
      %v2137 = vpop.permute.xlu0 %2136
      %2138 = vrot.lane.b32.xlu0 %v2118, 24
      %v2139 = vpop.permute.xlu0 %2138
      %2140 = vrot.lane.b32.xlu0 %v2119, 24
      %v2141 = vpop.permute.xlu0 %2140
      %2142 = vrot.lane.b32.xlu0 %v2120, 24
      %v2143 = vpop.permute.xlu0 %2142
      %2144 = vrot.lane.b32.xlu0 %v2121, 24
      %v2145 = vpop.permute.xlu0 %2144
      %2146 = vrot.lane.b32.xlu0 %v2122, 24
      %v2147 = vpop.permute.xlu0 %2146
      %2148 = vrot.lane.b32.xlu0 %v2123, 24
      %v2149 = vpop.permute.xlu0 %2148
      %2150 = vrot.lane.b32.xlu0 %v2124, 24
      %v2151 = vpop.permute.xlu0 %2150
      %2152 = vrot.lane.b32.xlu0 %v2125, 24
      %v2153 = vpop.permute.xlu0 %2152
      %2154 = vrot.lane.b32.xlu0 %v2126, 24
      %v2155 = vpop.permute.xlu0 %2154
      %2156 = vrot.lane.b32.xlu0 %v2127, 24
      %v2157 = vpop.permute.xlu0 %2156
      %2158 = vrot.lane.b32.xlu0 %v2128, 24
      %v2159 = vpop.permute.xlu0 %2158
      %2160 = vrot.lane.b32.xlu0 %v2129, 24
      %v2161 = vpop.permute.xlu0 %2160
      %vm2178 = vcmask 261312
      %2179 = vst.msk [vmem:[#allocation3] sm:$0xff] %vm2178, %v2131
      %2180 = vst.msk [vmem:[#allocation3 + $0x8] sm:$0xff] %vm2178, %v2133
      %2181 = vst.msk [vmem:[#allocation3 + $0x10] sm:$0xff] %vm2178, %v2135
      %2182 = vst.msk [vmem:[#allocation3 + $0x18] sm:$0xff] %vm2178, %v2137
      %2183 = vst.msk [vmem:[#allocation3 + $0x20] sm:$0xff] %vm2178, %v2139
      %2184 = vst.msk [vmem:[#allocation3 + $0x28] sm:$0xff] %vm2178, %v2141
      %2185 = vst.msk [vmem:[#allocation3 + $0x30] sm:$0xff] %vm2178, %v2143
      %2186 = vst.msk [vmem:[#allocation3 + $0x38] sm:$0xff] %vm2178, %v2145
      %2187 = vst.msk [vmem:[#allocation3 + $0x40] sm:$0xff] %vm2178, %v2147
      %2188 = vst.msk [vmem:[#allocation3 + $0x48] sm:$0xff] %vm2178, %v2149
      %2189 = vst.msk [vmem:[#allocation3 + $0x50] sm:$0xff] %vm2178, %v2151
      %2190 = vst.msk [vmem:[#allocation3 + $0x58] sm:$0xff] %vm2178, %v2153
      %2191 = vst.msk [vmem:[#allocation3 + $0x60] sm:$0xff] %vm2178, %v2155
      %2192 = vst.msk [vmem:[#allocation3 + $0x68] sm:$0xff] %vm2178, %v2157
      %2193 = vst.msk [vmem:[#allocation3 + $0x70] sm:$0xff] %vm2178, %v2159
      %2194 = vst.msk [vmem:[#allocation3 + $0x78] sm:$0xff] %vm2178, %v2161
      %v2195 = vld [vmem:[%s882] sm:$0xf]
      %v2196 = vld [vmem:[%s882 + $0x4] sm:$0xf]
      %v2197 = vld [vmem:[%s882 + $0x8] sm:$0x1]
      %v2198 = vld [vmem:[%s882 + $0xc] sm:$0xf]
      %v2199 = vld [vmem:[%s882 + $0x10] sm:$0xf]
      %v2200 = vld [vmem:[%s882 + $0x14] sm:$0x1]
      %v2201 = vld [vmem:[%s882 + $0x18] sm:$0xf]
      %v2202 = vld [vmem:[%s882 + $0x1c] sm:$0xf]
      %v2203 = vld [vmem:[%s882 + $0x20] sm:$0x1]
      %v2204 = vld [vmem:[%s882 + $0x24] sm:$0xf]
      %v2205 = vld [vmem:[%s882 + $0x28] sm:$0xf]
      %v2206 = vld [vmem:[%s882 + $0x2c] sm:$0x1]
      %v2207 = vld [vmem:[%s882 + $0x30] sm:$0xf]
      %v2208 = vld [vmem:[%s882 + $0x34] sm:$0xf]
      %v2209 = vld [vmem:[%s882 + $0x38] sm:$0x1]
      %v2210 = vld [vmem:[%s882 + $0x3c] sm:$0xf]
      %v2211 = vld [vmem:[%s882 + $0x40] sm:$0xf]
      %v2212 = vld [vmem:[%s882 + $0x44] sm:$0x1]
      %v2213 = vld [vmem:[%s882 + $0x48] sm:$0xf]
      %v2214 = vld [vmem:[%s882 + $0x4c] sm:$0xf]
      %v2215 = vld [vmem:[%s882 + $0x50] sm:$0x1]
      %v2216 = vld [vmem:[%s882 + $0x54] sm:$0xf]
      %v2217 = vld [vmem:[%s882 + $0x58] sm:$0xf]
      %v2218 = vld [vmem:[%s882 + $0x5c] sm:$0x1]
      %v2219 = vld [vmem:[%s882 + $0x60] sm:$0xf]
      %v2220 = vld [vmem:[%s882 + $0x64] sm:$0xf]
      %v2221 = vld [vmem:[%s882 + $0x68] sm:$0x1]
      %v2222 = vld [vmem:[%s882 + $0x6c] sm:$0xf]
      %v2223 = vld [vmem:[%s882 + $0x70] sm:$0xf]
      %v2224 = vld [vmem:[%s882 + $0x74] sm:$0x1]
      %v2225 = vld [vmem:[%s882 + $0x78] sm:$0xf]
      %v2226 = vld [vmem:[%s882 + $0x7c] sm:$0xf]
      %v2227 = vld [vmem:[%s882 + $0x80] sm:$0x1]
      %v2228 = vld [vmem:[%s882 + $0x84] sm:$0xf]
      %v2229 = vld [vmem:[%s882 + $0x88] sm:$0xf]
      %v2230 = vld [vmem:[%s882 + $0x8c] sm:$0x1]
      %v2231 = vld [vmem:[%s882 + $0x90] sm:$0xf]
      %v2232 = vld [vmem:[%s882 + $0x94] sm:$0xf]
      %v2233 = vld [vmem:[%s882 + $0x98] sm:$0x1]
      %v2234 = vld [vmem:[%s882 + $0x9c] sm:$0xf]
      %v2235 = vld [vmem:[%s882 + $0xa0] sm:$0xf]
      %v2236 = vld [vmem:[%s882 + $0xa4] sm:$0x1]
      %v2237 = vld [vmem:[%s882 + $0xa8] sm:$0xf]
      %v2238 = vld [vmem:[%s882 + $0xac] sm:$0xf]
      %v2239 = vld [vmem:[%s882 + $0xb0] sm:$0x1]
      %v2240 = vld [vmem:[%s882 + $0xb4] sm:$0xf]
      %v2241 = vld [vmem:[%s882 + $0xb8] sm:$0xf]
      %v2242 = vld [vmem:[%s882 + $0xbc] sm:$0x1]
      %v2244 = vshrl.u32 %v2195, 16
      %v2246 = vrot.slane %v2244, 4
      %v2247 = vshll.u32 %v2195, 16
      %v2249 = vrot.slane %v2247, 5
      %v2250 = vor.u32 %v2246, %v2249
      %v2251 = vrot.slane %v2250, 4
      %v2253 = vshll.u32 %v2196, 16
      %v2255 = vrot.slane %v2253, 5
      %v2256 = vsel %vm1196, %v2251, %v2255
      %v2257 = vshrl.u32 %v2196, 16
      %v2259 = vrot.slane %v2257, 4
      %v2260 = vor.u32 %v2259, %v2255
      %v2261 = vrot.slane %v2260, 4
      %v2263 = vshll.u32 %v2197, 16
      %v2265 = vrot.slane %v2263, 5
      %v2266 = vsel %vm1196, %v2261, %v2265
      %v2268 = vshrl.u32 %v2198, 16
      %v2270 = vrot.slane %v2268, 4
      %v2271 = vshll.u32 %v2198, 16
      %v2273 = vrot.slane %v2271, 5
      %v2274 = vor.u32 %v2270, %v2273
      %v2275 = vrot.slane %v2274, 4
      %v2277 = vshll.u32 %v2199, 16
      %v2279 = vrot.slane %v2277, 5
      %v2280 = vsel %vm1196, %v2275, %v2279
      %v2281 = vshrl.u32 %v2199, 16
      %v2283 = vrot.slane %v2281, 4
      %v2284 = vor.u32 %v2283, %v2279
      %v2285 = vrot.slane %v2284, 4
      %v2287 = vshll.u32 %v2200, 16
      %v2289 = vrot.slane %v2287, 5
      %v2290 = vsel %vm1196, %v2285, %v2289
      %v2292 = vshrl.u32 %v2201, 16
      %v2294 = vrot.slane %v2292, 4
      %v2295 = vshll.u32 %v2201, 16
      %v2297 = vrot.slane %v2295, 5
      %v2298 = vor.u32 %v2294, %v2297
      %v2299 = vrot.slane %v2298, 4
      %v2301 = vshll.u32 %v2202, 16
      %v2303 = vrot.slane %v2301, 5
      %v2304 = vsel %vm1196, %v2299, %v2303
      %v2305 = vshrl.u32 %v2202, 16
      %v2307 = vrot.slane %v2305, 4
      %v2308 = vor.u32 %v2307, %v2303
      %v2309 = vrot.slane %v2308, 4
      %v2311 = vshll.u32 %v2203, 16
      %v2313 = vrot.slane %v2311, 5
      %v2314 = vsel %vm1196, %v2309, %v2313
      %v2316 = vshrl.u32 %v2204, 16
      %v2318 = vrot.slane %v2316, 4
      %v2319 = vshll.u32 %v2204, 16
      %v2321 = vrot.slane %v2319, 5
      %v2322 = vor.u32 %v2318, %v2321
      %v2323 = vrot.slane %v2322, 4
      %v2325 = vshll.u32 %v2205, 16
      %v2327 = vrot.slane %v2325, 5
      %v2328 = vsel %vm1196, %v2323, %v2327
      %v2329 = vshrl.u32 %v2205, 16
      %v2331 = vrot.slane %v2329, 4
      %v2332 = vor.u32 %v2331, %v2327
      %v2333 = vrot.slane %v2332, 4
      %v2335 = vshll.u32 %v2206, 16
      %v2337 = vrot.slane %v2335, 5
      %v2338 = vsel %vm1196, %v2333, %v2337
      %v2340 = vshrl.u32 %v2207, 16
      %v2342 = vrot.slane %v2340, 4
      %v2343 = vshll.u32 %v2207, 16
      %v2345 = vrot.slane %v2343, 5
      %v2346 = vor.u32 %v2342, %v2345
      %v2347 = vrot.slane %v2346, 4
      %v2349 = vshll.u32 %v2208, 16
      %v2351 = vrot.slane %v2349, 5
      %v2352 = vsel %vm1196, %v2347, %v2351
      %v2353 = vshrl.u32 %v2208, 16
      %v2355 = vrot.slane %v2353, 4
      %v2356 = vor.u32 %v2355, %v2351
      %v2357 = vrot.slane %v2356, 4
      %v2359 = vshll.u32 %v2209, 16
      %v2361 = vrot.slane %v2359, 5
      %v2362 = vsel %vm1196, %v2357, %v2361
      %v2364 = vshrl.u32 %v2210, 16
      %v2366 = vrot.slane %v2364, 4
      %v2367 = vshll.u32 %v2210, 16
      %v2369 = vrot.slane %v2367, 5
      %v2370 = vor.u32 %v2366, %v2369
      %v2371 = vrot.slane %v2370, 4
      %v2373 = vshll.u32 %v2211, 16
      %v2375 = vrot.slane %v2373, 5
      %v2376 = vsel %vm1196, %v2371, %v2375
      %v2377 = vshrl.u32 %v2211, 16
      %v2379 = vrot.slane %v2377, 4
      %v2380 = vor.u32 %v2379, %v2375
      %v2381 = vrot.slane %v2380, 4
      %v2383 = vshll.u32 %v2212, 16
      %v2385 = vrot.slane %v2383, 5
      %v2386 = vsel %vm1196, %v2381, %v2385
      %v2388 = vshrl.u32 %v2213, 16
      %v2390 = vrot.slane %v2388, 4
      %v2391 = vshll.u32 %v2213, 16
      %v2393 = vrot.slane %v2391, 5
      %v2394 = vor.u32 %v2390, %v2393
      %v2395 = vrot.slane %v2394, 4
      %v2397 = vshll.u32 %v2214, 16
      %v2399 = vrot.slane %v2397, 5
      %v2400 = vsel %vm1196, %v2395, %v2399
      %v2401 = vshrl.u32 %v2214, 16
      %v2403 = vrot.slane %v2401, 4
      %v2404 = vor.u32 %v2403, %v2399
      %v2405 = vrot.slane %v2404, 4
      %v2407 = vshll.u32 %v2215, 16
      %v2409 = vrot.slane %v2407, 5
      %v2410 = vsel %vm1196, %v2405, %v2409
      %v2412 = vshrl.u32 %v2216, 16
      %v2414 = vrot.slane %v2412, 4
      %v2415 = vshll.u32 %v2216, 16
      %v2417 = vrot.slane %v2415, 5
      %v2418 = vor.u32 %v2414, %v2417
      %v2419 = vrot.slane %v2418, 4
      %v2421 = vshll.u32 %v2217, 16
      %v2423 = vrot.slane %v2421, 5
      %v2424 = vsel %vm1196, %v2419, %v2423
      %v2425 = vshrl.u32 %v2217, 16
      %v2427 = vrot.slane %v2425, 4
      %v2428 = vor.u32 %v2427, %v2423
      %v2429 = vrot.slane %v2428, 4
      %v2431 = vshll.u32 %v2218, 16
      %v2433 = vrot.slane %v2431, 5
      %v2434 = vsel %vm1196, %v2429, %v2433
      %v2436 = vshrl.u32 %v2219, 16
      %v2438 = vrot.slane %v2436, 4
      %v2439 = vshll.u32 %v2219, 16
      %v2441 = vrot.slane %v2439, 5
      %v2442 = vor.u32 %v2438, %v2441
      %v2443 = vrot.slane %v2442, 4
      %v2445 = vshll.u32 %v2220, 16
      %v2447 = vrot.slane %v2445, 5
      %v2448 = vsel %vm1196, %v2443, %v2447
      %v2449 = vshrl.u32 %v2220, 16
      %v2451 = vrot.slane %v2449, 4
      %v2452 = vor.u32 %v2451, %v2447
      %v2453 = vrot.slane %v2452, 4
      %v2455 = vshll.u32 %v2221, 16
      %v2457 = vrot.slane %v2455, 5
      %v2458 = vsel %vm1196, %v2453, %v2457
      %v2460 = vshrl.u32 %v2222, 16
      %v2462 = vrot.slane %v2460, 4
      %v2463 = vshll.u32 %v2222, 16
      %v2465 = vrot.slane %v2463, 5
      %v2466 = vor.u32 %v2462, %v2465
      %v2467 = vrot.slane %v2466, 4
      %v2469 = vshll.u32 %v2223, 16
      %v2471 = vrot.slane %v2469, 5
      %v2472 = vsel %vm1196, %v2467, %v2471
      %v2473 = vshrl.u32 %v2223, 16
      %v2475 = vrot.slane %v2473, 4
      %v2476 = vor.u32 %v2475, %v2471
      %v2477 = vrot.slane %v2476, 4
      %v2479 = vshll.u32 %v2224, 16
      %v2481 = vrot.slane %v2479, 5
      %v2482 = vsel %vm1196, %v2477, %v2481
      %v2484 = vshrl.u32 %v2225, 16
      %v2486 = vrot.slane %v2484, 4
      %v2487 = vshll.u32 %v2225, 16
      %v2489 = vrot.slane %v2487, 5
      %v2490 = vor.u32 %v2486, %v2489
      %v2491 = vrot.slane %v2490, 4
      %v2493 = vshll.u32 %v2226, 16
      %v2495 = vrot.slane %v2493, 5
      %v2496 = vsel %vm1196, %v2491, %v2495
      %v2497 = vshrl.u32 %v2226, 16
      %v2499 = vrot.slane %v2497, 4
      %v2500 = vor.u32 %v2499, %v2495
      %v2501 = vrot.slane %v2500, 4
      %v2503 = vshll.u32 %v2227, 16
      %v2505 = vrot.slane %v2503, 5
      %v2506 = vsel %vm1196, %v2501, %v2505
      %v2508 = vshrl.u32 %v2228, 16
      %v2510 = vrot.slane %v2508, 4
      %v2511 = vshll.u32 %v2228, 16
      %v2513 = vrot.slane %v2511, 5
      %v2514 = vor.u32 %v2510, %v2513
      %v2515 = vrot.slane %v2514, 4
      %v2517 = vshll.u32 %v2229, 16
      %v2519 = vrot.slane %v2517, 5
      %v2520 = vsel %vm1196, %v2515, %v2519
      %v2521 = vshrl.u32 %v2229, 16
      %v2523 = vrot.slane %v2521, 4
      %v2524 = vor.u32 %v2523, %v2519
      %v2525 = vrot.slane %v2524, 4
      %v2527 = vshll.u32 %v2230, 16
      %v2529 = vrot.slane %v2527, 5
      %v2530 = vsel %vm1196, %v2525, %v2529
      %v2532 = vshrl.u32 %v2231, 16
      %v2534 = vrot.slane %v2532, 4
      %v2535 = vshll.u32 %v2231, 16
      %v2537 = vrot.slane %v2535, 5
      %v2538 = vor.u32 %v2534, %v2537
      %v2539 = vrot.slane %v2538, 4
      %v2541 = vshll.u32 %v2232, 16
      %v2543 = vrot.slane %v2541, 5
      %v2544 = vsel %vm1196, %v2539, %v2543
      %v2545 = vshrl.u32 %v2232, 16
      %v2547 = vrot.slane %v2545, 4
      %v2548 = vor.u32 %v2547, %v2543
      %v2549 = vrot.slane %v2548, 4
      %v2551 = vshll.u32 %v2233, 16
      %v2553 = vrot.slane %v2551, 5
      %v2554 = vsel %vm1196, %v2549, %v2553
      %v2556 = vshrl.u32 %v2234, 16
      %v2558 = vrot.slane %v2556, 4
      %v2559 = vshll.u32 %v2234, 16
      %v2561 = vrot.slane %v2559, 5
      %v2562 = vor.u32 %v2558, %v2561
      %v2563 = vrot.slane %v2562, 4
      %v2565 = vshll.u32 %v2235, 16
      %v2567 = vrot.slane %v2565, 5
      %v2568 = vsel %vm1196, %v2563, %v2567
      %v2569 = vshrl.u32 %v2235, 16
      %v2571 = vrot.slane %v2569, 4
      %v2572 = vor.u32 %v2571, %v2567
      %v2573 = vrot.slane %v2572, 4
      %v2575 = vshll.u32 %v2236, 16
      %v2577 = vrot.slane %v2575, 5
      %v2578 = vsel %vm1196, %v2573, %v2577
      %v2580 = vshrl.u32 %v2237, 16
      %v2582 = vrot.slane %v2580, 4
      %v2583 = vshll.u32 %v2237, 16
      %v2585 = vrot.slane %v2583, 5
      %v2586 = vor.u32 %v2582, %v2585
      %v2587 = vrot.slane %v2586, 4
      %v2589 = vshll.u32 %v2238, 16
      %v2591 = vrot.slane %v2589, 5
      %v2592 = vsel %vm1196, %v2587, %v2591
      %v2593 = vshrl.u32 %v2238, 16
      %v2595 = vrot.slane %v2593, 4
      %v2596 = vor.u32 %v2595, %v2591
      %v2597 = vrot.slane %v2596, 4
      %v2599 = vshll.u32 %v2239, 16
      %v2601 = vrot.slane %v2599, 5
      %v2602 = vsel %vm1196, %v2597, %v2601
      %v2604 = vshrl.u32 %v2240, 16
      %v2606 = vrot.slane %v2604, 4
      %v2607 = vshll.u32 %v2240, 16
      %v2609 = vrot.slane %v2607, 5
      %v2610 = vor.u32 %v2606, %v2609
      %v2611 = vrot.slane %v2610, 4
      %v2613 = vshll.u32 %v2241, 16
      %v2615 = vrot.slane %v2613, 5
      %v2616 = vsel %vm1196, %v2611, %v2615
      %v2617 = vshrl.u32 %v2241, 16
      %v2619 = vrot.slane %v2617, 4
      %v2620 = vor.u32 %v2619, %v2615
      %v2621 = vrot.slane %v2620, 4
      %v2623 = vshll.u32 %v2242, 16
      %v2625 = vrot.slane %v2623, 5
      %v2626 = vsel %vm1196, %v2621, %v2625
      %v2627 = vunpack.c.l.b16 %v2256
      %v2628 = vunpack.c.l.b16 %v2266
      %v2629 = vunpack.c.l.b16 %v2280
      %v2630 = vunpack.c.l.b16 %v2290
      %v2631 = vunpack.c.l.b16 %v2304
      %v2632 = vunpack.c.l.b16 %v2314
      %v2633 = vunpack.c.l.b16 %v2328
      %v2634 = vunpack.c.l.b16 %v2338
      %v2635 = vunpack.c.l.b16 %v2352
      %v2636 = vunpack.c.l.b16 %v2362
      %v2637 = vunpack.c.l.b16 %v2376
      %v2638 = vunpack.c.l.b16 %v2386
      %v2639 = vunpack.c.l.b16 %v2400
      %v2640 = vunpack.c.l.b16 %v2410
      %v2641 = vunpack.c.l.b16 %v2424
      %v2642 = vunpack.c.l.b16 %v2434
      %v2643 = vunpack.c.l.b16 %v2448
      %v2644 = vunpack.c.l.b16 %v2458
      %v2645 = vunpack.c.l.b16 %v2472
      %v2646 = vunpack.c.l.b16 %v2482
      %v2647 = vunpack.c.l.b16 %v2496
      %v2648 = vunpack.c.l.b16 %v2506
      %v2649 = vunpack.c.l.b16 %v2520
      %v2650 = vunpack.c.l.b16 %v2530
      %v2651 = vunpack.c.l.b16 %v2544
      %v2652 = vunpack.c.l.b16 %v2554
      %v2653 = vunpack.c.l.b16 %v2568
      %v2654 = vunpack.c.l.b16 %v2578
      %v2655 = vunpack.c.l.b16 %v2592
      %v2656 = vunpack.c.l.b16 %v2602
      %v2657 = vunpack.c.l.b16 %v2616
      %v2658 = vunpack.c.l.b16 %v2626
      %v2659 = vpack.c.b16 %v2628, %v2627
      %v2660 = vpack.c.b16 %v2630, %v2629
      %v2661 = vpack.c.b16 %v2632, %v2631
      %v2662 = vpack.c.b16 %v2634, %v2633
      %v2663 = vpack.c.b16 %v2636, %v2635
      %v2664 = vpack.c.b16 %v2638, %v2637
      %v2665 = vpack.c.b16 %v2640, %v2639
      %v2666 = vpack.c.b16 %v2642, %v2641
      %v2667 = vpack.c.b16 %v2644, %v2643
      %v2668 = vpack.c.b16 %v2646, %v2645
      %v2669 = vpack.c.b16 %v2648, %v2647
      %v2670 = vpack.c.b16 %v2650, %v2649
      %v2671 = vpack.c.b16 %v2652, %v2651
      %v2672 = vpack.c.b16 %v2654, %v2653
      %v2673 = vpack.c.b16 %v2656, %v2655
      %v2674 = vpack.c.b16 %v2658, %v2657
      %2675 = vrot.lane.b32.xlu0 %v2659, 32
      %v2676 = vpop.permute.xlu0 %2675
      %2677 = vrot.lane.b32.xlu0 %v2660, 32
      %v2678 = vpop.permute.xlu0 %2677
      %2679 = vrot.lane.b32.xlu0 %v2661, 32
      %v2680 = vpop.permute.xlu0 %2679
      %2681 = vrot.lane.b32.xlu0 %v2662, 32
      %v2682 = vpop.permute.xlu0 %2681
      %2683 = vrot.lane.b32.xlu0 %v2663, 32
      %v2684 = vpop.permute.xlu0 %2683
      %2685 = vrot.lane.b32.xlu0 %v2664, 32
      %v2686 = vpop.permute.xlu0 %2685
      %2687 = vrot.lane.b32.xlu0 %v2665, 32
      %v2688 = vpop.permute.xlu0 %2687
      %2689 = vrot.lane.b32.xlu0 %v2666, 32
      %v2690 = vpop.permute.xlu0 %2689
      %2691 = vrot.lane.b32.xlu0 %v2667, 32
      %v2692 = vpop.permute.xlu0 %2691
      %2693 = vrot.lane.b32.xlu0 %v2668, 32
      %v2694 = vpop.permute.xlu0 %2693
      %2695 = vrot.lane.b32.xlu0 %v2669, 32
      %v2696 = vpop.permute.xlu0 %2695
      %2697 = vrot.lane.b32.xlu0 %v2670, 32
      %v2698 = vpop.permute.xlu0 %2697
      %2699 = vrot.lane.b32.xlu0 %v2671, 32
      %v2700 = vpop.permute.xlu0 %2699
      %2701 = vrot.lane.b32.xlu0 %v2672, 32
      %v2702 = vpop.permute.xlu0 %2701
      %2703 = vrot.lane.b32.xlu0 %v2673, 32
      %v2704 = vpop.permute.xlu0 %2703
      %2705 = vrot.lane.b32.xlu0 %v2674, 32
      %v2706 = vpop.permute.xlu0 %2705
      %vm2723 = vcmask 326912
      %2724 = vst.msk [vmem:[#allocation3] sm:$0xff] %vm2723, %v2676
      %2725 = vst.msk [vmem:[#allocation3 + $0x8] sm:$0xff] %vm2723, %v2678
      %2726 = vst.msk [vmem:[#allocation3 + $0x10] sm:$0xff] %vm2723, %v2680
      %2727 = vst.msk [vmem:[#allocation3 + $0x18] sm:$0xff] %vm2723, %v2682
      %2728 = vst.msk [vmem:[#allocation3 + $0x20] sm:$0xff] %vm2723, %v2684
      %2729 = vst.msk [vmem:[#allocation3 + $0x28] sm:$0xff] %vm2723, %v2686
      %2730 = vst.msk [vmem:[#allocation3 + $0x30] sm:$0xff] %vm2723, %v2688
      %2731 = vst.msk [vmem:[#allocation3 + $0x38] sm:$0xff] %vm2723, %v2690
      %2732 = vst.msk [vmem:[#allocation3 + $0x40] sm:$0xff] %vm2723, %v2692
      %2733 = vst.msk [vmem:[#allocation3 + $0x48] sm:$0xff] %vm2723, %v2694
      %2734 = vst.msk [vmem:[#allocation3 + $0x50] sm:$0xff] %vm2723, %v2696
      %2735 = vst.msk [vmem:[#allocation3 + $0x58] sm:$0xff] %vm2723, %v2698
      %2736 = vst.msk [vmem:[#allocation3 + $0x60] sm:$0xff] %vm2723, %v2700
      %2737 = vst.msk [vmem:[#allocation3 + $0x68] sm:$0xff] %vm2723, %v2702
      %2738 = vst.msk [vmem:[#allocation3 + $0x70] sm:$0xff] %vm2723, %v2704
      %2739 = vst.msk [vmem:[#allocation3 + $0x78] sm:$0xff] %vm2723, %v2706
      %v2740 = vld [vmem:[%s882] sm:$0xe]
      %v2741 = vld [vmem:[%s882 + $0x4] sm:$0xf]
      %v2742 = vld [vmem:[%s882 + $0x8] sm:$0x1]
      %v2743 = vld [vmem:[%s882 + $0xc] sm:$0xe]
      %v2744 = vld [vmem:[%s882 + $0x10] sm:$0xf]
      %v2745 = vld [vmem:[%s882 + $0x14] sm:$0x1]
      %v2746 = vld [vmem:[%s882 + $0x18] sm:$0xe]
      %v2747 = vld [vmem:[%s882 + $0x1c] sm:$0xf]
      %v2748 = vld [vmem:[%s882 + $0x20] sm:$0x1]
      %v2749 = vld [vmem:[%s882 + $0x24] sm:$0xe]
      %v2750 = vld [vmem:[%s882 + $0x28] sm:$0xf]
      %v2751 = vld [vmem:[%s882 + $0x2c] sm:$0x1]
      %v2752 = vld [vmem:[%s882 + $0x30] sm:$0xe]
      %v2753 = vld [vmem:[%s882 + $0x34] sm:$0xf]
      %v2754 = vld [vmem:[%s882 + $0x38] sm:$0x1]
      %v2755 = vld [vmem:[%s882 + $0x3c] sm:$0xe]
      %v2756 = vld [vmem:[%s882 + $0x40] sm:$0xf]
      %v2757 = vld [vmem:[%s882 + $0x44] sm:$0x1]
      %v2758 = vld [vmem:[%s882 + $0x48] sm:$0xe]
      %v2759 = vld [vmem:[%s882 + $0x4c] sm:$0xf]
      %v2760 = vld [vmem:[%s882 + $0x50] sm:$0x1]
      %v2761 = vld [vmem:[%s882 + $0x54] sm:$0xe]
      %v2762 = vld [vmem:[%s882 + $0x58] sm:$0xf]
      %v2763 = vld [vmem:[%s882 + $0x5c] sm:$0x1]
      %v2764 = vld [vmem:[%s882 + $0x60] sm:$0xe]
      %v2765 = vld [vmem:[%s882 + $0x64] sm:$0xf]
      %v2766 = vld [vmem:[%s882 + $0x68] sm:$0x1]
      %v2767 = vld [vmem:[%s882 + $0x6c] sm:$0xe]
      %v2768 = vld [vmem:[%s882 + $0x70] sm:$0xf]
      %v2769 = vld [vmem:[%s882 + $0x74] sm:$0x1]
      %v2770 = vld [vmem:[%s882 + $0x78] sm:$0xe]
      %v2771 = vld [vmem:[%s882 + $0x7c] sm:$0xf]
      %v2772 = vld [vmem:[%s882 + $0x80] sm:$0x1]
      %v2773 = vld [vmem:[%s882 + $0x84] sm:$0xe]
      %v2774 = vld [vmem:[%s882 + $0x88] sm:$0xf]
      %v2775 = vld [vmem:[%s882 + $0x8c] sm:$0x1]
      %v2776 = vld [vmem:[%s882 + $0x90] sm:$0xe]
      %v2777 = vld [vmem:[%s882 + $0x94] sm:$0xf]
      %v2778 = vld [vmem:[%s882 + $0x98] sm:$0x1]
      %v2779 = vld [vmem:[%s882 + $0x9c] sm:$0xe]
      %v2780 = vld [vmem:[%s882 + $0xa0] sm:$0xf]
      %v2781 = vld [vmem:[%s882 + $0xa4] sm:$0x1]
      %v2782 = vld [vmem:[%s882 + $0xa8] sm:$0xe]
      %v2783 = vld [vmem:[%s882 + $0xac] sm:$0xf]
      %v2784 = vld [vmem:[%s882 + $0xb0] sm:$0x1]
      %v2785 = vld [vmem:[%s882 + $0xb4] sm:$0xe]
      %v2786 = vld [vmem:[%s882 + $0xb8] sm:$0xf]
      %v2787 = vld [vmem:[%s882 + $0xbc] sm:$0x1]
      %v2836 = vrot.slane %v2740, 5
      %v2837 = vrot.slane %v2836, 4
      %v2838 = vrot.slane %v2741, 5
      %v2839 = vsel %vm1792, %v2837, %v2838
      %v2840 = vrot.slane %v2838, 4
      %v2841 = vrot.slane %v2742, 5
      %v2842 = vsel %vm1792, %v2840, %v2841
      %v2843 = vrot.slane %v2743, 5
      %v2844 = vrot.slane %v2843, 4
      %v2845 = vrot.slane %v2744, 5
      %v2846 = vsel %vm1792, %v2844, %v2845
      %v2847 = vrot.slane %v2845, 4
      %v2848 = vrot.slane %v2745, 5
      %v2849 = vsel %vm1792, %v2847, %v2848
      %v2850 = vrot.slane %v2746, 5
      %v2851 = vrot.slane %v2850, 4
      %v2852 = vrot.slane %v2747, 5
      %v2853 = vsel %vm1792, %v2851, %v2852
      %v2854 = vrot.slane %v2852, 4
      %v2855 = vrot.slane %v2748, 5
      %v2856 = vsel %vm1792, %v2854, %v2855
      %v2857 = vrot.slane %v2749, 5
      %v2858 = vrot.slane %v2857, 4
      %v2859 = vrot.slane %v2750, 5
      %v2860 = vsel %vm1792, %v2858, %v2859
      %v2861 = vrot.slane %v2859, 4
      %v2862 = vrot.slane %v2751, 5
      %v2863 = vsel %vm1792, %v2861, %v2862
      %v2864 = vrot.slane %v2752, 5
      %v2865 = vrot.slane %v2864, 4
      %v2866 = vrot.slane %v2753, 5
      %v2867 = vsel %vm1792, %v2865, %v2866
      %v2868 = vrot.slane %v2866, 4
      %v2869 = vrot.slane %v2754, 5
      %v2870 = vsel %vm1792, %v2868, %v2869
      %v2871 = vrot.slane %v2755, 5
      %v2872 = vrot.slane %v2871, 4
      %v2873 = vrot.slane %v2756, 5
      %v2874 = vsel %vm1792, %v2872, %v2873
      %v2875 = vrot.slane %v2873, 4
      %v2876 = vrot.slane %v2757, 5
      %v2877 = vsel %vm1792, %v2875, %v2876
      %v2878 = vrot.slane %v2758, 5
      %v2879 = vrot.slane %v2878, 4
      %v2880 = vrot.slane %v2759, 5
      %v2881 = vsel %vm1792, %v2879, %v2880
      %v2882 = vrot.slane %v2880, 4
      %v2883 = vrot.slane %v2760, 5
      %v2884 = vsel %vm1792, %v2882, %v2883
      %v2885 = vrot.slane %v2761, 5
      %v2886 = vrot.slane %v2885, 4
      %v2887 = vrot.slane %v2762, 5
      %v2888 = vsel %vm1792, %v2886, %v2887
      %v2889 = vrot.slane %v2887, 4
      %v2890 = vrot.slane %v2763, 5
      %v2891 = vsel %vm1792, %v2889, %v2890
      %v2892 = vrot.slane %v2764, 5
      %v2893 = vrot.slane %v2892, 4
      %v2894 = vrot.slane %v2765, 5
      %v2895 = vsel %vm1792, %v2893, %v2894
      %v2896 = vrot.slane %v2894, 4
      %v2897 = vrot.slane %v2766, 5
      %v2898 = vsel %vm1792, %v2896, %v2897
      %v2899 = vrot.slane %v2767, 5
      %v2900 = vrot.slane %v2899, 4
      %v2901 = vrot.slane %v2768, 5
      %v2902 = vsel %vm1792, %v2900, %v2901
      %v2903 = vrot.slane %v2901, 4
      %v2904 = vrot.slane %v2769, 5
      %v2905 = vsel %vm1792, %v2903, %v2904
      %v2906 = vrot.slane %v2770, 5
      %v2907 = vrot.slane %v2906, 4
      %v2908 = vrot.slane %v2771, 5
      %v2909 = vsel %vm1792, %v2907, %v2908
      %v2910 = vrot.slane %v2908, 4
      %v2911 = vrot.slane %v2772, 5
      %v2912 = vsel %vm1792, %v2910, %v2911
      %v2913 = vrot.slane %v2773, 5
      %v2914 = vrot.slane %v2913, 4
      %v2915 = vrot.slane %v2774, 5
      %v2916 = vsel %vm1792, %v2914, %v2915
      %v2917 = vrot.slane %v2915, 4
      %v2918 = vrot.slane %v2775, 5
      %v2919 = vsel %vm1792, %v2917, %v2918
      %v2920 = vrot.slane %v2776, 5
      %v2921 = vrot.slane %v2920, 4
      %v2922 = vrot.slane %v2777, 5
      %v2923 = vsel %vm1792, %v2921, %v2922
      %v2924 = vrot.slane %v2922, 4
      %v2925 = vrot.slane %v2778, 5
      %v2926 = vsel %vm1792, %v2924, %v2925
      %v2927 = vrot.slane %v2779, 5
      %v2928 = vrot.slane %v2927, 4
      %v2929 = vrot.slane %v2780, 5
      %v2930 = vsel %vm1792, %v2928, %v2929
      %v2931 = vrot.slane %v2929, 4
      %v2932 = vrot.slane %v2781, 5
      %v2933 = vsel %vm1792, %v2931, %v2932
      %v2934 = vrot.slane %v2782, 5
      %v2935 = vrot.slane %v2934, 4
      %v2936 = vrot.slane %v2783, 5
      %v2937 = vsel %vm1792, %v2935, %v2936
      %v2938 = vrot.slane %v2936, 4
      %v2939 = vrot.slane %v2784, 5
      %v2940 = vsel %vm1792, %v2938, %v2939
      %v2941 = vrot.slane %v2785, 5
      %v2942 = vrot.slane %v2941, 4
      %v2943 = vrot.slane %v2786, 5
      %v2944 = vsel %vm1792, %v2942, %v2943
      %v2945 = vrot.slane %v2943, 4
      %v2946 = vrot.slane %v2787, 5
      %v2947 = vsel %vm1792, %v2945, %v2946
      %v2948 = vunpack.c.l.b16 %v2839
      %v2949 = vunpack.c.l.b16 %v2842
      %v2950 = vunpack.c.l.b16 %v2846
      %v2951 = vunpack.c.l.b16 %v2849
      %v2952 = vunpack.c.l.b16 %v2853
      %v2953 = vunpack.c.l.b16 %v2856
      %v2954 = vunpack.c.l.b16 %v2860
      %v2955 = vunpack.c.l.b16 %v2863
      %v2956 = vunpack.c.l.b16 %v2867
      %v2957 = vunpack.c.l.b16 %v2870
      %v2958 = vunpack.c.l.b16 %v2874
      %v2959 = vunpack.c.l.b16 %v2877
      %v2960 = vunpack.c.l.b16 %v2881
      %v2961 = vunpack.c.l.b16 %v2884
      %v2962 = vunpack.c.l.b16 %v2888
      %v2963 = vunpack.c.l.b16 %v2891
      %v2964 = vunpack.c.l.b16 %v2895
      %v2965 = vunpack.c.l.b16 %v2898
      %v2966 = vunpack.c.l.b16 %v2902
      %v2967 = vunpack.c.l.b16 %v2905
      %v2968 = vunpack.c.l.b16 %v2909
      %v2969 = vunpack.c.l.b16 %v2912
      %v2970 = vunpack.c.l.b16 %v2916
      %v2971 = vunpack.c.l.b16 %v2919
      %v2972 = vunpack.c.l.b16 %v2923
      %v2973 = vunpack.c.l.b16 %v2926
      %v2974 = vunpack.c.l.b16 %v2930
      %v2975 = vunpack.c.l.b16 %v2933
      %v2976 = vunpack.c.l.b16 %v2937
      %v2977 = vunpack.c.l.b16 %v2940
      %v2978 = vunpack.c.l.b16 %v2944
      %v2979 = vunpack.c.l.b16 %v2947
      %v2980 = vpack.c.b16 %v2949, %v2948
      %v2981 = vpack.c.b16 %v2951, %v2950
      %v2982 = vpack.c.b16 %v2953, %v2952
      %v2983 = vpack.c.b16 %v2955, %v2954
      %v2984 = vpack.c.b16 %v2957, %v2956
      %v2985 = vpack.c.b16 %v2959, %v2958
      %v2986 = vpack.c.b16 %v2961, %v2960
      %v2987 = vpack.c.b16 %v2963, %v2962
      %v2988 = vpack.c.b16 %v2965, %v2964
      %v2989 = vpack.c.b16 %v2967, %v2966
      %v2990 = vpack.c.b16 %v2969, %v2968
      %v2991 = vpack.c.b16 %v2971, %v2970
      %v2992 = vpack.c.b16 %v2973, %v2972
      %v2993 = vpack.c.b16 %v2975, %v2974
      %v2994 = vpack.c.b16 %v2977, %v2976
      %v2995 = vpack.c.b16 %v2979, %v2978
      %2996 = vrot.lane.b32.xlu0 %v2980, 40
      %v2997 = vpop.permute.xlu0 %2996
      %2998 = vrot.lane.b32.xlu0 %v2981, 40
      %v2999 = vpop.permute.xlu0 %2998
      %3000 = vrot.lane.b32.xlu0 %v2982, 40
      %v3001 = vpop.permute.xlu0 %3000
      %3002 = vrot.lane.b32.xlu0 %v2983, 40
      %v3003 = vpop.permute.xlu0 %3002
      %3004 = vrot.lane.b32.xlu0 %v2984, 40
      %v3005 = vpop.permute.xlu0 %3004
      %3006 = vrot.lane.b32.xlu0 %v2985, 40
      %v3007 = vpop.permute.xlu0 %3006
      %3008 = vrot.lane.b32.xlu0 %v2986, 40
      %v3009 = vpop.permute.xlu0 %3008
      %3010 = vrot.lane.b32.xlu0 %v2987, 40
      %v3011 = vpop.permute.xlu0 %3010
      %3012 = vrot.lane.b32.xlu0 %v2988, 40
      %v3013 = vpop.permute.xlu0 %3012
      %3014 = vrot.lane.b32.xlu0 %v2989, 40
      %v3015 = vpop.permute.xlu0 %3014
      %3016 = vrot.lane.b32.xlu0 %v2990, 40
      %v3017 = vpop.permute.xlu0 %3016
      %3018 = vrot.lane.b32.xlu0 %v2991, 40
      %v3019 = vpop.permute.xlu0 %3018
      %3020 = vrot.lane.b32.xlu0 %v2992, 40
      %v3021 = vpop.permute.xlu0 %3020
      %3022 = vrot.lane.b32.xlu0 %v2993, 40
      %v3023 = vpop.permute.xlu0 %3022
      %3024 = vrot.lane.b32.xlu0 %v2994, 40
      %v3025 = vpop.permute.xlu0 %3024
      %3026 = vrot.lane.b32.xlu0 %v2995, 40
      %v3027 = vpop.permute.xlu0 %3026
      %vm3044 = vcmask 392512
      %3045 = vst.msk [vmem:[#allocation3] sm:$0xff] %vm3044, %v2997
      %3046 = vst.msk [vmem:[#allocation3 + $0x8] sm:$0xff] %vm3044, %v2999
      %3047 = vst.msk [vmem:[#allocation3 + $0x10] sm:$0xff] %vm3044, %v3001
      %3048 = vst.msk [vmem:[#allocation3 + $0x18] sm:$0xff] %vm3044, %v3003
      %3049 = vst.msk [vmem:[#allocation3 + $0x20] sm:$0xff] %vm3044, %v3005
      %3050 = vst.msk [vmem:[#allocation3 + $0x28] sm:$0xff] %vm3044, %v3007
      %3051 = vst.msk [vmem:[#allocation3 + $0x30] sm:$0xff] %vm3044, %v3009
      %3052 = vst.msk [vmem:[#allocation3 + $0x38] sm:$0xff] %vm3044, %v3011
      %3053 = vst.msk [vmem:[#allocation3 + $0x40] sm:$0xff] %vm3044, %v3013
      %3054 = vst.msk [vmem:[#allocation3 + $0x48] sm:$0xff] %vm3044, %v3015
      %3055 = vst.msk [vmem:[#allocation3 + $0x50] sm:$0xff] %vm3044, %v3017
      %3056 = vst.msk [vmem:[#allocation3 + $0x58] sm:$0xff] %vm3044, %v3019
      %3057 = vst.msk [vmem:[#allocation3 + $0x60] sm:$0xff] %vm3044, %v3021
      %3058 = vst.msk [vmem:[#allocation3 + $0x68] sm:$0xff] %vm3044, %v3023
      %3059 = vst.msk [vmem:[#allocation3 + $0x70] sm:$0xff] %vm3044, %v3025
      %3060 = vst.msk [vmem:[#allocation3 + $0x78] sm:$0xff] %vm3044, %v3027
      %s3061 = scalar_lea.vmem [#allocation2], 24
      %v3062 = vld [vmem:[%s3061] sm:$0xf]
      %v3063 = vld [vmem:[%s3061 + $0x4] sm:$0xf]
      %v3064 = vld [vmem:[%s3061 + $0xc] sm:$0xf]
      %v3065 = vld [vmem:[%s3061 + $0x10] sm:$0xf]
      %v3066 = vld [vmem:[%s3061 + $0x18] sm:$0xf]
      %v3067 = vld [vmem:[%s3061 + $0x1c] sm:$0xf]
      %v3068 = vld [vmem:[%s3061 + $0x24] sm:$0xf]
      %v3069 = vld [vmem:[%s3061 + $0x28] sm:$0xf]
      %v3070 = vld [vmem:[%s3061 + $0x30] sm:$0xf]
      %v3071 = vld [vmem:[%s3061 + $0x34] sm:$0xf]
      %v3072 = vld [vmem:[%s3061 + $0x3c] sm:$0xf]
      %v3073 = vld [vmem:[%s3061 + $0x40] sm:$0xf]
      %v3074 = vld [vmem:[%s3061 + $0x48] sm:$0xf]
      %v3075 = vld [vmem:[%s3061 + $0x4c] sm:$0xf]
      %v3076 = vld [vmem:[%s3061 + $0x54] sm:$0xf]
      %v3077 = vld [vmem:[%s3061 + $0x58] sm:$0xf]
      %v3078 = vld [vmem:[%s3061 + $0x60] sm:$0xf]
      %v3079 = vld [vmem:[%s3061 + $0x64] sm:$0xf]
      %v3080 = vld [vmem:[%s3061 + $0x6c] sm:$0xf]
      %v3081 = vld [vmem:[%s3061 + $0x70] sm:$0xf]
      %v3082 = vld [vmem:[%s3061 + $0x78] sm:$0xf]
      %v3083 = vld [vmem:[%s3061 + $0x7c] sm:$0xf]
      %v3084 = vld [vmem:[%s3061 + $0x84] sm:$0xf]
      %v3085 = vld [vmem:[%s3061 + $0x88] sm:$0xf]
      %v3086 = vld [vmem:[%s3061 + $0x90] sm:$0xf]
      %v3087 = vld [vmem:[%s3061 + $0x94] sm:$0xf]
      %v3088 = vld [vmem:[%s3061 + $0x9c] sm:$0xf]
      %v3089 = vld [vmem:[%s3061 + $0xa0] sm:$0xf]
      %v3090 = vld [vmem:[%s3061 + $0xa8] sm:$0xf]
      %v3091 = vld [vmem:[%s3061 + $0xac] sm:$0xf]
      %v3092 = vld [vmem:[%s3061 + $0xb4] sm:$0xf]
      %v3093 = vld [vmem:[%s3061 + $0xb8] sm:$0xf]
      %v3126 = vunpack.c.l.b16 %v3062
      %v3127 = vunpack.c.l.b16 %v3063
      %v3128 = vunpack.c.l.b16 %v3064
      %v3129 = vunpack.c.l.b16 %v3065
      %v3130 = vunpack.c.l.b16 %v3066
      %v3131 = vunpack.c.l.b16 %v3067
      %v3132 = vunpack.c.l.b16 %v3068
      %v3133 = vunpack.c.l.b16 %v3069
      %v3134 = vunpack.c.l.b16 %v3070
      %v3135 = vunpack.c.l.b16 %v3071
      %v3136 = vunpack.c.l.b16 %v3072
      %v3137 = vunpack.c.l.b16 %v3073
      %v3138 = vunpack.c.l.b16 %v3074
      %v3139 = vunpack.c.l.b16 %v3075
      %v3140 = vunpack.c.l.b16 %v3076
      %v3141 = vunpack.c.l.b16 %v3077
      %v3142 = vunpack.c.l.b16 %v3078
      %v3143 = vunpack.c.l.b16 %v3079
      %v3144 = vunpack.c.l.b16 %v3080
      %v3145 = vunpack.c.l.b16 %v3081
      %v3146 = vunpack.c.l.b16 %v3082
      %v3147 = vunpack.c.l.b16 %v3083
      %v3148 = vunpack.c.l.b16 %v3084
      %v3149 = vunpack.c.l.b16 %v3085
      %v3150 = vunpack.c.l.b16 %v3086
      %v3151 = vunpack.c.l.b16 %v3087
      %v3152 = vunpack.c.l.b16 %v3088
      %v3153 = vunpack.c.l.b16 %v3089
      %v3154 = vunpack.c.l.b16 %v3090
      %v3155 = vunpack.c.l.b16 %v3091
      %v3156 = vunpack.c.l.b16 %v3092
      %v3157 = vunpack.c.l.b16 %v3093
      %v3158 = vpack.c.b16 %v3127, %v3126
      %v3159 = vpack.c.b16 %v3129, %v3128
      %v3160 = vpack.c.b16 %v3131, %v3130
      %v3161 = vpack.c.b16 %v3133, %v3132
      %v3162 = vpack.c.b16 %v3135, %v3134
      %v3163 = vpack.c.b16 %v3137, %v3136
      %v3164 = vpack.c.b16 %v3139, %v3138
      %v3165 = vpack.c.b16 %v3141, %v3140
      %v3166 = vpack.c.b16 %v3143, %v3142
      %v3167 = vpack.c.b16 %v3145, %v3144
      %v3168 = vpack.c.b16 %v3147, %v3146
      %v3169 = vpack.c.b16 %v3149, %v3148
      %v3170 = vpack.c.b16 %v3151, %v3150
      %v3171 = vpack.c.b16 %v3153, %v3152
      %v3172 = vpack.c.b16 %v3155, %v3154
      %v3173 = vpack.c.b16 %v3157, %v3156
      %3174 = vrot.lane.b32.xlu0 %v3158, 48
      %v3175 = vpop.permute.xlu0 %3174
      %3176 = vrot.lane.b32.xlu0 %v3159, 48
      %v3177 = vpop.permute.xlu0 %3176
      %3178 = vrot.lane.b32.xlu0 %v3160, 48
      %v3179 = vpop.permute.xlu0 %3178
      %3180 = vrot.lane.b32.xlu0 %v3161, 48
      %v3181 = vpop.permute.xlu0 %3180
      %3182 = vrot.lane.b32.xlu0 %v3162, 48
      %v3183 = vpop.permute.xlu0 %3182
      %3184 = vrot.lane.b32.xlu0 %v3163, 48
      %v3185 = vpop.permute.xlu0 %3184
      %3186 = vrot.lane.b32.xlu0 %v3164, 48
      %v3187 = vpop.permute.xlu0 %3186
      %3188 = vrot.lane.b32.xlu0 %v3165, 48
      %v3189 = vpop.permute.xlu0 %3188
      %3190 = vrot.lane.b32.xlu0 %v3166, 48
      %v3191 = vpop.permute.xlu0 %3190
      %3192 = vrot.lane.b32.xlu0 %v3167, 48
      %v3193 = vpop.permute.xlu0 %3192
      %3194 = vrot.lane.b32.xlu0 %v3168, 48
      %v3195 = vpop.permute.xlu0 %3194
      %3196 = vrot.lane.b32.xlu0 %v3169, 48
      %v3197 = vpop.permute.xlu0 %3196
      %3198 = vrot.lane.b32.xlu0 %v3170, 48
      %v3199 = vpop.permute.xlu0 %3198
      %3200 = vrot.lane.b32.xlu0 %v3171, 48
      %v3201 = vpop.permute.xlu0 %3200
      %3202 = vrot.lane.b32.xlu0 %v3172, 48
      %v3203 = vpop.permute.xlu0 %3202
      %3204 = vrot.lane.b32.xlu0 %v3173, 48
      %v3205 = vpop.permute.xlu0 %3204
      %vm3222 = vcmask 458112
      %3223 = vst.msk [vmem:[#allocation3] sm:$0xff] %vm3222, %v3175
      %3224 = vst.msk [vmem:[#allocation3 + $0x8] sm:$0xff] %vm3222, %v3177
      %3225 = vst.msk [vmem:[#allocation3 + $0x10] sm:$0xff] %vm3222, %v3179
      %3226 = vst.msk [vmem:[#allocation3 + $0x18] sm:$0xff] %vm3222, %v3181
      %3227 = vst.msk [vmem:[#allocation3 + $0x20] sm:$0xff] %vm3222, %v3183
      %3228 = vst.msk [vmem:[#allocation3 + $0x28] sm:$0xff] %vm3222, %v3185
      %3229 = vst.msk [vmem:[#allocation3 + $0x30] sm:$0xff] %vm3222, %v3187
      %3230 = vst.msk [vmem:[#allocation3 + $0x38] sm:$0xff] %vm3222, %v3189
      %3231 = vst.msk [vmem:[#allocation3 + $0x40] sm:$0xff] %vm3222, %v3191
      %3232 = vst.msk [vmem:[#allocation3 + $0x48] sm:$0xff] %vm3222, %v3193
      %3233 = vst.msk [vmem:[#allocation3 + $0x50] sm:$0xff] %vm3222, %v3195
      %3234 = vst.msk [vmem:[#allocation3 + $0x58] sm:$0xff] %vm3222, %v3197
      %3235 = vst.msk [vmem:[#allocation3 + $0x60] sm:$0xff] %vm3222, %v3199
      %3236 = vst.msk [vmem:[#allocation3 + $0x68] sm:$0xff] %vm3222, %v3201
      %3237 = vst.msk [vmem:[#allocation3 + $0x70] sm:$0xff] %vm3222, %v3203
      %3238 = vst.msk [vmem:[#allocation3 + $0x78] sm:$0xff] %vm3222, %v3205
      %v3239 = vld [vmem:[%s3061] sm:$0xf]
      %v3240 = vld [vmem:[%s3061 + $0x4] sm:$0xf]
      %v3241 = vld [vmem:[%s3061 + $0x8] sm:$0x1]
      %v3242 = vld [vmem:[%s3061 + $0xc] sm:$0xf]
      %v3243 = vld [vmem:[%s3061 + $0x10] sm:$0xf]
      %v3244 = vld [vmem:[%s3061 + $0x14] sm:$0x1]
      %v3245 = vld [vmem:[%s3061 + $0x18] sm:$0xf]
      %v3246 = vld [vmem:[%s3061 + $0x1c] sm:$0xf]
      %v3247 = vld [vmem:[%s3061 + $0x20] sm:$0x1]
      %v3248 = vld [vmem:[%s3061 + $0x24] sm:$0xf]
      %v3249 = vld [vmem:[%s3061 + $0x28] sm:$0xf]
      %v3250 = vld [vmem:[%s3061 + $0x2c] sm:$0x1]
      %v3251 = vld [vmem:[%s3061 + $0x30] sm:$0xf]
      %v3252 = vld [vmem:[%s3061 + $0x34] sm:$0xf]
      %v3253 = vld [vmem:[%s3061 + $0x38] sm:$0x1]
      %v3254 = vld [vmem:[%s3061 + $0x3c] sm:$0xf]
      %v3255 = vld [vmem:[%s3061 + $0x40] sm:$0xf]
      %v3256 = vld [vmem:[%s3061 + $0x44] sm:$0x1]
      %v3257 = vld [vmem:[%s3061 + $0x48] sm:$0xf]
      %v3258 = vld [vmem:[%s3061 + $0x4c] sm:$0xf]
      %v3259 = vld [vmem:[%s3061 + $0x50] sm:$0x1]
      %v3260 = vld [vmem:[%s3061 + $0x54] sm:$0xf]
      %v3261 = vld [vmem:[%s3061 + $0x58] sm:$0xf]
      %v3262 = vld [vmem:[%s3061 + $0x5c] sm:$0x1]
      %v3263 = vld [vmem:[%s3061 + $0x60] sm:$0xf]
      %v3264 = vld [vmem:[%s3061 + $0x64] sm:$0xf]
      %v3265 = vld [vmem:[%s3061 + $0x68] sm:$0x1]
      %v3266 = vld [vmem:[%s3061 + $0x6c] sm:$0xf]
      %v3267 = vld [vmem:[%s3061 + $0x70] sm:$0xf]
      %v3268 = vld [vmem:[%s3061 + $0x74] sm:$0x1]
      %v3269 = vld [vmem:[%s3061 + $0x78] sm:$0xf]
      %v3270 = vld [vmem:[%s3061 + $0x7c] sm:$0xf]
      %v3271 = vld [vmem:[%s3061 + $0x80] sm:$0x1]
      %v3272 = vld [vmem:[%s3061 + $0x84] sm:$0xf]
      %v3273 = vld [vmem:[%s3061 + $0x88] sm:$0xf]
      %v3274 = vld [vmem:[%s3061 + $0x8c] sm:$0x1]
      %v3275 = vld [vmem:[%s3061 + $0x90] sm:$0xf]
      %v3276 = vld [vmem:[%s3061 + $0x94] sm:$0xf]
      %v3277 = vld [vmem:[%s3061 + $0x98] sm:$0x1]
      %v3278 = vld [vmem:[%s3061 + $0x9c] sm:$0xf]
      %v3279 = vld [vmem:[%s3061 + $0xa0] sm:$0xf]
      %v3280 = vld [vmem:[%s3061 + $0xa4] sm:$0x1]
      %v3281 = vld [vmem:[%s3061 + $0xa8] sm:$0xf]
      %v3282 = vld [vmem:[%s3061 + $0xac] sm:$0xf]
      %v3283 = vld [vmem:[%s3061 + $0xb0] sm:$0x1]
      %v3284 = vld [vmem:[%s3061 + $0xb4] sm:$0xf]
      %v3285 = vld [vmem:[%s3061 + $0xb8] sm:$0xf]
      %v3286 = vld [vmem:[%s3061 + $0xbc] sm:$0x1]
      %v3288 = vshrl.u32 %v3239, 16
      %v3290 = vrot.slane %v3288, 4
      %v3291 = vshll.u32 %v3239, 16
      %v3293 = vrot.slane %v3291, 5
      %v3294 = vor.u32 %v3290, %v3293
      %v3295 = vrot.slane %v3294, 4
      %v3297 = vshll.u32 %v3240, 16
      %v3299 = vrot.slane %v3297, 5
      %v3300 = vsel %vm1196, %v3295, %v3299
      %v3301 = vshrl.u32 %v3240, 16
      %v3303 = vrot.slane %v3301, 4
      %v3304 = vor.u32 %v3303, %v3299
      %v3305 = vrot.slane %v3304, 4
      %v3307 = vshll.u32 %v3241, 16
      %v3309 = vrot.slane %v3307, 5
      %v3310 = vsel %vm1196, %v3305, %v3309
      %v3312 = vshrl.u32 %v3242, 16
      %v3314 = vrot.slane %v3312, 4
      %v3315 = vshll.u32 %v3242, 16
      %v3317 = vrot.slane %v3315, 5
      %v3318 = vor.u32 %v3314, %v3317
      %v3319 = vrot.slane %v3318, 4
      %v3321 = vshll.u32 %v3243, 16
      %v3323 = vrot.slane %v3321, 5
      %v3324 = vsel %vm1196, %v3319, %v3323
      %v3325 = vshrl.u32 %v3243, 16
      %v3327 = vrot.slane %v3325, 4
      %v3328 = vor.u32 %v3327, %v3323
      %v3329 = vrot.slane %v3328, 4
      %v3331 = vshll.u32 %v3244, 16
      %v3333 = vrot.slane %v3331, 5
      %v3334 = vsel %vm1196, %v3329, %v3333
      %v3336 = vshrl.u32 %v3245, 16
      %v3338 = vrot.slane %v3336, 4
      %v3339 = vshll.u32 %v3245, 16
      %v3341 = vrot.slane %v3339, 5
      %v3342 = vor.u32 %v3338, %v3341
      %v3343 = vrot.slane %v3342, 4
      %v3345 = vshll.u32 %v3246, 16
      %v3347 = vrot.slane %v3345, 5
      %v3348 = vsel %vm1196, %v3343, %v3347
      %v3349 = vshrl.u32 %v3246, 16
      %v3351 = vrot.slane %v3349, 4
      %v3352 = vor.u32 %v3351, %v3347
      %v3353 = vrot.slane %v3352, 4
      %v3355 = vshll.u32 %v3247, 16
      %v3357 = vrot.slane %v3355, 5
      %v3358 = vsel %vm1196, %v3353, %v3357
      %v3360 = vshrl.u32 %v3248, 16
      %v3362 = vrot.slane %v3360, 4
      %v3363 = vshll.u32 %v3248, 16
      %v3365 = vrot.slane %v3363, 5
      %v3366 = vor.u32 %v3362, %v3365
      %v3367 = vrot.slane %v3366, 4
      %v3369 = vshll.u32 %v3249, 16
      %v3371 = vrot.slane %v3369, 5
      %v3372 = vsel %vm1196, %v3367, %v3371
      %v3373 = vshrl.u32 %v3249, 16
      %v3375 = vrot.slane %v3373, 4
      %v3376 = vor.u32 %v3375, %v3371
      %v3377 = vrot.slane %v3376, 4
      %v3379 = vshll.u32 %v3250, 16
      %v3381 = vrot.slane %v3379, 5
      %v3382 = vsel %vm1196, %v3377, %v3381
      %v3384 = vshrl.u32 %v3251, 16
      %v3386 = vrot.slane %v3384, 4
      %v3387 = vshll.u32 %v3251, 16
      %v3389 = vrot.slane %v3387, 5
      %v3390 = vor.u32 %v3386, %v3389
      %v3391 = vrot.slane %v3390, 4
      %v3393 = vshll.u32 %v3252, 16
      %v3395 = vrot.slane %v3393, 5
      %v3396 = vsel %vm1196, %v3391, %v3395
      %v3397 = vshrl.u32 %v3252, 16
      %v3399 = vrot.slane %v3397, 4
      %v3400 = vor.u32 %v3399, %v3395
      %v3401 = vrot.slane %v3400, 4
      %v3403 = vshll.u32 %v3253, 16
      %v3405 = vrot.slane %v3403, 5
      %v3406 = vsel %vm1196, %v3401, %v3405
      %v3408 = vshrl.u32 %v3254, 16
      %v3410 = vrot.slane %v3408, 4
      %v3411 = vshll.u32 %v3254, 16
      %v3413 = vrot.slane %v3411, 5
      %v3414 = vor.u32 %v3410, %v3413
      %v3415 = vrot.slane %v3414, 4
      %v3417 = vshll.u32 %v3255, 16
      %v3419 = vrot.slane %v3417, 5
      %v3420 = vsel %vm1196, %v3415, %v3419
      %v3421 = vshrl.u32 %v3255, 16
      %v3423 = vrot.slane %v3421, 4
      %v3424 = vor.u32 %v3423, %v3419
      %v3425 = vrot.slane %v3424, 4
      %v3427 = vshll.u32 %v3256, 16
      %v3429 = vrot.slane %v3427, 5
      %v3430 = vsel %vm1196, %v3425, %v3429
      %v3432 = vshrl.u32 %v3257, 16
      %v3434 = vrot.slane %v3432, 4
      %v3435 = vshll.u32 %v3257, 16
      %v3437 = vrot.slane %v3435, 5
      %v3438 = vor.u32 %v3434, %v3437
      %v3439 = vrot.slane %v3438, 4
      %v3441 = vshll.u32 %v3258, 16
      %v3443 = vrot.slane %v3441, 5
      %v3444 = vsel %vm1196, %v3439, %v3443
      %v3445 = vshrl.u32 %v3258, 16
      %v3447 = vrot.slane %v3445, 4
      %v3448 = vor.u32 %v3447, %v3443
      %v3449 = vrot.slane %v3448, 4
      %v3451 = vshll.u32 %v3259, 16
      %v3453 = vrot.slane %v3451, 5
      %v3454 = vsel %vm1196, %v3449, %v3453
      %v3456 = vshrl.u32 %v3260, 16
      %v3458 = vrot.slane %v3456, 4
      %v3459 = vshll.u32 %v3260, 16
      %v3461 = vrot.slane %v3459, 5
      %v3462 = vor.u32 %v3458, %v3461
      %v3463 = vrot.slane %v3462, 4
      %v3465 = vshll.u32 %v3261, 16
      %v3467 = vrot.slane %v3465, 5
      %v3468 = vsel %vm1196, %v3463, %v3467
      %v3469 = vshrl.u32 %v3261, 16
      %v3471 = vrot.slane %v3469, 4
      %v3472 = vor.u32 %v3471, %v3467
      %v3473 = vrot.slane %v3472, 4
      %v3475 = vshll.u32 %v3262, 16
      %v3477 = vrot.slane %v3475, 5
      %v3478 = vsel %vm1196, %v3473, %v3477
      %v3480 = vshrl.u32 %v3263, 16
      %v3482 = vrot.slane %v3480, 4
      %v3483 = vshll.u32 %v3263, 16
      %v3485 = vrot.slane %v3483, 5
      %v3486 = vor.u32 %v3482, %v3485
      %v3487 = vrot.slane %v3486, 4
      %v3489 = vshll.u32 %v3264, 16
      %v3491 = vrot.slane %v3489, 5
      %v3492 = vsel %vm1196, %v3487, %v3491
      %v3493 = vshrl.u32 %v3264, 16
      %v3495 = vrot.slane %v3493, 4
      %v3496 = vor.u32 %v3495, %v3491
      %v3497 = vrot.slane %v3496, 4
      %v3499 = vshll.u32 %v3265, 16
      %v3501 = vrot.slane %v3499, 5
      %v3502 = vsel %vm1196, %v3497, %v3501
      %v3504 = vshrl.u32 %v3266, 16
      %v3506 = vrot.slane %v3504, 4
      %v3507 = vshll.u32 %v3266, 16
      %v3509 = vrot.slane %v3507, 5
      %v3510 = vor.u32 %v3506, %v3509
      %v3511 = vrot.slane %v3510, 4
      %v3513 = vshll.u32 %v3267, 16
      %v3515 = vrot.slane %v3513, 5
      %v3516 = vsel %vm1196, %v3511, %v3515
      %v3517 = vshrl.u32 %v3267, 16
      %v3519 = vrot.slane %v3517, 4
      %v3520 = vor.u32 %v3519, %v3515
      %v3521 = vrot.slane %v3520, 4
      %v3523 = vshll.u32 %v3268, 16
      %v3525 = vrot.slane %v3523, 5
      %v3526 = vsel %vm1196, %v3521, %v3525
      %v3528 = vshrl.u32 %v3269, 16
      %v3530 = vrot.slane %v3528, 4
      %v3531 = vshll.u32 %v3269, 16
      %v3533 = vrot.slane %v3531, 5
      %v3534 = vor.u32 %v3530, %v3533
      %v3535 = vrot.slane %v3534, 4
      %v3537 = vshll.u32 %v3270, 16
      %v3539 = vrot.slane %v3537, 5
      %v3540 = vsel %vm1196, %v3535, %v3539
      %v3541 = vshrl.u32 %v3270, 16
      %v3543 = vrot.slane %v3541, 4
      %v3544 = vor.u32 %v3543, %v3539
      %v3545 = vrot.slane %v3544, 4
      %v3547 = vshll.u32 %v3271, 16
      %v3549 = vrot.slane %v3547, 5
      %v3550 = vsel %vm1196, %v3545, %v3549
      %v3552 = vshrl.u32 %v3272, 16
      %v3554 = vrot.slane %v3552, 4
      %v3555 = vshll.u32 %v3272, 16
      %v3557 = vrot.slane %v3555, 5
      %v3558 = vor.u32 %v3554, %v3557
      %v3559 = vrot.slane %v3558, 4
      %v3561 = vshll.u32 %v3273, 16
      %v3563 = vrot.slane %v3561, 5
      %v3564 = vsel %vm1196, %v3559, %v3563
      %v3565 = vshrl.u32 %v3273, 16
      %v3567 = vrot.slane %v3565, 4
      %v3568 = vor.u32 %v3567, %v3563
      %v3569 = vrot.slane %v3568, 4
      %v3571 = vshll.u32 %v3274, 16
      %v3573 = vrot.slane %v3571, 5
      %v3574 = vsel %vm1196, %v3569, %v3573
      %v3576 = vshrl.u32 %v3275, 16
      %v3578 = vrot.slane %v3576, 4
      %v3579 = vshll.u32 %v3275, 16
      %v3581 = vrot.slane %v3579, 5
      %v3582 = vor.u32 %v3578, %v3581
      %v3583 = vrot.slane %v3582, 4
      %v3585 = vshll.u32 %v3276, 16
      %v3587 = vrot.slane %v3585, 5
      %v3588 = vsel %vm1196, %v3583, %v3587
      %v3589 = vshrl.u32 %v3276, 16
      %v3591 = vrot.slane %v3589, 4
      %v3592 = vor.u32 %v3591, %v3587
      %v3593 = vrot.slane %v3592, 4
      %v3595 = vshll.u32 %v3277, 16
      %v3597 = vrot.slane %v3595, 5
      %v3598 = vsel %vm1196, %v3593, %v3597
      %v3600 = vshrl.u32 %v3278, 16
      %v3602 = vrot.slane %v3600, 4
      %v3603 = vshll.u32 %v3278, 16
      %v3605 = vrot.slane %v3603, 5
      %v3606 = vor.u32 %v3602, %v3605
      %v3607 = vrot.slane %v3606, 4
      %v3609 = vshll.u32 %v3279, 16
      %v3611 = vrot.slane %v3609, 5
      %v3612 = vsel %vm1196, %v3607, %v3611
      %v3613 = vshrl.u32 %v3279, 16
      %v3615 = vrot.slane %v3613, 4
      %v3616 = vor.u32 %v3615, %v3611
      %v3617 = vrot.slane %v3616, 4
      %v3619 = vshll.u32 %v3280, 16
      %v3621 = vrot.slane %v3619, 5
      %v3622 = vsel %vm1196, %v3617, %v3621
      %v3624 = vshrl.u32 %v3281, 16
      %v3626 = vrot.slane %v3624, 4
      %v3627 = vshll.u32 %v3281, 16
      %v3629 = vrot.slane %v3627, 5
      %v3630 = vor.u32 %v3626, %v3629
      %v3631 = vrot.slane %v3630, 4
      %v3633 = vshll.u32 %v3282, 16
      %v3635 = vrot.slane %v3633, 5
      %v3636 = vsel %vm1196, %v3631, %v3635
      %v3637 = vshrl.u32 %v3282, 16
      %v3639 = vrot.slane %v3637, 4
      %v3640 = vor.u32 %v3639, %v3635
      %v3641 = vrot.slane %v3640, 4
      %v3643 = vshll.u32 %v3283, 16
      %v3645 = vrot.slane %v3643, 5
      %v3646 = vsel %vm1196, %v3641, %v3645
      %v3648 = vshrl.u32 %v3284, 16
      %v3650 = vrot.slane %v3648, 4
      %v3651 = vshll.u32 %v3284, 16
      %v3653 = vrot.slane %v3651, 5
      %v3654 = vor.u32 %v3650, %v3653
      %v3655 = vrot.slane %v3654, 4
      %v3657 = vshll.u32 %v3285, 16
      %v3659 = vrot.slane %v3657, 5
      %v3660 = vsel %vm1196, %v3655, %v3659
      %v3661 = vshrl.u32 %v3285, 16
      %v3663 = vrot.slane %v3661, 4
      %v3664 = vor.u32 %v3663, %v3659
      %v3665 = vrot.slane %v3664, 4
      %v3667 = vshll.u32 %v3286, 16
      %v3669 = vrot.slane %v3667, 5
      %v3670 = vsel %vm1196, %v3665, %v3669
      %v3671 = vunpack.c.l.b16 %v3300
      %v3672 = vunpack.c.l.b16 %v3310
      %v3673 = vunpack.c.l.b16 %v3324
      %v3674 = vunpack.c.l.b16 %v3334
      %v3675 = vunpack.c.l.b16 %v3348
      %v3676 = vunpack.c.l.b16 %v3358
      %v3677 = vunpack.c.l.b16 %v3372
      %v3678 = vunpack.c.l.b16 %v3382
      %v3679 = vunpack.c.l.b16 %v3396
      %v3680 = vunpack.c.l.b16 %v3406
      %v3681 = vunpack.c.l.b16 %v3420
      %v3682 = vunpack.c.l.b16 %v3430
      %v3683 = vunpack.c.l.b16 %v3444
      %v3684 = vunpack.c.l.b16 %v3454
      %v3685 = vunpack.c.l.b16 %v3468
      %v3686 = vunpack.c.l.b16 %v3478
      %v3687 = vunpack.c.l.b16 %v3492
      %v3688 = vunpack.c.l.b16 %v3502
      %v3689 = vunpack.c.l.b16 %v3516
      %v3690 = vunpack.c.l.b16 %v3526
      %v3691 = vunpack.c.l.b16 %v3540
      %v3692 = vunpack.c.l.b16 %v3550
      %v3693 = vunpack.c.l.b16 %v3564
      %v3694 = vunpack.c.l.b16 %v3574
      %v3695 = vunpack.c.l.b16 %v3588
      %v3696 = vunpack.c.l.b16 %v3598
      %v3697 = vunpack.c.l.b16 %v3612
      %v3698 = vunpack.c.l.b16 %v3622
      %v3699 = vunpack.c.l.b16 %v3636
      %v3700 = vunpack.c.l.b16 %v3646
      %v3701 = vunpack.c.l.b16 %v3660
      %v3702 = vunpack.c.l.b16 %v3670
      %v3703 = vpack.c.b16 %v3672, %v3671
      %v3704 = vpack.c.b16 %v3674, %v3673
      %v3705 = vpack.c.b16 %v3676, %v3675
      %v3706 = vpack.c.b16 %v3678, %v3677
      %v3707 = vpack.c.b16 %v3680, %v3679
      %v3708 = vpack.c.b16 %v3682, %v3681
      %v3709 = vpack.c.b16 %v3684, %v3683
      %v3710 = vpack.c.b16 %v3686, %v3685
      %v3711 = vpack.c.b16 %v3688, %v3687
      %v3712 = vpack.c.b16 %v3690, %v3689
      %v3713 = vpack.c.b16 %v3692, %v3691
      %v3714 = vpack.c.b16 %v3694, %v3693
      %v3715 = vpack.c.b16 %v3696, %v3695
      %v3716 = vpack.c.b16 %v3698, %v3697
      %v3717 = vpack.c.b16 %v3700, %v3699
      %v3718 = vpack.c.b16 %v3702, %v3701
      %3719 = vrot.lane.b32.xlu0 %v3703, 56
      %v3720 = vpop.permute.xlu0 %3719
      %3721 = vrot.lane.b32.xlu0 %v3704, 56
      %v3722 = vpop.permute.xlu0 %3721
      %3723 = vrot.lane.b32.xlu0 %v3705, 56
      %v3724 = vpop.permute.xlu0 %3723
      %3725 = vrot.lane.b32.xlu0 %v3706, 56
      %v3726 = vpop.permute.xlu0 %3725
      %3727 = vrot.lane.b32.xlu0 %v3707, 56
      %v3728 = vpop.permute.xlu0 %3727
      %3729 = vrot.lane.b32.xlu0 %v3708, 56
      %v3730 = vpop.permute.xlu0 %3729
      %3731 = vrot.lane.b32.xlu0 %v3709, 56
      %v3732 = vpop.permute.xlu0 %3731
      %3733 = vrot.lane.b32.xlu0 %v3710, 56
      %v3734 = vpop.permute.xlu0 %3733
      %3735 = vrot.lane.b32.xlu0 %v3711, 56
      %v3736 = vpop.permute.xlu0 %3735
      %3737 = vrot.lane.b32.xlu0 %v3712, 56
      %v3738 = vpop.permute.xlu0 %3737
      %3739 = vrot.lane.b32.xlu0 %v3713, 56
      %v3740 = vpop.permute.xlu0 %3739
      %3741 = vrot.lane.b32.xlu0 %v3714, 56
      %v3742 = vpop.permute.xlu0 %3741
      %3743 = vrot.lane.b32.xlu0 %v3715, 56
      %v3744 = vpop.permute.xlu0 %3743
      %3745 = vrot.lane.b32.xlu0 %v3716, 56
      %v3746 = vpop.permute.xlu0 %3745
      %3747 = vrot.lane.b32.xlu0 %v3717, 56
      %v3748 = vpop.permute.xlu0 %3747
      %3749 = vrot.lane.b32.xlu0 %v3718, 56
      %v3750 = vpop.permute.xlu0 %3749
      %vm3767 = vcmask 523712
      %3768 = vst.msk [vmem:[#allocation3] sm:$0xff] %vm3767, %v3720
      %3769 = vst.msk [vmem:[#allocation3 + $0x8] sm:$0xff] %vm3767, %v3722
      %3770 = vst.msk [vmem:[#allocation3 + $0x10] sm:$0xff] %vm3767, %v3724
      %3771 = vst.msk [vmem:[#allocation3 + $0x18] sm:$0xff] %vm3767, %v3726
      %3772 = vst.msk [vmem:[#allocation3 + $0x20] sm:$0xff] %vm3767, %v3728
      %3773 = vst.msk [vmem:[#allocation3 + $0x28] sm:$0xff] %vm3767, %v3730
      %3774 = vst.msk [vmem:[#allocation3 + $0x30] sm:$0xff] %vm3767, %v3732
      %3775 = vst.msk [vmem:[#allocation3 + $0x38] sm:$0xff] %vm3767, %v3734
      %3776 = vst.msk [vmem:[#allocation3 + $0x40] sm:$0xff] %vm3767, %v3736
      %3777 = vst.msk [vmem:[#allocation3 + $0x48] sm:$0xff] %vm3767, %v3738
      %3778 = vst.msk [vmem:[#allocation3 + $0x50] sm:$0xff] %vm3767, %v3740
      %3779 = vst.msk [vmem:[#allocation3 + $0x58] sm:$0xff] %vm3767, %v3742
      %3780 = vst.msk [vmem:[#allocation3 + $0x60] sm:$0xff] %vm3767, %v3744
      %3781 = vst.msk [vmem:[#allocation3 + $0x68] sm:$0xff] %vm3767, %v3746
      %3782 = vst.msk [vmem:[#allocation3 + $0x70] sm:$0xff] %vm3767, %v3748
      %3783 = vst.msk [vmem:[#allocation3 + $0x78] sm:$0xff] %vm3767, %v3750
      %v3784 = vld [vmem:[%s3061] sm:$0xe]
      %v3785 = vld [vmem:[%s3061 + $0x4] sm:$0xf]
      %v3786 = vld [vmem:[%s3061 + $0x8] sm:$0x1]
      %v3787 = vld [vmem:[%s3061 + $0xc] sm:$0xe]
      %v3788 = vld [vmem:[%s3061 + $0x10] sm:$0xf]
      %v3789 = vld [vmem:[%s3061 + $0x14] sm:$0x1]
      %v3790 = vld [vmem:[%s3061 + $0x18] sm:$0xe]
      %v3791 = vld [vmem:[%s3061 + $0x1c] sm:$0xf]
      %v3792 = vld [vmem:[%s3061 + $0x20] sm:$0x1]
      %v3793 = vld [vmem:[%s3061 + $0x24] sm:$0xe]
      %v3794 = vld [vmem:[%s3061 + $0x28] sm:$0xf]
      %v3795 = vld [vmem:[%s3061 + $0x2c] sm:$0x1]
      %v3796 = vld [vmem:[%s3061 + $0x30] sm:$0xe]
      %v3797 = vld [vmem:[%s3061 + $0x34] sm:$0xf]
      %v3798 = vld [vmem:[%s3061 + $0x38] sm:$0x1]
      %v3799 = vld [vmem:[%s3061 + $0x3c] sm:$0xe]
      %v3800 = vld [vmem:[%s3061 + $0x40] sm:$0xf]
      %v3801 = vld [vmem:[%s3061 + $0x44] sm:$0x1]
      %v3802 = vld [vmem:[%s3061 + $0x48] sm:$0xe]
      %v3803 = vld [vmem:[%s3061 + $0x4c] sm:$0xf]
      %v3804 = vld [vmem:[%s3061 + $0x50] sm:$0x1]
      %v3805 = vld [vmem:[%s3061 + $0x54] sm:$0xe]
      %v3806 = vld [vmem:[%s3061 + $0x58] sm:$0xf]
      %v3807 = vld [vmem:[%s3061 + $0x5c] sm:$0x1]
      %v3808 = vld [vmem:[%s3061 + $0x60] sm:$0xe]
      %v3809 = vld [vmem:[%s3061 + $0x64] sm:$0xf]
      %v3810 = vld [vmem:[%s3061 + $0x68] sm:$0x1]
      %v3811 = vld [vmem:[%s3061 + $0x6c] sm:$0xe]
      %v3812 = vld [vmem:[%s3061 + $0x70] sm:$0xf]
      %v3813 = vld [vmem:[%s3061 + $0x74] sm:$0x1]
      %v3814 = vld [vmem:[%s3061 + $0x78] sm:$0xe]
      %v3815 = vld [vmem:[%s3061 + $0x7c] sm:$0xf]
      %v3816 = vld [vmem:[%s3061 + $0x80] sm:$0x1]
      %v3817 = vld [vmem:[%s3061 + $0x84] sm:$0xe]
      %v3818 = vld [vmem:[%s3061 + $0x88] sm:$0xf]
      %v3819 = vld [vmem:[%s3061 + $0x8c] sm:$0x1]
      %v3820 = vld [vmem:[%s3061 + $0x90] sm:$0xe]
      %v3821 = vld [vmem:[%s3061 + $0x94] sm:$0xf]
      %v3822 = vld [vmem:[%s3061 + $0x98] sm:$0x1]
      %v3823 = vld [vmem:[%s3061 + $0x9c] sm:$0xe]
      %v3824 = vld [vmem:[%s3061 + $0xa0] sm:$0xf]
      %v3825 = vld [vmem:[%s3061 + $0xa4] sm:$0x1]
      %v3826 = vld [vmem:[%s3061 + $0xa8] sm:$0xe]
      %v3827 = vld [vmem:[%s3061 + $0xac] sm:$0xf]
      %v3828 = vld [vmem:[%s3061 + $0xb0] sm:$0x1]
      %v3829 = vld [vmem:[%s3061 + $0xb4] sm:$0xe]
      %v3830 = vld [vmem:[%s3061 + $0xb8] sm:$0xf]
      %v3831 = vld [vmem:[%s3061 + $0xbc] sm:$0x1]
      %v3880 = vrot.slane %v3784, 5
      %v3881 = vrot.slane %v3880, 4
      %v3882 = vrot.slane %v3785, 5
      %v3883 = vsel %vm1792, %v3881, %v3882
      %v3884 = vrot.slane %v3882, 4
      %v3885 = vrot.slane %v3786, 5
      %v3886 = vsel %vm1792, %v3884, %v3885
      %v3887 = vrot.slane %v3787, 5
      %v3888 = vrot.slane %v3887, 4
      %v3889 = vrot.slane %v3788, 5
      %v3890 = vsel %vm1792, %v3888, %v3889
      %v3891 = vrot.slane %v3889, 4
      %v3892 = vrot.slane %v3789, 5
      %v3893 = vsel %vm1792, %v3891, %v3892
      %v3894 = vrot.slane %v3790, 5
      %v3895 = vrot.slane %v3894, 4
      %v3896 = vrot.slane %v3791, 5
      %v3897 = vsel %vm1792, %v3895, %v3896
      %v3898 = vrot.slane %v3896, 4
      %v3899 = vrot.slane %v3792, 5
      %v3900 = vsel %vm1792, %v3898, %v3899
      %v3901 = vrot.slane %v3793, 5
      %v3902 = vrot.slane %v3901, 4
      %v3903 = vrot.slane %v3794, 5
      %v3904 = vsel %vm1792, %v3902, %v3903
      %v3905 = vrot.slane %v3903, 4
      %v3906 = vrot.slane %v3795, 5
      %v3907 = vsel %vm1792, %v3905, %v3906
      %v3908 = vrot.slane %v3796, 5
      %v3909 = vrot.slane %v3908, 4
      %v3910 = vrot.slane %v3797, 5
      %v3911 = vsel %vm1792, %v3909, %v3910
      %v3912 = vrot.slane %v3910, 4
      %v3913 = vrot.slane %v3798, 5
      %v3914 = vsel %vm1792, %v3912, %v3913
      %v3915 = vrot.slane %v3799, 5
      %v3916 = vrot.slane %v3915, 4
      %v3917 = vrot.slane %v3800, 5
      %v3918 = vsel %vm1792, %v3916, %v3917
      %v3919 = vrot.slane %v3917, 4
      %v3920 = vrot.slane %v3801, 5
      %v3921 = vsel %vm1792, %v3919, %v3920
      %v3922 = vrot.slane %v3802, 5
      %v3923 = vrot.slane %v3922, 4
      %v3924 = vrot.slane %v3803, 5
      %v3925 = vsel %vm1792, %v3923, %v3924
      %v3926 = vrot.slane %v3924, 4
      %v3927 = vrot.slane %v3804, 5
      %v3928 = vsel %vm1792, %v3926, %v3927
      %v3929 = vrot.slane %v3805, 5
      %v3930 = vrot.slane %v3929, 4
      %v3931 = vrot.slane %v3806, 5
      %v3932 = vsel %vm1792, %v3930, %v3931
      %v3933 = vrot.slane %v3931, 4
      %v3934 = vrot.slane %v3807, 5
      %v3935 = vsel %vm1792, %v3933, %v3934
      %v3936 = vrot.slane %v3808, 5
      %v3937 = vrot.slane %v3936, 4
      %v3938 = vrot.slane %v3809, 5
      %v3939 = vsel %vm1792, %v3937, %v3938
      %v3940 = vrot.slane %v3938, 4
      %v3941 = vrot.slane %v3810, 5
      %v3942 = vsel %vm1792, %v3940, %v3941
      %v3943 = vrot.slane %v3811, 5
      %v3944 = vrot.slane %v3943, 4
      %v3945 = vrot.slane %v3812, 5
      %v3946 = vsel %vm1792, %v3944, %v3945
      %v3947 = vrot.slane %v3945, 4
      %v3948 = vrot.slane %v3813, 5
      %v3949 = vsel %vm1792, %v3947, %v3948
      %v3950 = vrot.slane %v3814, 5
      %v3951 = vrot.slane %v3950, 4
      %v3952 = vrot.slane %v3815, 5
      %v3953 = vsel %vm1792, %v3951, %v3952
      %v3954 = vrot.slane %v3952, 4
      %v3955 = vrot.slane %v3816, 5
      %v3956 = vsel %vm1792, %v3954, %v3955
      %v3957 = vrot.slane %v3817, 5
      %v3958 = vrot.slane %v3957, 4
      %v3959 = vrot.slane %v3818, 5
      %v3960 = vsel %vm1792, %v3958, %v3959
      %v3961 = vrot.slane %v3959, 4
      %v3962 = vrot.slane %v3819, 5
      %v3963 = vsel %vm1792, %v3961, %v3962
      %v3964 = vrot.slane %v3820, 5
      %v3965 = vrot.slane %v3964, 4
      %v3966 = vrot.slane %v3821, 5
      %v3967 = vsel %vm1792, %v3965, %v3966
      %v3968 = vrot.slane %v3966, 4
      %v3969 = vrot.slane %v3822, 5
      %v3970 = vsel %vm1792, %v3968, %v3969
      %v3971 = vrot.slane %v3823, 5
      %v3972 = vrot.slane %v3971, 4
      %v3973 = vrot.slane %v3824, 5
      %v3974 = vsel %vm1792, %v3972, %v3973
      %v3975 = vrot.slane %v3973, 4
      %v3976 = vrot.slane %v3825, 5
      %v3977 = vsel %vm1792, %v3975, %v3976
      %v3978 = vrot.slane %v3826, 5
      %v3979 = vrot.slane %v3978, 4
      %v3980 = vrot.slane %v3827, 5
      %v3981 = vsel %vm1792, %v3979, %v3980
      %v3982 = vrot.slane %v3980, 4
      %v3983 = vrot.slane %v3828, 5
      %v3984 = vsel %vm1792, %v3982, %v3983
      %v3985 = vrot.slane %v3829, 5
      %v3986 = vrot.slane %v3985, 4
      %v3987 = vrot.slane %v3830, 5
      %v3988 = vsel %vm1792, %v3986, %v3987
      %v3989 = vrot.slane %v3987, 4
      %v3990 = vrot.slane %v3831, 5
      %v3991 = vsel %vm1792, %v3989, %v3990
      %v3992 = vunpack.c.l.b16 %v3883
      %v3993 = vunpack.c.l.b16 %v3886
      %v3994 = vunpack.c.l.b16 %v3890
      %v3995 = vunpack.c.l.b16 %v3893
      %v3996 = vunpack.c.l.b16 %v3897
      %v3997 = vunpack.c.l.b16 %v3900
      %v3998 = vunpack.c.l.b16 %v3904
      %v3999 = vunpack.c.l.b16 %v3907
      %v4000 = vunpack.c.l.b16 %v3911
      %v4001 = vunpack.c.l.b16 %v3914
      %v4002 = vunpack.c.l.b16 %v3918
      %v4003 = vunpack.c.l.b16 %v3921
      %v4004 = vunpack.c.l.b16 %v3925
      %v4005 = vunpack.c.l.b16 %v3928
      %v4006 = vunpack.c.l.b16 %v3932
      %v4007 = vunpack.c.l.b16 %v3935
      %v4008 = vunpack.c.l.b16 %v3939
      %v4009 = vunpack.c.l.b16 %v3942
      %v4010 = vunpack.c.l.b16 %v3946
      %v4011 = vunpack.c.l.b16 %v3949
      %v4012 = vunpack.c.l.b16 %v3953
      %v4013 = vunpack.c.l.b16 %v3956
      %v4014 = vunpack.c.l.b16 %v3960
      %v4015 = vunpack.c.l.b16 %v3963
      %v4016 = vunpack.c.l.b16 %v3967
      %v4017 = vunpack.c.l.b16 %v3970
      %v4018 = vunpack.c.l.b16 %v3974
      %v4019 = vunpack.c.l.b16 %v3977
      %v4020 = vunpack.c.l.b16 %v3981
      %v4021 = vunpack.c.l.b16 %v3984
      %v4022 = vunpack.c.l.b16 %v3988
      %v4023 = vunpack.c.l.b16 %v3991
      %v4024 = vpack.c.b16 %v3993, %v3992
      %v4025 = vpack.c.b16 %v3995, %v3994
      %v4026 = vpack.c.b16 %v3997, %v3996
      %v4027 = vpack.c.b16 %v3999, %v3998
      %v4028 = vpack.c.b16 %v4001, %v4000
      %v4029 = vpack.c.b16 %v4003, %v4002
      %v4030 = vpack.c.b16 %v4005, %v4004
      %v4031 = vpack.c.b16 %v4007, %v4006
      %v4032 = vpack.c.b16 %v4009, %v4008
      %v4033 = vpack.c.b16 %v4011, %v4010
      %v4034 = vpack.c.b16 %v4013, %v4012
      %v4035 = vpack.c.b16 %v4015, %v4014
      %v4036 = vpack.c.b16 %v4017, %v4016
      %v4037 = vpack.c.b16 %v4019, %v4018
      %v4038 = vpack.c.b16 %v4021, %v4020
      %v4039 = vpack.c.b16 %v4023, %v4022
      %4040 = vrot.lane.b32.xlu0 %v4024, 64
      %v4041 = vpop.permute.xlu0 %4040
      %4042 = vrot.lane.b32.xlu0 %v4025, 64
      %v4043 = vpop.permute.xlu0 %4042
      %4044 = vrot.lane.b32.xlu0 %v4026, 64
      %v4045 = vpop.permute.xlu0 %4044
      %4046 = vrot.lane.b32.xlu0 %v4027, 64
      %v4047 = vpop.permute.xlu0 %4046
      %4048 = vrot.lane.b32.xlu0 %v4028, 64
      %v4049 = vpop.permute.xlu0 %4048
      %4050 = vrot.lane.b32.xlu0 %v4029, 64
      %v4051 = vpop.permute.xlu0 %4050
      %4052 = vrot.lane.b32.xlu0 %v4030, 64
      %v4053 = vpop.permute.xlu0 %4052
      %4054 = vrot.lane.b32.xlu0 %v4031, 64
      %v4055 = vpop.permute.xlu0 %4054
      %4056 = vrot.lane.b32.xlu0 %v4032, 64
      %v4057 = vpop.permute.xlu0 %4056
      %4058 = vrot.lane.b32.xlu0 %v4033, 64
      %v4059 = vpop.permute.xlu0 %4058
      %4060 = vrot.lane.b32.xlu0 %v4034, 64
      %v4061 = vpop.permute.xlu0 %4060
      %4062 = vrot.lane.b32.xlu0 %v4035, 64
      %v4063 = vpop.permute.xlu0 %4062
      %4064 = vrot.lane.b32.xlu0 %v4036, 64
      %v4065 = vpop.permute.xlu0 %4064
      %4066 = vrot.lane.b32.xlu0 %v4037, 64
      %v4067 = vpop.permute.xlu0 %4066
      %4068 = vrot.lane.b32.xlu0 %v4038, 64
      %v4069 = vpop.permute.xlu0 %4068
      %4070 = vrot.lane.b32.xlu0 %v4039, 64
      %v4071 = vpop.permute.xlu0 %4070
      %vm4088 = vcmask 589312
      %4089 = vst.msk [vmem:[#allocation3] sm:$0xff] %vm4088, %v4041
      %4090 = vst.msk [vmem:[#allocation3 + $0x8] sm:$0xff] %vm4088, %v4043
      %4091 = vst.msk [vmem:[#allocation3 + $0x10] sm:$0xff] %vm4088, %v4045
      %4092 = vst.msk [vmem:[#allocation3 + $0x18] sm:$0xff] %vm4088, %v4047
      %4093 = vst.msk [vmem:[#allocation3 + $0x20] sm:$0xff] %vm4088, %v4049
      %4094 = vst.msk [vmem:[#allocation3 + $0x28] sm:$0xff] %vm4088, %v4051
      %4095 = vst.msk [vmem:[#allocation3 + $0x30] sm:$0xff] %vm4088, %v4053
      %4096 = vst.msk [vmem:[#allocation3 + $0x38] sm:$0xff] %vm4088, %v4055
      %4097 = vst.msk [vmem:[#allocation3 + $0x40] sm:$0xff] %vm4088, %v4057
      %4098 = vst.msk [vmem:[#allocation3 + $0x48] sm:$0xff] %vm4088, %v4059
      %4099 = vst.msk [vmem:[#allocation3 + $0x50] sm:$0xff] %vm4088, %v4061
      %4100 = vst.msk [vmem:[#allocation3 + $0x58] sm:$0xff] %vm4088, %v4063
      %4101 = vst.msk [vmem:[#allocation3 + $0x60] sm:$0xff] %vm4088, %v4065
      %4102 = vst.msk [vmem:[#allocation3 + $0x68] sm:$0xff] %vm4088, %v4067
      %4103 = vst.msk [vmem:[#allocation3 + $0x70] sm:$0xff] %vm4088, %v4069
      %4104 = vst.msk [vmem:[#allocation3 + $0x78] sm:$0xff] %vm4088, %v4071
      %v4105 = vld [vmem:[#allocation3] sm:$0xff]
      %v4106 = vld [vmem:[#allocation3 + $0x8] sm:$0xff]
      %v4107 = vld [vmem:[#allocation3 + $0x10] sm:$0xff]
      %v4108 = vld [vmem:[#allocation3 + $0x18] sm:$0xff]
      %v4109 = vld [vmem:[#allocation3 + $0x20] sm:$0xff]
      %v4110 = vld [vmem:[#allocation3 + $0x28] sm:$0xff]
      %v4111 = vld [vmem:[#allocation3 + $0x30] sm:$0xff]
      %v4112 = vld [vmem:[#allocation3 + $0x38] sm:$0xff]
      %v4113 = vld [vmem:[#allocation3 + $0x40] sm:$0xff]
      %v4114 = vld [vmem:[#allocation3 + $0x48] sm:$0xff]
      %v4115 = vld [vmem:[#allocation3 + $0x50] sm:$0xff]
      %v4116 = vld [vmem:[#allocation3 + $0x58] sm:$0xff]
      %v4117 = vld [vmem:[#allocation3 + $0x60] sm:$0xff]
      %v4118 = vld [vmem:[#allocation3 + $0x68] sm:$0xff]
      %v4119 = vld [vmem:[#allocation3 + $0x70] sm:$0xff]
      %v4120 = vld [vmem:[#allocation3 + $0x78] sm:$0xff]
      %v4121 = vld [vmem:[%s3] sm:$0xf]
      %v4122 = vld [vmem:[%s3 + $0x4] sm:$0xf]
      %v4123 = vld [vmem:[%s3 + $0x8] sm:$0xf]
      %v4124 = vld [vmem:[%s3 + $0xc] sm:$0xf]
      %v4125 = vld [vmem:[%s3 + $0x10] sm:$0xf]
      %v4126 = vld [vmem:[%s3 + $0x14] sm:$0xf]
      %v4127 = vld [vmem:[%s3 + $0x18] sm:$0xf]
      %v4128 = vld [vmem:[%s3 + $0x1c] sm:$0xf]
      %v4129 = vld [vmem:[%s3 + $0x20] sm:$0xf]
      %v4139 = vunpack.c.l.b16 %v4121
      %v4140 = vunpack.c.l.b16 %v4122
      %v4141 = vunpack.c.l.b16 %v4123
      %v4142 = vunpack.c.l.b16 %v4124
      %v4143 = vunpack.c.l.b16 %v4125
      %v4144 = vunpack.c.l.b16 %v4126
      %v4145 = vunpack.c.l.b16 %v4127
      %v4146 = vunpack.c.l.b16 %v4128
      %v4147 = vunpack.c.l.b16 %v4129
      %v4148 = vpack.c.b16 %v4140, %v4139
      %v4149 = vpack.c.b16 %v4142, %v4141
      %v4150 = vpack.c.b16 %v4144, %v4143
      %v4151 = vpack.c.b16 %v4146, %v4145
      %v4152 = vpack.c.b16 %v4147, %v4147
      %vm4157 = vcmask 588800
      %v4159 = vsel %vm4157, %v4105, 0
      %v4162 = vsel %vm4157, %v4106, 0
      %v4165 = vsel %vm4157, %v4107, 0
      %v4168 = vsel %vm4157, %v4108, 0
      %v4171 = vsel %vm4157, %v4109, 0
      %v4174 = vsel %vm4157, %v4110, 0
      %v4177 = vsel %vm4157, %v4111, 0
      %v4180 = vsel %vm4157, %v4112, 0
      %v4183 = vsel %vm4157, %v4113, 0
      %v4186 = vsel %vm4157, %v4114, 0
      %v4189 = vsel %vm4157, %v4115, 0
      %v4192 = vsel %vm4157, %v4116, 0
      %v4195 = vsel %vm4157, %v4117, 0
      %v4198 = vsel %vm4157, %v4118, 0
      %v4201 = vsel %vm4157, %v4119, 0
      %v4204 = vsel %vm4157, %v4120, 0
      %vm4206 = vcmask 1043456
      %v4208 = vsel %vm4206, %v4152, 0
      %4210 = vmatprep.subr.bf16.mxu0 0
      %4211 = vmatpush1.bf16.msra.mxu0 %v4148
      %4212 = vmatprep.subr.bf16.mxu0 0
      %4213 = vmatpush1.bf16.msra.mxu0 %v4149
      %4214 = vmatprep.subr.bf16.mxu0 0
      %4215 = vmatpush1.bf16.msra.mxu0 %v4150
      %4216 = vmatprep.subr.bf16.mxu0 0
      %4217 = vmatpush1.bf16.msra.mxu0 %v4151
      %4218 = vmatprep.subr.bf16.mxu0 0
      %4219 = vmatpush1.bf16.msra.mxu0 %v4208
      %4220 = vmatprep.subr.bf16.mxu0 0
      %4221 = vmatpush1.bf16.msra.mxu0 0
      %4222 = vmatprep.subr.bf16.mxu0 0
      %4223 = vmatpush1.bf16.msra.mxu0 0
      %4224 = vmatprep.subr.bf16.mxu0 0
      %4225 = vmatpush1.bf16.msra.mxu0 0
      %4226 = vmatprep.subr.bf16.mxu0 0
      %4227 = vmatpush1.bf16.msra.mxu0 0
      %4228 = vmatprep.subr.bf16.mxu0 0
      %4229 = vmatpush1.bf16.msra.mxu0 0
      %4230 = vmatprep.subr.bf16.mxu0 0
      %4231 = vmatpush1.bf16.msra.mxu0 0
      %4232 = vmatprep.subr.bf16.mxu0 0
      %4233 = vmatpush1.bf16.msra.mxu0 0
      %4234 = vmatprep.subr.bf16.mxu0 0
      %4235 = vmatpush1.bf16.msra.mxu0 0
      %4236 = vmatprep.subr.bf16.mxu0 0
      %4237 = vmatpush1.bf16.msra.mxu0 0
      %4238 = vmatprep.subr.bf16.mxu0 0
      %4239 = vmatpush1.bf16.msra.mxu0 0
      %4240 = vmatprep.subr.bf16.mxu0 0
      %4241 = vmatpush1.bf16.msra.mxu0 0
      %4242 = vmatprep.mubr.bf16.mxu0 0
      %4243 = vmatmul.mubr.bf16.gmra.mrb[0].mxu0 %v4159
      %v4244 = vpop.f32.mrb[0].mxu0
      %v4245 = vadd.f32 0.0, %v4244
      %v4246 = vpop.f32.mrb[0].mxu0
      %v4247 = vpop.f32.mrb[0].mxu0
      %v4248 = vadd.f32 0.0, %v4247
      %v4249 = vpop.f32.mrb[0].mxu0
      %4250 = vmatprep.mubr.bf16.mxu0 0
      %4251 = vmatmul.mubr.bf16.gmra.mrb[0].mxu0 %v4162
      %v4252 = vpop.f32.mrb[0].mxu0
      %v4253 = vadd.f32 0.0, %v4252
      %v4254 = vpop.f32.mrb[0].mxu0
      %v4255 = vpop.f32.mrb[0].mxu0
      %v4256 = vadd.f32 0.0, %v4255
      %v4257 = vpop.f32.mrb[0].mxu0
      %4258 = vmatprep.mubr.bf16.mxu0 0
      %4259 = vmatmul.mubr.bf16.gmra.mrb[0].mxu0 %v4165
      %v4260 = vpop.f32.mrb[0].mxu0
      %v4261 = vadd.f32 0.0, %v4260
      %v4262 = vpop.f32.mrb[0].mxu0
      %v4263 = vpop.f32.mrb[0].mxu0
      %v4264 = vadd.f32 0.0, %v4263
      %v4265 = vpop.f32.mrb[0].mxu0
      %4266 = vmatprep.mubr.bf16.mxu0 0
      %4267 = vmatmul.mubr.bf16.gmra.mrb[0].mxu0 %v4168
      %v4268 = vpop.f32.mrb[0].mxu0
      %v4269 = vadd.f32 0.0, %v4268
      %v4270 = vpop.f32.mrb[0].mxu0
      %v4271 = vpop.f32.mrb[0].mxu0
      %v4272 = vadd.f32 0.0, %v4271
      %v4273 = vpop.f32.mrb[0].mxu0
      %4274 = vmatprep.mubr.bf16.mxu0 0
      %4275 = vmatmul.mubr.bf16.gmra.mrb[0].mxu0 %v4171
      %v4276 = vpop.f32.mrb[0].mxu0
      %v4277 = vadd.f32 0.0, %v4276
      %v4278 = vpop.f32.mrb[0].mxu0
      %v4279 = vpop.f32.mrb[0].mxu0
      %v4280 = vadd.f32 0.0, %v4279
      %v4281 = vpop.f32.mrb[0].mxu0
      %4282 = vmatprep.mubr.bf16.mxu0 0
      %4283 = vmatmul.mubr.bf16.gmra.mrb[0].mxu0 %v4174
      %v4284 = vpop.f32.mrb[0].mxu0
      %v4285 = vadd.f32 0.0, %v4284
      %v4286 = vpop.f32.mrb[0].mxu0
      %v4287 = vpop.f32.mrb[0].mxu0
      %v4288 = vadd.f32 0.0, %v4287
      %v4289 = vpop.f32.mrb[0].mxu0
      %4290 = vmatprep.mubr.bf16.mxu0 0
      %4291 = vmatmul.mubr.bf16.gmra.mrb[0].mxu0 %v4177
      %v4292 = vpop.f32.mrb[0].mxu0
      %v4293 = vadd.f32 0.0, %v4292
      %v4294 = vpop.f32.mrb[0].mxu0
      %v4295 = vpop.f32.mrb[0].mxu0
      %v4296 = vadd.f32 0.0, %v4295
      %v4297 = vpop.f32.mrb[0].mxu0
      %4298 = vmatprep.mubr.bf16.mxu0 0
      %4299 = vmatmul.mubr.bf16.gmra.mrb[0].mxu0 %v4180
      %v4300 = vpop.f32.mrb[0].mxu0
      %v4301 = vadd.f32 0.0, %v4300
      %v4302 = vpop.f32.mrb[0].mxu0
      %v4303 = vpop.f32.mrb[0].mxu0
      %v4304 = vadd.f32 0.0, %v4303
      %v4305 = vpop.f32.mrb[0].mxu0
      %4306 = vmatprep.mubr.bf16.mxu0 0
      %4307 = vmatmul.mubr.bf16.gmra.mrb[0].mxu0 %v4183
      %v4308 = vpop.f32.mrb[0].mxu0
      %v4309 = vadd.f32 0.0, %v4308
      %v4310 = vpop.f32.mrb[0].mxu0
      %v4311 = vpop.f32.mrb[0].mxu0
      %v4312 = vadd.f32 0.0, %v4311
      %v4313 = vpop.f32.mrb[0].mxu0
      %4314 = vmatprep.mubr.bf16.mxu0 0
      %4315 = vmatmul.mubr.bf16.gmra.mrb[0].mxu0 %v4186
      %v4316 = vpop.f32.mrb[0].mxu0
      %v4317 = vadd.f32 0.0, %v4316
      %v4318 = vpop.f32.mrb[0].mxu0
      %v4319 = vpop.f32.mrb[0].mxu0
      %v4320 = vadd.f32 0.0, %v4319
      %v4321 = vpop.f32.mrb[0].mxu0
      %4322 = vmatprep.mubr.bf16.mxu0 0
      %4323 = vmatmul.mubr.bf16.gmra.mrb[0].mxu0 %v4189
      %v4324 = vpop.f32.mrb[0].mxu0
      %v4325 = vadd.f32 0.0, %v4324
      %v4326 = vpop.f32.mrb[0].mxu0
      %v4327 = vpop.f32.mrb[0].mxu0
      %v4328 = vadd.f32 0.0, %v4327
      %v4329 = vpop.f32.mrb[0].mxu0
      %4330 = vmatprep.mubr.bf16.mxu0 0
      %4331 = vmatmul.mubr.bf16.gmra.mrb[0].mxu0 %v4192
      %v4332 = vpop.f32.mrb[0].mxu0
      %v4333 = vadd.f32 0.0, %v4332
      %v4334 = vpop.f32.mrb[0].mxu0
      %v4335 = vpop.f32.mrb[0].mxu0
      %v4336 = vadd.f32 0.0, %v4335
      %v4337 = vpop.f32.mrb[0].mxu0
      %4338 = vmatprep.mubr.bf16.mxu0 0
      %4339 = vmatmul.mubr.bf16.gmra.mrb[0].mxu0 %v4195
      %v4340 = vpop.f32.mrb[0].mxu0
      %v4341 = vadd.f32 0.0, %v4340
      %v4342 = vpop.f32.mrb[0].mxu0
      %v4343 = vpop.f32.mrb[0].mxu0
      %v4344 = vadd.f32 0.0, %v4343
      %v4345 = vpop.f32.mrb[0].mxu0
      %4346 = vmatprep.mubr.bf16.mxu0 0
      %4347 = vmatmul.mubr.bf16.gmra.mrb[0].mxu0 %v4198
      %v4348 = vpop.f32.mrb[0].mxu0
      %v4349 = vadd.f32 0.0, %v4348
      %v4350 = vpop.f32.mrb[0].mxu0
      %v4351 = vpop.f32.mrb[0].mxu0
      %v4352 = vadd.f32 0.0, %v4351
      %v4353 = vpop.f32.mrb[0].mxu0
      %4354 = vmatprep.mubr.bf16.mxu0 0
      %4355 = vmatmul.mubr.bf16.gmra.mrb[0].mxu0 %v4201
      %v4356 = vpop.f32.mrb[0].mxu0
      %v4357 = vadd.f32 0.0, %v4356
      %v4358 = vpop.f32.mrb[0].mxu0
      %v4359 = vpop.f32.mrb[0].mxu0
      %v4360 = vadd.f32 0.0, %v4359
      %v4361 = vpop.f32.mrb[0].mxu0
      %4362 = vmatprep.mubr.bf16.mxu0 0
      %4363 = vmatmul.mubr.bf16.gmra.mrb[0].mxu0 %v4204
      %v4364 = vpop.f32.mrb[0].mxu0
      %v4365 = vadd.f32 0.0, %v4364
      %v4366 = vpop.f32.mrb[0].mxu0
      %v4367 = vpop.f32.mrb[0].mxu0
      %v4368 = vadd.f32 0.0, %v4367
      %v4369 = vpop.f32.mrb[0].mxu0
      %4370 = vdwg.mxu0
      %4371 = vst.msk [vmem:[%s254] sm:$0xff] %vm1129, %v4245
      %4372 = vst.msk [vmem:[%s254 + $0x8] sm:$0xff] %vm1129, %v4248
      %4373 = vst.msk [vmem:[%s254 + $0x10] sm:$0xff] %vm1129, %v4253
      %4374 = vst.msk [vmem:[%s254 + $0x18] sm:$0xff] %vm1129, %v4256
      %4375 = vst.msk [vmem:[%s254 + $0x20] sm:$0xff] %vm1129, %v4261
      %4376 = vst.msk [vmem:[%s254 + $0x28] sm:$0xff] %vm1129, %v4264
      %4377 = vst.msk [vmem:[%s254 + $0x30] sm:$0xff] %vm1129, %v4269
      %4378 = vst.msk [vmem:[%s254 + $0x38] sm:$0xff] %vm1129, %v4272
      %4379 = vst.msk [vmem:[%s254 + $0x40] sm:$0xff] %vm1129, %v4277
      %4380 = vst.msk [vmem:[%s254 + $0x48] sm:$0xff] %vm1129, %v4280
      %4381 = vst.msk [vmem:[%s254 + $0x50] sm:$0xff] %vm1129, %v4285
      %4382 = vst.msk [vmem:[%s254 + $0x58] sm:$0xff] %vm1129, %v4288
      %4383 = vst.msk [vmem:[%s254 + $0x60] sm:$0xff] %vm1129, %v4293
      %4384 = vst.msk [vmem:[%s254 + $0x68] sm:$0xff] %vm1129, %v4296
      %4385 = vst.msk [vmem:[%s254 + $0x70] sm:$0xff] %vm1129, %v4301
      %4386 = vst.msk [vmem:[%s254 + $0x78] sm:$0xff] %vm1129, %v4304
      %4387 = vst.msk [vmem:[%s254 + $0x80] sm:$0xff] %vm1129, %v4309
      %4388 = vst.msk [vmem:[%s254 + $0x88] sm:$0xff] %vm1129, %v4312
      %4389 = vst.msk [vmem:[%s254 + $0x90] sm:$0xff] %vm1129, %v4317
      %4390 = vst.msk [vmem:[%s254 + $0x98] sm:$0xff] %vm1129, %v4320
      %4391 = vst.msk [vmem:[%s254 + $0xa0] sm:$0xff] %vm1129, %v4325
      %4392 = vst.msk [vmem:[%s254 + $0xa8] sm:$0xff] %vm1129, %v4328
      %4393 = vst.msk [vmem:[%s254 + $0xb0] sm:$0xff] %vm1129, %v4333
      %4394 = vst.msk [vmem:[%s254 + $0xb8] sm:$0xff] %vm1129, %v4336
      %4395 = vst.msk [vmem:[%s254 + $0xc0] sm:$0xff] %vm1129, %v4341
      %4396 = vst.msk [vmem:[%s254 + $0xc8] sm:$0xff] %vm1129, %v4344
      %4397 = vst.msk [vmem:[%s254 + $0xd0] sm:$0xff] %vm1129, %v4349
      %4398 = vst.msk [vmem:[%s254 + $0xd8] sm:$0xff] %vm1129, %v4352
      %4399 = vst.msk [vmem:[%s254 + $0xe0] sm:$0xff] %vm1129, %v4357
      %4400 = vst.msk [vmem:[%s254 + $0xe8] sm:$0xff] %vm1129, %v4360
      %4401 = vst.msk [vmem:[%s254 + $0xf0] sm:$0xff] %vm1129, %v4365
      %4402 = vst.msk [vmem:[%s254 + $0xf8] sm:$0xff] %vm1129, %v4368
      // Predicated region
      $region41: #{resnet_block_forward.4} parent=35 // pred_check
        %p4403 = pneg %p261
      $region42: #{resnet_block_forward.4} parent=35 // pred_check_branch
        %4405 = sbr.rel (%p4403) target = $region44
      $region43: #{resnet_block_forward.4} parent=35 // pred_region
        %vm4406 = vcmask 58368
        %4407 = vst.msk [vmem:[%s259] sm:$0x3] %vm4406, 0.0
      $region44: #{resnet_block_forward.4} parent=35 // pred_fallthru
        _
      %v4408 = vsel %vm1129, %v4245, 0.0
      %v4409 = vsel %vm1129, %v4248, 0.0
      %v4410 = vadd.f32 %v4408, %v4409
      %v4411 = vsel %vm1129, %v4253, 0.0
      %v4412 = vadd.f32 %v4410, %v4411
      %v4413 = vsel %vm1129, %v4256, 0.0
      %v4414 = vadd.f32 %v4412, %v4413
      %v4415 = vsel %vm1129, %v4261, 0.0
      %v4416 = vadd.f32 %v4414, %v4415
      %v4417 = vsel %vm1129, %v4264, 0.0
      %v4418 = vadd.f32 %v4416, %v4417
      %v4419 = vsel %vm1129, %v4269, 0.0
      %v4420 = vadd.f32 %v4418, %v4419
      %v4421 = vsel %vm1129, %v4272, 0.0
      %v4422 = vadd.f32 %v4420, %v4421
      %v4423 = vsel %vm1129, %v4277, 0.0
      %v4424 = vadd.f32 %v4422, %v4423
      %v4425 = vsel %vm1129, %v4280, 0.0
      %v4426 = vadd.f32 %v4424, %v4425
      %v4427 = vsel %vm1129, %v4285, 0.0
      %v4428 = vadd.f32 %v4426, %v4427
      %v4429 = vsel %vm1129, %v4288, 0.0
      %v4430 = vadd.f32 %v4428, %v4429
      %v4431 = vsel %vm1129, %v4293, 0.0
      %v4432 = vadd.f32 %v4430, %v4431
      %v4433 = vsel %vm1129, %v4296, 0.0
      %v4434 = vadd.f32 %v4432, %v4433
      %v4435 = vsel %vm1129, %v4301, 0.0
      %v4436 = vadd.f32 %v4434, %v4435
      %v4437 = vsel %vm1129, %v4304, 0.0
      %v4438 = vadd.f32 %v4436, %v4437
      %v4439 = vsel %vm1129, %v4309, 0.0
      %v4440 = vadd.f32 %v4438, %v4439
      %v4441 = vsel %vm1129, %v4312, 0.0
      %v4442 = vadd.f32 %v4440, %v4441
      %v4443 = vsel %vm1129, %v4317, 0.0
      %v4444 = vadd.f32 %v4442, %v4443
      %v4445 = vsel %vm1129, %v4320, 0.0
      %v4446 = vadd.f32 %v4444, %v4445
      %v4447 = vsel %vm1129, %v4325, 0.0
      %v4448 = vadd.f32 %v4446, %v4447
      %v4449 = vsel %vm1129, %v4328, 0.0
      %v4450 = vadd.f32 %v4448, %v4449
      %v4451 = vsel %vm1129, %v4333, 0.0
      %v4452 = vadd.f32 %v4450, %v4451
      %v4453 = vsel %vm1129, %v4336, 0.0
      %v4454 = vadd.f32 %v4452, %v4453
      %v4455 = vsel %vm1129, %v4341, 0.0
      %v4456 = vadd.f32 %v4454, %v4455
      %v4457 = vsel %vm1129, %v4344, 0.0
      %v4458 = vadd.f32 %v4456, %v4457
      %v4459 = vsel %vm1129, %v4349, 0.0
      %v4460 = vadd.f32 %v4458, %v4459
      %v4461 = vsel %vm1129, %v4352, 0.0
      %v4462 = vadd.f32 %v4460, %v4461
      %v4463 = vsel %vm1129, %v4357, 0.0
      %v4464 = vadd.f32 %v4462, %v4463
      %v4465 = vsel %vm1129, %v4360, 0.0
      %v4466 = vadd.f32 %v4464, %v4465
      %v4467 = vsel %vm1129, %v4365, 0.0
      %v4468 = vadd.f32 %v4466, %v4467
      %v4469 = vsel %vm1129, %v4368, 0.0
      %v4470 = vadd.f32 %v4468, %v4469
      %v4471 = vrot.slane %v4470, 4
      %v4472 = vadd.f32 %v4470, %v4471
      %v4473 = vrot.slane %v4472, 2
      %v4474 = vadd.f32 %v4472, %v4473
      %v4475 = vrot.slane %v4474, 1
      %v4476 = vadd.f32 %v4474, %v4475
      %v4477 = vmul.f32 %v4245, %v4245
      %v4478 = vmul.f32 %v4248, %v4248
      %v4479 = vmul.f32 %v4253, %v4253
      %v4480 = vmul.f32 %v4256, %v4256
      %v4481 = vmul.f32 %v4261, %v4261
      %v4482 = vmul.f32 %v4264, %v4264
      %v4483 = vmul.f32 %v4269, %v4269
      %v4484 = vmul.f32 %v4272, %v4272
      %v4485 = vmul.f32 %v4277, %v4277
      %v4486 = vmul.f32 %v4280, %v4280
      %v4487 = vmul.f32 %v4285, %v4285
      %v4488 = vmul.f32 %v4288, %v4288
      %v4489 = vmul.f32 %v4293, %v4293
      %v4490 = vmul.f32 %v4296, %v4296
      %v4491 = vmul.f32 %v4301, %v4301
      %v4492 = vmul.f32 %v4304, %v4304
      %v4493 = vmul.f32 %v4309, %v4309
      %v4494 = vmul.f32 %v4312, %v4312
      %v4495 = vmul.f32 %v4317, %v4317
      %v4496 = vmul.f32 %v4320, %v4320
      %v4497 = vmul.f32 %v4325, %v4325
      %v4498 = vmul.f32 %v4328, %v4328
      %v4499 = vmul.f32 %v4333, %v4333
      %v4500 = vmul.f32 %v4336, %v4336
      %v4501 = vmul.f32 %v4341, %v4341
      %v4502 = vmul.f32 %v4344, %v4344
      %v4503 = vmul.f32 %v4349, %v4349
      %v4504 = vmul.f32 %v4352, %v4352
      %v4505 = vmul.f32 %v4357, %v4357
      %v4506 = vmul.f32 %v4360, %v4360
      %v4507 = vmul.f32 %v4365, %v4365
      %v4508 = vmul.f32 %v4368, %v4368
      %v4509 = vsel %vm1129, %v4477, 0.0
      %v4510 = vsel %vm1129, %v4478, 0.0
      %v4511 = vadd.f32 %v4509, %v4510
      %v4512 = vsel %vm1129, %v4479, 0.0
      %v4513 = vadd.f32 %v4511, %v4512
      %v4514 = vsel %vm1129, %v4480, 0.0
      %v4515 = vadd.f32 %v4513, %v4514
      %v4516 = vsel %vm1129, %v4481, 0.0
      %v4517 = vadd.f32 %v4515, %v4516
      %v4518 = vsel %vm1129, %v4482, 0.0
      %v4519 = vadd.f32 %v4517, %v4518
      %v4520 = vsel %vm1129, %v4483, 0.0
      %v4521 = vadd.f32 %v4519, %v4520
      %v4522 = vsel %vm1129, %v4484, 0.0
      %v4523 = vadd.f32 %v4521, %v4522
      %v4524 = vsel %vm1129, %v4485, 0.0
      %v4525 = vadd.f32 %v4523, %v4524
      %v4526 = vsel %vm1129, %v4486, 0.0
      %v4527 = vadd.f32 %v4525, %v4526
      %v4528 = vsel %vm1129, %v4487, 0.0
      %v4529 = vadd.f32 %v4527, %v4528
      %v4530 = vsel %vm1129, %v4488, 0.0
      %v4531 = vadd.f32 %v4529, %v4530
      %v4532 = vsel %vm1129, %v4489, 0.0
      %v4533 = vadd.f32 %v4531, %v4532
      %v4534 = vsel %vm1129, %v4490, 0.0
      %v4535 = vadd.f32 %v4533, %v4534
      %v4536 = vsel %vm1129, %v4491, 0.0
      %v4537 = vadd.f32 %v4535, %v4536
      %v4538 = vsel %vm1129, %v4492, 0.0
      %v4539 = vadd.f32 %v4537, %v4538
      %v4540 = vsel %vm1129, %v4493, 0.0
      %v4541 = vadd.f32 %v4539, %v4540
      %v4542 = vsel %vm1129, %v4494, 0.0
      %v4543 = vadd.f32 %v4541, %v4542
      %v4544 = vsel %vm1129, %v4495, 0.0
      %v4545 = vadd.f32 %v4543, %v4544
      %v4546 = vsel %vm1129, %v4496, 0.0
      %v4547 = vadd.f32 %v4545, %v4546
      %v4548 = vsel %vm1129, %v4497, 0.0
      %v4549 = vadd.f32 %v4547, %v4548
      %v4550 = vsel %vm1129, %v4498, 0.0
      %v4551 = vadd.f32 %v4549, %v4550
      %v4552 = vsel %vm1129, %v4499, 0.0
      %v4553 = vadd.f32 %v4551, %v4552
      %v4554 = vsel %vm1129, %v4500, 0.0
      %v4555 = vadd.f32 %v4553, %v4554
      %v4556 = vsel %vm1129, %v4501, 0.0
      %v4557 = vadd.f32 %v4555, %v4556
      %v4558 = vsel %vm1129, %v4502, 0.0
      %v4559 = vadd.f32 %v4557, %v4558
      %v4560 = vsel %vm1129, %v4503, 0.0
      %v4561 = vadd.f32 %v4559, %v4560
      %v4562 = vsel %vm1129, %v4504, 0.0
      %v4563 = vadd.f32 %v4561, %v4562
      %v4564 = vsel %vm1129, %v4505, 0.0
      %v4565 = vadd.f32 %v4563, %v4564
      %v4566 = vsel %vm1129, %v4506, 0.0
      %v4567 = vadd.f32 %v4565, %v4566
      %v4568 = vsel %vm1129, %v4507, 0.0
      %v4569 = vadd.f32 %v4567, %v4568
      %v4570 = vsel %vm1129, %v4508, 0.0
      %v4571 = vadd.f32 %v4569, %v4570
      %v4572 = vrot.slane %v4571, 4
      %v4573 = vadd.f32 %v4571, %v4572
      %v4574 = vrot.slane %v4573, 2
      %v4575 = vadd.f32 %v4573, %v4574
      %v4576 = vrot.slane %v4575, 1
      %v4577 = vadd.f32 %v4575, %v4576
      %vm4578 = vcmask 1040384
      %v4579 = vsel %vm4578, %v4476, %v4577
      %v4580 = vld [vmem:[%s259] sm:$0x3]
      %v4581 = vadd.f32 %v4580, %v4579
      %vm4582 = vcmask 58368
      %4583 = vst.msk [vmem:[%s259] sm:$0x3] %vm4582, %v4581
      %s4584 = sadd.s32 %s21, %s22
      %p4585 = scmp.lt.s32.totalorder %s4584, 1
      %s4586 = scalar_select %p4585, %s4584, 1
      %s4587 = smul.addr %s4586, 32
      %s4588 = smul.addr %s4587, 8
      %s4589 = scalar_lea.vmem %s4, %s4588
      %p4590 = scmp.lt.s32.totalorder %s21, 1
      %s4591 = scalar_select %p4590, %s21, 1
      %s4592 = smul.addr %s4591, 2
      %s4593 = scalar_lea.vmem %s5, %s4592
      // Predicated region
      $region45: #{resnet_block_forward.4} parent=35 // pred_check
        %p4594 = pneg %p140
      $region46: #{resnet_block_forward.4} parent=35 // pred_check_branch
        %4596 = sbr.rel (%p4594) target = $region48
      $region47: #{resnet_block_forward.4} parent=35 // pred_region
        %s4597 = sadd.s32 %s21, %s22
      $region48: #{resnet_block_forward.4} parent=35 // pred_fallthru
        _
      // Predicated region
      $region49: #{resnet_block_forward.4} parent=35 // pred_check
        %p4598 = pneg %p166
      $region50: #{resnet_block_forward.4} parent=35 // pred_check_branch
        %4600 = sbr.rel (%p4598) target = $region52
      $region51: #{resnet_block_forward.4} parent=35 // pred_region
        _
      $region52: #{resnet_block_forward.4} parent=35 // pred_fallthru
        _
    $region36: #{resnet_block_forward.4} parent=5 // pred_fallthru
      _
    %p4601 = scmp.le.s32.totalorder 2, %s12
    // Predicated region
    $region53: #{resnet_block_forward.4} parent=5 // pred_check
      %p4602 = pneg %p4601
    $region54: #{resnet_block_forward.4} parent=5 // pred_check_branch
      %4604 = sbr.rel (%p4602) target = $region56
    $region55: #{resnet_block_forward.4} parent=5 // pred_region
      %s4605 = ssub.s32 %s12, 2
      // Predicated region
      $region57: #{resnet_block_forward.4} parent=55 // pred_check
        %p4606 = pneg %p146
      $region58: #{resnet_block_forward.4} parent=55 // pred_check_branch
        %4608 = sbr.rel (%p4606) target = $region60
      $region59: #{resnet_block_forward.4} parent=55 // pred_region
        %s4609 = sadd.s32 %s23, %s24
        %p4610 = scmp.lt.s32.totalorder %s4609, 1
        %s4611 = scalar_select %p4610, %s4609, 1
        %s4612 = smul.addr %s4611, 32
        %s4613 = smul.addr %s4612, 8
        %s4614 = scalar_lea.vmem %s4, %s4613
      $region60: #{resnet_block_forward.4} parent=55 // pred_fallthru
        _
      // Predicated region
      $region61: #{resnet_block_forward.4} parent=55 // pred_check
        %p4615 = pneg %p172
      $region62: #{resnet_block_forward.4} parent=55 // pred_check_branch
        %4617 = sbr.rel (%p4615) target = $region64
      $region63: #{resnet_block_forward.4} parent=55 // pred_region
        %p4618 = scmp.lt.s32.totalorder %s23, 1
        %s4619 = scalar_select %p4618, %s23, 1
        %s4620 = smul.addr %s4619, 2
        %s4621 = scalar_lea.vmem %s5, %s4620
      $region64: #{resnet_block_forward.4} parent=55 // pred_fallthru
        _
    $region56: #{resnet_block_forward.4} parent=5 // pred_fallthru
      _
  $region6: #{resnet_block_forward.4} parent=0 // loop_footer
    %s16 = sadd.s32 1, %s12
  $region7: #{resnet_block_forward.4} parent=0 // loop_footer_branch
    %11 = sbr.rel target = $region3
  $region8: #{resnet_block_forward.4} parent=0 // loop_exit
    _

</llo_original>
